<compile_context>
chip_gen: v6e
topology: v6e:2x2x1
jax: 0.10.0
libtpu: 0.0.40
codegen_flags: <defaults>
</compile_context>

<pallas_src>
import functools

import jax
import jax.numpy as jnp
from jax.experimental import pallas as pl
from jax.experimental.pallas import tpu as pltpu

EPS = 1e-5
ACT_DTYPE = jnp.bfloat16            # storage dtype for the big activations


# ----------------------------------------------------------------------------
# Small helpers
# ----------------------------------------------------------------------------
@functools.lru_cache(maxsize=None)
def _vmem_limit_bytes():
    """Per-generation scoped-VMEM cap: 3/4 of physical, capped at 96 MiB.

    ~96 MiB on v5e/v6e (128 MiB physical), 48 MiB on v7x (64 MiB physical);
    conservative 48 MiB fallback when the query is unavailable.
    """
    try:
        cap = int(pltpu.get_tpu_info().vmem_capacity_bytes)
    except Exception:
        cap = 64 * 1024 * 1024
    return int(min(cap * 3 // 4, 96 * 1024 * 1024))


def _cparams(semantics):
    return pltpu.CompilerParams(dimension_semantics=semantics,
                                vmem_limit_bytes=_vmem_limit_bytes())


def _full_block(shape):
    """Whole-array VMEM block for a grid=(1,) pallas_call (tiny tensors only)."""
    nd = len(shape)
    return pl.BlockSpec(shape, lambda i, _nd=nd: (0,) * _nd)


def _pick_row_tile(rows, cap=2048):
    """Largest divisor of `rows` <= cap, preferring bf16-friendly 16-multiples."""
    cap = min(cap, rows)
    fallback = None
    for t in range(cap, 0, -1):
        if rows % t:
            continue
        if t % 16 == 0:
            return t
        if fallback is None and (t % 8 == 0 or t == rows):
            fallback = t
    return fallback if fallback is not None else rows


def _bn_scale_shift(ssum, ssq, gamma, beta, n_rows):
    """Fold global training-mode BN stats into per-channel (scale, shift)."""
    mean = ssum / n_rows                                      # (1, C)
    var = jnp.maximum(ssq / n_rows - mean * mean, 0.0)        # biased, one-pass
    scale = gamma * jax.lax.rsqrt(var + EPS)
    shift = beta - mean * scale
    return scale, shift


def _fold_bn(scale, shift, w, b, act_dtype):
    """Fold a preceding BN (y = z*scale + shift) into the next Linear.

    y @ W + b == z @ (scale^T * W) + (shift @ W + b): mathematically identical
    to normalize-then-Linear, and with act_dtype=bfloat16 it gives a
    single-pass bf16 x bf16 MXU matmul in the kernel.
    """
    w_eff = (scale.reshape(-1, 1) * w).astype(act_dtype)
    b_eff = b + shift @ w                                     # (1, cout) f32
    return w_eff, b_eff


def _reduce_stats(arr):
    """(ncores*8, C) MXU-accumulated per-core partials -> (1, C) global sums."""
    return arr.reshape(-1, 8, arr.shape[-1])[:, 0, :].sum(axis=0, keepdims=True)


# ----------------------------------------------------------------------------
# In-kernel helpers
# ----------------------------------------------------------------------------
def _layer1_fma(x, w, b):
    # K=3 contraction as three VPU broadcast FMAs (avoids a 3/128-lane matmul).
    z = (x[:, 0:1] * w[0:1, :]
         + x[:, 1:2] * w[1:2, :]
         + x[:, 2:3] * w[2:3, :]
         + b)
    return jnp.maximum(z, 0.0)


def _accum_stats(z, ssum_ref, ssq_ref):
    # Column sums via an (8, TM) ones matmul: the reduction rides the MXU (all
    # 8 result rows are identical copies of the sum), keeping the VPU free.
    ones = jnp.ones((8, z.shape[0]), jnp.float32)
    ssum_ref[...] += jnp.dot(ones, z, preferred_element_type=jnp.float32)
    ssq_ref[...] += jnp.dot(ones, z * z, preferred_element_type=jnp.float32)


# ----------------------------------------------------------------------------
# Pass A: layer-1 (3->64) global BN statistics only (activation not stored)
# ----------------------------------------------------------------------------
def layer1_stats_kernel(x_ref, w1_ref, b1_ref, ssum_ref, ssq_ref):
    @pl.when(pl.program_id(1) == 0)
    def _init():
        ssum_ref[...] = jnp.zeros_like(ssum_ref)
        ssq_ref[...] = jnp.zeros_like(ssq_ref)

    z1 = _layer1_fma(x_ref[...], w1_ref[...], b1_ref[...])
    _accum_stats(z1, ssum_ref, ssq_ref)


# ----------------------------------------------------------------------------
# Pass B: recompute layer 1 from x, BN folded into layer 2 (64->128) matmul
# ----------------------------------------------------------------------------
def layer12_kernel(x_ref, w1_ref, b1_ref, w2_ref, b2_ref,
                   z_ref, ssum_ref, ssq_ref):
    @pl.when(pl.program_id(1) == 0)
    def _init():
        ssum_ref[...] = jnp.zeros_like(ssum_ref)
        ssq_ref[...] = jnp.zeros_like(ssq_ref)

    # Recompute layer 1 (3 FMAs -- cheaper than a (rows,64) HBM round trip),
    # cast to the activation storage dtype, then the BN-folded layer-2 matmul.
    z1 = _layer1_fma(x_ref[...], w1_ref[...], b1_ref[...]).astype(z_ref.dtype)
    z2 = jnp.dot(z1, w2_ref[...],
                 preferred_element_type=jnp.float32) + b2_ref[...]
    z2 = jnp.maximum(z2, 0.0)
    z_ref[...] = z2.astype(z_ref.dtype)
    _accum_stats(z2, ssum_ref, ssq_ref)


# ----------------------------------------------------------------------------
# Pass C: BN folded into layer 3 (128->1024) matmul
# ----------------------------------------------------------------------------
def layer3_kernel(zp_ref, w_ref, b_ref, z_ref, ssum_ref, ssq_ref):
    @pl.when(pl.program_id(1) == 0)
    def _init():
        ssum_ref[...] = jnp.zeros_like(ssum_ref)
        ssq_ref[...] = jnp.zeros_like(ssq_ref)

    z = jnp.dot(zp_ref[...], w_ref[...],
                preferred_element_type=jnp.float32) + b_ref[...]
    z = jnp.maximum(z, 0.0)
    z_ref[...] = z.astype(z_ref.dtype)
    _accum_stats(z, ssum_ref, ssq_ref)


# ----------------------------------------------------------------------------
# Pass D: fused BN-normalize + MaxPool1d over torch's .view(-1, 1024, N) axis
# ----------------------------------------------------------------------------
def norm_pool_kernel(z_ref, sc_ref, sh_ref, o_ref, acc_ref, *, num_points, tn):
    k = pl.program_id(1)

    @pl.when(k == 0)
    def _init():
        acc_ref[...] = jnp.full_like(acc_ref, -jnp.inf)

    h = (z_ref[...].astype(jnp.float32) * sc_ref[...].astype(jnp.float32)
         + sh_ref[...].astype(jnp.float32))                  # (1, 1024, tn)
    # Mask pool-axis padding lanes (last block when tn does not divide N).
    p = k * tn + jax.lax.broadcasted_iota(jnp.int32, h.shape, 2)
    h = jnp.where(p < num_points, h, -jnp.inf)
    # Lane-dense running max in VMEM scratch; single store on the last step.
    acc_ref[...] = jnp.maximum(acc_ref[...], h)

    @pl.when(k == pl.num_programs(1) - 1)
    def _store():
        o_ref[...] = jnp.max(acc_ref[...], axis=-1, keepdims=True)


def _pool_tables(scale, shift, num_points, tn, act_dtype):
    """(1, 1024, tn) scale/shift tables in the torch .view(-1,1024,N) layout.

    View element (b, ch, p) carries BN channel (ch*N + p) % 1024; the table
    only needs min(N, 1024) columns (period 1024 in p) and is stored in the
    activation dtype so it stays VMEM-resident in the pool kernel.
    """
    ch = jnp.arange(1024, dtype=jnp.int32).reshape(1024, 1)
    q = jnp.arange(tn, dtype=jnp.int32).reshape(1, tn)
    idx = (ch * num_points + q) % 1024
    sc_tab = jnp.take(scale.reshape(-1), idx).astype(act_dtype)
    sh_tab = jnp.take(shift.reshape(-1), idx).astype(act_dtype)
    return sc_tab.reshape(1, 1024, tn), sh_tab.reshape(1, 1024, tn)


# ----------------------------------------------------------------------------
# Pass E: tiny global head  (B, 1024) -> 512 -> 256 -> 9
# ----------------------------------------------------------------------------
def _nonlinear(h, w_ref, b_ref, g_ref, be_ref):
    """Linear -> ReLU -> BatchNorm1d (training-mode stats over the B rows)."""
    z = jnp.dot(h, w_ref[...], preferred_element_type=jnp.float32) + b_ref[...]
    z = jnp.maximum(z, 0.0)
    mean = jnp.mean(z, axis=0, keepdims=True)
    var = jnp.maximum(jnp.mean(z * z, axis=0, keepdims=True) - mean * mean, 0.0)
    return (z - mean) * jax.lax.rsqrt(var + EPS) * g_ref[...] + be_ref[...]


def head_kernel(p_ref, w4, b4, g4, be4, w5, b5, g5, be5, w6, b6, o_ref):
    h = p_ref[...]
    h = _nonlinear(h, w4, b4, g4, be4)                 # 1024 -> 512
    h = _nonlinear(h, w5, b5, g5, be5)                 # 512  -> 256
    o_ref[...] = jnp.dot(h, w6[...],
                         preferred_element_type=jnp.float32) + b6[...]  # -> 9


# ----------------------------------------------------------------------------
# Parameters (deterministic, synthetic — matches torch layer shapes)
# ----------------------------------------------------------------------------
def init_params(key):
    dims = [(3, 64), (64, 128), (128, 1024), (1024, 512), (512, 256), (256, 9)]
    params = []
    for i, (cin, cout) in enumerate(dims):
        key, kw, kb, kg, ke = jax.random.split(key, 5)
        w = (jax.random.normal(kw, (cin, cout), jnp.float32)
             / jnp.sqrt(jnp.float32(cin)))
        b = 0.01 * jax.random.normal(kb, (1, cout), jnp.float32)
        layer = {"w": w, "b": b}
        if i < 5:  # the first five layers are NonLinear (carry a BatchNorm1d)
            layer["g"] = 1.0 + 0.1 * jax.random.normal(kg, (1, cout), jnp.float32)
            layer["be"] = 0.1 * jax.random.normal(ke, (1, cout), jnp.float32)
        params.append(layer)
    return params


# ----------------------------------------------------------------------------
# Forward wrapper
# ----------------------------------------------------------------------------
def input_tnet_forward(x, params, num_points, act_dtype=ACT_DTYPE,
                       row_tile_cap=2048):
    rows = x.shape[0]                       # B * num_points
    batch = rows // num_points
    tm = _pick_row_tile(rows, row_tile_cap)
    steps = rows // tm
    # Megacore: split the row axis over (up to) two cores; the BN statistics
    # are accumulated per core and combined in the wrapper.
    ncores = 2 if (steps % 2 == 0 and steps >= 2) else 1
    spc = steps // ncores
    grid = (ncores, spc)
    sem = ("parallel", "arbitrary")

    row_idx = lambda c, i: (c * spc + i, 0)
    const_idx = lambda c, i: (0, 0)
    stats_idx = lambda c, i: (c, 0)

    def stats_out(cout):
        return (pl.BlockSpec((8, cout), stats_idx),
                jax.ShapeDtypeStruct((ncores * 8, cout), jnp.float32))

    p0, p1, p2 = params[0], params[1], params[2]

    # ---- pass A: layer-1 (3->64) BN statistics only -------------------------
    spec64, shape64 = stats_out(64)
    s1, q1 = pl.pallas_call(
        layer1_stats_kernel,
        grid=grid,
        in_specs=[pl.BlockSpec((tm, 3), row_idx),
                  pl.BlockSpec((3, 64), const_idx),
                  pl.BlockSpec((1, 64), const_idx)],
        out_specs=(spec64, spec64),
        out_shape=(shape64, shape64),
        compiler_params=_cparams(sem),
    )(x, p0["w"], p0["b"])
    sc1, sh1 = _bn_scale_shift(_reduce_stats(s1), _reduce_stats(q1),
                               p0["g"], p0["be"], rows)

    # ---- pass B: recompute layer 1, BN folded into layer 2 (64->128) --------
    w2e, b2e = _fold_bn(sc1, sh1, p1["w"], p1["b"], act_dtype)
    spec128, shape128 = stats_out(128)
    z2, s2, q2 = pl.pallas_call(
        layer12_kernel,
        grid=grid,
        in_specs=[pl.BlockSpec((tm, 3), row_idx),
                  pl.BlockSpec((3, 64), const_idx),
                  pl.BlockSpec((1, 64), const_idx),
                  pl.BlockSpec((64, 128), const_idx),
                  pl.BlockSpec((1, 128), const_idx)],
        out_specs=(pl.BlockSpec((tm, 128), row_idx), spec128, spec128),
        out_shape=(jax.ShapeDtypeStruct((rows, 128), act_dtype),
                   shape128, shape128),
        compiler_params=_cparams(sem),
    )(x, p0["w"], p0["b"], w2e, b2e)
    sc2, sh2 = _bn_scale_shift(_reduce_stats(s2), _reduce_stats(q2),
                               p1["g"], p1["be"], rows)

    # ---- pass C: BN folded into layer 3 (128->1024) --------------------------
    w3e, b3e = _fold_bn(sc2, sh2, p2["w"], p2["b"], act_dtype)
    spec1024, shape1024 = stats_out(1024)
    z3, s3, q3 = pl.pallas_call(
        layer3_kernel,
        grid=grid,
        in_specs=[pl.BlockSpec((tm, 128), row_idx),
                  pl.BlockSpec((128, 1024), const_idx),
                  pl.BlockSpec((1, 1024), const_idx)],
        out_specs=(pl.BlockSpec((tm, 1024), row_idx), spec1024, spec1024),
        out_shape=(jax.ShapeDtypeStruct((rows, 1024), act_dtype),
                   shape1024, shape1024),
        compiler_params=_cparams(sem),
    )(z2, w3e, b3e)
    sc3, sh3 = _bn_scale_shift(_reduce_stats(s3), _reduce_stats(q3),
                               p2["g"], p2["be"], rows)

    # ---- pass D: fused BN-normalize + MaxPool over torch's .view(-1,1024,N) --
    tn = num_points if num_points <= 1024 else 1024
    nk = -(-num_points // tn)                            # ceil-div
    sc_tab, sh_tab = _pool_tables(sc3, sh3, num_points, tn, act_dtype)
    z3_view = z3.reshape(batch, 1024, num_points)        # row-major torch .view
    pooled = pl.pallas_call(
        functools.partial(norm_pool_kernel, num_points=num_points, tn=tn),
        grid=(batch, nk),
        in_specs=[pl.BlockSpec((1, 1024, tn), lambda b, k: (b, 0, k)),
                  pl.BlockSpec((1, 1024, tn), lambda b, k: (0, 0, 0)),
                  pl.BlockSpec((1, 1024, tn), lambda b, k: (0, 0, 0))],
        out_specs=pl.BlockSpec((1, 1024, 1), lambda b, k: (b, 0, 0)),
        out_shape=jax.ShapeDtypeStruct((batch, 1024, 1), jnp.float32),
        scratch_shapes=[pltpu.VMEM((1, 1024, tn), jnp.float32)],
        compiler_params=_cparams(("parallel", "arbitrary")),
    )(z3_view, sc_tab, sh_tab)
    pooled = pooled.reshape(batch, 1024)

    # ---- pass E: tiny global head (B, 1024) -> 9 -----------------------------
    head_args = []
    for layer in params[3:5]:
        head_args += [layer["w"], layer["b"], layer["g"], layer["be"]]
    head_args += [params[5]["w"], params[5]["b"]]
    mat9 = pl.pallas_call(
        head_kernel,
        grid=(1,),
        in_specs=[_full_block(a.shape) for a in (pooled, *head_args)],
        out_specs=_full_block((batch, 9)),
        out_shape=jax.ShapeDtypeStruct((batch, 9), jnp.float32),
        compiler_params=_cparams(("arbitrary",)),
    )(pooled, *head_args)

    # ---- apply the learned 3x3 transform (negligible FLOPs -> plain XLA) -----
    matrix = mat9.reshape(batch, 3, 3)                   # torch .view(-1, 3, 3)
    pts = x.reshape(batch, num_points, 3)                # torch .view(-1, N, 3)
    out = jnp.matmul(pts, matrix)
    return out.reshape(-1, 3)                            # torch .view(-1, 3)


# ----------------------------------------------------------------------------
# Pure-JAX reference matched to the kernels' math.
#
# The BN folding (W' = diag(scale) W, b' = shift @ W + b) is mathematically
# identical to torch's normalize-then-Linear; act_dtype is the storage dtype
# of the large stage-1 activations (float32 reproduces the PyTorch f32
# forward, bfloat16 mirrors the kernels' production storage).
# ----------------------------------------------------------------------------
def reference_forward(x, params, num_points, act_dtype=jnp.float32):
    rows = x.shape[0]
    batch = rows // num_points
    p0, p1, p2 = params[0], params[1], params[2]

    def stats(z, layer):
        ssum = jnp.sum(z, axis=0, keepdims=True)
        ssq = jnp.sum(z * z, axis=0, keepdims=True)
        return _bn_scale_shift(ssum, ssq, layer["g"], layer["be"], rows)

    z1 = jnp.maximum(x @ p0["w"] + p0["b"], 0.0)
    sc1, sh1 = stats(z1, p0)

    w2e, b2e = _fold_bn(sc1, sh1, p1["w"], p1["b"], act_dtype)
    z2 = jnp.maximum(jnp.dot(z1.astype(act_dtype), w2e,
                             preferred_element_type=jnp.float32) + b2e, 0.0)
    sc2, sh2 = stats(z2, p1)

    w3e, b3e = _fold_bn(sc2, sh2, p2["w"], p2["b"], act_dtype)
    z3 = jnp.maximum(jnp.dot(z2.astype(act_dtype), w3e,
                             preferred_element_type=jnp.float32) + b3e, 0.0)
    sc3, sh3 = stats(z3, p2)

    z3n = (z3.astype(act_dtype).astype(jnp.float32)
           * sc3.astype(act_dtype).astype(jnp.float32)
           + sh3.astype(act_dtype).astype(jnp.float32))
    pooled = z3n.reshape(batch, 1024, num_points).max(axis=-1)

    h = pooled
    for layer in params[3:5]:
        z = jnp.maximum(h @ layer["w"] + layer["b"], 0.0)
        mean = z.mean(0, keepdims=True)
        var = jnp.maximum((z * z).mean(0, keepdims=True) - mean * mean, 0.0)
        h = (z - mean) * jax.lax.rsqrt(var + EPS) * layer["g"] + layer["be"]
    mat = (h @ params[5]["w"] + params[5]["b"]).reshape(batch, 3, 3)
    pts = x.reshape(batch, num_points, 3)
    return jnp.matmul(pts, mat).reshape(-1, 3)


# ----------------------------------------------------------------------------
if __name__ == "__main__":
    key = jax.random.PRNGKey(0)
    k_param, k_x = jax.random.split(key)

    batch, num_points = 4, 16
    x = jax.random.normal(k_x, (batch * num_points, 3), jnp.float32)
    params = init_params(k_param)

    # Production path: bf16 activation storage, whole-row tiles.
    fwd = jax.jit(functools.partial(input_tnet_forward, num_points=num_points))
    out = jax.block_until_ready(fwd(x, params))

    # f32-storage path with a tiny row tile, exercising the multi-step grid
    # and the per-core BN-partial accumulation path of the same kernels.
    fwd_f32 = jax.jit(functools.partial(input_tnet_forward,
                                        num_points=num_points,
                                        act_dtype=jnp.float32,
                                        row_tile_cap=16))
    out_f32 = jax.block_until_ready(fwd_f32(x, params))

    ref_f32 = reference_forward(x, params, num_points)
    ref_bf16 = reference_forward(x, params, num_points, act_dtype=ACT_DTYPE)

    assert out.shape == (batch * num_points, 3)
    assert bool(jnp.all(jnp.isfinite(out)))
    # f32-storage kernels reproduce the PyTorch-f32 forward.
    assert jnp.allclose(out_f32, ref_f32, rtol=1e-3, atol=1e-3), (
        float(jnp.max(jnp.abs(out_f32 - ref_f32))))
    # bf16 production path against a storage-matched reference.  (bf16 is not
    # compared against the f32 reference: with tiny batches the head
    # BatchNorm divides by the std over only 4 rows, so bf16 storage can
    # legitimately flip near-tie channels -- a property of the module at this
    # batch size, not of the kernels.)
    assert jnp.allclose(out, ref_bf16, rtol=5e-3, atol=5e-3), (
        float(jnp.max(jnp.abs(out - ref_bf16))))

    print("KERNEL_OK")
</pallas_src>

<mosaic_0001>
module attributes {stable_mosaic.version = 11 : i64} {
  func.func @layer1_stats_kernel(%arg0: i32, %arg1: i32, %arg2: memref<64x3xf32, #tpu.memory_space<vmem>>, %arg3: memref<3x64xf32, #tpu.memory_space<vmem>>, %arg4: memref<1x64xf32, #tpu.memory_space<vmem>>, %arg5: memref<8x64xf32, #tpu.memory_space<vmem>>, %arg6: memref<8x64xf32, #tpu.memory_space<vmem>>) attributes {dimension_semantics = [#tpu.dimension_semantics<parallel>, #tpu.dimension_semantics<arbitrary>], iteration_bounds = array<i64: 1, 1>, scalar_prefetch = 0 : i64, scratch_operands = 0 : i64, tpu.core_type = #tpu.core_type<tc>, window_params = [{transform_indices = @transform_0, window_bounds = array<i64: 64, 3>}, {pipeline_mode = #tpu.pipeline_mode<synchronous>, transform_indices = @transform_1, window_bounds = array<i64: 3, 64>}, {pipeline_mode = #tpu.pipeline_mode<synchronous>, transform_indices = @transform_2, window_bounds = array<i64: 1, 64>}, {transform_indices = @transform_3, window_bounds = array<i64: 8, 64>}, {transform_indices = @transform_4, window_bounds = array<i64: 8, 64>}]} {
    %c0_i32 = arith.constant 0 : i32
    %0 = arith.cmpi eq, %arg1, %c0_i32 : i32
    %1 = arith.extui %0 : i1 to i32
    %c0_i32_0 = arith.constant 0 : i32
    %2 = arith.cmpi ne, %1, %c0_i32_0 : i32
    scf.if %2 {
      %cst_17 = arith.constant 0.000000e+00 : f32
      %37 = vector.broadcast %cst_17 : f32 to vector<8x64xf32>
      %c0_18 = arith.constant 0 : index
      %c0_19 = arith.constant 0 : index
      %38 = vector.load %arg5[%c0_18, %c0_19] : memref<8x64xf32, #tpu.memory_space<vmem>>, vector<8x64xf32>
      tpu.vector_store %arg5[%c0_18, %c0_19], %37 {strides = array<i32>} : memref<8x64xf32, #tpu.memory_space<vmem>>, vector<8x64xf32>,
      %cst_20 = arith.constant 0.000000e+00 : f32
      %39 = vector.broadcast %cst_20 : f32 to vector<8x64xf32>
      %c0_21 = arith.constant 0 : index
      %c0_22 = arith.constant 0 : index
      %40 = vector.load %arg6[%c0_21, %c0_22] : memref<8x64xf32, #tpu.memory_space<vmem>>, vector<8x64xf32>
      tpu.vector_store %arg6[%c0_21, %c0_22], %39 {strides = array<i32>} : memref<8x64xf32, #tpu.memory_space<vmem>>, vector<8x64xf32>,
    } else {
    }
    %c0 = arith.constant 0 : index
    %c0_1 = arith.constant 0 : index
    %3 = vector.load %arg2[%c0, %c0_1] : memref<64x3xf32, #tpu.memory_space<vmem>>, vector<64x3xf32>
    %c0_2 = arith.constant 0 : index
    %c0_3 = arith.constant 0 : index
    %4 = vector.load %arg3[%c0_2, %c0_3] : memref<3x64xf32, #tpu.memory_space<vmem>>, vector<3x64xf32>
    %c0_4 = arith.constant 0 : index
    %c0_5 = arith.constant 0 : index
    %5 = vector.load %arg4[%c0_4, %c0_5] : memref<1x64xf32, #tpu.memory_space<vmem>>, vector<1x64xf32>
    %6 = vector.extract_strided_slice %3 {offsets = [0, 0], sizes = [64, 1], strides = [1, 1]} : vector<64x3xf32> to vector<64x1xf32>
    %7 = vector.extract_strided_slice %4 {offsets = [0, 0], sizes = [1, 64], strides = [1, 1]} : vector<3x64xf32> to vector<1x64xf32>
    %8 = vector.broadcast %6 : vector<64x1xf32> to vector<64x64xf32>
    %9 = vector.broadcast %7 : vector<1x64xf32> to vector<64x64xf32>
    %10 = arith.mulf %8, %9 : vector<64x64xf32>
    %11 = vector.extract_strided_slice %3 {offsets = [0, 1], sizes = [64, 1], strides = [1, 1]} : vector<64x3xf32> to vector<64x1xf32>
    %12 = vector.extract_strided_slice %4 {offsets = [1, 0], sizes = [1, 64], strides = [1, 1]} : vector<3x64xf32> to vector<1x64xf32>
    %13 = vector.broadcast %11 : vector<64x1xf32> to vector<64x64xf32>
    %14 = vector.broadcast %12 : vector<1x64xf32> to vector<64x64xf32>
    %15 = arith.mulf %13, %14 : vector<64x64xf32>
    %16 = arith.addf %10, %15 : vector<64x64xf32>
    %17 = vector.extract_strided_slice %3 {offsets = [0, 2], sizes = [64, 1], strides = [1, 1]} : vector<64x3xf32> to vector<64x1xf32>
    %18 = vector.extract_strided_slice %4 {offsets = [2, 0], sizes = [1, 64], strides = [1, 1]} : vector<3x64xf32> to vector<1x64xf32>
    %19 = vector.broadcast %17 : vector<64x1xf32> to vector<64x64xf32>
    %20 = vector.broadcast %18 : vector<1x64xf32> to vector<64x64xf32>
    %21 = arith.mulf %19, %20 : vector<64x64xf32>
    %22 = arith.addf %16, %21 : vector<64x64xf32>
    %23 = vector.broadcast %5 : vector<1x64xf32> to vector<64x64xf32>
    %24 = arith.addf %22, %23 : vector<64x64xf32>
    %cst = arith.constant 0.000000e+00 : f32
    %25 = vector.broadcast %cst : f32 to vector<64x64xf32>
    %26 = arith.maximumf %24, %25 : vector<64x64xf32>
    %cst_6 = arith.constant 1.000000e+00 : f32
    %27 = vector.broadcast %cst_6 : f32 to vector<8x64xf32>
    %c0_7 = arith.constant 0 : index
    %c0_8 = arith.constant 0 : index
    %28 = vector.load %arg5[%c0_7, %c0_8] : memref<8x64xf32, #tpu.memory_space<vmem>>, vector<8x64xf32>
    %cst_9 = arith.constant dense<0.000000e+00> : vector<8x64xf32>
    %29 = tpu.matmul %27, %26, %cst_9 {dimension_numbers = #tpu.dot_dimension_numbers<[1], [0], [0], [1], [0, 0, 1, 1], [], []>} : vector<8x64xf32>, vector<64x64xf32>, vector<8x64xf32> -> vector<8x64xf32>
    %30 = arith.addf %28, %29 : vector<8x64xf32>
    %c0_10 = arith.constant 0 : index
    %c0_11 = arith.constant 0 : index
    %31 = vector.load %arg5[%c0_10, %c0_11] : memref<8x64xf32, #tpu.memory_space<vmem>>, vector<8x64xf32>
    tpu.vector_store %arg5[%c0_10, %c0_11], %30 {strides = array<i32>} : memref<8x64xf32, #tpu.memory_space<vmem>>, vector<8x64xf32>,
    %c0_12 = arith.constant 0 : index
    %c0_13 = arith.constant 0 : index
    %32 = vector.load %arg6[%c0_12, %c0_13] : memref<8x64xf32, #tpu.memory_space<vmem>>, vector<8x64xf32>
    %33 = arith.mulf %26, %26 : vector<64x64xf32>
    %cst_14 = arith.constant dense<0.000000e+00> : vector<8x64xf32>
    %34 = tpu.matmul %27, %33, %cst_14 {dimension_numbers = #tpu.dot_dimension_numbers<[1], [0], [0], [1], [0, 0, 1, 1], [], []>} : vector<8x64xf32>, vector<64x64xf32>, vector<8x64xf32> -> vector<8x64xf32>
    %35 = arith.addf %32, %34 : vector<8x64xf32>
    %c0_15 = arith.constant 0 : index
    %c0_16 = arith.constant 0 : index
    %36 = vector.load %arg6[%c0_15, %c0_16] : memref<8x64xf32, #tpu.memory_space<vmem>>, vector<8x64xf32>
    tpu.vector_store %arg6[%c0_15, %c0_16], %35 {strides = array<i32>} : memref<8x64xf32, #tpu.memory_space<vmem>>, vector<8x64xf32>,
    return
  }
  func.func @transform_0(%arg0: i32, %arg1: i32) -> (i32, i32) {
    %c1_i32 = arith.constant 1 : i32
    %0 = arith.muli %arg0, %c1_i32 : i32
    %1 = arith.addi %0, %arg1 : i32
    %c0_i32 = arith.constant 0 : i32
    %c0_i32_0 = arith.constant 0 : i32
    return %1, %c0_i32 : i32, i32
  }
  func.func @transform_1(%arg0: i32, %arg1: i32) -> (i32, i32) {
    %c0_i32 = arith.constant 0 : i32
    %c0_i32_0 = arith.constant 0 : i32
    %c0_i32_1 = arith.constant 0 : i32
    return %c0_i32, %c0_i32_0 : i32, i32
  }
  func.func @transform_2(%arg0: i32, %arg1: i32) -> (i32, i32) {
    %c0_i32 = arith.constant 0 : i32
    %c0_i32_0 = arith.constant 0 : i32
    %c0_i32_1 = arith.constant 0 : i32
    return %c0_i32, %c0_i32_0 : i32, i32
  }
  func.func @transform_3(%arg0: i32, %arg1: i32) -> (i32, i32) {
    %c0_i32 = arith.constant 0 : i32
    %c0_i32_0 = arith.constant 0 : i32
    return %arg0, %c0_i32 : i32, i32
  }
  func.func @transform_4(%arg0: i32, %arg1: i32) -> (i32, i32) {
    %c0_i32 = arith.constant 0 : i32
    %c0_i32_0 = arith.constant 0 : i32
    return %arg0, %c0_i32 : i32, i32
  }
}

module attributes {stable_mosaic.version = 11 : i64} {
  func.func @layer12_kernel(%arg0: i32, %arg1: i32, %arg2: memref<64x3xf32, #tpu.memory_space<vmem>>, %arg3: memref<3x64xf32, #tpu.memory_space<vmem>>, %arg4: memref<1x64xf32, #tpu.memory_space<vmem>>, %arg5: memref<64x128xbf16, #tpu.memory_space<vmem>>, %arg6: memref<1x128xf32, #tpu.memory_space<vmem>>, %arg7: memref<64x128xbf16, #tpu.memory_space<vmem>>, %arg8: memref<8x128xf32, #tpu.memory_space<vmem>>, %arg9: memref<8x128xf32, #tpu.memory_space<vmem>>) attributes {dimension_semantics = [#tpu.dimension_semantics<parallel>, #tpu.dimension_semantics<arbitrary>], iteration_bounds = array<i64: 1, 1>, scalar_prefetch = 0 : i64, scratch_operands = 0 : i64, tpu.core_type = #tpu.core_type<tc>, window_params = [{transform_indices = @transform_0, window_bounds = array<i64: 64, 3>}, {pipeline_mode = #tpu.pipeline_mode<synchronous>, transform_indices = @transform_1, window_bounds = array<i64: 3, 64>}, {pipeline_mode = #tpu.pipeline_mode<synchronous>, transform_indices = @transform_2, window_bounds = array<i64: 1, 64>}, {pipeline_mode = #tpu.pipeline_mode<synchronous>, transform_indices = @transform_3, window_bounds = array<i64: 64, 128>}, {pipeline_mode = #tpu.pipeline_mode<synchronous>, transform_indices = @transform_4, window_bounds = array<i64: 1, 128>}, {transform_indices = @transform_5, window_bounds = array<i64: 64, 128>}, {transform_indices = @transform_6, window_bounds = array<i64: 8, 128>}, {transform_indices = @transform_7, window_bounds = array<i64: 8, 128>}]} {
    %c0_i32 = arith.constant 0 : i32
    %0 = arith.cmpi eq, %arg1, %c0_i32 : i32
    %1 = arith.extui %0 : i1 to i32
    %c0_i32_0 = arith.constant 0 : i32
    %2 = arith.cmpi ne, %1, %c0_i32_0 : i32
    scf.if %2 {
      %cst_25 = arith.constant 0.000000e+00 : f32
      %47 = vector.broadcast %cst_25 : f32 to vector<8x128xf32>
      %c0_26 = arith.constant 0 : index
      %c0_27 = arith.constant 0 : index
      %48 = vector.load %arg8[%c0_26, %c0_27] : memref<8x128xf32, #tpu.memory_space<vmem>>, vector<8x128xf32>
      tpu.vector_store %arg8[%c0_26, %c0_27], %47 {strides = array<i32>} : memref<8x128xf32, #tpu.memory_space<vmem>>, vector<8x128xf32>,
      %cst_28 = arith.constant 0.000000e+00 : f32
      %49 = vector.broadcast %cst_28 : f32 to vector<8x128xf32>
      %c0_29 = arith.constant 0 : index
      %c0_30 = arith.constant 0 : index
      %50 = vector.load %arg9[%c0_29, %c0_30] : memref<8x128xf32, #tpu.memory_space<vmem>>, vector<8x128xf32>
      tpu.vector_store %arg9[%c0_29, %c0_30], %49 {strides = array<i32>} : memref<8x128xf32, #tpu.memory_space<vmem>>, vector<8x128xf32>,
    } else {
    }
    %c0 = arith.constant 0 : index
    %c0_1 = arith.constant 0 : index
    %3 = vector.load %arg2[%c0, %c0_1] : memref<64x3xf32, #tpu.memory_space<vmem>>, vector<64x3xf32>
    %c0_2 = arith.constant 0 : index
    %c0_3 = arith.constant 0 : index
    %4 = vector.load %arg3[%c0_2, %c0_3] : memref<3x64xf32, #tpu.memory_space<vmem>>, vector<3x64xf32>
    %c0_4 = arith.constant 0 : index
    %c0_5 = arith.constant 0 : index
    %5 = vector.load %arg4[%c0_4, %c0_5] : memref<1x64xf32, #tpu.memory_space<vmem>>, vector<1x64xf32>
    %6 = vector.extract_strided_slice %3 {offsets = [0, 0], sizes = [64, 1], strides = [1, 1]} : vector<64x3xf32> to vector<64x1xf32>
    %7 = vector.extract_strided_slice %4 {offsets = [0, 0], sizes = [1, 64], strides = [1, 1]} : vector<3x64xf32> to vector<1x64xf32>
    %8 = vector.broadcast %6 : vector<64x1xf32> to vector<64x64xf32>
    %9 = vector.broadcast %7 : vector<1x64xf32> to vector<64x64xf32>
    %10 = arith.mulf %8, %9 : vector<64x64xf32>
    %11 = vector.extract_strided_slice %3 {offsets = [0, 1], sizes = [64, 1], strides = [1, 1]} : vector<64x3xf32> to vector<64x1xf32>
    %12 = vector.extract_strided_slice %4 {offsets = [1, 0], sizes = [1, 64], strides = [1, 1]} : vector<3x64xf32> to vector<1x64xf32>
    %13 = vector.broadcast %11 : vector<64x1xf32> to vector<64x64xf32>
    %14 = vector.broadcast %12 : vector<1x64xf32> to vector<64x64xf32>
    %15 = arith.mulf %13, %14 : vector<64x64xf32>
    %16 = arith.addf %10, %15 : vector<64x64xf32>
    %17 = vector.extract_strided_slice %3 {offsets = [0, 2], sizes = [64, 1], strides = [1, 1]} : vector<64x3xf32> to vector<64x1xf32>
    %18 = vector.extract_strided_slice %4 {offsets = [2, 0], sizes = [1, 64], strides = [1, 1]} : vector<3x64xf32> to vector<1x64xf32>
    %19 = vector.broadcast %17 : vector<64x1xf32> to vector<64x64xf32>
    %20 = vector.broadcast %18 : vector<1x64xf32> to vector<64x64xf32>
    %21 = arith.mulf %19, %20 : vector<64x64xf32>
    %22 = arith.addf %16, %21 : vector<64x64xf32>
    %23 = vector.broadcast %5 : vector<1x64xf32> to vector<64x64xf32>
    %24 = arith.addf %22, %23 : vector<64x64xf32>
    %cst = arith.constant 0.000000e+00 : f32
    %25 = vector.broadcast %cst : f32 to vector<64x64xf32>
    %26 = arith.maximumf %24, %25 : vector<64x64xf32>
    %27 = arith.truncf %26 : vector<64x64xf32> to vector<64x64xbf16>
    %c0_6 = arith.constant 0 : index
    %c0_7 = arith.constant 0 : index
    %28 = vector.load %arg5[%c0_6, %c0_7] : memref<64x128xbf16, #tpu.memory_space<vmem>>, vector<64x128xbf16>
    %cst_8 = arith.constant dense<0.000000e+00> : vector<64x128xf32>
    %29 = tpu.matmul %27, %28, %cst_8 {dimension_numbers = #tpu.dot_dimension_numbers<[1], [0], [0], [1], [0, 0, 1, 1], [], []>} : vector<64x64xbf16>, vector<64x128xbf16>, vector<64x128xf32> -> vector<64x128xf32>
    %c0_9 = arith.constant 0 : index
    %c0_10 = arith.constant 0 : index
    %30 = vector.load %arg6[%c0_9, %c0_10] : memref<1x128xf32, #tpu.memory_space<vmem>>, vector<1x128xf32>
    %31 = vector.broadcast %30 : vector<1x128xf32> to vector<64x128xf32>
    %32 = arith.addf %29, %31 : vector<64x128xf32>
    %cst_11 = arith.constant 0.000000e+00 : f32
    %33 = vector.broadcast %cst_11 : f32 to vector<64x128xf32>
    %34 = arith.maximumf %32, %33 : vector<64x128xf32>
    %35 = arith.truncf %34 : vector<64x128xf32> to vector<64x128xbf16>
    %c0_12 = arith.constant 0 : index
    %c0_13 = arith.constant 0 : index
    %36 = vector.load %arg7[%c0_12, %c0_13] : memref<64x128xbf16, #tpu.memory_space<vmem>>, vector<64x128xbf16>
    tpu.vector_store %arg7[%c0_12, %c0_13], %35 {strides = array<i32>} : memref<64x128xbf16, #tpu.memory_space<vmem>>, vector<64x128xbf16>,
    %cst_14 = arith.constant 1.000000e+00 : f32
    %37 = vector.broadcast %cst_14 : f32 to vector<8x64xf32>
    %c0_15 = arith.constant 0 : index
    %c0_16 = arith.constant 0 : index
    %38 = vector.load %arg8[%c0_15, %c0_16] : memref<8x128xf32, #tpu.memory_space<vmem>>, vector<8x128xf32>
    %cst_17 = arith.constant dense<0.000000e+00> : vector<8x128xf32>
    %39 = tpu.matmul %37, %34, %cst_17 {dimension_numbers = #tpu.dot_dimension_numbers<[1], [0], [0], [1], [0, 0, 1, 1], [], []>} : vector<8x64xf32>, vector<64x128xf32>, vector<8x128xf32> -> vector<8x128xf32>
    %40 = arith.addf %38, %39 : vector<8x128xf32>
    %c0_18 = arith.constant 0 : index
    %c0_19 = arith.constant 0 : index
    %41 = vector.load %arg8[%c0_18, %c0_19] : memref<8x128xf32, #tpu.memory_space<vmem>>, vector<8x128xf32>
    tpu.vector_store %arg8[%c0_18, %c0_19], %40 {strides = array<i32>} : memref<8x128xf32, #tpu.memory_space<vmem>>, vector<8x128xf32>,
    %c0_20 = arith.constant 0 : index
    %c0_21 = arith.constant 0 : index
    %42 = vector.load %arg9[%c0_20, %c0_21] : memref<8x128xf32, #tpu.memory_space<vmem>>, vector<8x128xf32>
    %43 = arith.mulf %34, %34 : vector<64x128xf32>
    %cst_22 = arith.constant dense<0.000000e+00> : vector<8x128xf32>
    %44 = tpu.matmul %37, %43, %cst_22 {dimension_numbers = #tpu.dot_dimension_numbers<[1], [0], [0], [1], [0, 0, 1, 1], [], []>} : vector<8x64xf32>, vector<64x128xf32>, vector<8x128xf32> -> vector<8x128xf32>
    %45 = arith.addf %42, %44 : vector<8x128xf32>
    %c0_23 = arith.constant 0 : index
    %c0_24 = arith.constant 0 : index
    %46 = vector.load %arg9[%c0_23, %c0_24] : memref<8x128xf32, #tpu.memory_space<vmem>>, vector<8x128xf32>
    tpu.vector_store %arg9[%c0_23, %c0_24], %45 {strides = array<i32>} : memref<8x128xf32, #tpu.memory_space<vmem>>, vector<8x128xf32>,
    return
  }
  func.func @transform_0(%arg0: i32, %arg1: i32) -> (i32, i32) {
    %c1_i32 = arith.constant 1 : i32
    %0 = arith.muli %arg0, %c1_i32 : i32
    %1 = arith.addi %0, %arg1 : i32
    %c0_i32 = arith.constant 0 : i32
    %c0_i32_0 = arith.constant 0 : i32
    return %1, %c0_i32 : i32, i32
  }
  func.func @transform_1(%arg0: i32, %arg1: i32) -> (i32, i32) {
    %c0_i32 = arith.constant 0 : i32
    %c0_i32_0 = arith.constant 0 : i32
    %c0_i32_1 = arith.constant 0 : i32
    return %c0_i32, %c0_i32_0 : i32, i32
  }
  func.func @transform_2(%arg0: i32, %arg1: i32) -> (i32, i32) {
    %c0_i32 = arith.constant 0 : i32
    %c0_i32_0 = arith.constant 0 : i32
    %c0_i32_1 = arith.constant 0 : i32
    return %c0_i32, %c0_i32_0 : i32, i32
  }
  func.func @transform_3(%arg0: i32, %arg1: i32) -> (i32, i32) {
    %c0_i32 = arith.constant 0 : i32
    %c0_i32_0 = arith.constant 0 : i32
    %c0_i32_1 = arith.constant 0 : i32
    return %c0_i32, %c0_i32_0 : i32, i32
  }
  func.func @transform_4(%arg0: i32, %arg1: i32) -> (i32, i32) {
    %c0_i32 = arith.constant 0 : i32
    %c0_i32_0 = arith.constant 0 : i32
    %c0_i32_1 = arith.constant 0 : i32
    return %c0_i32, %c0_i32_0 : i32, i32
  }
  func.func @transform_5(%arg0: i32, %arg1: i32) -> (i32, i32) {
    %c1_i32 = arith.constant 1 : i32
    %0 = arith.muli %arg0, %c1_i32 : i32
    %1 = arith.addi %0, %arg1 : i32
    %c0_i32 = arith.constant 0 : i32
    %c0_i32_0 = arith.constant 0 : i32
    return %1, %c0_i32 : i32, i32
  }
  func.func @transform_6(%arg0: i32, %arg1: i32) -> (i32, i32) {
    %c0_i32 = arith.constant 0 : i32
    %c0_i32_0 = arith.constant 0 : i32
    return %arg0, %c0_i32 : i32, i32
  }
  func.func @transform_7(%arg0: i32, %arg1: i32) -> (i32, i32) {
    %c0_i32 = arith.constant 0 : i32
    %c0_i32_0 = arith.constant 0 : i32
    return %arg0, %c0_i32 : i32, i32
  }
}

module attributes {stable_mosaic.version = 11 : i64} {
  func.func @layer3_kernel(%arg0: i32, %arg1: i32, %arg2: memref<64x128xbf16, #tpu.memory_space<vmem>>, %arg3: memref<128x1024xbf16, #tpu.memory_space<vmem>>, %arg4: memref<1x1024xf32, #tpu.memory_space<vmem>>, %arg5: memref<64x1024xbf16, #tpu.memory_space<vmem>>, %arg6: memref<8x1024xf32, #tpu.memory_space<vmem>>, %arg7: memref<8x1024xf32, #tpu.memory_space<vmem>>) attributes {dimension_semantics = [#tpu.dimension_semantics<parallel>, #tpu.dimension_semantics<arbitrary>], iteration_bounds = array<i64: 1, 1>, scalar_prefetch = 0 : i64, scratch_operands = 0 : i64, tpu.core_type = #tpu.core_type<tc>, window_params = [{transform_indices = @transform_0, window_bounds = array<i64: 64, 128>}, {pipeline_mode = #tpu.pipeline_mode<synchronous>, transform_indices = @transform_1, window_bounds = array<i64: 128, 1024>}, {pipeline_mode = #tpu.pipeline_mode<synchronous>, transform_indices = @transform_2, window_bounds = array<i64: 1, 1024>}, {transform_indices = @transform_3, window_bounds = array<i64: 64, 1024>}, {transform_indices = @transform_4, window_bounds = array<i64: 8, 1024>}, {transform_indices = @transform_5, window_bounds = array<i64: 8, 1024>}]} {
    %c0_i32 = arith.constant 0 : i32
    %0 = arith.cmpi eq, %arg1, %c0_i32 : i32
    %1 = arith.extui %0 : i1 to i32
    %c0_i32_0 = arith.constant 0 : i32
    %2 = arith.cmpi ne, %1, %c0_i32_0 : i32
    scf.if %2 {
      %cst_20 = arith.constant 0.000000e+00 : f32
      %23 = vector.broadcast %cst_20 : f32 to vector<8x1024xf32>
      %c0_21 = arith.constant 0 : index
      %c0_22 = arith.constant 0 : index
      %24 = vector.load %arg6[%c0_21, %c0_22] : memref<8x1024xf32, #tpu.memory_space<vmem>>, vector<8x1024xf32>
      tpu.vector_store %arg6[%c0_21, %c0_22], %23 {strides = array<i32>} : memref<8x1024xf32, #tpu.memory_space<vmem>>, vector<8x1024xf32>,
      %cst_23 = arith.constant 0.000000e+00 : f32
      %25 = vector.broadcast %cst_23 : f32 to vector<8x1024xf32>
      %c0_24 = arith.constant 0 : index
      %c0_25 = arith.constant 0 : index
      %26 = vector.load %arg7[%c0_24, %c0_25] : memref<8x1024xf32, #tpu.memory_space<vmem>>, vector<8x1024xf32>
      tpu.vector_store %arg7[%c0_24, %c0_25], %25 {strides = array<i32>} : memref<8x1024xf32, #tpu.memory_space<vmem>>, vector<8x1024xf32>,
    } else {
    }
    %c0 = arith.constant 0 : index
    %c0_1 = arith.constant 0 : index
    %3 = vector.load %arg2[%c0, %c0_1] : memref<64x128xbf16, #tpu.memory_space<vmem>>, vector<64x128xbf16>
    %c0_2 = arith.constant 0 : index
    %c0_3 = arith.constant 0 : index
    %4 = vector.load %arg3[%c0_2, %c0_3] : memref<128x1024xbf16, #tpu.memory_space<vmem>>, vector<128x1024xbf16>
    %cst = arith.constant dense<0.000000e+00> : vector<64x1024xf32>
    %5 = tpu.matmul %3, %4, %cst {dimension_numbers = #tpu.dot_dimension_numbers<[1], [0], [0], [1], [0, 0, 1, 1], [], []>} : vector<64x128xbf16>, vector<128x1024xbf16>, vector<64x1024xf32> -> vector<64x1024xf32>
    %c0_4 = arith.constant 0 : index
    %c0_5 = arith.constant 0 : index
    %6 = vector.load %arg4[%c0_4, %c0_5] : memref<1x1024xf32, #tpu.memory_space<vmem>>, vector<1x1024xf32>
    %7 = vector.broadcast %6 : vector<1x1024xf32> to vector<64x1024xf32>
    %8 = arith.addf %5, %7 : vector<64x1024xf32>
    %cst_6 = arith.constant 0.000000e+00 : f32
    %9 = vector.broadcast %cst_6 : f32 to vector<64x1024xf32>
    %10 = arith.maximumf %8, %9 : vector<64x1024xf32>
    %11 = arith.truncf %10 : vector<64x1024xf32> to vector<64x1024xbf16>
    %c0_7 = arith.constant 0 : index
    %c0_8 = arith.constant 0 : index
    %12 = vector.load %arg5[%c0_7, %c0_8] : memref<64x1024xbf16, #tpu.memory_space<vmem>>, vector<64x1024xbf16>
    tpu.vector_store %arg5[%c0_7, %c0_8], %11 {strides = array<i32>} : memref<64x1024xbf16, #tpu.memory_space<vmem>>, vector<64x1024xbf16>,
    %cst_9 = arith.constant 1.000000e+00 : f32
    %13 = vector.broadcast %cst_9 : f32 to vector<8x64xf32>
    %c0_10 = arith.constant 0 : index
    %c0_11 = arith.constant 0 : index
    %14 = vector.load %arg6[%c0_10, %c0_11] : memref<8x1024xf32, #tpu.memory_space<vmem>>, vector<8x1024xf32>
    %cst_12 = arith.constant dense<0.000000e+00> : vector<8x1024xf32>
    %15 = tpu.matmul %13, %10, %cst_12 {dimension_numbers = #tpu.dot_dimension_numbers<[1], [0], [0], [1], [0, 0, 1, 1], [], []>} : vector<8x64xf32>, vector<64x1024xf32>, vector<8x1024xf32> -> vector<8x1024xf32>
    %16 = arith.addf %14, %15 : vector<8x1024xf32>
    %c0_13 = arith.constant 0 : index
    %c0_14 = arith.constant 0 : index
    %17 = vector.load %arg6[%c0_13, %c0_14] : memref<8x1024xf32, #tpu.memory_space<vmem>>, vector<8x1024xf32>
    tpu.vector_store %arg6[%c0_13, %c0_14], %16 {strides = array<i32>} : memref<8x1024xf32, #tpu.memory_space<vmem>>, vector<8x1024xf32>,
    %c0_15 = arith.constant 0 : index
    %c0_16 = arith.constant 0 : index
    %18 = vector.load %arg7[%c0_15, %c0_16] : memref<8x1024xf32, #tpu.memory_space<vmem>>, vector<8x1024xf32>
    %19 = arith.mulf %10, %10 : vector<64x1024xf32>
    %cst_17 = arith.constant dense<0.000000e+00> : vector<8x1024xf32>
    %20 = tpu.matmul %13, %19, %cst_17 {dimension_numbers = #tpu.dot_dimension_numbers<[1], [0], [0], [1], [0, 0, 1, 1], [], []>} : vector<8x64xf32>, vector<64x1024xf32>, vector<8x1024xf32> -> vector<8x1024xf32>
    %21 = arith.addf %18, %20 : vector<8x1024xf32>
    %c0_18 = arith.constant 0 : index
    %c0_19 = arith.constant 0 : index
    %22 = vector.load %arg7[%c0_18, %c0_19] : memref<8x1024xf32, #tpu.memory_space<vmem>>, vector<8x1024xf32>
    tpu.vector_store %arg7[%c0_18, %c0_19], %21 {strides = array<i32>} : memref<8x1024xf32, #tpu.memory_space<vmem>>, vector<8x1024xf32>,
    return
  }
  func.func @transform_0(%arg0: i32, %arg1: i32) -> (i32, i32) {
    %c1_i32 = arith.constant 1 : i32
    %0 = arith.muli %arg0, %c1_i32 : i32
    %1 = arith.addi %0, %arg1 : i32
    %c0_i32 = arith.constant 0 : i32
    %c0_i32_0 = arith.constant 0 : i32
    return %1, %c0_i32 : i32, i32
  }
  func.func @transform_1(%arg0: i32, %arg1: i32) -> (i32, i32) {
    %c0_i32 = arith.constant 0 : i32
    %c0_i32_0 = arith.constant 0 : i32
    %c0_i32_1 = arith.constant 0 : i32
    return %c0_i32, %c0_i32_0 : i32, i32
  }
  func.func @transform_2(%arg0: i32, %arg1: i32) -> (i32, i32) {
    %c0_i32 = arith.constant 0 : i32
    %c0_i32_0 = arith.constant 0 : i32
    %c0_i32_1 = arith.constant 0 : i32
    return %c0_i32, %c0_i32_0 : i32, i32
  }
  func.func @transform_3(%arg0: i32, %arg1: i32) -> (i32, i32) {
    %c1_i32 = arith.constant 1 : i32
    %0 = arith.muli %arg0, %c1_i32 : i32
    %1 = arith.addi %0, %arg1 : i32
    %c0_i32 = arith.constant 0 : i32
    %c0_i32_0 = arith.constant 0 : i32
    return %1, %c0_i32 : i32, i32
  }
  func.func @transform_4(%arg0: i32, %arg1: i32) -> (i32, i32) {
    %c0_i32 = arith.constant 0 : i32
    %c0_i32_0 = arith.constant 0 : i32
    return %arg0, %c0_i32 : i32, i32
  }
  func.func @transform_5(%arg0: i32, %arg1: i32) -> (i32, i32) {
    %c0_i32 = arith.constant 0 : i32
    %c0_i32_0 = arith.constant 0 : i32
    return %arg0, %c0_i32 : i32, i32
  }
}

module attributes {stable_mosaic.version = 11 : i64} {
  func.func @norm_pool_kernel(%arg0: i32, %arg1: i32, %arg2: memref<1x1024x16xbf16, #tpu.memory_space<vmem>>, %arg3: memref<1x1024x16xbf16, #tpu.memory_space<vmem>>, %arg4: memref<1x1024x16xbf16, #tpu.memory_space<vmem>>, %arg5: memref<1x1024x1xf32, #tpu.memory_space<vmem>>, %arg6: memref<1x1024x16xf32, #tpu.memory_space<vmem>>) attributes {dimension_semantics = [#tpu.dimension_semantics<parallel>, #tpu.dimension_semantics<arbitrary>], iteration_bounds = array<i64: 4, 1>, scalar_prefetch = 0 : i64, scratch_operands = 1 : i64, tpu.core_type = #tpu.core_type<tc>, window_params = [{transform_indices = @transform_0, window_bounds = array<i64: 1, 1024, 16>}, {pipeline_mode = #tpu.pipeline_mode<synchronous>, transform_indices = @transform_1, window_bounds = array<i64: 1, 1024, 16>}, {pipeline_mode = #tpu.pipeline_mode<synchronous>, transform_indices = @transform_2, window_bounds = array<i64: 1, 1024, 16>}, {transform_indices = @transform_3, window_bounds = array<i64: 1, 1024, 1>}]} {
    %c0_i32 = arith.constant 0 : i32
    %0 = arith.cmpi eq, %arg1, %c0_i32 : i32
    %1 = arith.extui %0 : i1 to i32
    %c0_i32_0 = arith.constant 0 : i32
    %2 = arith.cmpi ne, %1, %c0_i32_0 : i32
    scf.if %2 {
      %cst_18 = arith.constant 0xFF800000 : f32
      %25 = vector.broadcast %cst_18 : f32 to vector<1x1024x16xf32>
      %c0_19 = arith.constant 0 : index
      %c0_20 = arith.constant 0 : index
      %c0_21 = arith.constant 0 : index
      %26 = vector.load %arg6[%c0_19, %c0_20, %c0_21] : memref<1x1024x16xf32, #tpu.memory_space<vmem>>, vector<1x1024x16xf32>
      tpu.vector_store %arg6[%c0_19, %c0_20, %c0_21], %25 {strides = array<i32>} : memref<1x1024x16xf32, #tpu.memory_space<vmem>>, vector<1x1024x16xf32>,
    } else {
    }
    %c0 = arith.constant 0 : index
    %c0_1 = arith.constant 0 : index
    %c0_2 = arith.constant 0 : index
    %3 = vector.load %arg2[%c0, %c0_1, %c0_2] : memref<1x1024x16xbf16, #tpu.memory_space<vmem>>, vector<1x1024x16xbf16>
    %4 = arith.extf %3 : vector<1x1024x16xbf16> to vector<1x1024x16xf32>
    %c0_3 = arith.constant 0 : index
    %c0_4 = arith.constant 0 : index
    %c0_5 = arith.constant 0 : index
    %5 = vector.load %arg3[%c0_3, %c0_4, %c0_5] : memref<1x1024x16xbf16, #tpu.memory_space<vmem>>, vector<1x1024x16xbf16>
    %6 = arith.extf %5 : vector<1x1024x16xbf16> to vector<1x1024x16xf32>
    %7 = arith.mulf %4, %6 : vector<1x1024x16xf32>
    %c0_6 = arith.constant 0 : index
    %c0_7 = arith.constant 0 : index
    %c0_8 = arith.constant 0 : index
    %8 = vector.load %arg4[%c0_6, %c0_7, %c0_8] : memref<1x1024x16xbf16, #tpu.memory_space<vmem>>, vector<1x1024x16xbf16>
    %9 = arith.extf %8 : vector<1x1024x16xbf16> to vector<1x1024x16xf32>
    %10 = arith.addf %7, %9 : vector<1x1024x16xf32>
    %c16_i32 = arith.constant 16 : i32
    %11 = arith.muli %arg1, %c16_i32 : i32
    %12 = tpu.iota {dimensions = array<i32: 2>} : vector<1x1024x16xi32>
    %13 = vector.broadcast %11 : i32 to vector<1x1024x16xi32>
    %14 = arith.addi %13, %12 : vector<1x1024x16xi32>
    %c16_i32_9 = arith.constant 16 : i32
    %15 = vector.broadcast %c16_i32_9 : i32 to vector<1x1024x16xi32>
    %16 = arith.cmpi slt, %14, %15 : vector<1x1024x16xi32>
    %cst = arith.constant 0xFF800000 : f32
    %17 = vector.broadcast %cst : f32 to vector<1x1024x16xf32>
    %18 = arith.select %16, %10, %17 : vector<1x1024x16xi1>, vector<1x1024x16xf32>
    %c0_10 = arith.constant 0 : index
    %c0_11 = arith.constant 0 : index
    %c0_12 = arith.constant 0 : index
    %19 = vector.load %arg6[%c0_10, %c0_11, %c0_12] : memref<1x1024x16xf32, #tpu.memory_space<vmem>>, vector<1x1024x16xf32>
    %20 = arith.maximumf %19, %18 : vector<1x1024x16xf32>
    %c0_13 = arith.constant 0 : index
    %c0_14 = arith.constant 0 : index
    %c0_15 = arith.constant 0 : index
    %21 = vector.load %arg6[%c0_13, %c0_14, %c0_15] : memref<1x1024x16xf32, #tpu.memory_space<vmem>>, vector<1x1024x16xf32>
    tpu.vector_store %arg6[%c0_13, %c0_14, %c0_15], %20 {strides = array<i32>} : memref<1x1024x16xf32, #tpu.memory_space<vmem>>, vector<1x1024x16xf32>,
    %c0_i32_16 = arith.constant 0 : i32
    %22 = arith.cmpi eq, %arg1, %c0_i32_16 : i32
    %23 = arith.extui %22 : i1 to i32
    %c0_i32_17 = arith.constant 0 : i32
    %24 = arith.cmpi ne, %23, %c0_i32_17 : i32
    scf.if %24 {
      %c0_18 = arith.constant 0 : index
      %c0_19 = arith.constant 0 : index
      %c0_20 = arith.constant 0 : index
      %25 = vector.load %arg6[%c0_18, %c0_19, %c0_20] : memref<1x1024x16xf32, #tpu.memory_space<vmem>>, vector<1x1024x16xf32>
      %cst_21 = arith.constant dense<0xFF800000> : vector<1x1024xf32>
      %26 = vector.multi_reduction <maximumf>, %25, %cst_21 [2] : vector<1x1024x16xf32> to vector<1x1024xf32>
      %27 = vector.shape_cast %26 : vector<1x1024xf32> to vector<1x1024x1xf32>
      %c0_22 = arith.constant 0 : index
      %c0_23 = arith.constant 0 : index
      %c0_24 = arith.constant 0 : index
      %28 = vector.load %arg5[%c0_22, %c0_23, %c0_24] : memref<1x1024x1xf32, #tpu.memory_space<vmem>>, vector<1x1024x1xf32>
      tpu.vector_store %arg5[%c0_22, %c0_23, %c0_24], %27 {strides = array<i32>} : memref<1x1024x1xf32, #tpu.memory_space<vmem>>, vector<1x1024x1xf32>,
    } else {
    }
    return
  }
  func.func @transform_0(%arg0: i32, %arg1: i32) -> (i32, i32, i32) {
    %c0_i32 = arith.constant 0 : i32
    %c0_i32_0 = arith.constant 0 : i32
    return %arg0, %c0_i32, %arg1 : i32, i32, i32
  }
  func.func @transform_1(%arg0: i32, %arg1: i32) -> (i32, i32, i32) {
    %c0_i32 = arith.constant 0 : i32
    %c0_i32_0 = arith.constant 0 : i32
    %c0_i32_1 = arith.constant 0 : i32
    %c0_i32_2 = arith.constant 0 : i32
    return %c0_i32, %c0_i32_0, %c0_i32_1 : i32, i32, i32
  }
  func.func @transform_2(%arg0: i32, %arg1: i32) -> (i32, i32, i32) {
    %c0_i32 = arith.constant 0 : i32
    %c0_i32_0 = arith.constant 0 : i32
    %c0_i32_1 = arith.constant 0 : i32
    %c0_i32_2 = arith.constant 0 : i32
    return %c0_i32, %c0_i32_0, %c0_i32_1 : i32, i32, i32
  }
  func.func @transform_3(%arg0: i32, %arg1: i32) -> (i32, i32, i32) {
    %c0_i32 = arith.constant 0 : i32
    %c0_i32_0 = arith.constant 0 : i32
    %c0_i32_1 = arith.constant 0 : i32
    return %arg0, %c0_i32, %c0_i32_0 : i32, i32, i32
  }
}

module attributes {stable_mosaic.version = 11 : i64} {
  func.func @head_kernel(%arg0: i32, %arg1: memref<4x1024xf32, #tpu.memory_space<vmem>>, %arg2: memref<1024x512xf32, #tpu.memory_space<vmem>>, %arg3: memref<1x512xf32, #tpu.memory_space<vmem>>, %arg4: memref<1x512xf32, #tpu.memory_space<vmem>>, %arg5: memref<1x512xf32, #tpu.memory_space<vmem>>, %arg6: memref<512x256xf32, #tpu.memory_space<vmem>>, %arg7: memref<1x256xf32, #tpu.memory_space<vmem>>, %arg8: memref<1x256xf32, #tpu.memory_space<vmem>>, %arg9: memref<1x256xf32, #tpu.memory_space<vmem>>, %arg10: memref<256x9xf32, #tpu.memory_space<vmem>>, %arg11: memref<1x9xf32, #tpu.memory_space<vmem>>, %arg12: memref<4x9xf32, #tpu.memory_space<vmem>>) attributes {dimension_semantics = [#tpu.dimension_semantics<arbitrary>], iteration_bounds = array<i64: 1>, scalar_prefetch = 0 : i64, scratch_operands = 0 : i64, tpu.core_type = #tpu.core_type<tc>, window_params = [{pipeline_mode = #tpu.pipeline_mode<synchronous>, transform_indices = @transform_0, window_bounds = array<i64: 4, 1024>}, {pipeline_mode = #tpu.pipeline_mode<synchronous>, transform_indices = @transform_1, window_bounds = array<i64: 1024, 512>}, {pipeline_mode = #tpu.pipeline_mode<synchronous>, transform_indices = @transform_2, window_bounds = array<i64: 1, 512>}, {pipeline_mode = #tpu.pipeline_mode<synchronous>, transform_indices = @transform_3, window_bounds = array<i64: 1, 512>}, {pipeline_mode = #tpu.pipeline_mode<synchronous>, transform_indices = @transform_4, window_bounds = array<i64: 1, 512>}, {pipeline_mode = #tpu.pipeline_mode<synchronous>, transform_indices = @transform_5, window_bounds = array<i64: 512, 256>}, {pipeline_mode = #tpu.pipeline_mode<synchronous>, transform_indices = @transform_6, window_bounds = array<i64: 1, 256>}, {pipeline_mode = #tpu.pipeline_mode<synchronous>, transform_indices = @transform_7, window_bounds = array<i64: 1, 256>}, {pipeline_mode = #tpu.pipeline_mode<synchronous>, transform_indices = @transform_8, window_bounds = array<i64: 1, 256>}, {pipeline_mode = #tpu.pipeline_mode<synchronous>, transform_indices = @transform_9, window_bounds = array<i64: 256, 9>}, {pipeline_mode = #tpu.pipeline_mode<synchronous>, transform_indices = @transform_10, window_bounds = array<i64: 1, 9>}, {pipeline_mode = #tpu.pipeline_mode<synchronous>, transform_indices = @transform_11, window_bounds = array<i64: 4, 9>}]} {
    %c0 = arith.constant 0 : index
    %c0_0 = arith.constant 0 : index
    %0 = vector.load %arg1[%c0, %c0_0] : memref<4x1024xf32, #tpu.memory_space<vmem>>, vector<4x1024xf32>
    %c0_1 = arith.constant 0 : index
    %c0_2 = arith.constant 0 : index
    %1 = vector.load %arg2[%c0_1, %c0_2] : memref<1024x512xf32, #tpu.memory_space<vmem>>, vector<1024x512xf32>
    %cst = arith.constant dense<0.000000e+00> : vector<4x512xf32>
    %2 = tpu.matmul %0, %1, %cst {dimension_numbers = #tpu.dot_dimension_numbers<[1], [0], [0], [1], [0, 0, 1, 1], [], []>} : vector<4x1024xf32>, vector<1024x512xf32>, vector<4x512xf32> -> vector<4x512xf32>
    %c0_3 = arith.constant 0 : index
    %c0_4 = arith.constant 0 : index
    %3 = vector.load %arg3[%c0_3, %c0_4] : memref<1x512xf32, #tpu.memory_space<vmem>>, vector<1x512xf32>
    %4 = vector.broadcast %3 : vector<1x512xf32> to vector<4x512xf32>
    %5 = arith.addf %2, %4 : vector<4x512xf32>
    %cst_5 = arith.constant 0.000000e+00 : f32
    %6 = vector.broadcast %cst_5 : f32 to vector<4x512xf32>
    %7 = arith.maximumf %5, %6 : vector<4x512xf32>
    %cst_6 = arith.constant dense<0.000000e+00> : vector<512xf32>
    %8 = vector.multi_reduction <add>, %7, %cst_6 [0] : vector<4x512xf32> to vector<512xf32>
    %9 = vector.shape_cast %8 : vector<512xf32> to vector<1x512xf32>
    %cst_7 = arith.constant 4.000000e+00 : f32
    %10 = vector.broadcast %cst_7 : f32 to vector<1x512xf32>
    %11 = arith.divf %9, %10 : vector<1x512xf32>
    %12 = arith.mulf %7, %7 : vector<4x512xf32>
    %cst_8 = arith.constant dense<0.000000e+00> : vector<512xf32>
    %13 = vector.multi_reduction <add>, %12, %cst_8 [0] : vector<4x512xf32> to vector<512xf32>
    %14 = vector.shape_cast %13 : vector<512xf32> to vector<1x512xf32>
    %cst_9 = arith.constant 4.000000e+00 : f32
    %15 = vector.broadcast %cst_9 : f32 to vector<1x512xf32>
    %16 = arith.divf %14, %15 : vector<1x512xf32>
    %17 = arith.mulf %11, %11 : vector<1x512xf32>
    %18 = arith.subf %16, %17 : vector<1x512xf32>
    %cst_10 = arith.constant 0.000000e+00 : f32
    %19 = vector.broadcast %cst_10 : f32 to vector<1x512xf32>
    %20 = arith.maximumf %18, %19 : vector<1x512xf32>
    %21 = vector.broadcast %11 : vector<1x512xf32> to vector<4x512xf32>
    %22 = arith.subf %7, %21 : vector<4x512xf32>
    %cst_11 = arith.constant 9.99999974E-6 : f32
    %23 = vector.broadcast %cst_11 : f32 to vector<1x512xf32>
    %24 = arith.addf %20, %23 : vector<1x512xf32>
    %25 = math.rsqrt %24 : vector<1x512xf32>
    %26 = vector.broadcast %25 : vector<1x512xf32> to vector<4x512xf32>
    %27 = arith.mulf %22, %26 : vector<4x512xf32>
    %c0_12 = arith.constant 0 : index
    %c0_13 = arith.constant 0 : index
    %28 = vector.load %arg4[%c0_12, %c0_13] : memref<1x512xf32, #tpu.memory_space<vmem>>, vector<1x512xf32>
    %29 = vector.broadcast %28 : vector<1x512xf32> to vector<4x512xf32>
    %30 = arith.mulf %27, %29 : vector<4x512xf32>
    %c0_14 = arith.constant 0 : index
    %c0_15 = arith.constant 0 : index
    %31 = vector.load %arg5[%c0_14, %c0_15] : memref<1x512xf32, #tpu.memory_space<vmem>>, vector<1x512xf32>
    %32 = vector.broadcast %31 : vector<1x512xf32> to vector<4x512xf32>
    %33 = arith.addf %30, %32 : vector<4x512xf32>
    %c0_16 = arith.constant 0 : index
    %c0_17 = arith.constant 0 : index
    %34 = vector.load %arg6[%c0_16, %c0_17] : memref<512x256xf32, #tpu.memory_space<vmem>>, vector<512x256xf32>
    %cst_18 = arith.constant dense<0.000000e+00> : vector<4x256xf32>
    %35 = tpu.matmul %33, %34, %cst_18 {dimension_numbers = #tpu.dot_dimension_numbers<[1], [0], [0], [1], [0, 0, 1, 1], [], []>} : vector<4x512xf32>, vector<512x256xf32>, vector<4x256xf32> -> vector<4x256xf32>
    %c0_19 = arith.constant 0 : index
    %c0_20 = arith.constant 0 : index
    %36 = vector.load %arg7[%c0_19, %c0_20] : memref<1x256xf32, #tpu.memory_space<vmem>>, vector<1x256xf32>
    %37 = vector.broadcast %36 : vector<1x256xf32> to vector<4x256xf32>
    %38 = arith.addf %35, %37 : vector<4x256xf32>
    %cst_21 = arith.constant 0.000000e+00 : f32
    %39 = vector.broadcast %cst_21 : f32 to vector<4x256xf32>
    %40 = arith.maximumf %38, %39 : vector<4x256xf32>
    %cst_22 = arith.constant dense<0.000000e+00> : vector<256xf32>
    %41 = vector.multi_reduction <add>, %40, %cst_22 [0] : vector<4x256xf32> to vector<256xf32>
    %42 = vector.shape_cast %41 : vector<256xf32> to vector<1x256xf32>
    %cst_23 = arith.constant 4.000000e+00 : f32
    %43 = vector.broadcast %cst_23 : f32 to vector<1x256xf32>
    %44 = arith.divf %42, %43 : vector<1x256xf32>
    %45 = arith.mulf %40, %40 : vector<4x256xf32>
    %cst_24 = arith.constant dense<0.000000e+00> : vector<256xf32>
    %46 = vector.multi_reduction <add>, %45, %cst_24 [0] : vector<4x256xf32> to vector<256xf32>
    %47 = vector.shape_cast %46 : vector<256xf32> to vector<1x256xf32>
    %cst_25 = arith.constant 4.000000e+00 : f32
    %48 = vector.broadcast %cst_25 : f32 to vector<1x256xf32>
    %49 = arith.divf %47, %48 : vector<1x256xf32>
    %50 = arith.mulf %44, %44 : vector<1x256xf32>
    %51 = arith.subf %49, %50 : vector<1x256xf32>
    %cst_26 = arith.constant 0.000000e+00 : f32
    %52 = vector.broadcast %cst_26 : f32 to vector<1x256xf32>
    %53 = arith.maximumf %51, %52 : vector<1x256xf32>
    %54 = vector.broadcast %44 : vector<1x256xf32> to vector<4x256xf32>
    %55 = arith.subf %40, %54 : vector<4x256xf32>
    %cst_27 = arith.constant 9.99999974E-6 : f32
    %56 = vector.broadcast %cst_27 : f32 to vector<1x256xf32>
    %57 = arith.addf %53, %56 : vector<1x256xf32>
    %58 = math.rsqrt %57 : vector<1x256xf32>
    %59 = vector.broadcast %58 : vector<1x256xf32> to vector<4x256xf32>
    %60 = arith.mulf %55, %59 : vector<4x256xf32>
    %c0_28 = arith.constant 0 : index
    %c0_29 = arith.constant 0 : index
    %61 = vector.load %arg8[%c0_28, %c0_29] : memref<1x256xf32, #tpu.memory_space<vmem>>, vector<1x256xf32>
    %62 = vector.broadcast %61 : vector<1x256xf32> to vector<4x256xf32>
    %63 = arith.mulf %60, %62 : vector<4x256xf32>
    %c0_30 = arith.constant 0 : index
    %c0_31 = arith.constant 0 : index
    %64 = vector.load %arg9[%c0_30, %c0_31] : memref<1x256xf32, #tpu.memory_space<vmem>>, vector<1x256xf32>
    %65 = vector.broadcast %64 : vector<1x256xf32> to vector<4x256xf32>
    %66 = arith.addf %63, %65 : vector<4x256xf32>
    %c0_32 = arith.constant 0 : index
    %c0_33 = arith.constant 0 : index
    %67 = vector.load %arg10[%c0_32, %c0_33] : memref<256x9xf32, #tpu.memory_space<vmem>>, vector<256x9xf32>
    %cst_34 = arith.constant dense<0.000000e+00> : vector<4x9xf32>
    %68 = tpu.matmul %66, %67, %cst_34 {dimension_numbers = #tpu.dot_dimension_numbers<[1], [0], [0], [1], [0, 0, 1, 1], [], []>} : vector<4x256xf32>, vector<256x9xf32>, vector<4x9xf32> -> vector<4x9xf32>
    %c0_35 = arith.constant 0 : index
    %c0_36 = arith.constant 0 : index
    %69 = vector.load %arg11[%c0_35, %c0_36] : memref<1x9xf32, #tpu.memory_space<vmem>>, vector<1x9xf32>
    %70 = vector.broadcast %69 : vector<1x9xf32> to vector<4x9xf32>
    %71 = arith.addf %68, %70 : vector<4x9xf32>
    %c0_37 = arith.constant 0 : index
    %c0_38 = arith.constant 0 : index
    %72 = vector.load %arg12[%c0_37, %c0_38] : memref<4x9xf32, #tpu.memory_space<vmem>>, vector<4x9xf32>
    tpu.vector_store %arg12[%c0_37, %c0_38], %71 {strides = array<i32>} : memref<4x9xf32, #tpu.memory_space<vmem>>, vector<4x9xf32>,
    return
  }
  func.func @transform_0(%arg0: i32) -> (i32, i32) {
    %c0_i32 = arith.constant 0 : i32
    %c0_i32_0 = arith.constant 0 : i32
    %c0_i32_1 = arith.constant 0 : i32
    return %c0_i32, %c0_i32_0 : i32, i32
  }
  func.func @transform_1(%arg0: i32) -> (i32, i32) {
    %c0_i32 = arith.constant 0 : i32
    %c0_i32_0 = arith.constant 0 : i32
    %c0_i32_1 = arith.constant 0 : i32
    return %c0_i32, %c0_i32_0 : i32, i32
  }
  func.func @transform_2(%arg0: i32) -> (i32, i32) {
    %c0_i32 = arith.constant 0 : i32
    %c0_i32_0 = arith.constant 0 : i32
    %c0_i32_1 = arith.constant 0 : i32
    return %c0_i32, %c0_i32_0 : i32, i32
  }
  func.func @transform_3(%arg0: i32) -> (i32, i32) {
    %c0_i32 = arith.constant 0 : i32
    %c0_i32_0 = arith.constant 0 : i32
    %c0_i32_1 = arith.constant 0 : i32
    return %c0_i32, %c0_i32_0 : i32, i32
  }
  func.func @transform_4(%arg0: i32) -> (i32, i32) {
    %c0_i32 = arith.constant 0 : i32
    %c0_i32_0 = arith.constant 0 : i32
    %c0_i32_1 = arith.constant 0 : i32
    return %c0_i32, %c0_i32_0 : i32, i32
  }
  func.func @transform_5(%arg0: i32) -> (i32, i32) {
    %c0_i32 = arith.constant 0 : i32
    %c0_i32_0 = arith.constant 0 : i32
    %c0_i32_1 = arith.constant 0 : i32
    return %c0_i32, %c0_i32_0 : i32, i32
  }
  func.func @transform_6(%arg0: i32) -> (i32, i32) {
    %c0_i32 = arith.constant 0 : i32
    %c0_i32_0 = arith.constant 0 : i32
    %c0_i32_1 = arith.constant 0 : i32
    return %c0_i32, %c0_i32_0 : i32, i32
  }
  func.func @transform_7(%arg0: i32) -> (i32, i32) {
    %c0_i32 = arith.constant 0 : i32
    %c0_i32_0 = arith.constant 0 : i32
    %c0_i32_1 = arith.constant 0 : i32
    return %c0_i32, %c0_i32_0 : i32, i32
  }
  func.func @transform_8(%arg0: i32) -> (i32, i32) {
    %c0_i32 = arith.constant 0 : i32
    %c0_i32_0 = arith.constant 0 : i32
    %c0_i32_1 = arith.constant 0 : i32
    return %c0_i32, %c0_i32_0 : i32, i32
  }
  func.func @transform_9(%arg0: i32) -> (i32, i32) {
    %c0_i32 = arith.constant 0 : i32
    %c0_i32_0 = arith.constant 0 : i32
    %c0_i32_1 = arith.constant 0 : i32
    return %c0_i32, %c0_i32_0 : i32, i32
  }
  func.func @transform_10(%arg0: i32) -> (i32, i32) {
    %c0_i32 = arith.constant 0 : i32
    %c0_i32_0 = arith.constant 0 : i32
    %c0_i32_1 = arith.constant 0 : i32
    return %c0_i32, %c0_i32_0 : i32, i32
  }
  func.func @transform_11(%arg0: i32) -> (i32, i32) {
    %c0_i32 = arith.constant 0 : i32
    %c0_i32_0 = arith.constant 0 : i32
    %c0_i32_1 = arith.constant 0 : i32
    return %c0_i32, %c0_i32_0 : i32, i32
  }
}

</mosaic_0001>

<llo_original>
// kernel: input_tnet_forward.5
$region0: #{input_tnet_forward.5}
  #allocation0 [shape = 'u32[]', space=smem, size = 0x4, offset = 0x4, fixed_abs, tag = 'smem constant byte address 0x4 - core index']
  #allocation1 [shape = 'u32[144,128]{1,0:T(1,128)}', space=vmem, size = 0x12000, scoped, tag = 'internal scratch']
  %s0 = inlined_call_operand.vmem [shape: f32[64,3], index: 0, kind: input, shape index: {}]
  %s1 = inlined_call_operand.hbm [shape: f32[3,64], index: 1, kind: input, shape index: {}]
  %s2 = inlined_call_operand.hbm [shape: f32[1,64], index: 2, kind: input, shape index: {}]
  %s3 = inlined_call_operand.vmem [shape: f32[8,64], index: 3, kind: output, shape index: {0}]
  %s4 = inlined_call_operand.vmem [shape: f32[8,64], index: 4, kind: output, shape index: {1}]
  %5 = xla_tuple %s3, %s4
  %s6 = sld [smem:[#allocation0]]
  $region42: #{input_tnet_forward.5} parent=0
    _
  %s8 = ssub.s32 1, %s6
  %s9 = scalar_select 0, %s8, %s6
  $region1: #{input_tnet_forward.5} parent=0
    #allocation2 [shape = 'u8[2048]{0}', space=vmem, size = 0x800, scoped, tag = 'input window, operand 1, single buffered']
    #allocation3 [shape = 's32[1]{0}', space=sflag, size = 0x4, scoped, tag = 'scoped memory for input_tnet_forward.5']
    #allocation4 [shape = 'u8[512]{0}', space=vmem, size = 0x400, scoped, tag = 'input window, operand 2, single buffered']
    #allocation5 [shape = 's32[1]{0}', space=sflag, size = 0x4, scoped, tag = 'scoped memory for input_tnet_forward.5']
    %10 = vsyncpa [#allocation3], 0
    %11 = vsyncpa [#allocation5], 0
    // Predicated region
    $region2: #{input_tnet_forward.5} parent=1 // pred_check
      _
    $region3: #{input_tnet_forward.5} parent=1 // pred_check_branch
      %13 = sbr.rel (0) target = $region5
    $region4: #{input_tnet_forward.5} parent=1 // pred_region
      %s14 = sadd.s32 0, 0
      %s15 = smul.u32 8, %s14
      %p16 = scmp.lt.s32.totalorder %s15, 7
      %s17 = scalar_select %p16, %s15, 7
      %s18 = smul.addr %s17, 8
      %s19 = scalar_lea.vmem %s0, %s18
      %s20 = sadd.s32 0, 0
      %s21 = smul.u32 8, %s20
    $region5: #{input_tnet_forward.5} parent=1 // pred_fallthru
      _
    // Predicated region
    $region6: #{input_tnet_forward.5} parent=1 // pred_check
      _
    $region7: #{input_tnet_forward.5} parent=1 // pred_check_branch
      %23 = sbr.rel (0) target = $region9
    $region8: #{input_tnet_forward.5} parent=1 // pred_region
      %s25 = ssub.s32 64, 64
      %26 = vsyncadd [#allocation3], %s25
      %s28 = sshll.u32 [#allocation2], 4
      %s29 = int_to_ptr.vmem [resolvable:$true] %s28
      %31 = dma.hbm_to_vmem [thread:$0]  %s1, 64, %s29, [#allocation3]
    $region9: #{input_tnet_forward.5} parent=1 // pred_fallthru
      _
    // Predicated region
    $region10: #{input_tnet_forward.5} parent=1 // pred_check
      _
    $region11: #{input_tnet_forward.5} parent=1 // pred_check_branch
      %33 = sbr.rel (0) target = $region13
    $region12: #{input_tnet_forward.5} parent=1 // pred_region
      %s35 = ssub.s32 16, 16
      %36 = vsyncadd [#allocation5], %s35
      %s38 = sshll.u32 [#allocation4], 4
      %s39 = int_to_ptr.vmem [resolvable:$true] %s38
      %41 = dma.hbm_to_vmem [thread:$0]  %s2, 16, %s39, [#allocation5]
    $region13: #{input_tnet_forward.5} parent=1 // pred_fallthru
      _
    // Predicated region
    $region14: #{input_tnet_forward.5} parent=1 // pred_check
      _
    $region15: #{input_tnet_forward.5} parent=1 // pred_check_branch
      %43 = sbr.rel (0) target = $region17
    $region16: #{input_tnet_forward.5} parent=1 // pred_region
      %44 = dma.done [#allocation3], 64
    $region17: #{input_tnet_forward.5} parent=1 // pred_fallthru
      _
    // Predicated region
    $region18: #{input_tnet_forward.5} parent=1 // pred_check
      _
    $region19: #{input_tnet_forward.5} parent=1 // pred_check_branch
      %46 = sbr.rel (0) target = $region21
    $region20: #{input_tnet_forward.5} parent=1 // pred_region
      %47 = dma.done [#allocation5], 16
    $region21: #{input_tnet_forward.5} parent=1 // pred_fallthru
      _
    %s48 = sadd.s32 0, 0
    %s49 = smul.u32 8, %s48
    %p50 = scmp.lt.s32.totalorder %s49, 7
    %s51 = scalar_select %p50, %s49, 7
    %s52 = smul.addr %s51, 8
    %s53 = scalar_lea.vmem %s0, %s52
    %s54 = sadd.s32 0, 0
    %s55 = smul.u32 8, %s54
    %p56 = scmp.lt.s32.totalorder %s55, 7
    %s57 = scalar_select %p56, %s55, 7
    %s58 = smul.addr %s57, 8
    %s59 = scalar_lea.vmem %s0, %s58
    %s60 = sadd.s32 0, 0
    %s61 = smul.u32 8, %s60
    %p62 = scmp.eq.s32.totalorder 0, 0
    // Predicated region
    $region22: #{input_tnet_forward.5} parent=1 // pred_check
      %p63 = pneg %p62
    $region23: #{input_tnet_forward.5} parent=1 // pred_check_branch
      %65 = sbr.rel (%p63) target = $region25
    $region24: #{input_tnet_forward.5} parent=1 // pred_region
      %vm66 = vcmask 523264
      %67 = vst.msk [vmem:[%s3] sm:$0xff] %vm66, 0.0
      %68 = vst.msk [vmem:[%s4] sm:$0xff] %vm66, 0.0
    $region25: #{input_tnet_forward.5} parent=1 // pred_fallthru
      _
    %v69 = vld [vmem:[%s59] sm:$0xff]
    %v70 = vld [vmem:[%s59 + $0x8] sm:$0xff]
    %v71 = vld [vmem:[%s59 + $0x10] sm:$0xff]
    %v72 = vld [vmem:[%s59 + $0x18] sm:$0xff]
    %v73 = vld [vmem:[%s59 + $0x20] sm:$0xff]
    %v74 = vld [vmem:[%s59 + $0x28] sm:$0xff]
    %v75 = vld [vmem:[%s59 + $0x30] sm:$0xff]
    %v76 = vld [vmem:[%s59 + $0x38] sm:$0xff]
    %v77 = vld [vmem:[#allocation2] sm:$0x7]
    %v78 = vld [vmem:[#allocation4] sm:$0x1]
    %80 = vset.pattern.permute.xlu0 0
    %81 = vperm.xlu0 %80, %v69
    %v82 = vpop.permute.xlu0 %81
    %85 = vset.pattern.permute.xlu0 0
    %86 = vperm.xlu0 %85, %v70
    %v87 = vpop.permute.xlu0 %86
    %90 = vset.pattern.permute.xlu0 0
    %91 = vperm.xlu0 %90, %v71
    %v92 = vpop.permute.xlu0 %91
    %95 = vset.pattern.permute.xlu0 0
    %96 = vperm.xlu0 %95, %v72
    %v97 = vpop.permute.xlu0 %96
    %100 = vset.pattern.permute.xlu0 0
    %101 = vperm.xlu0 %100, %v73
    %v102 = vpop.permute.xlu0 %101
    %105 = vset.pattern.permute.xlu0 0
    %106 = vperm.xlu0 %105, %v74
    %v107 = vpop.permute.xlu0 %106
    %110 = vset.pattern.permute.xlu0 0
    %111 = vperm.xlu0 %110, %v75
    %v112 = vpop.permute.xlu0 %111
    %115 = vset.pattern.permute.xlu0 0
    %116 = vperm.xlu0 %115, %v76
    %v117 = vpop.permute.xlu0 %116
    %v119 = vlaneseq
    %v120 = vshrl.u32 %v119, 7
    %v121 = vsub.s32 0, %v120
    %v122 = vrot.slane %v77, %v121
    %v123 = vmul.f32 %v82, %v122
    %v124 = vmul.f32 %v87, %v122
    %v125 = vmul.f32 %v92, %v122
    %v126 = vmul.f32 %v97, %v122
    %v127 = vmul.f32 %v102, %v122
    %v128 = vmul.f32 %v107, %v122
    %v129 = vmul.f32 %v112, %v122
    %v130 = vmul.f32 %v117, %v122
    %131 = vset.pattern.permute.xlu0 1
    %132 = vperm.xlu0 %131, %v69
    %v133 = vpop.permute.xlu0 %132
    %135 = vset.pattern.permute.xlu0 1
    %136 = vperm.xlu0 %135, %v70
    %v137 = vpop.permute.xlu0 %136
    %139 = vset.pattern.permute.xlu0 1
    %140 = vperm.xlu0 %139, %v71
    %v141 = vpop.permute.xlu0 %140
    %143 = vset.pattern.permute.xlu0 1
    %144 = vperm.xlu0 %143, %v72
    %v145 = vpop.permute.xlu0 %144
    %147 = vset.pattern.permute.xlu0 1
    %148 = vperm.xlu0 %147, %v73
    %v149 = vpop.permute.xlu0 %148
    %151 = vset.pattern.permute.xlu0 1
    %152 = vperm.xlu0 %151, %v74
    %v153 = vpop.permute.xlu0 %152
    %155 = vset.pattern.permute.xlu0 1
    %156 = vperm.xlu0 %155, %v75
    %v157 = vpop.permute.xlu0 %156
    %159 = vset.pattern.permute.xlu0 1
    %160 = vperm.xlu0 %159, %v76
    %v161 = vpop.permute.xlu0 %160
    %v163 = vlaneseq
    %v164 = vshrl.u32 %v163, 7
    %v165 = vsub.s32 1, %v164
    %v166 = vrot.slane %v77, %v165
    %v167 = vmul.f32 %v133, %v166
    %v168 = vmul.f32 %v137, %v166
    %v169 = vmul.f32 %v141, %v166
    %v170 = vmul.f32 %v145, %v166
    %v171 = vmul.f32 %v149, %v166
    %v172 = vmul.f32 %v153, %v166
    %v173 = vmul.f32 %v157, %v166
    %v174 = vmul.f32 %v161, %v166
    %v175 = vadd.f32 %v123, %v167
    %v176 = vadd.f32 %v124, %v168
    %v177 = vadd.f32 %v125, %v169
    %v178 = vadd.f32 %v126, %v170
    %v179 = vadd.f32 %v127, %v171
    %v180 = vadd.f32 %v128, %v172
    %v181 = vadd.f32 %v129, %v173
    %v182 = vadd.f32 %v130, %v174
    %183 = vset.pattern.permute.xlu0 2
    %184 = vperm.xlu0 %183, %v69
    %v185 = vpop.permute.xlu0 %184
    %187 = vset.pattern.permute.xlu0 2
    %188 = vperm.xlu0 %187, %v70
    %v189 = vpop.permute.xlu0 %188
    %191 = vset.pattern.permute.xlu0 2
    %192 = vperm.xlu0 %191, %v71
    %v193 = vpop.permute.xlu0 %192
    %195 = vset.pattern.permute.xlu0 2
    %196 = vperm.xlu0 %195, %v72
    %v197 = vpop.permute.xlu0 %196
    %199 = vset.pattern.permute.xlu0 2
    %200 = vperm.xlu0 %199, %v73
    %v201 = vpop.permute.xlu0 %200
    %203 = vset.pattern.permute.xlu0 2
    %204 = vperm.xlu0 %203, %v74
    %v205 = vpop.permute.xlu0 %204
    %207 = vset.pattern.permute.xlu0 2
    %208 = vperm.xlu0 %207, %v75
    %v209 = vpop.permute.xlu0 %208
    %211 = vset.pattern.permute.xlu0 2
    %212 = vperm.xlu0 %211, %v76
    %v213 = vpop.permute.xlu0 %212
    %v215 = vlaneseq
    %v216 = vshrl.u32 %v215, 7
    %v217 = vsub.s32 2, %v216
    %v218 = vrot.slane %v77, %v217
    %v219 = vmul.f32 %v185, %v218
    %v220 = vmul.f32 %v189, %v218
    %v221 = vmul.f32 %v193, %v218
    %v222 = vmul.f32 %v197, %v218
    %v223 = vmul.f32 %v201, %v218
    %v224 = vmul.f32 %v205, %v218
    %v225 = vmul.f32 %v209, %v218
    %v226 = vmul.f32 %v213, %v218
    %v227 = vadd.f32 %v175, %v219
    %v228 = vadd.f32 %v176, %v220
    %v229 = vadd.f32 %v177, %v221
    %v230 = vadd.f32 %v178, %v222
    %v231 = vadd.f32 %v179, %v223
    %v232 = vadd.f32 %v180, %v224
    %v233 = vadd.f32 %v181, %v225
    %v234 = vadd.f32 %v182, %v226
    %v236 = vlaneseq
    %v237 = vshrl.u32 %v236, 7
    %v238 = vsub.s32 0, %v237
    %v239 = vrot.slane %v78, %v238
    %v241 = vadd.f32 %v227, %v239
    %v242 = vadd.f32 %v228, %v239
    %v243 = vadd.f32 %v229, %v239
    %v244 = vadd.f32 %v230, %v239
    %v245 = vadd.f32 %v231, %v239
    %v246 = vadd.f32 %v232, %v239
    %v247 = vadd.f32 %v233, %v239
    %v248 = vadd.f32 %v234, %v239
    %v249 = vmax.f32 %v241, 0.0
    %v250 = vmax.f32 %v242, 0.0
    %v251 = vmax.f32 %v243, 0.0
    %v252 = vmax.f32 %v244, 0.0
    %v253 = vmax.f32 %v245, 0.0
    %v254 = vmax.f32 %v246, 0.0
    %v255 = vmax.f32 %v247, 0.0
    %v256 = vmax.f32 %v248, 0.0
    %v257 = vld [vmem:[%s3] sm:$0xff]
    %vm258 = vcmask 523264
    %v260 = vsel %vm258, 1.0, 0
    %262 = vmatprep.subr.mxu0 0.0
    %263 = vmatpush1.msra.mxu0 0.0
    %264 = vmatprep.subr.mxu0 0.0
    %265 = vmatpush1.msra.mxu0 0.0
    %266 = vmatprep.subr.mxu0 0.0
    %267 = vmatpush1.msra.mxu0 0.0
    %268 = vmatprep.subr.mxu0 0.0
    %269 = vmatpush1.msra.mxu0 0.0
    %270 = vmatprep.subr.mxu0 0.0
    %271 = vmatpush1.msra.mxu0 0.0
    %272 = vmatprep.subr.mxu0 0.0
    %273 = vmatpush1.msra.mxu0 0.0
    %274 = vmatprep.subr.mxu0 0.0
    %275 = vmatpush1.msra.mxu0 0.0
    %276 = vmatprep.subr.mxu0 0.0
    %277 = vmatpush1.msra.mxu0 0.0
    %278 = vmatprep.subr.mxu0 0.0
    %279 = vmatpush1.msra.mxu0 %v256
    %280 = vmatprep.subr.mxu0 0.0
    %281 = vmatpush1.msra.mxu0 %v255
    %282 = vmatprep.subr.mxu0 0.0
    %283 = vmatpush1.msra.mxu0 %v254
    %284 = vmatprep.subr.mxu0 0.0
    %285 = vmatpush1.msra.mxu0 %v253
    %286 = vmatprep.subr.mxu0 0.0
    %287 = vmatpush1.msra.mxu0 %v252
    %288 = vmatprep.subr.mxu0 0.0
    %289 = vmatpush1.msra.mxu0 %v251
    %290 = vmatprep.subr.mxu0 0.0
    %291 = vmatpush1.msra.mxu0 %v250
    %292 = vmatprep.subr.mxu0 0.0
    %293 = vmatpush1.msra.mxu0 %v249
    %294 = vmatprep.subr.mxu0 0.0
    %295 = vmatpush2.msra.mxu0 0.0
    %296 = vmatprep.subr.mxu0 0.0
    %297 = vmatpush2.msra.mxu0 0.0
    %298 = vmatprep.subr.mxu0 0.0
    %299 = vmatpush2.msra.mxu0 0.0
    %300 = vmatprep.subr.mxu0 0.0
    %301 = vmatpush2.msra.mxu0 0.0
    %302 = vmatprep.subr.mxu0 0.0
    %303 = vmatpush2.msra.mxu0 0.0
    %304 = vmatprep.subr.mxu0 0.0
    %305 = vmatpush2.msra.mxu0 0.0
    %306 = vmatprep.subr.mxu0 0.0
    %307 = vmatpush2.msra.mxu0 0.0
    %308 = vmatprep.subr.mxu0 0.0
    %309 = vmatpush2.msra.mxu0 0.0
    %310 = vmatprep.subr.mxu0 0.0
    %311 = vmatpush2.msra.mxu0 0.0
    %312 = vmatprep.subr.mxu0 0.0
    %313 = vmatpush2.msra.mxu0 0.0
    %314 = vmatprep.subr.mxu0 0.0
    %315 = vmatpush2.msra.mxu0 0.0
    %316 = vmatprep.subr.mxu0 0.0
    %317 = vmatpush2.msra.mxu0 0.0
    %318 = vmatprep.subr.mxu0 0.0
    %319 = vmatpush2.msra.mxu0 0.0
    %320 = vmatprep.subr.mxu0 0.0
    %321 = vmatpush2.msra.mxu0 0.0
    %322 = vmatprep.subr.mxu0 0.0
    %323 = vmatpush2.msra.mxu0 0.0
    %324 = vmatprep.subr.mxu0 0.0
    %325 = vmatpush2.msra.mxu0 0.0
    %326 = vmatprep.mubr.f32.mxu0 0.0
    %327 = vmatmul.mubr.f32.gmra.mxu0 %v260
    %v328 = vpop.f32.mrf.mxu0
    %v329 = vadd.f32 0.0, %v328
    %v330 = vpop.f32.mrf.mxu0
    %331 = vdwg.mxu0
    %v332 = vadd.f32 %v257, %v329
    %333 = vst.msk [vmem:[%s3] sm:$0xff] %vm258, %v332
    %v334 = vld [vmem:[%s4] sm:$0xff]
    %v335 = vmul.f32 %v249, %v249
    %v336 = vmul.f32 %v250, %v250
    %v337 = vmul.f32 %v251, %v251
    %v338 = vmul.f32 %v252, %v252
    %v339 = vmul.f32 %v253, %v253
    %v340 = vmul.f32 %v254, %v254
    %v341 = vmul.f32 %v255, %v255
    %v342 = vmul.f32 %v256, %v256
    %343 = vmatprep.subr.mxu0 0.0
    %344 = vmatpush1.msra.mxu0 0.0
    %345 = vmatprep.subr.mxu0 0.0
    %346 = vmatpush1.msra.mxu0 0.0
    %347 = vmatprep.subr.mxu0 0.0
    %348 = vmatpush1.msra.mxu0 0.0
    %349 = vmatprep.subr.mxu0 0.0
    %350 = vmatpush1.msra.mxu0 0.0
    %351 = vmatprep.subr.mxu0 0.0
    %352 = vmatpush1.msra.mxu0 0.0
    %353 = vmatprep.subr.mxu0 0.0
    %354 = vmatpush1.msra.mxu0 0.0
    %355 = vmatprep.subr.mxu0 0.0
    %356 = vmatpush1.msra.mxu0 0.0
    %357 = vmatprep.subr.mxu0 0.0
    %358 = vmatpush1.msra.mxu0 0.0
    %359 = vmatprep.subr.mxu0 0.0
    %360 = vmatpush1.msra.mxu0 %v342
    %361 = vmatprep.subr.mxu0 0.0
    %362 = vmatpush1.msra.mxu0 %v341
    %363 = vmatprep.subr.mxu0 0.0
    %364 = vmatpush1.msra.mxu0 %v340
    %365 = vmatprep.subr.mxu0 0.0
    %366 = vmatpush1.msra.mxu0 %v339
    %367 = vmatprep.subr.mxu0 0.0
    %368 = vmatpush1.msra.mxu0 %v338
    %369 = vmatprep.subr.mxu0 0.0
    %370 = vmatpush1.msra.mxu0 %v337
    %371 = vmatprep.subr.mxu0 0.0
    %372 = vmatpush1.msra.mxu0 %v336
    %373 = vmatprep.subr.mxu0 0.0
    %374 = vmatpush1.msra.mxu0 %v335
    %375 = vmatprep.subr.mxu0 0.0
    %376 = vmatpush2.msra.mxu0 0.0
    %377 = vmatprep.subr.mxu0 0.0
    %378 = vmatpush2.msra.mxu0 0.0
    %379 = vmatprep.subr.mxu0 0.0
    %380 = vmatpush2.msra.mxu0 0.0
    %381 = vmatprep.subr.mxu0 0.0
    %382 = vmatpush2.msra.mxu0 0.0
    %383 = vmatprep.subr.mxu0 0.0
    %384 = vmatpush2.msra.mxu0 0.0
    %385 = vmatprep.subr.mxu0 0.0
    %386 = vmatpush2.msra.mxu0 0.0
    %387 = vmatprep.subr.mxu0 0.0
    %388 = vmatpush2.msra.mxu0 0.0
    %389 = vmatprep.subr.mxu0 0.0
    %390 = vmatpush2.msra.mxu0 0.0
    %391 = vmatprep.subr.mxu0 0.0
    %392 = vmatpush2.msra.mxu0 0.0
    %393 = vmatprep.subr.mxu0 0.0
    %394 = vmatpush2.msra.mxu0 0.0
    %395 = vmatprep.subr.mxu0 0.0
    %396 = vmatpush2.msra.mxu0 0.0
    %397 = vmatprep.subr.mxu0 0.0
    %398 = vmatpush2.msra.mxu0 0.0
    %399 = vmatprep.subr.mxu0 0.0
    %400 = vmatpush2.msra.mxu0 0.0
    %401 = vmatprep.subr.mxu0 0.0
    %402 = vmatpush2.msra.mxu0 0.0
    %403 = vmatprep.subr.mxu0 0.0
    %404 = vmatpush2.msra.mxu0 0.0
    %405 = vmatprep.subr.mxu0 0.0
    %406 = vmatpush2.msra.mxu0 0.0
    %407 = vmatprep.mubr.f32.mxu0 0.0
    %408 = vmatmul.mubr.f32.gmra.mxu0 %v260
    %v409 = vpop.f32.mrf.mxu0
    %v410 = vadd.f32 0.0, %v409
    %v411 = vpop.f32.mrf.mxu0
    %412 = vdwg.mxu0
    %v413 = vadd.f32 %v334, %v410
    %414 = vst.msk [vmem:[%s4] sm:$0xff] %vm258, %v413
    // Predicated region
    $region26: #{input_tnet_forward.5} parent=1 // pred_check
      _
    $region27: #{input_tnet_forward.5} parent=1 // pred_check_branch
      %416 = sbr.rel (0) target = $region29
    $region28: #{input_tnet_forward.5} parent=1 // pred_region
      _
    $region29: #{input_tnet_forward.5} parent=1 // pred_fallthru
      _
    // Predicated region
    $region30: #{input_tnet_forward.5} parent=1 // pred_check
      _
    $region31: #{input_tnet_forward.5} parent=1 // pred_check_branch
      %418 = sbr.rel (0) target = $region33
    $region32: #{input_tnet_forward.5} parent=1 // pred_region
      _
    $region33: #{input_tnet_forward.5} parent=1 // pred_fallthru
      _
    // Predicated region
    $region34: #{input_tnet_forward.5} parent=1 // pred_check
      _
    $region35: #{input_tnet_forward.5} parent=1 // pred_check_branch
      %420 = sbr.rel (0) target = $region37
    $region36: #{input_tnet_forward.5} parent=1 // pred_region
      _
    $region37: #{input_tnet_forward.5} parent=1 // pred_fallthru
      _
    // Predicated region
    $region38: #{input_tnet_forward.5} parent=1 // pred_check
      _
    $region39: #{input_tnet_forward.5} parent=1 // pred_check_branch
      %422 = sbr.rel (0) target = $region41
    $region40: #{input_tnet_forward.5} parent=1 // pred_region
      _
    $region41: #{input_tnet_forward.5} parent=1 // pred_fallthru
      _
    %423 = vsyncpa [#allocation3], 1
    %424 = vsyncpa [#allocation5], 1

// kernel: input_tnet_forward.6
$region0: #{input_tnet_forward.6}
  #allocation0 [shape = 'u32[]', space=smem, size = 0x4, offset = 0x4, fixed_abs, tag = 'smem constant byte address 0x4 - core index']
  #allocation1 [shape = 'u32[144,128]{1,0:T(1,128)}', space=vmem, size = 0x12000, scoped, tag = 'internal scratch']
  %s0 = inlined_call_operand.vmem [shape: f32[64,3], index: 0, kind: input, shape index: {}]
  %s1 = inlined_call_operand.hbm [shape: f32[3,64], index: 1, kind: input, shape index: {}]
  %s2 = inlined_call_operand.hbm [shape: f32[1,64], index: 2, kind: input, shape index: {}]
  %s3 = inlined_call_operand.vmem [shape: bf16[64,128], index: 3, kind: input, shape index: {}]
  %s4 = inlined_call_operand.vmem [shape: f32[1,128], index: 4, kind: input, shape index: {}]
  %s5 = inlined_call_operand.vmem [shape: bf16[64,128], index: 5, kind: output, shape index: {0}]
  %s6 = inlined_call_operand.vmem [shape: f32[8,128], index: 6, kind: output, shape index: {1}]
  %s7 = inlined_call_operand.vmem [shape: f32[8,128], index: 7, kind: output, shape index: {2}]
  %8 = xla_tuple %s5, %s6, %s7
  %s9 = sld [smem:[#allocation0]]
  $region58: #{input_tnet_forward.6} parent=0
    _
  %s11 = ssub.s32 1, %s9
  %s12 = scalar_select 0, %s11, %s9
  $region1: #{input_tnet_forward.6} parent=0
    #allocation2 [shape = 'u8[2048]{0}', space=vmem, size = 0x800, scoped, tag = 'input window, operand 1, single buffered']
    #allocation3 [shape = 's32[1]{0}', space=sflag, size = 0x4, scoped, tag = 'scoped memory for input_tnet_forward.6']
    #allocation4 [shape = 'u8[512]{0}', space=vmem, size = 0x400, scoped, tag = 'input window, operand 2, single buffered']
    #allocation5 [shape = 's32[1]{0}', space=sflag, size = 0x4, scoped, tag = 'scoped memory for input_tnet_forward.6']
    %13 = vsyncpa [#allocation3], 0
    %14 = vsyncpa [#allocation5], 0
    // Predicated region
    $region2: #{input_tnet_forward.6} parent=1 // pred_check
      _
    $region3: #{input_tnet_forward.6} parent=1 // pred_check_branch
      %16 = sbr.rel (0) target = $region5
    $region4: #{input_tnet_forward.6} parent=1 // pred_region
      %s17 = sadd.s32 0, 0
      %s18 = smul.u32 8, %s17
      %p19 = scmp.lt.s32.totalorder %s18, 7
      %s20 = scalar_select %p19, %s18, 7
      %s21 = smul.addr %s20, 8
      %s22 = scalar_lea.vmem %s0, %s21
      %s23 = sadd.s32 0, 0
      %s24 = smul.u32 8, %s23
    $region5: #{input_tnet_forward.6} parent=1 // pred_fallthru
      _
    // Predicated region
    $region6: #{input_tnet_forward.6} parent=1 // pred_check
      _
    $region7: #{input_tnet_forward.6} parent=1 // pred_check_branch
      %26 = sbr.rel (0) target = $region9
    $region8: #{input_tnet_forward.6} parent=1 // pred_region
      %s28 = ssub.s32 64, 64
      %29 = vsyncadd [#allocation3], %s28
      %s31 = sshll.u32 [#allocation2], 4
      %s32 = int_to_ptr.vmem [resolvable:$true] %s31
      %34 = dma.hbm_to_vmem [thread:$0]  %s1, 64, %s32, [#allocation3]
    $region9: #{input_tnet_forward.6} parent=1 // pred_fallthru
      _
    // Predicated region
    $region10: #{input_tnet_forward.6} parent=1 // pred_check
      _
    $region11: #{input_tnet_forward.6} parent=1 // pred_check_branch
      %36 = sbr.rel (0) target = $region13
    $region12: #{input_tnet_forward.6} parent=1 // pred_region
      %s38 = ssub.s32 16, 16
      %39 = vsyncadd [#allocation5], %s38
      %s41 = sshll.u32 [#allocation4], 4
      %s42 = int_to_ptr.vmem [resolvable:$true] %s41
      %44 = dma.hbm_to_vmem [thread:$0]  %s2, 16, %s42, [#allocation5]
    $region13: #{input_tnet_forward.6} parent=1 // pred_fallthru
      _
    // Predicated region
    $region14: #{input_tnet_forward.6} parent=1 // pred_check
      _
    $region15: #{input_tnet_forward.6} parent=1 // pred_check_branch
      %46 = sbr.rel (0) target = $region17
    $region16: #{input_tnet_forward.6} parent=1 // pred_region
      _
    $region17: #{input_tnet_forward.6} parent=1 // pred_fallthru
      _
    // Predicated region
    $region18: #{input_tnet_forward.6} parent=1 // pred_check
      _
    $region19: #{input_tnet_forward.6} parent=1 // pred_check_branch
      %48 = sbr.rel (0) target = $region21
    $region20: #{input_tnet_forward.6} parent=1 // pred_region
      _
    $region21: #{input_tnet_forward.6} parent=1 // pred_fallthru
      _
    // Predicated region
    $region22: #{input_tnet_forward.6} parent=1 // pred_check
      _
    $region23: #{input_tnet_forward.6} parent=1 // pred_check_branch
      %50 = sbr.rel (0) target = $region25
    $region24: #{input_tnet_forward.6} parent=1 // pred_region
      %51 = dma.done [#allocation3], 64
    $region25: #{input_tnet_forward.6} parent=1 // pred_fallthru
      _
    // Predicated region
    $region26: #{input_tnet_forward.6} parent=1 // pred_check
      _
    $region27: #{input_tnet_forward.6} parent=1 // pred_check_branch
      %53 = sbr.rel (0) target = $region29
    $region28: #{input_tnet_forward.6} parent=1 // pred_region
      %54 = dma.done [#allocation5], 16
    $region29: #{input_tnet_forward.6} parent=1 // pred_fallthru
      _
    %s55 = sadd.s32 0, 0
    %s56 = smul.u32 8, %s55
    %p57 = scmp.lt.s32.totalorder %s56, 7
    %s58 = scalar_select %p57, %s56, 7
    %s59 = smul.addr %s58, 8
    %s60 = scalar_lea.vmem %s0, %s59
    %s61 = sadd.s32 0, 0
    %s62 = smul.u32 8, %s61
    %p63 = scmp.lt.s32.totalorder %s62, 7
    %s64 = scalar_select %p63, %s62, 7
    %s65 = smul.addr %s64, 4
    %s66 = scalar_lea.vmem %s5, %s65
    %s67 = sadd.s32 0, 0
    %s68 = smul.u32 8, %s67
    %p69 = scmp.lt.s32.totalorder %s68, 7
    %s70 = scalar_select %p69, %s68, 7
    %s71 = smul.addr %s70, 8
    %s72 = scalar_lea.vmem %s0, %s71
    %s73 = sadd.s32 0, 0
    %s74 = smul.u32 8, %s73
    %s75 = sadd.s32 0, 0
    %s76 = smul.u32 8, %s75
    %p77 = scmp.lt.s32.totalorder %s76, 7
    %s78 = scalar_select %p77, %s76, 7
    %s79 = smul.addr %s78, 4
    %s80 = scalar_lea.vmem %s5, %s79
    %s81 = sadd.s32 0, 0
    %s82 = smul.u32 8, %s81
    %p84 = scmp.eq.s32.totalorder 0, 0
    // Predicated region
    $region30: #{input_tnet_forward.6} parent=1 // pred_check
      %p85 = pneg %p84
    $region31: #{input_tnet_forward.6} parent=1 // pred_check_branch
      %87 = sbr.rel (%p85) target = $region33
    $region32: #{input_tnet_forward.6} parent=1 // pred_region
      %88 = vst [vmem:[%s6] sm:$0xff] 0.0
      %89 = vst [vmem:[%s7] sm:$0xff] 0.0
    $region33: #{input_tnet_forward.6} parent=1 // pred_fallthru
      _
    %v90 = vld [vmem:[%s72] sm:$0xff]
    %v91 = vld [vmem:[%s72 + $0x8] sm:$0xff]
    %v92 = vld [vmem:[%s72 + $0x10] sm:$0xff]
    %v93 = vld [vmem:[%s72 + $0x18] sm:$0xff]
    %v94 = vld [vmem:[%s72 + $0x20] sm:$0xff]
    %v95 = vld [vmem:[%s72 + $0x28] sm:$0xff]
    %v96 = vld [vmem:[%s72 + $0x30] sm:$0xff]
    %v97 = vld [vmem:[%s72 + $0x38] sm:$0xff]
    %v98 = vld [vmem:[#allocation2] sm:$0x7]
    %v99 = vld [vmem:[#allocation4] sm:$0x1]
    %101 = vset.pattern.permute.xlu0 0
    %102 = vperm.xlu0 %101, %v90
    %v103 = vpop.permute.xlu0 %102
    %106 = vset.pattern.permute.xlu0 0
    %107 = vperm.xlu0 %106, %v91
    %v108 = vpop.permute.xlu0 %107
    %111 = vset.pattern.permute.xlu0 0
    %112 = vperm.xlu0 %111, %v92
    %v113 = vpop.permute.xlu0 %112
    %116 = vset.pattern.permute.xlu0 0
    %117 = vperm.xlu0 %116, %v93
    %v118 = vpop.permute.xlu0 %117
    %121 = vset.pattern.permute.xlu0 0
    %122 = vperm.xlu0 %121, %v94
    %v123 = vpop.permute.xlu0 %122
    %126 = vset.pattern.permute.xlu0 0
    %127 = vperm.xlu0 %126, %v95
    %v128 = vpop.permute.xlu0 %127
    %131 = vset.pattern.permute.xlu0 0
    %132 = vperm.xlu0 %131, %v96
    %v133 = vpop.permute.xlu0 %132
    %136 = vset.pattern.permute.xlu0 0
    %137 = vperm.xlu0 %136, %v97
    %v138 = vpop.permute.xlu0 %137
    %v140 = vlaneseq
    %v141 = vshrl.u32 %v140, 7
    %v142 = vsub.s32 0, %v141
    %v143 = vrot.slane %v98, %v142
    %v144 = vmul.f32 %v103, %v143
    %v145 = vmul.f32 %v108, %v143
    %v146 = vmul.f32 %v113, %v143
    %v147 = vmul.f32 %v118, %v143
    %v148 = vmul.f32 %v123, %v143
    %v149 = vmul.f32 %v128, %v143
    %v150 = vmul.f32 %v133, %v143
    %v151 = vmul.f32 %v138, %v143
    %152 = vset.pattern.permute.xlu0 1
    %153 = vperm.xlu0 %152, %v90
    %v154 = vpop.permute.xlu0 %153
    %156 = vset.pattern.permute.xlu0 1
    %157 = vperm.xlu0 %156, %v91
    %v158 = vpop.permute.xlu0 %157
    %160 = vset.pattern.permute.xlu0 1
    %161 = vperm.xlu0 %160, %v92
    %v162 = vpop.permute.xlu0 %161
    %164 = vset.pattern.permute.xlu0 1
    %165 = vperm.xlu0 %164, %v93
    %v166 = vpop.permute.xlu0 %165
    %168 = vset.pattern.permute.xlu0 1
    %169 = vperm.xlu0 %168, %v94
    %v170 = vpop.permute.xlu0 %169
    %172 = vset.pattern.permute.xlu0 1
    %173 = vperm.xlu0 %172, %v95
    %v174 = vpop.permute.xlu0 %173
    %176 = vset.pattern.permute.xlu0 1
    %177 = vperm.xlu0 %176, %v96
    %v178 = vpop.permute.xlu0 %177
    %180 = vset.pattern.permute.xlu0 1
    %181 = vperm.xlu0 %180, %v97
    %v182 = vpop.permute.xlu0 %181
    %v184 = vlaneseq
    %v185 = vshrl.u32 %v184, 7
    %v186 = vsub.s32 1, %v185
    %v187 = vrot.slane %v98, %v186
    %v188 = vmul.f32 %v154, %v187
    %v189 = vmul.f32 %v158, %v187
    %v190 = vmul.f32 %v162, %v187
    %v191 = vmul.f32 %v166, %v187
    %v192 = vmul.f32 %v170, %v187
    %v193 = vmul.f32 %v174, %v187
    %v194 = vmul.f32 %v178, %v187
    %v195 = vmul.f32 %v182, %v187
    %v196 = vadd.f32 %v144, %v188
    %v197 = vadd.f32 %v145, %v189
    %v198 = vadd.f32 %v146, %v190
    %v199 = vadd.f32 %v147, %v191
    %v200 = vadd.f32 %v148, %v192
    %v201 = vadd.f32 %v149, %v193
    %v202 = vadd.f32 %v150, %v194
    %v203 = vadd.f32 %v151, %v195
    %204 = vset.pattern.permute.xlu0 2
    %205 = vperm.xlu0 %204, %v90
    %v206 = vpop.permute.xlu0 %205
    %208 = vset.pattern.permute.xlu0 2
    %209 = vperm.xlu0 %208, %v91
    %v210 = vpop.permute.xlu0 %209
    %212 = vset.pattern.permute.xlu0 2
    %213 = vperm.xlu0 %212, %v92
    %v214 = vpop.permute.xlu0 %213
    %216 = vset.pattern.permute.xlu0 2
    %217 = vperm.xlu0 %216, %v93
    %v218 = vpop.permute.xlu0 %217
    %220 = vset.pattern.permute.xlu0 2
    %221 = vperm.xlu0 %220, %v94
    %v222 = vpop.permute.xlu0 %221
    %224 = vset.pattern.permute.xlu0 2
    %225 = vperm.xlu0 %224, %v95
    %v226 = vpop.permute.xlu0 %225
    %228 = vset.pattern.permute.xlu0 2
    %229 = vperm.xlu0 %228, %v96
    %v230 = vpop.permute.xlu0 %229
    %232 = vset.pattern.permute.xlu0 2
    %233 = vperm.xlu0 %232, %v97
    %v234 = vpop.permute.xlu0 %233
    %v236 = vlaneseq
    %v237 = vshrl.u32 %v236, 7
    %v238 = vsub.s32 2, %v237
    %v239 = vrot.slane %v98, %v238
    %v240 = vmul.f32 %v206, %v239
    %v241 = vmul.f32 %v210, %v239
    %v242 = vmul.f32 %v214, %v239
    %v243 = vmul.f32 %v218, %v239
    %v244 = vmul.f32 %v222, %v239
    %v245 = vmul.f32 %v226, %v239
    %v246 = vmul.f32 %v230, %v239
    %v247 = vmul.f32 %v234, %v239
    %v248 = vadd.f32 %v196, %v240
    %v249 = vadd.f32 %v197, %v241
    %v250 = vadd.f32 %v198, %v242
    %v251 = vadd.f32 %v199, %v243
    %v252 = vadd.f32 %v200, %v244
    %v253 = vadd.f32 %v201, %v245
    %v254 = vadd.f32 %v202, %v246
    %v255 = vadd.f32 %v203, %v247
    %v257 = vlaneseq
    %v258 = vshrl.u32 %v257, 7
    %v259 = vsub.s32 0, %v258
    %v260 = vrot.slane %v99, %v259
    %v262 = vadd.f32 %v248, %v260
    %v263 = vadd.f32 %v249, %v260
    %v264 = vadd.f32 %v250, %v260
    %v265 = vadd.f32 %v251, %v260
    %v266 = vadd.f32 %v252, %v260
    %v267 = vadd.f32 %v253, %v260
    %v268 = vadd.f32 %v254, %v260
    %v269 = vadd.f32 %v255, %v260
    %v270 = vmax.f32 %v262, 0.0
    %v271 = vmax.f32 %v263, 0.0
    %v272 = vmax.f32 %v264, 0.0
    %v273 = vmax.f32 %v265, 0.0
    %v274 = vmax.f32 %v266, 0.0
    %v275 = vmax.f32 %v267, 0.0
    %v276 = vmax.f32 %v268, 0.0
    %v277 = vmax.f32 %v269, 0.0
    %v278 = vpack.c.bf16 %v271, %v270
    %v279 = vpack.c.bf16 %v273, %v272
    %v280 = vpack.c.bf16 %v275, %v274
    %v281 = vpack.c.bf16 %v277, %v276
    %v282 = vld [vmem:[%s3] sm:$0xf]
    %v283 = vld [vmem:[%s3 + $0x4] sm:$0xf]
    %v284 = vld [vmem:[%s3 + $0x8] sm:$0xf]
    %v285 = vld [vmem:[%s3 + $0xc] sm:$0xf]
    %v286 = vld [vmem:[%s3 + $0x10] sm:$0xf]
    %v287 = vld [vmem:[%s3 + $0x14] sm:$0xf]
    %v288 = vld [vmem:[%s3 + $0x18] sm:$0xf]
    %v289 = vld [vmem:[%s3 + $0x1c] sm:$0xf]
    %v290 = vld [vmem:[%s4] sm:$0x1]
    %v292 = vlaneseq
    %v293 = vshrl.u32 %v292, 7
    %v294 = vsub.s32 0, %v293
    %v295 = vrot.slane %v290, %v294
    %v305 = vunpack.c.l.b16 %v282
    %v306 = vunpack.c.l.b16 %v283
    %v307 = vunpack.c.l.b16 %v284
    %v308 = vunpack.c.l.b16 %v285
    %v309 = vunpack.c.l.b16 %v286
    %v310 = vunpack.c.l.b16 %v287
    %v311 = vunpack.c.l.b16 %v288
    %v312 = vunpack.c.l.b16 %v289
    %v313 = vpack.c.b16 %v306, %v305
    %v314 = vpack.c.b16 %v308, %v307
    %v315 = vpack.c.b16 %v310, %v309
    %v316 = vpack.c.b16 %v312, %v311
    %vm321 = vcmask 523264
    %v323 = vsel %vm321, %v278, 0
    %v326 = vsel %vm321, %v279, 0
    %v329 = vsel %vm321, %v280, 0
    %v332 = vsel %vm321, %v281, 0
    %334 = vmatprep.subr.bf16.mxu0 0
    %335 = vmatpush1.bf16.msra.mxu0 0
    %336 = vmatprep.subr.bf16.mxu0 0
    %337 = vmatpush1.bf16.msra.mxu0 0
    %338 = vmatprep.subr.bf16.mxu0 0
    %339 = vmatpush1.bf16.msra.mxu0 0
    %340 = vmatprep.subr.bf16.mxu0 0
    %341 = vmatpush1.bf16.msra.mxu0 0
    %342 = vmatprep.subr.bf16.mxu0 0
    %343 = vmatpush1.bf16.msra.mxu0 %v316
    %344 = vmatprep.subr.bf16.mxu0 0
    %345 = vmatpush1.bf16.msra.mxu0 %v315
    %346 = vmatprep.subr.bf16.mxu0 0
    %347 = vmatpush1.bf16.msra.mxu0 %v314
    %348 = vmatprep.subr.bf16.mxu0 0
    %349 = vmatpush1.bf16.msra.mxu0 %v313
    %350 = vmatprep.subr.bf16.mxu0 0
    %351 = vmatpush2.bf16.msra.mxu0 0
    %352 = vmatprep.subr.bf16.mxu0 0
    %353 = vmatpush2.bf16.msra.mxu0 0
    %354 = vmatprep.subr.bf16.mxu0 0
    %355 = vmatpush2.bf16.msra.mxu0 0
    %356 = vmatprep.subr.bf16.mxu0 0
    %357 = vmatpush2.bf16.msra.mxu0 0
    %358 = vmatprep.subr.bf16.mxu0 0
    %359 = vmatpush2.bf16.msra.mxu0 0
    %360 = vmatprep.subr.bf16.mxu0 0
    %361 = vmatpush2.bf16.msra.mxu0 0
    %362 = vmatprep.subr.bf16.mxu0 0
    %363 = vmatpush2.bf16.msra.mxu0 0
    %364 = vmatprep.subr.bf16.mxu0 0
    %365 = vmatpush2.bf16.msra.mxu0 0
    %366 = vmatprep.mubr.bf16.mxu0 0
    %367 = vmatmul.mubr.bf16.gmra.mxu0 %v323
    %v368 = vpop.f32.mrf.mxu0
    %v369 = vadd.f32 %v295, %v368
    %v370 = vpop.f32.mrf.mxu0
    %v371 = vpop.f32.mrf.mxu0
    %v372 = vadd.f32 %v295, %v371
    %v373 = vpop.f32.mrf.mxu0
    %374 = vmatprep.mubr.bf16.mxu0 0
    %375 = vmatmul.mubr.bf16.gmra.mxu0 %v326
    %v376 = vpop.f32.mrf.mxu0
    %v377 = vadd.f32 %v295, %v376
    %v378 = vpop.f32.mrf.mxu0
    %v379 = vpop.f32.mrf.mxu0
    %v380 = vadd.f32 %v295, %v379
    %v381 = vpop.f32.mrf.mxu0
    %382 = vmatprep.mubr.bf16.mxu0 0
    %383 = vmatmul.mubr.bf16.gmra.mxu0 %v329
    %v384 = vpop.f32.mrf.mxu0
    %v385 = vadd.f32 %v295, %v384
    %v386 = vpop.f32.mrf.mxu0
    %v387 = vpop.f32.mrf.mxu0
    %v388 = vadd.f32 %v295, %v387
    %v389 = vpop.f32.mrf.mxu0
    %390 = vmatprep.mubr.bf16.mxu0 0
    %391 = vmatmul.mubr.bf16.gmra.mxu0 %v332
    %v392 = vpop.f32.mrf.mxu0
    %v393 = vadd.f32 %v295, %v392
    %v394 = vpop.f32.mrf.mxu0
    %v395 = vpop.f32.mrf.mxu0
    %v396 = vadd.f32 %v295, %v395
    %v397 = vpop.f32.mrf.mxu0
    %398 = vdwg.mxu0
    %v399 = vmax.f32 %v369, 0.0
    %v400 = vmax.f32 %v372, 0.0
    %v401 = vmax.f32 %v377, 0.0
    %v402 = vmax.f32 %v380, 0.0
    %v403 = vmax.f32 %v385, 0.0
    %v404 = vmax.f32 %v388, 0.0
    %v405 = vmax.f32 %v393, 0.0
    %v406 = vmax.f32 %v396, 0.0
    %v407 = vpack.c.bf16 %v400, %v399
    %v408 = vpack.c.bf16 %v402, %v401
    %v409 = vpack.c.bf16 %v404, %v403
    %v410 = vpack.c.bf16 %v406, %v405
    %v415 = vunpack.c.l.b16 %v407
    %v416 = vunpack.c.h.b16 %v407
    %v417 = vunpack.c.l.b16 %v408
    %v418 = vunpack.c.h.b16 %v408
    %v419 = vunpack.c.l.b16 %v409
    %v420 = vunpack.c.h.b16 %v409
    %v421 = vunpack.c.l.b16 %v410
    %v422 = vunpack.c.h.b16 %v410
    %v423 = vpack.c.b16 %v415, %v415
    %v424 = vpack.c.b16 %v416, %v416
    %v425 = vpack.c.b16 %v417, %v417
    %v426 = vpack.c.b16 %v418, %v418
    %v427 = vpack.c.b16 %v419, %v419
    %v428 = vpack.c.b16 %v420, %v420
    %v429 = vpack.c.b16 %v421, %v421
    %v430 = vpack.c.b16 %v422, %v422
    %439 = vst [vmem:[%s80] sm:$0xf] %v423
    %440 = vst [vmem:[%s80 + $0x4] sm:$0xf] %v424
    %441 = vst [vmem:[%s80 + $0x8] sm:$0xf] %v425
    %442 = vst [vmem:[%s80 + $0xc] sm:$0xf] %v426
    %443 = vst [vmem:[%s80 + $0x10] sm:$0xf] %v427
    %444 = vst [vmem:[%s80 + $0x14] sm:$0xf] %v428
    %445 = vst [vmem:[%s80 + $0x18] sm:$0xf] %v429
    %446 = vst [vmem:[%s80 + $0x1c] sm:$0xf] %v430
    %v447 = vld [vmem:[%s6] sm:$0xff]
    %v449 = vsel %vm321, 1.0, 0
    %451 = vmatprep.subr.mxu0 0.0
    %452 = vmatpush1.msra.mxu0 0.0
    %453 = vmatprep.subr.mxu0 0.0
    %454 = vmatpush1.msra.mxu0 0.0
    %455 = vmatprep.subr.mxu0 0.0
    %456 = vmatpush1.msra.mxu0 0.0
    %457 = vmatprep.subr.mxu0 0.0
    %458 = vmatpush1.msra.mxu0 0.0
    %459 = vmatprep.subr.mxu0 0.0
    %460 = vmatpush1.msra.mxu0 0.0
    %461 = vmatprep.subr.mxu0 0.0
    %462 = vmatpush1.msra.mxu0 0.0
    %463 = vmatprep.subr.mxu0 0.0
    %464 = vmatpush1.msra.mxu0 0.0
    %465 = vmatprep.subr.mxu0 0.0
    %466 = vmatpush1.msra.mxu0 0.0
    %467 = vmatprep.subr.mxu0 0.0
    %468 = vmatpush1.msra.mxu0 %v406
    %469 = vmatprep.subr.mxu0 0.0
    %470 = vmatpush1.msra.mxu0 %v405
    %471 = vmatprep.subr.mxu0 0.0
    %472 = vmatpush1.msra.mxu0 %v404
    %473 = vmatprep.subr.mxu0 0.0
    %474 = vmatpush1.msra.mxu0 %v403
    %475 = vmatprep.subr.mxu0 0.0
    %476 = vmatpush1.msra.mxu0 %v402
    %477 = vmatprep.subr.mxu0 0.0
    %478 = vmatpush1.msra.mxu0 %v401
    %479 = vmatprep.subr.mxu0 0.0
    %480 = vmatpush1.msra.mxu0 %v400
    %481 = vmatprep.subr.mxu0 0.0
    %482 = vmatpush1.msra.mxu0 %v399
    %483 = vmatprep.subr.mxu0 0.0
    %484 = vmatpush2.msra.mxu0 0.0
    %485 = vmatprep.subr.mxu0 0.0
    %486 = vmatpush2.msra.mxu0 0.0
    %487 = vmatprep.subr.mxu0 0.0
    %488 = vmatpush2.msra.mxu0 0.0
    %489 = vmatprep.subr.mxu0 0.0
    %490 = vmatpush2.msra.mxu0 0.0
    %491 = vmatprep.subr.mxu0 0.0
    %492 = vmatpush2.msra.mxu0 0.0
    %493 = vmatprep.subr.mxu0 0.0
    %494 = vmatpush2.msra.mxu0 0.0
    %495 = vmatprep.subr.mxu0 0.0
    %496 = vmatpush2.msra.mxu0 0.0
    %497 = vmatprep.subr.mxu0 0.0
    %498 = vmatpush2.msra.mxu0 0.0
    %499 = vmatprep.subr.mxu0 0.0
    %500 = vmatpush2.msra.mxu0 0.0
    %501 = vmatprep.subr.mxu0 0.0
    %502 = vmatpush2.msra.mxu0 0.0
    %503 = vmatprep.subr.mxu0 0.0
    %504 = vmatpush2.msra.mxu0 0.0
    %505 = vmatprep.subr.mxu0 0.0
    %506 = vmatpush2.msra.mxu0 0.0
    %507 = vmatprep.subr.mxu0 0.0
    %508 = vmatpush2.msra.mxu0 0.0
    %509 = vmatprep.subr.mxu0 0.0
    %510 = vmatpush2.msra.mxu0 0.0
    %511 = vmatprep.subr.mxu0 0.0
    %512 = vmatpush2.msra.mxu0 0.0
    %513 = vmatprep.subr.mxu0 0.0
    %514 = vmatpush2.msra.mxu0 0.0
    %515 = vmatprep.mubr.f32.mxu0 0.0
    %516 = vmatmul.mubr.f32.gmra.mxu0 %v449
    %v517 = vpop.f32.mrf.mxu0
    %v518 = vadd.f32 0.0, %v517
    %v519 = vpop.f32.mrf.mxu0
    %520 = vdwg.mxu0
    %v521 = vadd.f32 %v447, %v518
    %522 = vst [vmem:[%s6] sm:$0xff] %v521
    %v523 = vld [vmem:[%s7] sm:$0xff]
    %v524 = vmul.f32 %v399, %v399
    %v525 = vmul.f32 %v400, %v400
    %v526 = vmul.f32 %v401, %v401
    %v527 = vmul.f32 %v402, %v402
    %v528 = vmul.f32 %v403, %v403
    %v529 = vmul.f32 %v404, %v404
    %v530 = vmul.f32 %v405, %v405
    %v531 = vmul.f32 %v406, %v406
    %532 = vmatprep.subr.mxu0 0.0
    %533 = vmatpush1.msra.mxu0 0.0
    %534 = vmatprep.subr.mxu0 0.0
    %535 = vmatpush1.msra.mxu0 0.0
    %536 = vmatprep.subr.mxu0 0.0
    %537 = vmatpush1.msra.mxu0 0.0
    %538 = vmatprep.subr.mxu0 0.0
    %539 = vmatpush1.msra.mxu0 0.0
    %540 = vmatprep.subr.mxu0 0.0
    %541 = vmatpush1.msra.mxu0 0.0
    %542 = vmatprep.subr.mxu0 0.0
    %543 = vmatpush1.msra.mxu0 0.0
    %544 = vmatprep.subr.mxu0 0.0
    %545 = vmatpush1.msra.mxu0 0.0
    %546 = vmatprep.subr.mxu0 0.0
    %547 = vmatpush1.msra.mxu0 0.0
    %548 = vmatprep.subr.mxu0 0.0
    %549 = vmatpush1.msra.mxu0 %v531
    %550 = vmatprep.subr.mxu0 0.0
    %551 = vmatpush1.msra.mxu0 %v530
    %552 = vmatprep.subr.mxu0 0.0
    %553 = vmatpush1.msra.mxu0 %v529
    %554 = vmatprep.subr.mxu0 0.0
    %555 = vmatpush1.msra.mxu0 %v528
    %556 = vmatprep.subr.mxu0 0.0
    %557 = vmatpush1.msra.mxu0 %v527
    %558 = vmatprep.subr.mxu0 0.0
    %559 = vmatpush1.msra.mxu0 %v526
    %560 = vmatprep.subr.mxu0 0.0
    %561 = vmatpush1.msra.mxu0 %v525
    %562 = vmatprep.subr.mxu0 0.0
    %563 = vmatpush1.msra.mxu0 %v524
    %564 = vmatprep.subr.mxu0 0.0
    %565 = vmatpush2.msra.mxu0 0.0
    %566 = vmatprep.subr.mxu0 0.0
    %567 = vmatpush2.msra.mxu0 0.0
    %568 = vmatprep.subr.mxu0 0.0
    %569 = vmatpush2.msra.mxu0 0.0
    %570 = vmatprep.subr.mxu0 0.0
    %571 = vmatpush2.msra.mxu0 0.0
    %572 = vmatprep.subr.mxu0 0.0
    %573 = vmatpush2.msra.mxu0 0.0
    %574 = vmatprep.subr.mxu0 0.0
    %575 = vmatpush2.msra.mxu0 0.0
    %576 = vmatprep.subr.mxu0 0.0
    %577 = vmatpush2.msra.mxu0 0.0
    %578 = vmatprep.subr.mxu0 0.0
    %579 = vmatpush2.msra.mxu0 0.0
    %580 = vmatprep.subr.mxu0 0.0
    %581 = vmatpush2.msra.mxu0 0.0
    %582 = vmatprep.subr.mxu0 0.0
    %583 = vmatpush2.msra.mxu0 0.0
    %584 = vmatprep.subr.mxu0 0.0
    %585 = vmatpush2.msra.mxu0 0.0
    %586 = vmatprep.subr.mxu0 0.0
    %587 = vmatpush2.msra.mxu0 0.0
    %588 = vmatprep.subr.mxu0 0.0
    %589 = vmatpush2.msra.mxu0 0.0
    %590 = vmatprep.subr.mxu0 0.0
    %591 = vmatpush2.msra.mxu0 0.0
    %592 = vmatprep.subr.mxu0 0.0
    %593 = vmatpush2.msra.mxu0 0.0
    %594 = vmatprep.subr.mxu0 0.0
    %595 = vmatpush2.msra.mxu0 0.0
    %596 = vmatprep.mubr.f32.mxu0 0.0
    %597 = vmatmul.mubr.f32.gmra.mxu0 %v449
    %v598 = vpop.f32.mrf.mxu0
    %v599 = vadd.f32 0.0, %v598
    %v600 = vpop.f32.mrf.mxu0
    %601 = vdwg.mxu0
    %v602 = vadd.f32 %v523, %v599
    %603 = vst [vmem:[%s7] sm:$0xff] %v602
    %s604 = sadd.s32 0, 0
    %s605 = smul.u32 8, %s604
    %p606 = scmp.lt.s32.totalorder %s605, 7
    %s607 = scalar_select %p606, %s605, 7
    %s608 = smul.addr %s607, 4
    %s609 = scalar_lea.vmem %s5, %s608
    // Predicated region
    $region34: #{input_tnet_forward.6} parent=1 // pred_check
      _
    $region35: #{input_tnet_forward.6} parent=1 // pred_check_branch
      %611 = sbr.rel (0) target = $region37
    $region36: #{input_tnet_forward.6} parent=1 // pred_region
      %s612 = sadd.s32 0, 0
      %s613 = smul.u32 8, %s612
    $region37: #{input_tnet_forward.6} parent=1 // pred_fallthru
      _
    // Predicated region
    $region38: #{input_tnet_forward.6} parent=1 // pred_check
      _
    $region39: #{input_tnet_forward.6} parent=1 // pred_check_branch
      %615 = sbr.rel (0) target = $region41
    $region40: #{input_tnet_forward.6} parent=1 // pred_region
      _
    $region41: #{input_tnet_forward.6} parent=1 // pred_fallthru
      _
    // Predicated region
    $region42: #{input_tnet_forward.6} parent=1 // pred_check
      _
    $region43: #{input_tnet_forward.6} parent=1 // pred_check_branch
      %617 = sbr.rel (0) target = $region45
    $region44: #{input_tnet_forward.6} parent=1 // pred_region
      _
    $region45: #{input_tnet_forward.6} parent=1 // pred_fallthru
      _
    // Predicated region
    $region46: #{input_tnet_forward.6} parent=1 // pred_check
      _
    $region47: #{input_tnet_forward.6} parent=1 // pred_check_branch
      %619 = sbr.rel (0) target = $region49
    $region48: #{input_tnet_forward.6} parent=1 // pred_region
      %s620 = sadd.s32 0, 0
      %s621 = smul.u32 8, %s620
      %p622 = scmp.lt.s32.totalorder %s621, 7
      %s623 = scalar_select %p622, %s621, 7
      %s624 = smul.addr %s623, 4
      %s625 = scalar_lea.vmem %s5, %s624
    $region49: #{input_tnet_forward.6} parent=1 // pred_fallthru
      _
    // Predicated region
    $region50: #{input_tnet_forward.6} parent=1 // pred_check
      _
    $region51: #{input_tnet_forward.6} parent=1 // pred_check_branch
      %627 = sbr.rel (0) target = $region53
    $region52: #{input_tnet_forward.6} parent=1 // pred_region
      _
    $region53: #{input_tnet_forward.6} parent=1 // pred_fallthru
      _
    // Predicated region
    $region54: #{input_tnet_forward.6} parent=1 // pred_check
      _
    $region55: #{input_tnet_forward.6} parent=1 // pred_check_branch
      %629 = sbr.rel (0) target = $region57
    $region56: #{input_tnet_forward.6} parent=1 // pred_region
      _
    $region57: #{input_tnet_forward.6} parent=1 // pred_fallthru
      _
    %630 = vsyncpa [#allocation3], 1
    %631 = vsyncpa [#allocation5], 1

// kernel: input_tnet_forward.7
$region0: #{input_tnet_forward.7}
  #allocation0 [shape = 'u32[]', space=smem, size = 0x4, offset = 0x4, fixed_abs, tag = 'smem constant byte address 0x4 - core index']
  #allocation1 [shape = 'u32[144,128]{1,0:T(1,128)}', space=vmem, size = 0x12000, scoped, tag = 'internal scratch']
  %s0 = inlined_call_operand.vmem [shape: bf16[64,128], index: 0, kind: input, shape index: {}]
  %s1 = inlined_call_operand.vmem [shape: bf16[128,1024], index: 1, kind: input, shape index: {}]
  %s2 = inlined_call_operand.vmem [shape: f32[1,1024], index: 2, kind: input, shape index: {}]
  %s3 = inlined_call_operand.vmem [shape: bf16[64,1024], index: 3, kind: output, shape index: {0}]
  %s4 = inlined_call_operand.vmem [shape: f32[8,1024], index: 4, kind: output, shape index: {1}]
  %s5 = inlined_call_operand.vmem [shape: f32[8,1024], index: 5, kind: output, shape index: {2}]
  %6 = xla_tuple %s3, %s4, %s5
  %s7 = sld [smem:[#allocation0]]
  $region42: #{input_tnet_forward.7} parent=0
    _
  %s9 = ssub.s32 1, %s7
  %s10 = scalar_select 0, %s9, %s7
  // Predicated region
  $region2: #{input_tnet_forward.7} parent=0 // pred_check
    _
  $region3: #{input_tnet_forward.7} parent=0 // pred_check_branch
    %12 = sbr.rel (0) target = $region5
  $region4: #{input_tnet_forward.7} parent=0 // pred_region
    %s13 = sadd.s32 0, 0
    %s14 = smul.u32 8, %s13
    %p15 = scmp.lt.s32.totalorder %s14, 7
    %s16 = scalar_select %p15, %s14, 7
    %s17 = smul.addr %s16, 4
    %s18 = scalar_lea.vmem %s0, %s17
    %s19 = sadd.s32 0, 0
    %s20 = smul.u32 8, %s19
  $region5: #{input_tnet_forward.7} parent=0 // pred_fallthru
    _
  // Predicated region
  $region6: #{input_tnet_forward.7} parent=0 // pred_check
    _
  $region7: #{input_tnet_forward.7} parent=0 // pred_check_branch
    %22 = sbr.rel (0) target = $region9
  $region8: #{input_tnet_forward.7} parent=0 // pred_region
    _
  $region9: #{input_tnet_forward.7} parent=0 // pred_fallthru
    _
  // Predicated region
  $region10: #{input_tnet_forward.7} parent=0 // pred_check
    _
  $region11: #{input_tnet_forward.7} parent=0 // pred_check_branch
    %24 = sbr.rel (0) target = $region13
  $region12: #{input_tnet_forward.7} parent=0 // pred_region
    _
  $region13: #{input_tnet_forward.7} parent=0 // pred_fallthru
    _
  %s25 = sadd.s32 0, 0
  %s26 = smul.u32 8, %s25
  %p27 = scmp.lt.s32.totalorder %s26, 7
  %s28 = scalar_select %p27, %s26, 7
  %s29 = smul.addr %s28, 4
  %s30 = scalar_lea.vmem %s0, %s29
  %s31 = sadd.s32 0, 0
  %s32 = smul.u32 8, %s31
  %p33 = scmp.lt.s32.totalorder %s32, 7
  %s34 = scalar_select %p33, %s32, 7
  %s35 = smul.addr %s34, 8
  %s36 = smul.addr %s35, 4
  %s37 = scalar_lea.vmem %s3, %s36
  %s38 = sadd.s32 0, 0
  %s39 = smul.u32 8, %s38
  %p40 = scmp.lt.s32.totalorder %s39, 7
  %s41 = scalar_select %p40, %s39, 7
  %s42 = smul.addr %s41, 4
  %s43 = scalar_lea.vmem %s0, %s42
  %s44 = sadd.s32 0, 0
  %s45 = smul.u32 8, %s44
  %s46 = sadd.s32 0, 0
  %s47 = smul.u32 8, %s46
  %p48 = scmp.lt.s32.totalorder %s47, 7
  %s49 = scalar_select %p48, %s47, 7
  %s50 = smul.addr %s49, 8
  %s51 = smul.addr %s50, 4
  %s52 = scalar_lea.vmem %s3, %s51
  %s53 = sadd.s32 0, 0
  %s54 = smul.u32 8, %s53
  %p56 = scmp.eq.s32.totalorder 0, 0
  // Predicated region
  $region14: #{input_tnet_forward.7} parent=0 // pred_check
    %p57 = pneg %p56
  $region15: #{input_tnet_forward.7} parent=0 // pred_check_branch
    %59 = sbr.rel (%p57) target = $region17
  $region16: #{input_tnet_forward.7} parent=0 // pred_region
    %60 = vst [vmem:[%s4] sm:$0xff] 0.0
    %61 = vst [vmem:[%s4 + $0x8] sm:$0xff] 0.0
    %62 = vst [vmem:[%s4 + $0x10] sm:$0xff] 0.0
    %63 = vst [vmem:[%s4 + $0x18] sm:$0xff] 0.0
    %64 = vst [vmem:[%s4 + $0x20] sm:$0xff] 0.0
    %65 = vst [vmem:[%s4 + $0x28] sm:$0xff] 0.0
    %66 = vst [vmem:[%s4 + $0x30] sm:$0xff] 0.0
    %67 = vst [vmem:[%s4 + $0x38] sm:$0xff] 0.0
    %68 = vst [vmem:[%s5] sm:$0xff] 0.0
    %69 = vst [vmem:[%s5 + $0x8] sm:$0xff] 0.0
    %70 = vst [vmem:[%s5 + $0x10] sm:$0xff] 0.0
    %71 = vst [vmem:[%s5 + $0x18] sm:$0xff] 0.0
    %72 = vst [vmem:[%s5 + $0x20] sm:$0xff] 0.0
    %73 = vst [vmem:[%s5 + $0x28] sm:$0xff] 0.0
    %74 = vst [vmem:[%s5 + $0x30] sm:$0xff] 0.0
    %75 = vst [vmem:[%s5 + $0x38] sm:$0xff] 0.0
  $region17: #{input_tnet_forward.7} parent=0 // pred_fallthru
    _
  %v76 = vld [vmem:[%s43] sm:$0xf]
  %v77 = vld [vmem:[%s43 + $0x4] sm:$0xf]
  %v78 = vld [vmem:[%s43 + $0x8] sm:$0xf]
  %v79 = vld [vmem:[%s43 + $0xc] sm:$0xf]
  %v80 = vld [vmem:[%s43 + $0x10] sm:$0xf]
  %v81 = vld [vmem:[%s43 + $0x14] sm:$0xf]
  %v82 = vld [vmem:[%s43 + $0x18] sm:$0xf]
  %v83 = vld [vmem:[%s43 + $0x1c] sm:$0xf]
  %v84 = vld [vmem:[%s1] sm:$0xff]
  %v85 = vld [vmem:[%s1 + $0x8] sm:$0xff]
  %v86 = vld [vmem:[%s1 + $0x10] sm:$0xff]
  %v87 = vld [vmem:[%s1 + $0x18] sm:$0xff]
  %v88 = vld [vmem:[%s1 + $0x20] sm:$0xff]
  %v89 = vld [vmem:[%s1 + $0x28] sm:$0xff]
  %v90 = vld [vmem:[%s1 + $0x30] sm:$0xff]
  %v91 = vld [vmem:[%s1 + $0x38] sm:$0xff]
  %v92 = vld [vmem:[%s1 + $0x40] sm:$0xff]
  %v93 = vld [vmem:[%s1 + $0x48] sm:$0xff]
  %v94 = vld [vmem:[%s1 + $0x50] sm:$0xff]
  %v95 = vld [vmem:[%s1 + $0x58] sm:$0xff]
  %v96 = vld [vmem:[%s1 + $0x60] sm:$0xff]
  %v97 = vld [vmem:[%s1 + $0x68] sm:$0xff]
  %v98 = vld [vmem:[%s1 + $0x70] sm:$0xff]
  %v99 = vld [vmem:[%s1 + $0x78] sm:$0xff]
  %v100 = vld [vmem:[%s1 + $0x80] sm:$0xff]
  %v101 = vld [vmem:[%s1 + $0x88] sm:$0xff]
  %v102 = vld [vmem:[%s1 + $0x90] sm:$0xff]
  %v103 = vld [vmem:[%s1 + $0x98] sm:$0xff]
  %v104 = vld [vmem:[%s1 + $0xa0] sm:$0xff]
  %v105 = vld [vmem:[%s1 + $0xa8] sm:$0xff]
  %v106 = vld [vmem:[%s1 + $0xb0] sm:$0xff]
  %v107 = vld [vmem:[%s1 + $0xb8] sm:$0xff]
  %v108 = vld [vmem:[%s1 + $0xc0] sm:$0xff]
  %v109 = vld [vmem:[%s1 + $0xc8] sm:$0xff]
  %v110 = vld [vmem:[%s1 + $0xd0] sm:$0xff]
  %v111 = vld [vmem:[%s1 + $0xd8] sm:$0xff]
  %v112 = vld [vmem:[%s1 + $0xe0] sm:$0xff]
  %v113 = vld [vmem:[%s1 + $0xe8] sm:$0xff]
  %v114 = vld [vmem:[%s1 + $0xf0] sm:$0xff]
  %v115 = vld [vmem:[%s1 + $0xf8] sm:$0xff]
  %v116 = vld [vmem:[%s1 + $0x100] sm:$0xff]
  %v117 = vld [vmem:[%s1 + $0x108] sm:$0xff]
  %v118 = vld [vmem:[%s1 + $0x110] sm:$0xff]
  %v119 = vld [vmem:[%s1 + $0x118] sm:$0xff]
  %v120 = vld [vmem:[%s1 + $0x120] sm:$0xff]
  %v121 = vld [vmem:[%s1 + $0x128] sm:$0xff]
  %v122 = vld [vmem:[%s1 + $0x130] sm:$0xff]
  %v123 = vld [vmem:[%s1 + $0x138] sm:$0xff]
  %v124 = vld [vmem:[%s1 + $0x140] sm:$0xff]
  %v125 = vld [vmem:[%s1 + $0x148] sm:$0xff]
  %v126 = vld [vmem:[%s1 + $0x150] sm:$0xff]
  %v127 = vld [vmem:[%s1 + $0x158] sm:$0xff]
  %v128 = vld [vmem:[%s1 + $0x160] sm:$0xff]
  %v129 = vld [vmem:[%s1 + $0x168] sm:$0xff]
  %v130 = vld [vmem:[%s1 + $0x170] sm:$0xff]
  %v131 = vld [vmem:[%s1 + $0x178] sm:$0xff]
  %v132 = vld [vmem:[%s1 + $0x180] sm:$0xff]
  %v133 = vld [vmem:[%s1 + $0x188] sm:$0xff]
  %v134 = vld [vmem:[%s1 + $0x190] sm:$0xff]
  %v135 = vld [vmem:[%s1 + $0x198] sm:$0xff]
  %v136 = vld [vmem:[%s1 + $0x1a0] sm:$0xff]
  %v137 = vld [vmem:[%s1 + $0x1a8] sm:$0xff]
  %v138 = vld [vmem:[%s1 + $0x1b0] sm:$0xff]
  %v139 = vld [vmem:[%s1 + $0x1b8] sm:$0xff]
  %v140 = vld [vmem:[%s1 + $0x1c0] sm:$0xff]
  %v141 = vld [vmem:[%s1 + $0x1c8] sm:$0xff]
  %v142 = vld [vmem:[%s1 + $0x1d0] sm:$0xff]
  %v143 = vld [vmem:[%s1 + $0x1d8] sm:$0xff]
  %v144 = vld [vmem:[%s1 + $0x1e0] sm:$0xff]
  %v145 = vld [vmem:[%s1 + $0x1e8] sm:$0xff]
  %v146 = vld [vmem:[%s1 + $0x1f0] sm:$0xff]
  %v147 = vld [vmem:[%s1 + $0x1f8] sm:$0xff]
  %v148 = vld [vmem:[%s2] sm:$0xff]
  %v150 = vlaneseq
  %v151 = vshrl.u32 %v150, 7
  %v152 = vsub.s32 0, %v151
  %v153 = vrot.slane %v148, %v152
  %v154 = vlaneseq
  %v155 = vshrl.u32 %v154, 7
  %v156 = vsub.s32 1, %v155
  %v157 = vrot.slane %v148, %v156
  %v158 = vlaneseq
  %v159 = vshrl.u32 %v158, 7
  %v160 = vsub.s32 2, %v159
  %v161 = vrot.slane %v148, %v160
  %v162 = vlaneseq
  %v163 = vshrl.u32 %v162, 7
  %v164 = vsub.s32 3, %v163
  %v165 = vrot.slane %v148, %v164
  %v166 = vlaneseq
  %v167 = vshrl.u32 %v166, 7
  %v168 = vsub.s32 4, %v167
  %v169 = vrot.slane %v148, %v168
  %v170 = vlaneseq
  %v171 = vshrl.u32 %v170, 7
  %v172 = vsub.s32 5, %v171
  %v173 = vrot.slane %v148, %v172
  %v174 = vlaneseq
  %v175 = vshrl.u32 %v174, 7
  %v176 = vsub.s32 6, %v175
  %v177 = vrot.slane %v148, %v176
  %v178 = vlaneseq
  %v179 = vshrl.u32 %v178, 7
  %v180 = vsub.s32 7, %v179
  %v181 = vrot.slane %v148, %v180
  %v198 = vunpack.c.l.b16 %v76
  %v199 = vunpack.c.l.b16 %v77
  %v200 = vunpack.c.l.b16 %v78
  %v201 = vunpack.c.l.b16 %v79
  %v202 = vunpack.c.l.b16 %v80
  %v203 = vunpack.c.l.b16 %v81
  %v204 = vunpack.c.l.b16 %v82
  %v205 = vunpack.c.l.b16 %v83
  %v206 = vpack.c.b16 %v199, %v198
  %v207 = vpack.c.b16 %v201, %v200
  %v208 = vpack.c.b16 %v203, %v202
  %v209 = vpack.c.b16 %v205, %v204
  %v278 = vunpack.c.l.b16 %v84
  %v279 = vunpack.c.h.b16 %v84
  %v280 = vunpack.c.l.b16 %v85
  %v281 = vunpack.c.h.b16 %v85
  %v282 = vunpack.c.l.b16 %v86
  %v283 = vunpack.c.h.b16 %v86
  %v284 = vunpack.c.l.b16 %v87
  %v285 = vunpack.c.h.b16 %v87
  %v286 = vunpack.c.l.b16 %v88
  %v287 = vunpack.c.h.b16 %v88
  %v288 = vunpack.c.l.b16 %v89
  %v289 = vunpack.c.h.b16 %v89
  %v290 = vunpack.c.l.b16 %v90
  %v291 = vunpack.c.h.b16 %v90
  %v292 = vunpack.c.l.b16 %v91
  %v293 = vunpack.c.h.b16 %v91
  %v294 = vunpack.c.l.b16 %v92
  %v295 = vunpack.c.h.b16 %v92
  %v296 = vunpack.c.l.b16 %v93
  %v297 = vunpack.c.h.b16 %v93
  %v298 = vunpack.c.l.b16 %v94
  %v299 = vunpack.c.h.b16 %v94
  %v300 = vunpack.c.l.b16 %v95
  %v301 = vunpack.c.h.b16 %v95
  %v302 = vunpack.c.l.b16 %v96
  %v303 = vunpack.c.h.b16 %v96
  %v304 = vunpack.c.l.b16 %v97
  %v305 = vunpack.c.h.b16 %v97
  %v306 = vunpack.c.l.b16 %v98
  %v307 = vunpack.c.h.b16 %v98
  %v308 = vunpack.c.l.b16 %v99
  %v309 = vunpack.c.h.b16 %v99
  %v310 = vunpack.c.l.b16 %v100
  %v311 = vunpack.c.h.b16 %v100
  %v312 = vunpack.c.l.b16 %v101
  %v313 = vunpack.c.h.b16 %v101
  %v314 = vunpack.c.l.b16 %v102
  %v315 = vunpack.c.h.b16 %v102
  %v316 = vunpack.c.l.b16 %v103
  %v317 = vunpack.c.h.b16 %v103
  %v318 = vunpack.c.l.b16 %v104
  %v319 = vunpack.c.h.b16 %v104
  %v320 = vunpack.c.l.b16 %v105
  %v321 = vunpack.c.h.b16 %v105
  %v322 = vunpack.c.l.b16 %v106
  %v323 = vunpack.c.h.b16 %v106
  %v324 = vunpack.c.l.b16 %v107
  %v325 = vunpack.c.h.b16 %v107
  %v326 = vunpack.c.l.b16 %v108
  %v327 = vunpack.c.h.b16 %v108
  %v328 = vunpack.c.l.b16 %v109
  %v329 = vunpack.c.h.b16 %v109
  %v330 = vunpack.c.l.b16 %v110
  %v331 = vunpack.c.h.b16 %v110
  %v332 = vunpack.c.l.b16 %v111
  %v333 = vunpack.c.h.b16 %v111
  %v334 = vunpack.c.l.b16 %v112
  %v335 = vunpack.c.h.b16 %v112
  %v336 = vunpack.c.l.b16 %v113
  %v337 = vunpack.c.h.b16 %v113
  %v338 = vunpack.c.l.b16 %v114
  %v339 = vunpack.c.h.b16 %v114
  %v340 = vunpack.c.l.b16 %v115
  %v341 = vunpack.c.h.b16 %v115
  %v342 = vunpack.c.l.b16 %v116
  %v343 = vunpack.c.h.b16 %v116
  %v344 = vunpack.c.l.b16 %v117
  %v345 = vunpack.c.h.b16 %v117
  %v346 = vunpack.c.l.b16 %v118
  %v347 = vunpack.c.h.b16 %v118
  %v348 = vunpack.c.l.b16 %v119
  %v349 = vunpack.c.h.b16 %v119
  %v350 = vunpack.c.l.b16 %v120
  %v351 = vunpack.c.h.b16 %v120
  %v352 = vunpack.c.l.b16 %v121
  %v353 = vunpack.c.h.b16 %v121
  %v354 = vunpack.c.l.b16 %v122
  %v355 = vunpack.c.h.b16 %v122
  %v356 = vunpack.c.l.b16 %v123
  %v357 = vunpack.c.h.b16 %v123
  %v358 = vunpack.c.l.b16 %v124
  %v359 = vunpack.c.h.b16 %v124
  %v360 = vunpack.c.l.b16 %v125
  %v361 = vunpack.c.h.b16 %v125
  %v362 = vunpack.c.l.b16 %v126
  %v363 = vunpack.c.h.b16 %v126
  %v364 = vunpack.c.l.b16 %v127
  %v365 = vunpack.c.h.b16 %v127
  %v366 = vunpack.c.l.b16 %v128
  %v367 = vunpack.c.h.b16 %v128
  %v368 = vunpack.c.l.b16 %v129
  %v369 = vunpack.c.h.b16 %v129
  %v370 = vunpack.c.l.b16 %v130
  %v371 = vunpack.c.h.b16 %v130
  %v372 = vunpack.c.l.b16 %v131
  %v373 = vunpack.c.h.b16 %v131
  %v374 = vunpack.c.l.b16 %v132
  %v375 = vunpack.c.h.b16 %v132
  %v376 = vunpack.c.l.b16 %v133
  %v377 = vunpack.c.h.b16 %v133
  %v378 = vunpack.c.l.b16 %v134
  %v379 = vunpack.c.h.b16 %v134
  %v380 = vunpack.c.l.b16 %v135
  %v381 = vunpack.c.h.b16 %v135
  %v382 = vunpack.c.l.b16 %v136
  %v383 = vunpack.c.h.b16 %v136
  %v384 = vunpack.c.l.b16 %v137
  %v385 = vunpack.c.h.b16 %v137
  %v386 = vunpack.c.l.b16 %v138
  %v387 = vunpack.c.h.b16 %v138
  %v388 = vunpack.c.l.b16 %v139
  %v389 = vunpack.c.h.b16 %v139
  %v390 = vunpack.c.l.b16 %v140
  %v391 = vunpack.c.h.b16 %v140
  %v392 = vunpack.c.l.b16 %v141
  %v393 = vunpack.c.h.b16 %v141
  %v394 = vunpack.c.l.b16 %v142
  %v395 = vunpack.c.h.b16 %v142
  %v396 = vunpack.c.l.b16 %v143
  %v397 = vunpack.c.h.b16 %v143
  %v398 = vunpack.c.l.b16 %v144
  %v399 = vunpack.c.h.b16 %v144
  %v400 = vunpack.c.l.b16 %v145
  %v401 = vunpack.c.h.b16 %v145
  %v402 = vunpack.c.l.b16 %v146
  %v403 = vunpack.c.h.b16 %v146
  %v404 = vunpack.c.l.b16 %v147
  %v405 = vunpack.c.h.b16 %v147
  %v406 = vpack.c.b16 %v286, %v278
  %v407 = vpack.c.b16 %v287, %v279
  %v408 = vpack.c.b16 %v288, %v280
  %v409 = vpack.c.b16 %v289, %v281
  %v410 = vpack.c.b16 %v290, %v282
  %v411 = vpack.c.b16 %v291, %v283
  %v412 = vpack.c.b16 %v292, %v284
  %v413 = vpack.c.b16 %v293, %v285
  %v414 = vpack.c.b16 %v302, %v294
  %v415 = vpack.c.b16 %v303, %v295
  %v416 = vpack.c.b16 %v304, %v296
  %v417 = vpack.c.b16 %v305, %v297
  %v418 = vpack.c.b16 %v306, %v298
  %v419 = vpack.c.b16 %v307, %v299
  %v420 = vpack.c.b16 %v308, %v300
  %v421 = vpack.c.b16 %v309, %v301
  %v422 = vpack.c.b16 %v318, %v310
  %v423 = vpack.c.b16 %v319, %v311
  %v424 = vpack.c.b16 %v320, %v312
  %v425 = vpack.c.b16 %v321, %v313
  %v426 = vpack.c.b16 %v322, %v314
  %v427 = vpack.c.b16 %v323, %v315
  %v428 = vpack.c.b16 %v324, %v316
  %v429 = vpack.c.b16 %v325, %v317
  %v430 = vpack.c.b16 %v334, %v326
  %v431 = vpack.c.b16 %v335, %v327
  %v432 = vpack.c.b16 %v336, %v328
  %v433 = vpack.c.b16 %v337, %v329
  %v434 = vpack.c.b16 %v338, %v330
  %v435 = vpack.c.b16 %v339, %v331
  %v436 = vpack.c.b16 %v340, %v332
  %v437 = vpack.c.b16 %v341, %v333
  %v438 = vpack.c.b16 %v350, %v342
  %v439 = vpack.c.b16 %v351, %v343
  %v440 = vpack.c.b16 %v352, %v344
  %v441 = vpack.c.b16 %v353, %v345
  %v442 = vpack.c.b16 %v354, %v346
  %v443 = vpack.c.b16 %v355, %v347
  %v444 = vpack.c.b16 %v356, %v348
  %v445 = vpack.c.b16 %v357, %v349
  %v446 = vpack.c.b16 %v366, %v358
  %v447 = vpack.c.b16 %v367, %v359
  %v448 = vpack.c.b16 %v368, %v360
  %v449 = vpack.c.b16 %v369, %v361
  %v450 = vpack.c.b16 %v370, %v362
  %v451 = vpack.c.b16 %v371, %v363
  %v452 = vpack.c.b16 %v372, %v364
  %v453 = vpack.c.b16 %v373, %v365
  %v454 = vpack.c.b16 %v382, %v374
  %v455 = vpack.c.b16 %v383, %v375
  %v456 = vpack.c.b16 %v384, %v376
  %v457 = vpack.c.b16 %v385, %v377
  %v458 = vpack.c.b16 %v386, %v378
  %v459 = vpack.c.b16 %v387, %v379
  %v460 = vpack.c.b16 %v388, %v380
  %v461 = vpack.c.b16 %v389, %v381
  %v462 = vpack.c.b16 %v398, %v390
  %v463 = vpack.c.b16 %v399, %v391
  %v464 = vpack.c.b16 %v400, %v392
  %v465 = vpack.c.b16 %v401, %v393
  %v466 = vpack.c.b16 %v402, %v394
  %v467 = vpack.c.b16 %v403, %v395
  %v468 = vpack.c.b16 %v404, %v396
  %v469 = vpack.c.b16 %v405, %v397
  %534 = vmatprep.subr.bf16.mxu0 %v463
  %535 = vmatpush1.bf16.msra.mxu0 %v462
  %536 = vmatprep.subr.bf16.mxu0 %v455
  %537 = vmatpush1.bf16.msra.mxu0 %v454
  %538 = vmatprep.subr.bf16.mxu0 %v447
  %539 = vmatpush1.bf16.msra.mxu0 %v446
  %540 = vmatprep.subr.bf16.mxu0 %v439
  %541 = vmatpush1.bf16.msra.mxu0 %v438
  %542 = vmatprep.subr.bf16.mxu0 %v431
  %543 = vmatpush1.bf16.msra.mxu0 %v430
  %544 = vmatprep.subr.bf16.mxu0 %v423
  %545 = vmatpush1.bf16.msra.mxu0 %v422
  %546 = vmatprep.subr.bf16.mxu0 %v415
  %547 = vmatpush1.bf16.msra.mxu0 %v414
  %548 = vmatprep.subr.bf16.mxu0 %v407
  %549 = vmatpush1.bf16.msra.mxu0 %v406
  %550 = vmatprep.subr.bf16.mxu0 0
  %551 = vmatpush2.bf16.msra.mxu0 0
  %552 = vmatprep.subr.bf16.mxu0 0
  %553 = vmatpush2.bf16.msra.mxu0 0
  %554 = vmatprep.subr.bf16.mxu0 0
  %555 = vmatpush2.bf16.msra.mxu0 0
  %556 = vmatprep.subr.bf16.mxu0 0
  %557 = vmatpush2.bf16.msra.mxu0 0
  %558 = vmatprep.subr.bf16.mxu0 0
  %559 = vmatpush2.bf16.msra.mxu0 0
  %560 = vmatprep.subr.bf16.mxu0 0
  %561 = vmatpush2.bf16.msra.mxu0 0
  %562 = vmatprep.subr.bf16.mxu0 0
  %563 = vmatpush2.bf16.msra.mxu0 0
  %564 = vmatprep.subr.bf16.mxu0 0
  %565 = vmatpush2.bf16.msra.mxu0 0
  %566 = vmatprep.mubr.bf16.mxu0 0
  %567 = vmatmul.mubr.bf16.gmra.mxu0 %v206
  %v568 = vpop.f32.mrf.mxu0
  %v569 = vadd.f32 %v153, %v568
  %v570 = vpop.f32.mrf.mxu0
  %v571 = vadd.f32 %v157, %v570
  %v572 = vpop.f32.mrf.mxu0
  %v573 = vadd.f32 %v153, %v572
  %v574 = vpop.f32.mrf.mxu0
  %v575 = vadd.f32 %v157, %v574
  %576 = vmatprep.mubr.bf16.mxu0 0
  %577 = vmatmul.mubr.bf16.gmra.mxu0 %v207
  %v578 = vpop.f32.mrf.mxu0
  %v579 = vadd.f32 %v153, %v578
  %v580 = vpop.f32.mrf.mxu0
  %v581 = vadd.f32 %v157, %v580
  %v582 = vpop.f32.mrf.mxu0
  %v583 = vadd.f32 %v153, %v582
  %v584 = vpop.f32.mrf.mxu0
  %v585 = vadd.f32 %v157, %v584
  %586 = vmatprep.mubr.bf16.mxu0 0
  %587 = vmatmul.mubr.bf16.gmra.mxu0 %v208
  %v588 = vpop.f32.mrf.mxu0
  %v589 = vadd.f32 %v153, %v588
  %v590 = vpop.f32.mrf.mxu0
  %v591 = vadd.f32 %v157, %v590
  %v592 = vpop.f32.mrf.mxu0
  %v593 = vadd.f32 %v153, %v592
  %v594 = vpop.f32.mrf.mxu0
  %v595 = vadd.f32 %v157, %v594
  %596 = vmatprep.mubr.bf16.mxu0 0
  %597 = vmatmul.mubr.bf16.gmra.mxu0 %v209
  %v598 = vpop.f32.mrf.mxu0
  %v599 = vadd.f32 %v153, %v598
  %v600 = vpop.f32.mrf.mxu0
  %v601 = vadd.f32 %v157, %v600
  %v602 = vpop.f32.mrf.mxu0
  %v603 = vadd.f32 %v153, %v602
  %v604 = vpop.f32.mrf.mxu0
  %v605 = vadd.f32 %v157, %v604
  %606 = vdwg.mxu0
  %607 = vmatprep.subr.bf16.mxu0 %v465
  %608 = vmatpush1.bf16.msra.mxu0 %v464
  %609 = vmatprep.subr.bf16.mxu0 %v457
  %610 = vmatpush1.bf16.msra.mxu0 %v456
  %611 = vmatprep.subr.bf16.mxu0 %v449
  %612 = vmatpush1.bf16.msra.mxu0 %v448
  %613 = vmatprep.subr.bf16.mxu0 %v441
  %614 = vmatpush1.bf16.msra.mxu0 %v440
  %615 = vmatprep.subr.bf16.mxu0 %v433
  %616 = vmatpush1.bf16.msra.mxu0 %v432
  %617 = vmatprep.subr.bf16.mxu0 %v425
  %618 = vmatpush1.bf16.msra.mxu0 %v424
  %619 = vmatprep.subr.bf16.mxu0 %v417
  %620 = vmatpush1.bf16.msra.mxu0 %v416
  %621 = vmatprep.subr.bf16.mxu0 %v409
  %622 = vmatpush1.bf16.msra.mxu0 %v408
  %623 = vmatprep.subr.bf16.mxu0 0
  %624 = vmatpush2.bf16.msra.mxu0 0
  %625 = vmatprep.subr.bf16.mxu0 0
  %626 = vmatpush2.bf16.msra.mxu0 0
  %627 = vmatprep.subr.bf16.mxu0 0
  %628 = vmatpush2.bf16.msra.mxu0 0
  %629 = vmatprep.subr.bf16.mxu0 0
  %630 = vmatpush2.bf16.msra.mxu0 0
  %631 = vmatprep.subr.bf16.mxu0 0
  %632 = vmatpush2.bf16.msra.mxu0 0
  %633 = vmatprep.subr.bf16.mxu0 0
  %634 = vmatpush2.bf16.msra.mxu0 0
  %635 = vmatprep.subr.bf16.mxu0 0
  %636 = vmatpush2.bf16.msra.mxu0 0
  %637 = vmatprep.subr.bf16.mxu0 0
  %638 = vmatpush2.bf16.msra.mxu0 0
  %639 = vmatprep.mubr.bf16.mxu0 0
  %640 = vmatmul.mubr.bf16.gmra.mxu0 %v206
  %v641 = vpop.f32.mrf.mxu0
  %v642 = vadd.f32 %v161, %v641
  %v643 = vpop.f32.mrf.mxu0
  %v644 = vadd.f32 %v165, %v643
  %v645 = vpop.f32.mrf.mxu0
  %v646 = vadd.f32 %v161, %v645
  %v647 = vpop.f32.mrf.mxu0
  %v648 = vadd.f32 %v165, %v647
  %649 = vmatprep.mubr.bf16.mxu0 0
  %650 = vmatmul.mubr.bf16.gmra.mxu0 %v207
  %v651 = vpop.f32.mrf.mxu0
  %v652 = vadd.f32 %v161, %v651
  %v653 = vpop.f32.mrf.mxu0
  %v654 = vadd.f32 %v165, %v653
  %v655 = vpop.f32.mrf.mxu0
  %v656 = vadd.f32 %v161, %v655
  %v657 = vpop.f32.mrf.mxu0
  %v658 = vadd.f32 %v165, %v657
  %659 = vmatprep.mubr.bf16.mxu0 0
  %660 = vmatmul.mubr.bf16.gmra.mxu0 %v208
  %v661 = vpop.f32.mrf.mxu0
  %v662 = vadd.f32 %v161, %v661
  %v663 = vpop.f32.mrf.mxu0
  %v664 = vadd.f32 %v165, %v663
  %v665 = vpop.f32.mrf.mxu0
  %v666 = vadd.f32 %v161, %v665
  %v667 = vpop.f32.mrf.mxu0
  %v668 = vadd.f32 %v165, %v667
  %669 = vmatprep.mubr.bf16.mxu0 0
  %670 = vmatmul.mubr.bf16.gmra.mxu0 %v209
  %v671 = vpop.f32.mrf.mxu0
  %v672 = vadd.f32 %v161, %v671
  %v673 = vpop.f32.mrf.mxu0
  %v674 = vadd.f32 %v165, %v673
  %v675 = vpop.f32.mrf.mxu0
  %v676 = vadd.f32 %v161, %v675
  %v677 = vpop.f32.mrf.mxu0
  %v678 = vadd.f32 %v165, %v677
  %679 = vdwg.mxu0
  %680 = vmatprep.subr.bf16.mxu0 %v467
  %681 = vmatpush1.bf16.msra.mxu0 %v466
  %682 = vmatprep.subr.bf16.mxu0 %v459
  %683 = vmatpush1.bf16.msra.mxu0 %v458
  %684 = vmatprep.subr.bf16.mxu0 %v451
  %685 = vmatpush1.bf16.msra.mxu0 %v450
  %686 = vmatprep.subr.bf16.mxu0 %v443
  %687 = vmatpush1.bf16.msra.mxu0 %v442
  %688 = vmatprep.subr.bf16.mxu0 %v435
  %689 = vmatpush1.bf16.msra.mxu0 %v434
  %690 = vmatprep.subr.bf16.mxu0 %v427
  %691 = vmatpush1.bf16.msra.mxu0 %v426
  %692 = vmatprep.subr.bf16.mxu0 %v419
  %693 = vmatpush1.bf16.msra.mxu0 %v418
  %694 = vmatprep.subr.bf16.mxu0 %v411
  %695 = vmatpush1.bf16.msra.mxu0 %v410
  %696 = vmatprep.subr.bf16.mxu0 0
  %697 = vmatpush2.bf16.msra.mxu0 0
  %698 = vmatprep.subr.bf16.mxu0 0
  %699 = vmatpush2.bf16.msra.mxu0 0
  %700 = vmatprep.subr.bf16.mxu0 0
  %701 = vmatpush2.bf16.msra.mxu0 0
  %702 = vmatprep.subr.bf16.mxu0 0
  %703 = vmatpush2.bf16.msra.mxu0 0
  %704 = vmatprep.subr.bf16.mxu0 0
  %705 = vmatpush2.bf16.msra.mxu0 0
  %706 = vmatprep.subr.bf16.mxu0 0
  %707 = vmatpush2.bf16.msra.mxu0 0
  %708 = vmatprep.subr.bf16.mxu0 0
  %709 = vmatpush2.bf16.msra.mxu0 0
  %710 = vmatprep.subr.bf16.mxu0 0
  %711 = vmatpush2.bf16.msra.mxu0 0
  %712 = vmatprep.mubr.bf16.mxu0 0
  %713 = vmatmul.mubr.bf16.gmra.mxu0 %v206
  %v714 = vpop.f32.mrf.mxu0
  %v715 = vadd.f32 %v169, %v714
  %v716 = vpop.f32.mrf.mxu0
  %v717 = vadd.f32 %v173, %v716
  %v718 = vpop.f32.mrf.mxu0
  %v719 = vadd.f32 %v169, %v718
  %v720 = vpop.f32.mrf.mxu0
  %v721 = vadd.f32 %v173, %v720
  %722 = vmatprep.mubr.bf16.mxu0 0
  %723 = vmatmul.mubr.bf16.gmra.mxu0 %v207
  %v724 = vpop.f32.mrf.mxu0
  %v725 = vadd.f32 %v169, %v724
  %v726 = vpop.f32.mrf.mxu0
  %v727 = vadd.f32 %v173, %v726
  %v728 = vpop.f32.mrf.mxu0
  %v729 = vadd.f32 %v169, %v728
  %v730 = vpop.f32.mrf.mxu0
  %v731 = vadd.f32 %v173, %v730
  %732 = vmatprep.mubr.bf16.mxu0 0
  %733 = vmatmul.mubr.bf16.gmra.mxu0 %v208
  %v734 = vpop.f32.mrf.mxu0
  %v735 = vadd.f32 %v169, %v734
  %v736 = vpop.f32.mrf.mxu0
  %v737 = vadd.f32 %v173, %v736
  %v738 = vpop.f32.mrf.mxu0
  %v739 = vadd.f32 %v169, %v738
  %v740 = vpop.f32.mrf.mxu0
  %v741 = vadd.f32 %v173, %v740
  %742 = vmatprep.mubr.bf16.mxu0 0
  %743 = vmatmul.mubr.bf16.gmra.mxu0 %v209
  %v744 = vpop.f32.mrf.mxu0
  %v745 = vadd.f32 %v169, %v744
  %v746 = vpop.f32.mrf.mxu0
  %v747 = vadd.f32 %v173, %v746
  %v748 = vpop.f32.mrf.mxu0
  %v749 = vadd.f32 %v169, %v748
  %v750 = vpop.f32.mrf.mxu0
  %v751 = vadd.f32 %v173, %v750
  %752 = vdwg.mxu0
  %753 = vmatprep.subr.bf16.mxu0 %v469
  %754 = vmatpush1.bf16.msra.mxu0 %v468
  %755 = vmatprep.subr.bf16.mxu0 %v461
  %756 = vmatpush1.bf16.msra.mxu0 %v460
  %757 = vmatprep.subr.bf16.mxu0 %v453
  %758 = vmatpush1.bf16.msra.mxu0 %v452
  %759 = vmatprep.subr.bf16.mxu0 %v445
  %760 = vmatpush1.bf16.msra.mxu0 %v444
  %761 = vmatprep.subr.bf16.mxu0 %v437
  %762 = vmatpush1.bf16.msra.mxu0 %v436
  %763 = vmatprep.subr.bf16.mxu0 %v429
  %764 = vmatpush1.bf16.msra.mxu0 %v428
  %765 = vmatprep.subr.bf16.mxu0 %v421
  %766 = vmatpush1.bf16.msra.mxu0 %v420
  %767 = vmatprep.subr.bf16.mxu0 %v413
  %768 = vmatpush1.bf16.msra.mxu0 %v412
  %769 = vmatprep.subr.bf16.mxu0 0
  %770 = vmatpush2.bf16.msra.mxu0 0
  %771 = vmatprep.subr.bf16.mxu0 0
  %772 = vmatpush2.bf16.msra.mxu0 0
  %773 = vmatprep.subr.bf16.mxu0 0
  %774 = vmatpush2.bf16.msra.mxu0 0
  %775 = vmatprep.subr.bf16.mxu0 0
  %776 = vmatpush2.bf16.msra.mxu0 0
  %777 = vmatprep.subr.bf16.mxu0 0
  %778 = vmatpush2.bf16.msra.mxu0 0
  %779 = vmatprep.subr.bf16.mxu0 0
  %780 = vmatpush2.bf16.msra.mxu0 0
  %781 = vmatprep.subr.bf16.mxu0 0
  %782 = vmatpush2.bf16.msra.mxu0 0
  %783 = vmatprep.subr.bf16.mxu0 0
  %784 = vmatpush2.bf16.msra.mxu0 0
  %785 = vmatprep.mubr.bf16.mxu0 0
  %786 = vmatmul.mubr.bf16.gmra.mxu0 %v206
  %v787 = vpop.f32.mrf.mxu0
  %v788 = vadd.f32 %v177, %v787
  %v789 = vpop.f32.mrf.mxu0
  %v790 = vadd.f32 %v181, %v789
  %v791 = vpop.f32.mrf.mxu0
  %v792 = vadd.f32 %v177, %v791
  %v793 = vpop.f32.mrf.mxu0
  %v794 = vadd.f32 %v181, %v793
  %795 = vmatprep.mubr.bf16.mxu0 0
  %796 = vmatmul.mubr.bf16.gmra.mxu0 %v207
  %v797 = vpop.f32.mrf.mxu0
  %v798 = vadd.f32 %v177, %v797
  %v799 = vpop.f32.mrf.mxu0
  %v800 = vadd.f32 %v181, %v799
  %v801 = vpop.f32.mrf.mxu0
  %v802 = vadd.f32 %v177, %v801
  %v803 = vpop.f32.mrf.mxu0
  %v804 = vadd.f32 %v181, %v803
  %805 = vmatprep.mubr.bf16.mxu0 0
  %806 = vmatmul.mubr.bf16.gmra.mxu0 %v208
  %v807 = vpop.f32.mrf.mxu0
  %v808 = vadd.f32 %v177, %v807
  %v809 = vpop.f32.mrf.mxu0
  %v810 = vadd.f32 %v181, %v809
  %v811 = vpop.f32.mrf.mxu0
  %v812 = vadd.f32 %v177, %v811
  %v813 = vpop.f32.mrf.mxu0
  %v814 = vadd.f32 %v181, %v813
  %815 = vmatprep.mubr.bf16.mxu0 0
  %816 = vmatmul.mubr.bf16.gmra.mxu0 %v209
  %v817 = vpop.f32.mrf.mxu0
  %v818 = vadd.f32 %v177, %v817
  %v819 = vpop.f32.mrf.mxu0
  %v820 = vadd.f32 %v181, %v819
  %v821 = vpop.f32.mrf.mxu0
  %v822 = vadd.f32 %v177, %v821
  %v823 = vpop.f32.mrf.mxu0
  %v824 = vadd.f32 %v181, %v823
  %825 = vdwg.mxu0
  %v826 = vmax.f32 %v569, 0.0
  %v827 = vmax.f32 %v571, 0.0
  %v828 = vmax.f32 %v642, 0.0
  %v829 = vmax.f32 %v644, 0.0
  %v830 = vmax.f32 %v715, 0.0
  %v831 = vmax.f32 %v717, 0.0
  %v832 = vmax.f32 %v788, 0.0
  %v833 = vmax.f32 %v790, 0.0
  %v834 = vmax.f32 %v573, 0.0
  %v835 = vmax.f32 %v575, 0.0
  %v836 = vmax.f32 %v646, 0.0
  %v837 = vmax.f32 %v648, 0.0
  %v838 = vmax.f32 %v719, 0.0
  %v839 = vmax.f32 %v721, 0.0
  %v840 = vmax.f32 %v792, 0.0
  %v841 = vmax.f32 %v794, 0.0
  %v842 = vmax.f32 %v579, 0.0
  %v843 = vmax.f32 %v581, 0.0
  %v844 = vmax.f32 %v652, 0.0
  %v845 = vmax.f32 %v654, 0.0
  %v846 = vmax.f32 %v725, 0.0
  %v847 = vmax.f32 %v727, 0.0
  %v848 = vmax.f32 %v798, 0.0
  %v849 = vmax.f32 %v800, 0.0
  %v850 = vmax.f32 %v583, 0.0
  %v851 = vmax.f32 %v585, 0.0
  %v852 = vmax.f32 %v656, 0.0
  %v853 = vmax.f32 %v658, 0.0
  %v854 = vmax.f32 %v729, 0.0
  %v855 = vmax.f32 %v731, 0.0
  %v856 = vmax.f32 %v802, 0.0
  %v857 = vmax.f32 %v804, 0.0
  %v858 = vmax.f32 %v589, 0.0
  %v859 = vmax.f32 %v591, 0.0
  %v860 = vmax.f32 %v662, 0.0
  %v861 = vmax.f32 %v664, 0.0
  %v862 = vmax.f32 %v735, 0.0
  %v863 = vmax.f32 %v737, 0.0
  %v864 = vmax.f32 %v808, 0.0
  %v865 = vmax.f32 %v810, 0.0
  %v866 = vmax.f32 %v593, 0.0
  %v867 = vmax.f32 %v595, 0.0
  %v868 = vmax.f32 %v666, 0.0
  %v869 = vmax.f32 %v668, 0.0
  %v870 = vmax.f32 %v739, 0.0
  %v871 = vmax.f32 %v741, 0.0
  %v872 = vmax.f32 %v812, 0.0
  %v873 = vmax.f32 %v814, 0.0
  %v874 = vmax.f32 %v599, 0.0
  %v875 = vmax.f32 %v601, 0.0
  %v876 = vmax.f32 %v672, 0.0
  %v877 = vmax.f32 %v674, 0.0
  %v878 = vmax.f32 %v745, 0.0
  %v879 = vmax.f32 %v747, 0.0
  %v880 = vmax.f32 %v818, 0.0
  %v881 = vmax.f32 %v820, 0.0
  %v882 = vmax.f32 %v603, 0.0
  %v883 = vmax.f32 %v605, 0.0
  %v884 = vmax.f32 %v676, 0.0
  %v885 = vmax.f32 %v678, 0.0
  %v886 = vmax.f32 %v749, 0.0
  %v887 = vmax.f32 %v751, 0.0
  %v888 = vmax.f32 %v822, 0.0
  %v889 = vmax.f32 %v824, 0.0
  %v890 = vpack.c.bf16 %v834, %v826
  %v891 = vpack.c.bf16 %v835, %v827
  %v892 = vpack.c.bf16 %v836, %v828
  %v893 = vpack.c.bf16 %v837, %v829
  %v894 = vpack.c.bf16 %v838, %v830
  %v895 = vpack.c.bf16 %v839, %v831
  %v896 = vpack.c.bf16 %v840, %v832
  %v897 = vpack.c.bf16 %v841, %v833
  %v898 = vpack.c.bf16 %v850, %v842
  %v899 = vpack.c.bf16 %v851, %v843
  %v900 = vpack.c.bf16 %v852, %v844
  %v901 = vpack.c.bf16 %v853, %v845
  %v902 = vpack.c.bf16 %v854, %v846
  %v903 = vpack.c.bf16 %v855, %v847
  %v904 = vpack.c.bf16 %v856, %v848
  %v905 = vpack.c.bf16 %v857, %v849
  %v906 = vpack.c.bf16 %v866, %v858
  %v907 = vpack.c.bf16 %v867, %v859
  %v908 = vpack.c.bf16 %v868, %v860
  %v909 = vpack.c.bf16 %v869, %v861
  %v910 = vpack.c.bf16 %v870, %v862
  %v911 = vpack.c.bf16 %v871, %v863
  %v912 = vpack.c.bf16 %v872, %v864
  %v913 = vpack.c.bf16 %v873, %v865
  %v914 = vpack.c.bf16 %v882, %v874
  %v915 = vpack.c.bf16 %v883, %v875
  %v916 = vpack.c.bf16 %v884, %v876
  %v917 = vpack.c.bf16 %v885, %v877
  %v918 = vpack.c.bf16 %v886, %v878
  %v919 = vpack.c.bf16 %v887, %v879
  %v920 = vpack.c.bf16 %v888, %v880
  %v921 = vpack.c.bf16 %v889, %v881
  %v954 = vunpack.c.l.b16 %v890
  %v955 = vunpack.c.l.b16 %v891
  %v956 = vunpack.c.l.b16 %v892
  %v957 = vunpack.c.l.b16 %v893
  %v958 = vunpack.c.l.b16 %v894
  %v959 = vunpack.c.l.b16 %v895
  %v960 = vunpack.c.l.b16 %v896
  %v961 = vunpack.c.l.b16 %v897
  %v962 = vunpack.c.h.b16 %v890
  %v963 = vunpack.c.h.b16 %v891
  %v964 = vunpack.c.h.b16 %v892
  %v965 = vunpack.c.h.b16 %v893
  %v966 = vunpack.c.h.b16 %v894
  %v967 = vunpack.c.h.b16 %v895
  %v968 = vunpack.c.h.b16 %v896
  %v969 = vunpack.c.h.b16 %v897
  %v970 = vunpack.c.l.b16 %v898
  %v971 = vunpack.c.l.b16 %v899
  %v972 = vunpack.c.l.b16 %v900
  %v973 = vunpack.c.l.b16 %v901
  %v974 = vunpack.c.l.b16 %v902
  %v975 = vunpack.c.l.b16 %v903
  %v976 = vunpack.c.l.b16 %v904
  %v977 = vunpack.c.l.b16 %v905
  %v978 = vunpack.c.h.b16 %v898
  %v979 = vunpack.c.h.b16 %v899
  %v980 = vunpack.c.h.b16 %v900
  %v981 = vunpack.c.h.b16 %v901
  %v982 = vunpack.c.h.b16 %v902
  %v983 = vunpack.c.h.b16 %v903
  %v984 = vunpack.c.h.b16 %v904
  %v985 = vunpack.c.h.b16 %v905
  %v986 = vunpack.c.l.b16 %v906
  %v987 = vunpack.c.l.b16 %v907
  %v988 = vunpack.c.l.b16 %v908
  %v989 = vunpack.c.l.b16 %v909
  %v990 = vunpack.c.l.b16 %v910
  %v991 = vunpack.c.l.b16 %v911
  %v992 = vunpack.c.l.b16 %v912
  %v993 = vunpack.c.l.b16 %v913
  %v994 = vunpack.c.h.b16 %v906
  %v995 = vunpack.c.h.b16 %v907
  %v996 = vunpack.c.h.b16 %v908
  %v997 = vunpack.c.h.b16 %v909
  %v998 = vunpack.c.h.b16 %v910
  %v999 = vunpack.c.h.b16 %v911
  %v1000 = vunpack.c.h.b16 %v912
  %v1001 = vunpack.c.h.b16 %v913
  %v1002 = vunpack.c.l.b16 %v914
  %v1003 = vunpack.c.l.b16 %v915
  %v1004 = vunpack.c.l.b16 %v916
  %v1005 = vunpack.c.l.b16 %v917
  %v1006 = vunpack.c.l.b16 %v918
  %v1007 = vunpack.c.l.b16 %v919
  %v1008 = vunpack.c.l.b16 %v920
  %v1009 = vunpack.c.l.b16 %v921
  %v1010 = vunpack.c.h.b16 %v914
  %v1011 = vunpack.c.h.b16 %v915
  %v1012 = vunpack.c.h.b16 %v916
  %v1013 = vunpack.c.h.b16 %v917
  %v1014 = vunpack.c.h.b16 %v918
  %v1015 = vunpack.c.h.b16 %v919
  %v1016 = vunpack.c.h.b16 %v920
  %v1017 = vunpack.c.h.b16 %v921
  %v1018 = vpack.c.b16 %v955, %v954
  %v1019 = vpack.c.b16 %v957, %v956
  %v1020 = vpack.c.b16 %v959, %v958
  %v1021 = vpack.c.b16 %v961, %v960
  %v1022 = vpack.c.b16 %v963, %v962
  %v1023 = vpack.c.b16 %v965, %v964
  %v1024 = vpack.c.b16 %v967, %v966
  %v1025 = vpack.c.b16 %v969, %v968
  %v1026 = vpack.c.b16 %v971, %v970
  %v1027 = vpack.c.b16 %v973, %v972
  %v1028 = vpack.c.b16 %v975, %v974
  %v1029 = vpack.c.b16 %v977, %v976
  %v1030 = vpack.c.b16 %v979, %v978
  %v1031 = vpack.c.b16 %v981, %v980
  %v1032 = vpack.c.b16 %v983, %v982
  %v1033 = vpack.c.b16 %v985, %v984
  %v1034 = vpack.c.b16 %v987, %v986
  %v1035 = vpack.c.b16 %v989, %v988
  %v1036 = vpack.c.b16 %v991, %v990
  %v1037 = vpack.c.b16 %v993, %v992
  %v1038 = vpack.c.b16 %v995, %v994
  %v1039 = vpack.c.b16 %v997, %v996
  %v1040 = vpack.c.b16 %v999, %v998
  %v1041 = vpack.c.b16 %v1001, %v1000
  %v1042 = vpack.c.b16 %v1003, %v1002
  %v1043 = vpack.c.b16 %v1005, %v1004
  %v1044 = vpack.c.b16 %v1007, %v1006
  %v1045 = vpack.c.b16 %v1009, %v1008
  %v1046 = vpack.c.b16 %v1011, %v1010
  %v1047 = vpack.c.b16 %v1013, %v1012
  %v1048 = vpack.c.b16 %v1015, %v1014
  %v1049 = vpack.c.b16 %v1017, %v1016
  %1082 = vst [vmem:[%s52] sm:$0xff] %v1018
  %1083 = vst [vmem:[%s52 + $0x8] sm:$0xff] %v1019
  %1084 = vst [vmem:[%s52 + $0x10] sm:$0xff] %v1020
  %1085 = vst [vmem:[%s52 + $0x18] sm:$0xff] %v1021
  %1086 = vst [vmem:[%s52 + $0x20] sm:$0xff] %v1022
  %1087 = vst [vmem:[%s52 + $0x28] sm:$0xff] %v1023
  %1088 = vst [vmem:[%s52 + $0x30] sm:$0xff] %v1024
  %1089 = vst [vmem:[%s52 + $0x38] sm:$0xff] %v1025
  %1090 = vst [vmem:[%s52 + $0x40] sm:$0xff] %v1026
  %1091 = vst [vmem:[%s52 + $0x48] sm:$0xff] %v1027
  %1092 = vst [vmem:[%s52 + $0x50] sm:$0xff] %v1028
  %1093 = vst [vmem:[%s52 + $0x58] sm:$0xff] %v1029
  %1094 = vst [vmem:[%s52 + $0x60] sm:$0xff] %v1030
  %1095 = vst [vmem:[%s52 + $0x68] sm:$0xff] %v1031
  %1096 = vst [vmem:[%s52 + $0x70] sm:$0xff] %v1032
  %1097 = vst [vmem:[%s52 + $0x78] sm:$0xff] %v1033
  %1098 = vst [vmem:[%s52 + $0x80] sm:$0xff] %v1034
  %1099 = vst [vmem:[%s52 + $0x88] sm:$0xff] %v1035
  %1100 = vst [vmem:[%s52 + $0x90] sm:$0xff] %v1036
  %1101 = vst [vmem:[%s52 + $0x98] sm:$0xff] %v1037
  %1102 = vst [vmem:[%s52 + $0xa0] sm:$0xff] %v1038
  %1103 = vst [vmem:[%s52 + $0xa8] sm:$0xff] %v1039
  %1104 = vst [vmem:[%s52 + $0xb0] sm:$0xff] %v1040
  %1105 = vst [vmem:[%s52 + $0xb8] sm:$0xff] %v1041
  %1106 = vst [vmem:[%s52 + $0xc0] sm:$0xff] %v1042
  %1107 = vst [vmem:[%s52 + $0xc8] sm:$0xff] %v1043
  %1108 = vst [vmem:[%s52 + $0xd0] sm:$0xff] %v1044
  %1109 = vst [vmem:[%s52 + $0xd8] sm:$0xff] %v1045
  %1110 = vst [vmem:[%s52 + $0xe0] sm:$0xff] %v1046
  %1111 = vst [vmem:[%s52 + $0xe8] sm:$0xff] %v1047
  %1112 = vst [vmem:[%s52 + $0xf0] sm:$0xff] %v1048
  %1113 = vst [vmem:[%s52 + $0xf8] sm:$0xff] %v1049
  %v1114 = vld [vmem:[%s4] sm:$0xff]
  %v1115 = vld [vmem:[%s4 + $0x8] sm:$0xff]
  %v1116 = vld [vmem:[%s4 + $0x10] sm:$0xff]
  %v1117 = vld [vmem:[%s4 + $0x18] sm:$0xff]
  %v1118 = vld [vmem:[%s4 + $0x20] sm:$0xff]
  %v1119 = vld [vmem:[%s4 + $0x28] sm:$0xff]
  %v1120 = vld [vmem:[%s4 + $0x30] sm:$0xff]
  %v1121 = vld [vmem:[%s4 + $0x38] sm:$0xff]
  %vm1122 = vcmask 523264
  %v1124 = vsel %vm1122, 1.0, 0
  %1126 = vmatprep.subr.mxu0 0.0
  %1127 = vmatpush1.msra.mxu0 0.0
  %1128 = vmatprep.subr.mxu0 0.0
  %1129 = vmatpush1.msra.mxu0 0.0
  %1130 = vmatprep.subr.mxu0 0.0
  %1131 = vmatpush1.msra.mxu0 0.0
  %1132 = vmatprep.subr.mxu0 0.0
  %1133 = vmatpush1.msra.mxu0 0.0
  %1134 = vmatprep.subr.mxu0 0.0
  %1135 = vmatpush1.msra.mxu0 0.0
  %1136 = vmatprep.subr.mxu0 0.0
  %1137 = vmatpush1.msra.mxu0 0.0
  %1138 = vmatprep.subr.mxu0 0.0
  %1139 = vmatpush1.msra.mxu0 0.0
  %1140 = vmatprep.subr.mxu0 0.0
  %1141 = vmatpush1.msra.mxu0 0.0
  %1142 = vmatprep.subr.mxu0 %v883
  %1143 = vmatpush1.msra.mxu0 %v882
  %1144 = vmatprep.subr.mxu0 %v875
  %1145 = vmatpush1.msra.mxu0 %v874
  %1146 = vmatprep.subr.mxu0 %v867
  %1147 = vmatpush1.msra.mxu0 %v866
  %1148 = vmatprep.subr.mxu0 %v859
  %1149 = vmatpush1.msra.mxu0 %v858
  %1150 = vmatprep.subr.mxu0 %v851
  %1151 = vmatpush1.msra.mxu0 %v850
  %1152 = vmatprep.subr.mxu0 %v843
  %1153 = vmatpush1.msra.mxu0 %v842
  %1154 = vmatprep.subr.mxu0 %v835
  %1155 = vmatpush1.msra.mxu0 %v834
  %1156 = vmatprep.subr.mxu0 %v827
  %1157 = vmatpush1.msra.mxu0 %v826
  %1158 = vmatprep.subr.mxu0 0.0
  %1159 = vmatpush2.msra.mxu0 0.0
  %1160 = vmatprep.subr.mxu0 0.0
  %1161 = vmatpush2.msra.mxu0 0.0
  %1162 = vmatprep.subr.mxu0 0.0
  %1163 = vmatpush2.msra.mxu0 0.0
  %1164 = vmatprep.subr.mxu0 0.0
  %1165 = vmatpush2.msra.mxu0 0.0
  %1166 = vmatprep.subr.mxu0 0.0
  %1167 = vmatpush2.msra.mxu0 0.0
  %1168 = vmatprep.subr.mxu0 0.0
  %1169 = vmatpush2.msra.mxu0 0.0
  %1170 = vmatprep.subr.mxu0 0.0
  %1171 = vmatpush2.msra.mxu0 0.0
  %1172 = vmatprep.subr.mxu0 0.0
  %1173 = vmatpush2.msra.mxu0 0.0
  %1174 = vmatprep.subr.mxu0 0.0
  %1175 = vmatpush2.msra.mxu0 0.0
  %1176 = vmatprep.subr.mxu0 0.0
  %1177 = vmatpush2.msra.mxu0 0.0
  %1178 = vmatprep.subr.mxu0 0.0
  %1179 = vmatpush2.msra.mxu0 0.0
  %1180 = vmatprep.subr.mxu0 0.0
  %1181 = vmatpush2.msra.mxu0 0.0
  %1182 = vmatprep.subr.mxu0 0.0
  %1183 = vmatpush2.msra.mxu0 0.0
  %1184 = vmatprep.subr.mxu0 0.0
  %1185 = vmatpush2.msra.mxu0 0.0
  %1186 = vmatprep.subr.mxu0 0.0
  %1187 = vmatpush2.msra.mxu0 0.0
  %1188 = vmatprep.subr.mxu0 0.0
  %1189 = vmatpush2.msra.mxu0 0.0
  %1190 = vmatprep.mubr.f32.mxu0 0.0
  %1191 = vmatmul.mubr.f32.gmra.mxu0 %v1124
  %v1192 = vpop.f32.mrf.mxu0
  %v1193 = vadd.f32 0.0, %v1192
  %v1194 = vpop.f32.mrf.mxu0
  %v1195 = vadd.f32 0.0, %v1194
  %1196 = vdwg.mxu0
  %1197 = vmatprep.subr.mxu0 0.0
  %1198 = vmatpush1.msra.mxu0 0.0
  %1199 = vmatprep.subr.mxu0 0.0
  %1200 = vmatpush1.msra.mxu0 0.0
  %1201 = vmatprep.subr.mxu0 0.0
  %1202 = vmatpush1.msra.mxu0 0.0
  %1203 = vmatprep.subr.mxu0 0.0
  %1204 = vmatpush1.msra.mxu0 0.0
  %1205 = vmatprep.subr.mxu0 0.0
  %1206 = vmatpush1.msra.mxu0 0.0
  %1207 = vmatprep.subr.mxu0 0.0
  %1208 = vmatpush1.msra.mxu0 0.0
  %1209 = vmatprep.subr.mxu0 0.0
  %1210 = vmatpush1.msra.mxu0 0.0
  %1211 = vmatprep.subr.mxu0 0.0
  %1212 = vmatpush1.msra.mxu0 0.0
  %1213 = vmatprep.subr.mxu0 %v885
  %1214 = vmatpush1.msra.mxu0 %v884
  %1215 = vmatprep.subr.mxu0 %v877
  %1216 = vmatpush1.msra.mxu0 %v876
  %1217 = vmatprep.subr.mxu0 %v869
  %1218 = vmatpush1.msra.mxu0 %v868
  %1219 = vmatprep.subr.mxu0 %v861
  %1220 = vmatpush1.msra.mxu0 %v860
  %1221 = vmatprep.subr.mxu0 %v853
  %1222 = vmatpush1.msra.mxu0 %v852
  %1223 = vmatprep.subr.mxu0 %v845
  %1224 = vmatpush1.msra.mxu0 %v844
  %1225 = vmatprep.subr.mxu0 %v837
  %1226 = vmatpush1.msra.mxu0 %v836
  %1227 = vmatprep.subr.mxu0 %v829
  %1228 = vmatpush1.msra.mxu0 %v828
  %1229 = vmatprep.subr.mxu0 0.0
  %1230 = vmatpush2.msra.mxu0 0.0
  %1231 = vmatprep.subr.mxu0 0.0
  %1232 = vmatpush2.msra.mxu0 0.0
  %1233 = vmatprep.subr.mxu0 0.0
  %1234 = vmatpush2.msra.mxu0 0.0
  %1235 = vmatprep.subr.mxu0 0.0
  %1236 = vmatpush2.msra.mxu0 0.0
  %1237 = vmatprep.subr.mxu0 0.0
  %1238 = vmatpush2.msra.mxu0 0.0
  %1239 = vmatprep.subr.mxu0 0.0
  %1240 = vmatpush2.msra.mxu0 0.0
  %1241 = vmatprep.subr.mxu0 0.0
  %1242 = vmatpush2.msra.mxu0 0.0
  %1243 = vmatprep.subr.mxu0 0.0
  %1244 = vmatpush2.msra.mxu0 0.0
  %1245 = vmatprep.subr.mxu0 0.0
  %1246 = vmatpush2.msra.mxu0 0.0
  %1247 = vmatprep.subr.mxu0 0.0
  %1248 = vmatpush2.msra.mxu0 0.0
  %1249 = vmatprep.subr.mxu0 0.0
  %1250 = vmatpush2.msra.mxu0 0.0
  %1251 = vmatprep.subr.mxu0 0.0
  %1252 = vmatpush2.msra.mxu0 0.0
  %1253 = vmatprep.subr.mxu0 0.0
  %1254 = vmatpush2.msra.mxu0 0.0
  %1255 = vmatprep.subr.mxu0 0.0
  %1256 = vmatpush2.msra.mxu0 0.0
  %1257 = vmatprep.subr.mxu0 0.0
  %1258 = vmatpush2.msra.mxu0 0.0
  %1259 = vmatprep.subr.mxu0 0.0
  %1260 = vmatpush2.msra.mxu0 0.0
  %1261 = vmatprep.mubr.f32.mxu0 0.0
  %1262 = vmatmul.mubr.f32.gmra.mxu0 %v1124
  %v1263 = vpop.f32.mrf.mxu0
  %v1264 = vadd.f32 0.0, %v1263
  %v1265 = vpop.f32.mrf.mxu0
  %v1266 = vadd.f32 0.0, %v1265
  %1267 = vdwg.mxu0
  %1268 = vmatprep.subr.mxu0 0.0
  %1269 = vmatpush1.msra.mxu0 0.0
  %1270 = vmatprep.subr.mxu0 0.0
  %1271 = vmatpush1.msra.mxu0 0.0
  %1272 = vmatprep.subr.mxu0 0.0
  %1273 = vmatpush1.msra.mxu0 0.0
  %1274 = vmatprep.subr.mxu0 0.0
  %1275 = vmatpush1.msra.mxu0 0.0
  %1276 = vmatprep.subr.mxu0 0.0
  %1277 = vmatpush1.msra.mxu0 0.0
  %1278 = vmatprep.subr.mxu0 0.0
  %1279 = vmatpush1.msra.mxu0 0.0
  %1280 = vmatprep.subr.mxu0 0.0
  %1281 = vmatpush1.msra.mxu0 0.0
  %1282 = vmatprep.subr.mxu0 0.0
  %1283 = vmatpush1.msra.mxu0 0.0
  %1284 = vmatprep.subr.mxu0 %v887
  %1285 = vmatpush1.msra.mxu0 %v886
  %1286 = vmatprep.subr.mxu0 %v879
  %1287 = vmatpush1.msra.mxu0 %v878
  %1288 = vmatprep.subr.mxu0 %v871
  %1289 = vmatpush1.msra.mxu0 %v870
  %1290 = vmatprep.subr.mxu0 %v863
  %1291 = vmatpush1.msra.mxu0 %v862
  %1292 = vmatprep.subr.mxu0 %v855
  %1293 = vmatpush1.msra.mxu0 %v854
  %1294 = vmatprep.subr.mxu0 %v847
  %1295 = vmatpush1.msra.mxu0 %v846
  %1296 = vmatprep.subr.mxu0 %v839
  %1297 = vmatpush1.msra.mxu0 %v838
  %1298 = vmatprep.subr.mxu0 %v831
  %1299 = vmatpush1.msra.mxu0 %v830
  %1300 = vmatprep.subr.mxu0 0.0
  %1301 = vmatpush2.msra.mxu0 0.0
  %1302 = vmatprep.subr.mxu0 0.0
  %1303 = vmatpush2.msra.mxu0 0.0
  %1304 = vmatprep.subr.mxu0 0.0
  %1305 = vmatpush2.msra.mxu0 0.0
  %1306 = vmatprep.subr.mxu0 0.0
  %1307 = vmatpush2.msra.mxu0 0.0
  %1308 = vmatprep.subr.mxu0 0.0
  %1309 = vmatpush2.msra.mxu0 0.0
  %1310 = vmatprep.subr.mxu0 0.0
  %1311 = vmatpush2.msra.mxu0 0.0
  %1312 = vmatprep.subr.mxu0 0.0
  %1313 = vmatpush2.msra.mxu0 0.0
  %1314 = vmatprep.subr.mxu0 0.0
  %1315 = vmatpush2.msra.mxu0 0.0
  %1316 = vmatprep.subr.mxu0 0.0
  %1317 = vmatpush2.msra.mxu0 0.0
  %1318 = vmatprep.subr.mxu0 0.0
  %1319 = vmatpush2.msra.mxu0 0.0
  %1320 = vmatprep.subr.mxu0 0.0
  %1321 = vmatpush2.msra.mxu0 0.0
  %1322 = vmatprep.subr.mxu0 0.0
  %1323 = vmatpush2.msra.mxu0 0.0
  %1324 = vmatprep.subr.mxu0 0.0
  %1325 = vmatpush2.msra.mxu0 0.0
  %1326 = vmatprep.subr.mxu0 0.0
  %1327 = vmatpush2.msra.mxu0 0.0
  %1328 = vmatprep.subr.mxu0 0.0
  %1329 = vmatpush2.msra.mxu0 0.0
  %1330 = vmatprep.subr.mxu0 0.0
  %1331 = vmatpush2.msra.mxu0 0.0
  %1332 = vmatprep.mubr.f32.mxu0 0.0
  %1333 = vmatmul.mubr.f32.gmra.mxu0 %v1124
  %v1334 = vpop.f32.mrf.mxu0
  %v1335 = vadd.f32 0.0, %v1334
  %v1336 = vpop.f32.mrf.mxu0
  %v1337 = vadd.f32 0.0, %v1336
  %1338 = vdwg.mxu0
  %1339 = vmatprep.subr.mxu0 0.0
  %1340 = vmatpush1.msra.mxu0 0.0
  %1341 = vmatprep.subr.mxu0 0.0
  %1342 = vmatpush1.msra.mxu0 0.0
  %1343 = vmatprep.subr.mxu0 0.0
  %1344 = vmatpush1.msra.mxu0 0.0
  %1345 = vmatprep.subr.mxu0 0.0
  %1346 = vmatpush1.msra.mxu0 0.0
  %1347 = vmatprep.subr.mxu0 0.0
  %1348 = vmatpush1.msra.mxu0 0.0
  %1349 = vmatprep.subr.mxu0 0.0
  %1350 = vmatpush1.msra.mxu0 0.0
  %1351 = vmatprep.subr.mxu0 0.0
  %1352 = vmatpush1.msra.mxu0 0.0
  %1353 = vmatprep.subr.mxu0 0.0
  %1354 = vmatpush1.msra.mxu0 0.0
  %1355 = vmatprep.subr.mxu0 %v889
  %1356 = vmatpush1.msra.mxu0 %v888
  %1357 = vmatprep.subr.mxu0 %v881
  %1358 = vmatpush1.msra.mxu0 %v880
  %1359 = vmatprep.subr.mxu0 %v873
  %1360 = vmatpush1.msra.mxu0 %v872
  %1361 = vmatprep.subr.mxu0 %v865
  %1362 = vmatpush1.msra.mxu0 %v864
  %1363 = vmatprep.subr.mxu0 %v857
  %1364 = vmatpush1.msra.mxu0 %v856
  %1365 = vmatprep.subr.mxu0 %v849
  %1366 = vmatpush1.msra.mxu0 %v848
  %1367 = vmatprep.subr.mxu0 %v841
  %1368 = vmatpush1.msra.mxu0 %v840
  %1369 = vmatprep.subr.mxu0 %v833
  %1370 = vmatpush1.msra.mxu0 %v832
  %1371 = vmatprep.subr.mxu0 0.0
  %1372 = vmatpush2.msra.mxu0 0.0
  %1373 = vmatprep.subr.mxu0 0.0
  %1374 = vmatpush2.msra.mxu0 0.0
  %1375 = vmatprep.subr.mxu0 0.0
  %1376 = vmatpush2.msra.mxu0 0.0
  %1377 = vmatprep.subr.mxu0 0.0
  %1378 = vmatpush2.msra.mxu0 0.0
  %1379 = vmatprep.subr.mxu0 0.0
  %1380 = vmatpush2.msra.mxu0 0.0
  %1381 = vmatprep.subr.mxu0 0.0
  %1382 = vmatpush2.msra.mxu0 0.0
  %1383 = vmatprep.subr.mxu0 0.0
  %1384 = vmatpush2.msra.mxu0 0.0
  %1385 = vmatprep.subr.mxu0 0.0
  %1386 = vmatpush2.msra.mxu0 0.0
  %1387 = vmatprep.subr.mxu0 0.0
  %1388 = vmatpush2.msra.mxu0 0.0
  %1389 = vmatprep.subr.mxu0 0.0
  %1390 = vmatpush2.msra.mxu0 0.0
  %1391 = vmatprep.subr.mxu0 0.0
  %1392 = vmatpush2.msra.mxu0 0.0
  %1393 = vmatprep.subr.mxu0 0.0
  %1394 = vmatpush2.msra.mxu0 0.0
  %1395 = vmatprep.subr.mxu0 0.0
  %1396 = vmatpush2.msra.mxu0 0.0
  %1397 = vmatprep.subr.mxu0 0.0
  %1398 = vmatpush2.msra.mxu0 0.0
  %1399 = vmatprep.subr.mxu0 0.0
  %1400 = vmatpush2.msra.mxu0 0.0
  %1401 = vmatprep.subr.mxu0 0.0
  %1402 = vmatpush2.msra.mxu0 0.0
  %1403 = vmatprep.mubr.f32.mxu0 0.0
  %1404 = vmatmul.mubr.f32.gmra.mxu0 %v1124
  %v1405 = vpop.f32.mrf.mxu0
  %v1406 = vadd.f32 0.0, %v1405
  %v1407 = vpop.f32.mrf.mxu0
  %v1408 = vadd.f32 0.0, %v1407
  %1409 = vdwg.mxu0
  %v1410 = vadd.f32 %v1114, %v1193
  %v1411 = vadd.f32 %v1115, %v1195
  %v1412 = vadd.f32 %v1116, %v1264
  %v1413 = vadd.f32 %v1117, %v1266
  %v1414 = vadd.f32 %v1118, %v1335
  %v1415 = vadd.f32 %v1119, %v1337
  %v1416 = vadd.f32 %v1120, %v1406
  %v1417 = vadd.f32 %v1121, %v1408
  %1418 = vst [vmem:[%s4] sm:$0xff] %v1410
  %1419 = vst [vmem:[%s4 + $0x8] sm:$0xff] %v1411
  %1420 = vst [vmem:[%s4 + $0x10] sm:$0xff] %v1412
  %1421 = vst [vmem:[%s4 + $0x18] sm:$0xff] %v1413
  %1422 = vst [vmem:[%s4 + $0x20] sm:$0xff] %v1414
  %1423 = vst [vmem:[%s4 + $0x28] sm:$0xff] %v1415
  %1424 = vst [vmem:[%s4 + $0x30] sm:$0xff] %v1416
  %1425 = vst [vmem:[%s4 + $0x38] sm:$0xff] %v1417
  %v1426 = vld [vmem:[%s5] sm:$0xff]
  %v1427 = vld [vmem:[%s5 + $0x8] sm:$0xff]
  %v1428 = vld [vmem:[%s5 + $0x10] sm:$0xff]
  %v1429 = vld [vmem:[%s5 + $0x18] sm:$0xff]
  %v1430 = vld [vmem:[%s5 + $0x20] sm:$0xff]
  %v1431 = vld [vmem:[%s5 + $0x28] sm:$0xff]
  %v1432 = vld [vmem:[%s5 + $0x30] sm:$0xff]
  %v1433 = vld [vmem:[%s5 + $0x38] sm:$0xff]
  %v1434 = vmul.f32 %v826, %v826
  %v1435 = vmul.f32 %v827, %v827
  %v1436 = vmul.f32 %v828, %v828
  %v1437 = vmul.f32 %v829, %v829
  %v1438 = vmul.f32 %v830, %v830
  %v1439 = vmul.f32 %v831, %v831
  %v1440 = vmul.f32 %v832, %v832
  %v1441 = vmul.f32 %v833, %v833
  %v1442 = vmul.f32 %v834, %v834
  %v1443 = vmul.f32 %v835, %v835
  %v1444 = vmul.f32 %v836, %v836
  %v1445 = vmul.f32 %v837, %v837
  %v1446 = vmul.f32 %v838, %v838
  %v1447 = vmul.f32 %v839, %v839
  %v1448 = vmul.f32 %v840, %v840
  %v1449 = vmul.f32 %v841, %v841
  %v1450 = vmul.f32 %v842, %v842
  %v1451 = vmul.f32 %v843, %v843
  %v1452 = vmul.f32 %v844, %v844
  %v1453 = vmul.f32 %v845, %v845
  %v1454 = vmul.f32 %v846, %v846
  %v1455 = vmul.f32 %v847, %v847
  %v1456 = vmul.f32 %v848, %v848
  %v1457 = vmul.f32 %v849, %v849
  %v1458 = vmul.f32 %v850, %v850
  %v1459 = vmul.f32 %v851, %v851
  %v1460 = vmul.f32 %v852, %v852
  %v1461 = vmul.f32 %v853, %v853
  %v1462 = vmul.f32 %v854, %v854
  %v1463 = vmul.f32 %v855, %v855
  %v1464 = vmul.f32 %v856, %v856
  %v1465 = vmul.f32 %v857, %v857
  %v1466 = vmul.f32 %v858, %v858
  %v1467 = vmul.f32 %v859, %v859
  %v1468 = vmul.f32 %v860, %v860
  %v1469 = vmul.f32 %v861, %v861
  %v1470 = vmul.f32 %v862, %v862
  %v1471 = vmul.f32 %v863, %v863
  %v1472 = vmul.f32 %v864, %v864
  %v1473 = vmul.f32 %v865, %v865
  %v1474 = vmul.f32 %v866, %v866
  %v1475 = vmul.f32 %v867, %v867
  %v1476 = vmul.f32 %v868, %v868
  %v1477 = vmul.f32 %v869, %v869
  %v1478 = vmul.f32 %v870, %v870
  %v1479 = vmul.f32 %v871, %v871
  %v1480 = vmul.f32 %v872, %v872
  %v1481 = vmul.f32 %v873, %v873
  %v1482 = vmul.f32 %v874, %v874
  %v1483 = vmul.f32 %v875, %v875
  %v1484 = vmul.f32 %v876, %v876
  %v1485 = vmul.f32 %v877, %v877
  %v1486 = vmul.f32 %v878, %v878
  %v1487 = vmul.f32 %v879, %v879
  %v1488 = vmul.f32 %v880, %v880
  %v1489 = vmul.f32 %v881, %v881
  %v1490 = vmul.f32 %v882, %v882
  %v1491 = vmul.f32 %v883, %v883
  %v1492 = vmul.f32 %v884, %v884
  %v1493 = vmul.f32 %v885, %v885
  %v1494 = vmul.f32 %v886, %v886
  %v1495 = vmul.f32 %v887, %v887
  %v1496 = vmul.f32 %v888, %v888
  %v1497 = vmul.f32 %v889, %v889
  %1498 = vmatprep.subr.mxu0 0.0
  %1499 = vmatpush1.msra.mxu0 0.0
  %1500 = vmatprep.subr.mxu0 0.0
  %1501 = vmatpush1.msra.mxu0 0.0
  %1502 = vmatprep.subr.mxu0 0.0
  %1503 = vmatpush1.msra.mxu0 0.0
  %1504 = vmatprep.subr.mxu0 0.0
  %1505 = vmatpush1.msra.mxu0 0.0
  %1506 = vmatprep.subr.mxu0 0.0
  %1507 = vmatpush1.msra.mxu0 0.0
  %1508 = vmatprep.subr.mxu0 0.0
  %1509 = vmatpush1.msra.mxu0 0.0
  %1510 = vmatprep.subr.mxu0 0.0
  %1511 = vmatpush1.msra.mxu0 0.0
  %1512 = vmatprep.subr.mxu0 0.0
  %1513 = vmatpush1.msra.mxu0 0.0
  %1514 = vmatprep.subr.mxu0 %v1491
  %1515 = vmatpush1.msra.mxu0 %v1490
  %1516 = vmatprep.subr.mxu0 %v1483
  %1517 = vmatpush1.msra.mxu0 %v1482
  %1518 = vmatprep.subr.mxu0 %v1475
  %1519 = vmatpush1.msra.mxu0 %v1474
  %1520 = vmatprep.subr.mxu0 %v1467
  %1521 = vmatpush1.msra.mxu0 %v1466
  %1522 = vmatprep.subr.mxu0 %v1459
  %1523 = vmatpush1.msra.mxu0 %v1458
  %1524 = vmatprep.subr.mxu0 %v1451
  %1525 = vmatpush1.msra.mxu0 %v1450
  %1526 = vmatprep.subr.mxu0 %v1443
  %1527 = vmatpush1.msra.mxu0 %v1442
  %1528 = vmatprep.subr.mxu0 %v1435
  %1529 = vmatpush1.msra.mxu0 %v1434
  %1530 = vmatprep.subr.mxu0 0.0
  %1531 = vmatpush2.msra.mxu0 0.0
  %1532 = vmatprep.subr.mxu0 0.0
  %1533 = vmatpush2.msra.mxu0 0.0
  %1534 = vmatprep.subr.mxu0 0.0
  %1535 = vmatpush2.msra.mxu0 0.0
  %1536 = vmatprep.subr.mxu0 0.0
  %1537 = vmatpush2.msra.mxu0 0.0
  %1538 = vmatprep.subr.mxu0 0.0
  %1539 = vmatpush2.msra.mxu0 0.0
  %1540 = vmatprep.subr.mxu0 0.0
  %1541 = vmatpush2.msra.mxu0 0.0
  %1542 = vmatprep.subr.mxu0 0.0
  %1543 = vmatpush2.msra.mxu0 0.0
  %1544 = vmatprep.subr.mxu0 0.0
  %1545 = vmatpush2.msra.mxu0 0.0
  %1546 = vmatprep.subr.mxu0 0.0
  %1547 = vmatpush2.msra.mxu0 0.0
  %1548 = vmatprep.subr.mxu0 0.0
  %1549 = vmatpush2.msra.mxu0 0.0
  %1550 = vmatprep.subr.mxu0 0.0
  %1551 = vmatpush2.msra.mxu0 0.0
  %1552 = vmatprep.subr.mxu0 0.0
  %1553 = vmatpush2.msra.mxu0 0.0
  %1554 = vmatprep.subr.mxu0 0.0
  %1555 = vmatpush2.msra.mxu0 0.0
  %1556 = vmatprep.subr.mxu0 0.0
  %1557 = vmatpush2.msra.mxu0 0.0
  %1558 = vmatprep.subr.mxu0 0.0
  %1559 = vmatpush2.msra.mxu0 0.0
  %1560 = vmatprep.subr.mxu0 0.0
  %1561 = vmatpush2.msra.mxu0 0.0
  %1562 = vmatprep.mubr.f32.mxu0 0.0
  %1563 = vmatmul.mubr.f32.gmra.mxu0 %v1124
  %v1564 = vpop.f32.mrf.mxu0
  %v1565 = vadd.f32 0.0, %v1564
  %v1566 = vpop.f32.mrf.mxu0
  %v1567 = vadd.f32 0.0, %v1566
  %1568 = vdwg.mxu0
  %1569 = vmatprep.subr.mxu0 0.0
  %1570 = vmatpush1.msra.mxu0 0.0
  %1571 = vmatprep.subr.mxu0 0.0
  %1572 = vmatpush1.msra.mxu0 0.0
  %1573 = vmatprep.subr.mxu0 0.0
  %1574 = vmatpush1.msra.mxu0 0.0
  %1575 = vmatprep.subr.mxu0 0.0
  %1576 = vmatpush1.msra.mxu0 0.0
  %1577 = vmatprep.subr.mxu0 0.0
  %1578 = vmatpush1.msra.mxu0 0.0
  %1579 = vmatprep.subr.mxu0 0.0
  %1580 = vmatpush1.msra.mxu0 0.0
  %1581 = vmatprep.subr.mxu0 0.0
  %1582 = vmatpush1.msra.mxu0 0.0
  %1583 = vmatprep.subr.mxu0 0.0
  %1584 = vmatpush1.msra.mxu0 0.0
  %1585 = vmatprep.subr.mxu0 %v1493
  %1586 = vmatpush1.msra.mxu0 %v1492
  %1587 = vmatprep.subr.mxu0 %v1485
  %1588 = vmatpush1.msra.mxu0 %v1484
  %1589 = vmatprep.subr.mxu0 %v1477
  %1590 = vmatpush1.msra.mxu0 %v1476
  %1591 = vmatprep.subr.mxu0 %v1469
  %1592 = vmatpush1.msra.mxu0 %v1468
  %1593 = vmatprep.subr.mxu0 %v1461
  %1594 = vmatpush1.msra.mxu0 %v1460
  %1595 = vmatprep.subr.mxu0 %v1453
  %1596 = vmatpush1.msra.mxu0 %v1452
  %1597 = vmatprep.subr.mxu0 %v1445
  %1598 = vmatpush1.msra.mxu0 %v1444
  %1599 = vmatprep.subr.mxu0 %v1437
  %1600 = vmatpush1.msra.mxu0 %v1436
  %1601 = vmatprep.subr.mxu0 0.0
  %1602 = vmatpush2.msra.mxu0 0.0
  %1603 = vmatprep.subr.mxu0 0.0
  %1604 = vmatpush2.msra.mxu0 0.0
  %1605 = vmatprep.subr.mxu0 0.0
  %1606 = vmatpush2.msra.mxu0 0.0
  %1607 = vmatprep.subr.mxu0 0.0
  %1608 = vmatpush2.msra.mxu0 0.0
  %1609 = vmatprep.subr.mxu0 0.0
  %1610 = vmatpush2.msra.mxu0 0.0
  %1611 = vmatprep.subr.mxu0 0.0
  %1612 = vmatpush2.msra.mxu0 0.0
  %1613 = vmatprep.subr.mxu0 0.0
  %1614 = vmatpush2.msra.mxu0 0.0
  %1615 = vmatprep.subr.mxu0 0.0
  %1616 = vmatpush2.msra.mxu0 0.0
  %1617 = vmatprep.subr.mxu0 0.0
  %1618 = vmatpush2.msra.mxu0 0.0
  %1619 = vmatprep.subr.mxu0 0.0
  %1620 = vmatpush2.msra.mxu0 0.0
  %1621 = vmatprep.subr.mxu0 0.0
  %1622 = vmatpush2.msra.mxu0 0.0
  %1623 = vmatprep.subr.mxu0 0.0
  %1624 = vmatpush2.msra.mxu0 0.0
  %1625 = vmatprep.subr.mxu0 0.0
  %1626 = vmatpush2.msra.mxu0 0.0
  %1627 = vmatprep.subr.mxu0 0.0
  %1628 = vmatpush2.msra.mxu0 0.0
  %1629 = vmatprep.subr.mxu0 0.0
  %1630 = vmatpush2.msra.mxu0 0.0
  %1631 = vmatprep.subr.mxu0 0.0
  %1632 = vmatpush2.msra.mxu0 0.0
  %1633 = vmatprep.mubr.f32.mxu0 0.0
  %1634 = vmatmul.mubr.f32.gmra.mxu0 %v1124
  %v1635 = vpop.f32.mrf.mxu0
  %v1636 = vadd.f32 0.0, %v1635
  %v1637 = vpop.f32.mrf.mxu0
  %v1638 = vadd.f32 0.0, %v1637
  %1639 = vdwg.mxu0
  %1640 = vmatprep.subr.mxu0 0.0
  %1641 = vmatpush1.msra.mxu0 0.0
  %1642 = vmatprep.subr.mxu0 0.0
  %1643 = vmatpush1.msra.mxu0 0.0
  %1644 = vmatprep.subr.mxu0 0.0
  %1645 = vmatpush1.msra.mxu0 0.0
  %1646 = vmatprep.subr.mxu0 0.0
  %1647 = vmatpush1.msra.mxu0 0.0
  %1648 = vmatprep.subr.mxu0 0.0
  %1649 = vmatpush1.msra.mxu0 0.0
  %1650 = vmatprep.subr.mxu0 0.0
  %1651 = vmatpush1.msra.mxu0 0.0
  %1652 = vmatprep.subr.mxu0 0.0
  %1653 = vmatpush1.msra.mxu0 0.0
  %1654 = vmatprep.subr.mxu0 0.0
  %1655 = vmatpush1.msra.mxu0 0.0
  %1656 = vmatprep.subr.mxu0 %v1495
  %1657 = vmatpush1.msra.mxu0 %v1494
  %1658 = vmatprep.subr.mxu0 %v1487
  %1659 = vmatpush1.msra.mxu0 %v1486
  %1660 = vmatprep.subr.mxu0 %v1479
  %1661 = vmatpush1.msra.mxu0 %v1478
  %1662 = vmatprep.subr.mxu0 %v1471
  %1663 = vmatpush1.msra.mxu0 %v1470
  %1664 = vmatprep.subr.mxu0 %v1463
  %1665 = vmatpush1.msra.mxu0 %v1462
  %1666 = vmatprep.subr.mxu0 %v1455
  %1667 = vmatpush1.msra.mxu0 %v1454
  %1668 = vmatprep.subr.mxu0 %v1447
  %1669 = vmatpush1.msra.mxu0 %v1446
  %1670 = vmatprep.subr.mxu0 %v1439
  %1671 = vmatpush1.msra.mxu0 %v1438
  %1672 = vmatprep.subr.mxu0 0.0
  %1673 = vmatpush2.msra.mxu0 0.0
  %1674 = vmatprep.subr.mxu0 0.0
  %1675 = vmatpush2.msra.mxu0 0.0
  %1676 = vmatprep.subr.mxu0 0.0
  %1677 = vmatpush2.msra.mxu0 0.0
  %1678 = vmatprep.subr.mxu0 0.0
  %1679 = vmatpush2.msra.mxu0 0.0
  %1680 = vmatprep.subr.mxu0 0.0
  %1681 = vmatpush2.msra.mxu0 0.0
  %1682 = vmatprep.subr.mxu0 0.0
  %1683 = vmatpush2.msra.mxu0 0.0
  %1684 = vmatprep.subr.mxu0 0.0
  %1685 = vmatpush2.msra.mxu0 0.0
  %1686 = vmatprep.subr.mxu0 0.0
  %1687 = vmatpush2.msra.mxu0 0.0
  %1688 = vmatprep.subr.mxu0 0.0
  %1689 = vmatpush2.msra.mxu0 0.0
  %1690 = vmatprep.subr.mxu0 0.0
  %1691 = vmatpush2.msra.mxu0 0.0
  %1692 = vmatprep.subr.mxu0 0.0
  %1693 = vmatpush2.msra.mxu0 0.0
  %1694 = vmatprep.subr.mxu0 0.0
  %1695 = vmatpush2.msra.mxu0 0.0
  %1696 = vmatprep.subr.mxu0 0.0
  %1697 = vmatpush2.msra.mxu0 0.0
  %1698 = vmatprep.subr.mxu0 0.0
  %1699 = vmatpush2.msra.mxu0 0.0
  %1700 = vmatprep.subr.mxu0 0.0
  %1701 = vmatpush2.msra.mxu0 0.0
  %1702 = vmatprep.subr.mxu0 0.0
  %1703 = vmatpush2.msra.mxu0 0.0
  %1704 = vmatprep.mubr.f32.mxu0 0.0
  %1705 = vmatmul.mubr.f32.gmra.mxu0 %v1124
  %v1706 = vpop.f32.mrf.mxu0
  %v1707 = vadd.f32 0.0, %v1706
  %v1708 = vpop.f32.mrf.mxu0
  %v1709 = vadd.f32 0.0, %v1708
  %1710 = vdwg.mxu0
  %1711 = vmatprep.subr.mxu0 0.0
  %1712 = vmatpush1.msra.mxu0 0.0
  %1713 = vmatprep.subr.mxu0 0.0
  %1714 = vmatpush1.msra.mxu0 0.0
  %1715 = vmatprep.subr.mxu0 0.0
  %1716 = vmatpush1.msra.mxu0 0.0
  %1717 = vmatprep.subr.mxu0 0.0
  %1718 = vmatpush1.msra.mxu0 0.0
  %1719 = vmatprep.subr.mxu0 0.0
  %1720 = vmatpush1.msra.mxu0 0.0
  %1721 = vmatprep.subr.mxu0 0.0
  %1722 = vmatpush1.msra.mxu0 0.0
  %1723 = vmatprep.subr.mxu0 0.0
  %1724 = vmatpush1.msra.mxu0 0.0
  %1725 = vmatprep.subr.mxu0 0.0
  %1726 = vmatpush1.msra.mxu0 0.0
  %1727 = vmatprep.subr.mxu0 %v1497
  %1728 = vmatpush1.msra.mxu0 %v1496
  %1729 = vmatprep.subr.mxu0 %v1489
  %1730 = vmatpush1.msra.mxu0 %v1488
  %1731 = vmatprep.subr.mxu0 %v1481
  %1732 = vmatpush1.msra.mxu0 %v1480
  %1733 = vmatprep.subr.mxu0 %v1473
  %1734 = vmatpush1.msra.mxu0 %v1472
  %1735 = vmatprep.subr.mxu0 %v1465
  %1736 = vmatpush1.msra.mxu0 %v1464
  %1737 = vmatprep.subr.mxu0 %v1457
  %1738 = vmatpush1.msra.mxu0 %v1456
  %1739 = vmatprep.subr.mxu0 %v1449
  %1740 = vmatpush1.msra.mxu0 %v1448
  %1741 = vmatprep.subr.mxu0 %v1441
  %1742 = vmatpush1.msra.mxu0 %v1440
  %1743 = vmatprep.subr.mxu0 0.0
  %1744 = vmatpush2.msra.mxu0 0.0
  %1745 = vmatprep.subr.mxu0 0.0
  %1746 = vmatpush2.msra.mxu0 0.0
  %1747 = vmatprep.subr.mxu0 0.0
  %1748 = vmatpush2.msra.mxu0 0.0
  %1749 = vmatprep.subr.mxu0 0.0
  %1750 = vmatpush2.msra.mxu0 0.0
  %1751 = vmatprep.subr.mxu0 0.0
  %1752 = vmatpush2.msra.mxu0 0.0
  %1753 = vmatprep.subr.mxu0 0.0
  %1754 = vmatpush2.msra.mxu0 0.0
  %1755 = vmatprep.subr.mxu0 0.0
  %1756 = vmatpush2.msra.mxu0 0.0
  %1757 = vmatprep.subr.mxu0 0.0
  %1758 = vmatpush2.msra.mxu0 0.0
  %1759 = vmatprep.subr.mxu0 0.0
  %1760 = vmatpush2.msra.mxu0 0.0
  %1761 = vmatprep.subr.mxu0 0.0
  %1762 = vmatpush2.msra.mxu0 0.0
  %1763 = vmatprep.subr.mxu0 0.0
  %1764 = vmatpush2.msra.mxu0 0.0
  %1765 = vmatprep.subr.mxu0 0.0
  %1766 = vmatpush2.msra.mxu0 0.0
  %1767 = vmatprep.subr.mxu0 0.0
  %1768 = vmatpush2.msra.mxu0 0.0
  %1769 = vmatprep.subr.mxu0 0.0
  %1770 = vmatpush2.msra.mxu0 0.0
  %1771 = vmatprep.subr.mxu0 0.0
  %1772 = vmatpush2.msra.mxu0 0.0
  %1773 = vmatprep.subr.mxu0 0.0
  %1774 = vmatpush2.msra.mxu0 0.0
  %1775 = vmatprep.mubr.f32.mxu0 0.0
  %1776 = vmatmul.mubr.f32.gmra.mxu0 %v1124
  %v1777 = vpop.f32.mrf.mxu0
  %v1778 = vadd.f32 0.0, %v1777
  %v1779 = vpop.f32.mrf.mxu0
  %v1780 = vadd.f32 0.0, %v1779
  %1781 = vdwg.mxu0
  %v1782 = vadd.f32 %v1426, %v1565
  %v1783 = vadd.f32 %v1427, %v1567
  %v1784 = vadd.f32 %v1428, %v1636
  %v1785 = vadd.f32 %v1429, %v1638
  %v1786 = vadd.f32 %v1430, %v1707
  %v1787 = vadd.f32 %v1431, %v1709
  %v1788 = vadd.f32 %v1432, %v1778
  %v1789 = vadd.f32 %v1433, %v1780
  %1790 = vst [vmem:[%s5] sm:$0xff] %v1782
  %1791 = vst [vmem:[%s5 + $0x8] sm:$0xff] %v1783
  %1792 = vst [vmem:[%s5 + $0x10] sm:$0xff] %v1784
  %1793 = vst [vmem:[%s5 + $0x18] sm:$0xff] %v1785
  %1794 = vst [vmem:[%s5 + $0x20] sm:$0xff] %v1786
  %1795 = vst [vmem:[%s5 + $0x28] sm:$0xff] %v1787
  %1796 = vst [vmem:[%s5 + $0x30] sm:$0xff] %v1788
  %1797 = vst [vmem:[%s5 + $0x38] sm:$0xff] %v1789
  %s1798 = sadd.s32 0, 0
  %s1799 = smul.u32 8, %s1798
  %p1800 = scmp.lt.s32.totalorder %s1799, 7
  %s1801 = scalar_select %p1800, %s1799, 7
  %s1802 = smul.addr %s1801, 8
  %s1803 = smul.addr %s1802, 4
  %s1804 = scalar_lea.vmem %s3, %s1803
  // Predicated region
  $region18: #{input_tnet_forward.7} parent=0 // pred_check
    _
  $region19: #{input_tnet_forward.7} parent=0 // pred_check_branch
    %1806 = sbr.rel (0) target = $region21
  $region20: #{input_tnet_forward.7} parent=0 // pred_region
    %s1807 = sadd.s32 0, 0
    %s1808 = smul.u32 8, %s1807
  $region21: #{input_tnet_forward.7} parent=0 // pred_fallthru
    _
  // Predicated region
  $region22: #{input_tnet_forward.7} parent=0 // pred_check
    _
  $region23: #{input_tnet_forward.7} parent=0 // pred_check_branch
    %1810 = sbr.rel (0) target = $region25
  $region24: #{input_tnet_forward.7} parent=0 // pred_region
    _
  $region25: #{input_tnet_forward.7} parent=0 // pred_fallthru
    _
  // Predicated region
  $region26: #{input_tnet_forward.7} parent=0 // pred_check
    _
  $region27: #{input_tnet_forward.7} parent=0 // pred_check_branch
    %1812 = sbr.rel (0) target = $region29
  $region28: #{input_tnet_forward.7} parent=0 // pred_region
    _
  $region29: #{input_tnet_forward.7} parent=0 // pred_fallthru
    _
  // Predicated region
  $region30: #{input_tnet_forward.7} parent=0 // pred_check
    _
  $region31: #{input_tnet_forward.7} parent=0 // pred_check_branch
    %1814 = sbr.rel (0) target = $region33
  $region32: #{input_tnet_forward.7} parent=0 // pred_region
    %s1815 = sadd.s32 0, 0
    %s1816 = smul.u32 8, %s1815
    %p1817 = scmp.lt.s32.totalorder %s1816, 7
    %s1818 = scalar_select %p1817, %s1816, 7
    %s1819 = smul.addr %s1818, 8
    %s1820 = smul.addr %s1819, 4
    %s1821 = scalar_lea.vmem %s3, %s1820
  $region33: #{input_tnet_forward.7} parent=0 // pred_fallthru
    _
  // Predicated region
  $region34: #{input_tnet_forward.7} parent=0 // pred_check
    _
  $region35: #{input_tnet_forward.7} parent=0 // pred_check_branch
    %1823 = sbr.rel (0) target = $region37
  $region36: #{input_tnet_forward.7} parent=0 // pred_region
    _
  $region37: #{input_tnet_forward.7} parent=0 // pred_fallthru
    _
  // Predicated region
  $region38: #{input_tnet_forward.7} parent=0 // pred_check
    _
  $region39: #{input_tnet_forward.7} parent=0 // pred_check_branch
    %1825 = sbr.rel (0) target = $region41
  $region40: #{input_tnet_forward.7} parent=0 // pred_region
    _
  $region41: #{input_tnet_forward.7} parent=0 // pred_fallthru
    _

// kernel: input_tnet_forward.8
$region0: #{input_tnet_forward.8}
  #allocation0 [shape = 'u32[]', space=smem, size = 0x4, offset = 0x4, fixed_abs, tag = 'smem constant byte address 0x4 - core index']
  #allocation1 [shape = 'u32[144,128]{1,0:T(1,128)}', space=vmem, size = 0x12000, scoped, tag = 'internal scratch']
  #allocation2 [shape = 'f32[1,1024,16]{2,1,0:T(8,128)}', space=vmem, size = 0x80000, scoped, tag = 'scratch operand']
  %s0 = inlined_call_operand.vmem [shape: bf16[4,1024,16], index: 0, kind: input, shape index: {}]
  %s1 = inlined_call_operand.vmem [shape: bf16[1,1024,16], index: 1, kind: input, shape index: {}]
  %s2 = inlined_call_operand.vmem [shape: bf16[1,1024,16], index: 2, kind: input, shape index: {}]
  %s3 = inlined_call_operand.vmem [shape: f32[4,1024,1], index: 3, kind: output, shape index: {}]
  %s4 = sld [smem:[#allocation0]]
  $region53: #{input_tnet_forward.8} parent=0
    _
  %s6 = ssub.s32 1, %s4
  %s7 = scalar_select 0, %s6, %s4
  loop: start=0, step=1, limit=6
  $region2: #{input_tnet_forward.8} parent=0 // loop_pre_header
    _
  $region3: #{input_tnet_forward.8} parent=0 // loop_header
    %s9 = sphi 0, %s13
    %p10 = scmp.ge.s32.totalorder %s9, 6
    %s16 = sphi 0, %s28
    %s17 = sphi 0, %s24
    %s18 = sphi 0, %s16
    %s19 = sphi 0, %s17
    %s20 = sphi 0, %s18
    %s21 = sphi 0, %s19
    %s33 = sphi 0, %s35
    %s36 = sphi 0, %s33
    %s37 = sphi 0, %s36
    %s53 = sphi 0, %s37
    %s57 = sphi 0, %s57
    %s59 = sphi 0, %s57
    %s60 = sphi 0, %s59
    %s74 = sphi 0, %s60
    %s78 = sphi 0, %s78
    %s80 = sphi 0, %s78
    %s81 = sphi 0, %s80
    %s95 = sphi 0, %s81
    %s101 = sphi 0, %s103
    %s104 = sphi 0, %s101
    %s105 = sphi 0, %s104
    %s121 = sphi 0, %s105
  $region4: #{input_tnet_forward.8} parent=0 // loop_header_branch
    %12 = sbr.rel (%p10) target = $region8
  $region5: #{input_tnet_forward.8} parent=0 // loop_body
    %s14 = ssub.s32 %s9, 1
    %s15 = ssub.s32 %s9, 2
    %s22 = sadd.s32 1, %s17
    %p23 = scmp.ge.s32.totalorder %s22, 1
    %s24 = scalar_select %p23, 0, %s22
    %s25 = sadd.s32 1, %s16
    %s26 = scalar_select %p23, %s25, %s16
    %p27 = scmp.ge.s32.totalorder %s26, 4
    %s28 = scalar_select %p27, 0, %s26
    %s29 = ssub.s32 %s16, %s28
    %s30 = ssub.s32 %s17, %s24
    %s31 = sor.u32 %s29, %s30
    %p32 = scmp.eq.s32.totalorder %s31, 0
    %s34 = sadd.s32 %s33, 1
    %s35 = scalar_select %p32, %s33, %s34
    %p38 = pneg %p32
    %p39 = scmp.eq.s32.totalorder %s9, 3
    %p40 = por %p38, %p39
    %p41 = scmp.ne.s32.totalorder %s33, %s36
    %p42 = scmp.eq.s32.totalorder %s9, 0
    %p43 = por %p41, %p42
    %p44 = scmp.ne.s32.totalorder %s33, %s36
    %p45 = scmp.eq.s32.totalorder %s14, 3
    %p46 = por %p44, %p45
    %p47 = scmp.ne.s32.totalorder %s36, %s37
    %p48 = scmp.eq.s32.totalorder %s14, 0
    %p49 = por %p47, %p48
    %p50 = scmp.ne.s32.totalorder %s36, %s37
    %p51 = scmp.eq.s32.totalorder %s15, 3
    %p52 = por %p50, %p51
    %p54 = scmp.ne.s32.totalorder %s37, %s53
    %p55 = scmp.eq.s32.totalorder %s15, 0
    %p56 = por %p54, %p55
    %s58 = sadd.s32 %s57, 1
    %p61 = scmp.eq.s32.totalorder %s9, 3
    %p62 = scmp.ne.s32.totalorder %s57, %s59
    %p63 = scmp.eq.s32.totalorder %s9, 0
    %p64 = por %p62, %p63
    %p65 = scmp.ne.s32.totalorder %s57, %s59
    %p66 = scmp.eq.s32.totalorder %s14, 3
    %p67 = por %p65, %p66
    %p68 = scmp.ne.s32.totalorder %s59, %s60
    %p69 = scmp.eq.s32.totalorder %s14, 0
    %p70 = por %p68, %p69
    %p71 = scmp.ne.s32.totalorder %s59, %s60
    %p72 = scmp.eq.s32.totalorder %s15, 3
    %p73 = por %p71, %p72
    %p75 = scmp.ne.s32.totalorder %s60, %s74
    %p76 = scmp.eq.s32.totalorder %s15, 0
    %p77 = por %p75, %p76
    %s79 = sadd.s32 %s78, 1
    %p82 = scmp.eq.s32.totalorder %s9, 3
    %p83 = scmp.ne.s32.totalorder %s78, %s80
    %p84 = scmp.eq.s32.totalorder %s9, 0
    %p85 = por %p83, %p84
    %p86 = scmp.ne.s32.totalorder %s78, %s80
    %p87 = scmp.eq.s32.totalorder %s14, 3
    %p88 = por %p86, %p87
    %p89 = scmp.ne.s32.totalorder %s80, %s81
    %p90 = scmp.eq.s32.totalorder %s14, 0
    %p91 = por %p89, %p90
    %p92 = scmp.ne.s32.totalorder %s80, %s81
    %p93 = scmp.eq.s32.totalorder %s15, 3
    %p94 = por %p92, %p93
    %p96 = scmp.ne.s32.totalorder %s81, %s95
    %p97 = scmp.eq.s32.totalorder %s15, 0
    %p98 = por %p96, %p97
    %s99 = ssub.s32 %s16, %s28
    %p100 = scmp.eq.s32.totalorder %s99, 0
    %s102 = sadd.s32 %s101, 1
    %s103 = scalar_select %p100, %s101, %s102
    %p106 = pneg %p100
    %p107 = scmp.eq.s32.totalorder %s9, 3
    %p108 = por %p106, %p107
    %p109 = scmp.ne.s32.totalorder %s101, %s104
    %p110 = scmp.eq.s32.totalorder %s9, 0
    %p111 = por %p109, %p110
    %p112 = scmp.ne.s32.totalorder %s101, %s104
    %p113 = scmp.eq.s32.totalorder %s14, 3
    %p114 = por %p112, %p113
    %p115 = scmp.ne.s32.totalorder %s104, %s105
    %p116 = scmp.eq.s32.totalorder %s14, 0
    %p117 = por %p115, %p116
    %p118 = scmp.ne.s32.totalorder %s104, %s105
    %p119 = scmp.eq.s32.totalorder %s15, 3
    %p120 = por %p118, %p119
    %p122 = scmp.ne.s32.totalorder %s105, %s121
    %p123 = scmp.eq.s32.totalorder %s15, 0
    %p124 = por %p122, %p123
    %p125 = scmp.le.s32.totalorder 1, %s9
    %p126 = scmp.lt.s32.totalorder %s9, 5
    %p127 = pnand %p125, %p126
    %p128 = pneg %p127
    // Predicated region
    $region9: #{input_tnet_forward.8} parent=5 // pred_check
      _
    $region10: #{input_tnet_forward.8} parent=5 // pred_check_branch
      %130 = sbr.rel (%p127) target = $region12
    $region11: #{input_tnet_forward.8} parent=5 // pred_region
      %s131 = ssub.s32 %s9, 1
      // Predicated region
      $region13: #{input_tnet_forward.8} parent=11 // pred_check
        %p132 = pneg %p70
      $region14: #{input_tnet_forward.8} parent=11 // pred_check_branch
        %134 = sbr.rel (%p132) target = $region16
      $region15: #{input_tnet_forward.8} parent=11 // pred_region
        _
      $region16: #{input_tnet_forward.8} parent=11 // pred_fallthru
        _
      // Predicated region
      $region17: #{input_tnet_forward.8} parent=11 // pred_check
        %p135 = pneg %p91
      $region18: #{input_tnet_forward.8} parent=11 // pred_check_branch
        %137 = sbr.rel (%p135) target = $region20
      $region19: #{input_tnet_forward.8} parent=11 // pred_region
        _
      $region20: #{input_tnet_forward.8} parent=11 // pred_fallthru
        _
    $region12: #{input_tnet_forward.8} parent=5 // pred_fallthru
      _
    %p138 = scmp.lt.s32.totalorder %s9, 4
    // Predicated region
    $region21: #{input_tnet_forward.8} parent=5 // pred_check
      %p139 = pneg %p138
    $region22: #{input_tnet_forward.8} parent=5 // pred_check_branch
      %141 = sbr.rel (%p139) target = $region24
    $region23: #{input_tnet_forward.8} parent=5 // pred_region
      // Predicated region
      $region25: #{input_tnet_forward.8} parent=23 // pred_check
        %p142 = pneg %p43
      $region26: #{input_tnet_forward.8} parent=23 // pred_check_branch
        %144 = sbr.rel (%p142) target = $region28
      $region27: #{input_tnet_forward.8} parent=23 // pred_region
        %p145 = scmp.lt.s32.totalorder %s16, 3
        %s146 = scalar_select %p145, %s16, 3
        %p147 = scmp.lt.s32.totalorder %s17, 0
        %s148 = scalar_select %p147, %s17, 0
        %s149 = smul.addr %s146, 128
        %s150 = sadd.s32 %s148, %s149
        %s151 = smul.addr %s150, 4
        %s152 = scalar_lea.vmem %s0, %s151
      $region28: #{input_tnet_forward.8} parent=23 // pred_fallthru
        _
    $region24: #{input_tnet_forward.8} parent=5 // pred_fallthru
      _
    %p153 = scmp.le.s32.totalorder 1, %s9
    %p154 = scmp.lt.s32.totalorder %s9, 5
    %p155 = pnand %p153, %p154
    %p156 = pneg %p155
    // Predicated region
    $region29: #{input_tnet_forward.8} parent=5 // pred_check
      _
    $region30: #{input_tnet_forward.8} parent=5 // pred_check_branch
      %158 = sbr.rel (%p155) target = $region32
    $region31: #{input_tnet_forward.8} parent=5 // pred_region
      %s159 = ssub.s32 %s9, 1
      %p160 = scmp.lt.s32.totalorder %s18, 3
      %s161 = scalar_select %p160, %s18, 3
      %p162 = scmp.lt.s32.totalorder %s19, 0
      %s163 = scalar_select %p162, %s19, 0
      %s164 = smul.addr %s161, 128
      %s165 = sadd.s32 %s163, %s164
      %s166 = smul.addr %s165, 4
      %s167 = scalar_lea.vmem %s0, %s166
      %p168 = pneg %p49
      %p169 = pneg %p46
      %p170 = pneg %p70
      %p171 = pneg %p67
      %p172 = pneg %p91
      %p173 = pneg %p88
      %p174 = pneg %p117
      %p175 = pneg %p114
      %p176 = scmp.lt.s32.totalorder %s18, 3
      %s177 = scalar_select %p176, %s18, 3
      %s178 = smul.addr %s177, 128
      %s179 = smul.addr %s178, 8
      %s180 = scalar_lea.vmem %s3, %s179
      %p181 = scmp.lt.s32.totalorder %s18, 3
      %s182 = scalar_select %p181, %s18, 3
      %p183 = scmp.lt.s32.totalorder %s19, 0
      %s184 = scalar_select %p183, %s19, 0
      %s185 = smul.addr %s182, 128
      %s186 = sadd.s32 %s184, %s185
      %s187 = smul.addr %s186, 4
      %s188 = scalar_lea.vmem %s0, %s187
      %p189 = scmp.lt.s32.totalorder %s18, 3
      %s190 = scalar_select %p189, %s18, 3
      %s191 = smul.addr %s190, 128
      %s192 = smul.addr %s191, 8
      %s193 = scalar_lea.vmem %s3, %s192
      %p194 = scmp.eq.s32.totalorder %s19, 0
      // Predicated region
      $region33: #{input_tnet_forward.8} parent=31 // pred_check
        %p195 = pneg %p194
      $region34: #{input_tnet_forward.8} parent=31 // pred_check_branch
        %197 = sbr.rel (%p195) target = $region36
      $region35: #{input_tnet_forward.8} parent=31 // pred_region
        %vm198 = vcmask 130048
        %199 = vst.msk [vmem:[#allocation2] sm:$0xff] %vm198, -inf
        %200 = vst.msk [vmem:[#allocation2 + $0x8] sm:$0xff] %vm198, -inf
        %201 = vst.msk [vmem:[#allocation2 + $0x10] sm:$0xff] %vm198, -inf
        %202 = vst.msk [vmem:[#allocation2 + $0x18] sm:$0xff] %vm198, -inf
        %203 = vst.msk [vmem:[#allocation2 + $0x20] sm:$0xff] %vm198, -inf
        %204 = vst.msk [vmem:[#allocation2 + $0x28] sm:$0xff] %vm198, -inf
        %205 = vst.msk [vmem:[#allocation2 + $0x30] sm:$0xff] %vm198, -inf
        %206 = vst.msk [vmem:[#allocation2 + $0x38] sm:$0xff] %vm198, -inf
        %207 = vst.msk [vmem:[#allocation2 + $0x40] sm:$0xff] %vm198, -inf
        %208 = vst.msk [vmem:[#allocation2 + $0x48] sm:$0xff] %vm198, -inf
        %209 = vst.msk [vmem:[#allocation2 + $0x50] sm:$0xff] %vm198, -inf
        %210 = vst.msk [vmem:[#allocation2 + $0x58] sm:$0xff] %vm198, -inf
        %211 = vst.msk [vmem:[#allocation2 + $0x60] sm:$0xff] %vm198, -inf
        %212 = vst.msk [vmem:[#allocation2 + $0x68] sm:$0xff] %vm198, -inf
        %213 = vst.msk [vmem:[#allocation2 + $0x70] sm:$0xff] %vm198, -inf
        %214 = vst.msk [vmem:[#allocation2 + $0x78] sm:$0xff] %vm198, -inf
        %215 = vst.msk [vmem:[#allocation2 + $0x80] sm:$0xff] %vm198, -inf
        %216 = vst.msk [vmem:[#allocation2 + $0x88] sm:$0xff] %vm198, -inf
        %217 = vst.msk [vmem:[#allocation2 + $0x90] sm:$0xff] %vm198, -inf
        %218 = vst.msk [vmem:[#allocation2 + $0x98] sm:$0xff] %vm198, -inf
        %219 = vst.msk [vmem:[#allocation2 + $0xa0] sm:$0xff] %vm198, -inf
        %220 = vst.msk [vmem:[#allocation2 + $0xa8] sm:$0xff] %vm198, -inf
        %221 = vst.msk [vmem:[#allocation2 + $0xb0] sm:$0xff] %vm198, -inf
        %222 = vst.msk [vmem:[#allocation2 + $0xb8] sm:$0xff] %vm198, -inf
        %223 = vst.msk [vmem:[#allocation2 + $0xc0] sm:$0xff] %vm198, -inf
        %224 = vst.msk [vmem:[#allocation2 + $0xc8] sm:$0xff] %vm198, -inf
        %225 = vst.msk [vmem:[#allocation2 + $0xd0] sm:$0xff] %vm198, -inf
        %226 = vst.msk [vmem:[#allocation2 + $0xd8] sm:$0xff] %vm198, -inf
        %227 = vst.msk [vmem:[#allocation2 + $0xe0] sm:$0xff] %vm198, -inf
        %228 = vst.msk [vmem:[#allocation2 + $0xe8] sm:$0xff] %vm198, -inf
        %229 = vst.msk [vmem:[#allocation2 + $0xf0] sm:$0xff] %vm198, -inf
        %230 = vst.msk [vmem:[#allocation2 + $0xf8] sm:$0xff] %vm198, -inf
        %231 = vst.msk [vmem:[#allocation2 + $0x100] sm:$0xff] %vm198, -inf
        %232 = vst.msk [vmem:[#allocation2 + $0x108] sm:$0xff] %vm198, -inf
        %233 = vst.msk [vmem:[#allocation2 + $0x110] sm:$0xff] %vm198, -inf
        %234 = vst.msk [vmem:[#allocation2 + $0x118] sm:$0xff] %vm198, -inf
        %235 = vst.msk [vmem:[#allocation2 + $0x120] sm:$0xff] %vm198, -inf
        %236 = vst.msk [vmem:[#allocation2 + $0x128] sm:$0xff] %vm198, -inf
        %237 = vst.msk [vmem:[#allocation2 + $0x130] sm:$0xff] %vm198, -inf
        %238 = vst.msk [vmem:[#allocation2 + $0x138] sm:$0xff] %vm198, -inf
        %239 = vst.msk [vmem:[#allocation2 + $0x140] sm:$0xff] %vm198, -inf
        %240 = vst.msk [vmem:[#allocation2 + $0x148] sm:$0xff] %vm198, -inf
        %241 = vst.msk [vmem:[#allocation2 + $0x150] sm:$0xff] %vm198, -inf
        %242 = vst.msk [vmem:[#allocation2 + $0x158] sm:$0xff] %vm198, -inf
        %243 = vst.msk [vmem:[#allocation2 + $0x160] sm:$0xff] %vm198, -inf
        %244 = vst.msk [vmem:[#allocation2 + $0x168] sm:$0xff] %vm198, -inf
        %245 = vst.msk [vmem:[#allocation2 + $0x170] sm:$0xff] %vm198, -inf
        %246 = vst.msk [vmem:[#allocation2 + $0x178] sm:$0xff] %vm198, -inf
        %247 = vst.msk [vmem:[#allocation2 + $0x180] sm:$0xff] %vm198, -inf
        %248 = vst.msk [vmem:[#allocation2 + $0x188] sm:$0xff] %vm198, -inf
        %249 = vst.msk [vmem:[#allocation2 + $0x190] sm:$0xff] %vm198, -inf
        %250 = vst.msk [vmem:[#allocation2 + $0x198] sm:$0xff] %vm198, -inf
        %251 = vst.msk [vmem:[#allocation2 + $0x1a0] sm:$0xff] %vm198, -inf
        %252 = vst.msk [vmem:[#allocation2 + $0x1a8] sm:$0xff] %vm198, -inf
        %253 = vst.msk [vmem:[#allocation2 + $0x1b0] sm:$0xff] %vm198, -inf
        %254 = vst.msk [vmem:[#allocation2 + $0x1b8] sm:$0xff] %vm198, -inf
        %255 = vst.msk [vmem:[#allocation2 + $0x1c0] sm:$0xff] %vm198, -inf
        %256 = vst.msk [vmem:[#allocation2 + $0x1c8] sm:$0xff] %vm198, -inf
        %257 = vst.msk [vmem:[#allocation2 + $0x1d0] sm:$0xff] %vm198, -inf
        %258 = vst.msk [vmem:[#allocation2 + $0x1d8] sm:$0xff] %vm198, -inf
        %259 = vst.msk [vmem:[#allocation2 + $0x1e0] sm:$0xff] %vm198, -inf
        %260 = vst.msk [vmem:[#allocation2 + $0x1e8] sm:$0xff] %vm198, -inf
        %261 = vst.msk [vmem:[#allocation2 + $0x1f0] sm:$0xff] %vm198, -inf
        %262 = vst.msk [vmem:[#allocation2 + $0x1f8] sm:$0xff] %vm198, -inf
        %263 = vst.msk [vmem:[#allocation2 + $0x200] sm:$0xff] %vm198, -inf
        %264 = vst.msk [vmem:[#allocation2 + $0x208] sm:$0xff] %vm198, -inf
        %265 = vst.msk [vmem:[#allocation2 + $0x210] sm:$0xff] %vm198, -inf
        %266 = vst.msk [vmem:[#allocation2 + $0x218] sm:$0xff] %vm198, -inf
        %267 = vst.msk [vmem:[#allocation2 + $0x220] sm:$0xff] %vm198, -inf
        %268 = vst.msk [vmem:[#allocation2 + $0x228] sm:$0xff] %vm198, -inf
        %269 = vst.msk [vmem:[#allocation2 + $0x230] sm:$0xff] %vm198, -inf
        %270 = vst.msk [vmem:[#allocation2 + $0x238] sm:$0xff] %vm198, -inf
        %271 = vst.msk [vmem:[#allocation2 + $0x240] sm:$0xff] %vm198, -inf
        %272 = vst.msk [vmem:[#allocation2 + $0x248] sm:$0xff] %vm198, -inf
        %273 = vst.msk [vmem:[#allocation2 + $0x250] sm:$0xff] %vm198, -inf
        %274 = vst.msk [vmem:[#allocation2 + $0x258] sm:$0xff] %vm198, -inf
        %275 = vst.msk [vmem:[#allocation2 + $0x260] sm:$0xff] %vm198, -inf
        %276 = vst.msk [vmem:[#allocation2 + $0x268] sm:$0xff] %vm198, -inf
        %277 = vst.msk [vmem:[#allocation2 + $0x270] sm:$0xff] %vm198, -inf
        %278 = vst.msk [vmem:[#allocation2 + $0x278] sm:$0xff] %vm198, -inf
        %279 = vst.msk [vmem:[#allocation2 + $0x280] sm:$0xff] %vm198, -inf
        %280 = vst.msk [vmem:[#allocation2 + $0x288] sm:$0xff] %vm198, -inf
        %281 = vst.msk [vmem:[#allocation2 + $0x290] sm:$0xff] %vm198, -inf
        %282 = vst.msk [vmem:[#allocation2 + $0x298] sm:$0xff] %vm198, -inf
        %283 = vst.msk [vmem:[#allocation2 + $0x2a0] sm:$0xff] %vm198, -inf
        %284 = vst.msk [vmem:[#allocation2 + $0x2a8] sm:$0xff] %vm198, -inf
        %285 = vst.msk [vmem:[#allocation2 + $0x2b0] sm:$0xff] %vm198, -inf
        %286 = vst.msk [vmem:[#allocation2 + $0x2b8] sm:$0xff] %vm198, -inf
        %287 = vst.msk [vmem:[#allocation2 + $0x2c0] sm:$0xff] %vm198, -inf
        %288 = vst.msk [vmem:[#allocation2 + $0x2c8] sm:$0xff] %vm198, -inf
        %289 = vst.msk [vmem:[#allocation2 + $0x2d0] sm:$0xff] %vm198, -inf
        %290 = vst.msk [vmem:[#allocation2 + $0x2d8] sm:$0xff] %vm198, -inf
        %291 = vst.msk [vmem:[#allocation2 + $0x2e0] sm:$0xff] %vm198, -inf
        %292 = vst.msk [vmem:[#allocation2 + $0x2e8] sm:$0xff] %vm198, -inf
        %293 = vst.msk [vmem:[#allocation2 + $0x2f0] sm:$0xff] %vm198, -inf
        %294 = vst.msk [vmem:[#allocation2 + $0x2f8] sm:$0xff] %vm198, -inf
        %295 = vst.msk [vmem:[#allocation2 + $0x300] sm:$0xff] %vm198, -inf
        %296 = vst.msk [vmem:[#allocation2 + $0x308] sm:$0xff] %vm198, -inf
        %297 = vst.msk [vmem:[#allocation2 + $0x310] sm:$0xff] %vm198, -inf
        %298 = vst.msk [vmem:[#allocation2 + $0x318] sm:$0xff] %vm198, -inf
        %299 = vst.msk [vmem:[#allocation2 + $0x320] sm:$0xff] %vm198, -inf
        %300 = vst.msk [vmem:[#allocation2 + $0x328] sm:$0xff] %vm198, -inf
        %301 = vst.msk [vmem:[#allocation2 + $0x330] sm:$0xff] %vm198, -inf
        %302 = vst.msk [vmem:[#allocation2 + $0x338] sm:$0xff] %vm198, -inf
        %303 = vst.msk [vmem:[#allocation2 + $0x340] sm:$0xff] %vm198, -inf
        %304 = vst.msk [vmem:[#allocation2 + $0x348] sm:$0xff] %vm198, -inf
        %305 = vst.msk [vmem:[#allocation2 + $0x350] sm:$0xff] %vm198, -inf
        %306 = vst.msk [vmem:[#allocation2 + $0x358] sm:$0xff] %vm198, -inf
        %307 = vst.msk [vmem:[#allocation2 + $0x360] sm:$0xff] %vm198, -inf
        %308 = vst.msk [vmem:[#allocation2 + $0x368] sm:$0xff] %vm198, -inf
        %309 = vst.msk [vmem:[#allocation2 + $0x370] sm:$0xff] %vm198, -inf
        %310 = vst.msk [vmem:[#allocation2 + $0x378] sm:$0xff] %vm198, -inf
        %311 = vst.msk [vmem:[#allocation2 + $0x380] sm:$0xff] %vm198, -inf
        %312 = vst.msk [vmem:[#allocation2 + $0x388] sm:$0xff] %vm198, -inf
        %313 = vst.msk [vmem:[#allocation2 + $0x390] sm:$0xff] %vm198, -inf
        %314 = vst.msk [vmem:[#allocation2 + $0x398] sm:$0xff] %vm198, -inf
        %315 = vst.msk [vmem:[#allocation2 + $0x3a0] sm:$0xff] %vm198, -inf
        %316 = vst.msk [vmem:[#allocation2 + $0x3a8] sm:$0xff] %vm198, -inf
        %317 = vst.msk [vmem:[#allocation2 + $0x3b0] sm:$0xff] %vm198, -inf
        %318 = vst.msk [vmem:[#allocation2 + $0x3b8] sm:$0xff] %vm198, -inf
        %319 = vst.msk [vmem:[#allocation2 + $0x3c0] sm:$0xff] %vm198, -inf
        %320 = vst.msk [vmem:[#allocation2 + $0x3c8] sm:$0xff] %vm198, -inf
        %321 = vst.msk [vmem:[#allocation2 + $0x3d0] sm:$0xff] %vm198, -inf
        %322 = vst.msk [vmem:[#allocation2 + $0x3d8] sm:$0xff] %vm198, -inf
        %323 = vst.msk [vmem:[#allocation2 + $0x3e0] sm:$0xff] %vm198, -inf
        %324 = vst.msk [vmem:[#allocation2 + $0x3e8] sm:$0xff] %vm198, -inf
        %325 = vst.msk [vmem:[#allocation2 + $0x3f0] sm:$0xff] %vm198, -inf
        %326 = vst.msk [vmem:[#allocation2 + $0x3f8] sm:$0xff] %vm198, -inf
      $region36: #{input_tnet_forward.8} parent=31 // pred_fallthru
        _
      %v327 = vld [vmem:[%s188] sm:$0xf]
      %v328 = vld [vmem:[%s188 + $0x4] sm:$0xf]
      %v329 = vld [vmem:[%s188 + $0x8] sm:$0xf]
      %v330 = vld [vmem:[%s188 + $0xc] sm:$0xf]
      %v331 = vld [vmem:[%s188 + $0x10] sm:$0xf]
      %v332 = vld [vmem:[%s188 + $0x14] sm:$0xf]
      %v333 = vld [vmem:[%s188 + $0x18] sm:$0xf]
      %v334 = vld [vmem:[%s188 + $0x1c] sm:$0xf]
      %v335 = vld [vmem:[%s188 + $0x20] sm:$0xf]
      %v336 = vld [vmem:[%s188 + $0x24] sm:$0xf]
      %v337 = vld [vmem:[%s188 + $0x28] sm:$0xf]
      %v338 = vld [vmem:[%s188 + $0x2c] sm:$0xf]
      %v339 = vld [vmem:[%s188 + $0x30] sm:$0xf]
      %v340 = vld [vmem:[%s188 + $0x34] sm:$0xf]
      %v341 = vld [vmem:[%s188 + $0x38] sm:$0xf]
      %v342 = vld [vmem:[%s188 + $0x3c] sm:$0xf]
      %v343 = vld [vmem:[%s188 + $0x40] sm:$0xf]
      %v344 = vld [vmem:[%s188 + $0x44] sm:$0xf]
      %v345 = vld [vmem:[%s188 + $0x48] sm:$0xf]
      %v346 = vld [vmem:[%s188 + $0x4c] sm:$0xf]
      %v347 = vld [vmem:[%s188 + $0x50] sm:$0xf]
      %v348 = vld [vmem:[%s188 + $0x54] sm:$0xf]
      %v349 = vld [vmem:[%s188 + $0x58] sm:$0xf]
      %v350 = vld [vmem:[%s188 + $0x5c] sm:$0xf]
      %v351 = vld [vmem:[%s188 + $0x60] sm:$0xf]
      %v352 = vld [vmem:[%s188 + $0x64] sm:$0xf]
      %v353 = vld [vmem:[%s188 + $0x68] sm:$0xf]
      %v354 = vld [vmem:[%s188 + $0x6c] sm:$0xf]
      %v355 = vld [vmem:[%s188 + $0x70] sm:$0xf]
      %v356 = vld [vmem:[%s188 + $0x74] sm:$0xf]
      %v357 = vld [vmem:[%s188 + $0x78] sm:$0xf]
      %v358 = vld [vmem:[%s188 + $0x7c] sm:$0xf]
      %v359 = vld [vmem:[%s188 + $0x80] sm:$0xf]
      %v360 = vld [vmem:[%s188 + $0x84] sm:$0xf]
      %v361 = vld [vmem:[%s188 + $0x88] sm:$0xf]
      %v362 = vld [vmem:[%s188 + $0x8c] sm:$0xf]
      %v363 = vld [vmem:[%s188 + $0x90] sm:$0xf]
      %v364 = vld [vmem:[%s188 + $0x94] sm:$0xf]
      %v365 = vld [vmem:[%s188 + $0x98] sm:$0xf]
      %v366 = vld [vmem:[%s188 + $0x9c] sm:$0xf]
      %v367 = vld [vmem:[%s188 + $0xa0] sm:$0xf]
      %v368 = vld [vmem:[%s188 + $0xa4] sm:$0xf]
      %v369 = vld [vmem:[%s188 + $0xa8] sm:$0xf]
      %v370 = vld [vmem:[%s188 + $0xac] sm:$0xf]
      %v371 = vld [vmem:[%s188 + $0xb0] sm:$0xf]
      %v372 = vld [vmem:[%s188 + $0xb4] sm:$0xf]
      %v373 = vld [vmem:[%s188 + $0xb8] sm:$0xf]
      %v374 = vld [vmem:[%s188 + $0xbc] sm:$0xf]
      %v375 = vld [vmem:[%s188 + $0xc0] sm:$0xf]
      %v376 = vld [vmem:[%s188 + $0xc4] sm:$0xf]
      %v377 = vld [vmem:[%s188 + $0xc8] sm:$0xf]
      %v378 = vld [vmem:[%s188 + $0xcc] sm:$0xf]
      %v379 = vld [vmem:[%s188 + $0xd0] sm:$0xf]
      %v380 = vld [vmem:[%s188 + $0xd4] sm:$0xf]
      %v381 = vld [vmem:[%s188 + $0xd8] sm:$0xf]
      %v382 = vld [vmem:[%s188 + $0xdc] sm:$0xf]
      %v383 = vld [vmem:[%s188 + $0xe0] sm:$0xf]
      %v384 = vld [vmem:[%s188 + $0xe4] sm:$0xf]
      %v385 = vld [vmem:[%s188 + $0xe8] sm:$0xf]
      %v386 = vld [vmem:[%s188 + $0xec] sm:$0xf]
      %v387 = vld [vmem:[%s188 + $0xf0] sm:$0xf]
      %v388 = vld [vmem:[%s188 + $0xf4] sm:$0xf]
      %v389 = vld [vmem:[%s188 + $0xf8] sm:$0xf]
      %v390 = vld [vmem:[%s188 + $0xfc] sm:$0xf]
      %v391 = vld [vmem:[%s188 + $0x100] sm:$0xf]
      %v392 = vld [vmem:[%s188 + $0x104] sm:$0xf]
      %v393 = vld [vmem:[%s188 + $0x108] sm:$0xf]
      %v394 = vld [vmem:[%s188 + $0x10c] sm:$0xf]
      %v395 = vld [vmem:[%s188 + $0x110] sm:$0xf]
      %v396 = vld [vmem:[%s188 + $0x114] sm:$0xf]
      %v397 = vld [vmem:[%s188 + $0x118] sm:$0xf]
      %v398 = vld [vmem:[%s188 + $0x11c] sm:$0xf]
      %v399 = vld [vmem:[%s188 + $0x120] sm:$0xf]
      %v400 = vld [vmem:[%s188 + $0x124] sm:$0xf]
      %v401 = vld [vmem:[%s188 + $0x128] sm:$0xf]
      %v402 = vld [vmem:[%s188 + $0x12c] sm:$0xf]
      %v403 = vld [vmem:[%s188 + $0x130] sm:$0xf]
      %v404 = vld [vmem:[%s188 + $0x134] sm:$0xf]
      %v405 = vld [vmem:[%s188 + $0x138] sm:$0xf]
      %v406 = vld [vmem:[%s188 + $0x13c] sm:$0xf]
      %v407 = vld [vmem:[%s188 + $0x140] sm:$0xf]
      %v408 = vld [vmem:[%s188 + $0x144] sm:$0xf]
      %v409 = vld [vmem:[%s188 + $0x148] sm:$0xf]
      %v410 = vld [vmem:[%s188 + $0x14c] sm:$0xf]
      %v411 = vld [vmem:[%s188 + $0x150] sm:$0xf]
      %v412 = vld [vmem:[%s188 + $0x154] sm:$0xf]
      %v413 = vld [vmem:[%s188 + $0x158] sm:$0xf]
      %v414 = vld [vmem:[%s188 + $0x15c] sm:$0xf]
      %v415 = vld [vmem:[%s188 + $0x160] sm:$0xf]
      %v416 = vld [vmem:[%s188 + $0x164] sm:$0xf]
      %v417 = vld [vmem:[%s188 + $0x168] sm:$0xf]
      %v418 = vld [vmem:[%s188 + $0x16c] sm:$0xf]
      %v419 = vld [vmem:[%s188 + $0x170] sm:$0xf]
      %v420 = vld [vmem:[%s188 + $0x174] sm:$0xf]
      %v421 = vld [vmem:[%s188 + $0x178] sm:$0xf]
      %v422 = vld [vmem:[%s188 + $0x17c] sm:$0xf]
      %v423 = vld [vmem:[%s188 + $0x180] sm:$0xf]
      %v424 = vld [vmem:[%s188 + $0x184] sm:$0xf]
      %v425 = vld [vmem:[%s188 + $0x188] sm:$0xf]
      %v426 = vld [vmem:[%s188 + $0x18c] sm:$0xf]
      %v427 = vld [vmem:[%s188 + $0x190] sm:$0xf]
      %v428 = vld [vmem:[%s188 + $0x194] sm:$0xf]
      %v429 = vld [vmem:[%s188 + $0x198] sm:$0xf]
      %v430 = vld [vmem:[%s188 + $0x19c] sm:$0xf]
      %v431 = vld [vmem:[%s188 + $0x1a0] sm:$0xf]
      %v432 = vld [vmem:[%s188 + $0x1a4] sm:$0xf]
      %v433 = vld [vmem:[%s188 + $0x1a8] sm:$0xf]
      %v434 = vld [vmem:[%s188 + $0x1ac] sm:$0xf]
      %v435 = vld [vmem:[%s188 + $0x1b0] sm:$0xf]
      %v436 = vld [vmem:[%s188 + $0x1b4] sm:$0xf]
      %v437 = vld [vmem:[%s188 + $0x1b8] sm:$0xf]
      %v438 = vld [vmem:[%s188 + $0x1bc] sm:$0xf]
      %v439 = vld [vmem:[%s188 + $0x1c0] sm:$0xf]
      %v440 = vld [vmem:[%s188 + $0x1c4] sm:$0xf]
      %v441 = vld [vmem:[%s188 + $0x1c8] sm:$0xf]
      %v442 = vld [vmem:[%s188 + $0x1cc] sm:$0xf]
      %v443 = vld [vmem:[%s188 + $0x1d0] sm:$0xf]
      %v444 = vld [vmem:[%s188 + $0x1d4] sm:$0xf]
      %v445 = vld [vmem:[%s188 + $0x1d8] sm:$0xf]
      %v446 = vld [vmem:[%s188 + $0x1dc] sm:$0xf]
      %v447 = vld [vmem:[%s188 + $0x1e0] sm:$0xf]
      %v448 = vld [vmem:[%s188 + $0x1e4] sm:$0xf]
      %v449 = vld [vmem:[%s188 + $0x1e8] sm:$0xf]
      %v450 = vld [vmem:[%s188 + $0x1ec] sm:$0xf]
      %v451 = vld [vmem:[%s188 + $0x1f0] sm:$0xf]
      %v452 = vld [vmem:[%s188 + $0x1f4] sm:$0xf]
      %v453 = vld [vmem:[%s188 + $0x1f8] sm:$0xf]
      %v454 = vld [vmem:[%s188 + $0x1fc] sm:$0xf]
      %v455 = vunpack.c.l.bf16 %v327
      %v456 = vunpack.c.l.bf16 %v328
      %v457 = vunpack.c.l.bf16 %v329
      %v458 = vunpack.c.l.bf16 %v330
      %v459 = vunpack.c.l.bf16 %v331
      %v460 = vunpack.c.l.bf16 %v332
      %v461 = vunpack.c.l.bf16 %v333
      %v462 = vunpack.c.l.bf16 %v334
      %v463 = vunpack.c.l.bf16 %v335
      %v464 = vunpack.c.l.bf16 %v336
      %v465 = vunpack.c.l.bf16 %v337
      %v466 = vunpack.c.l.bf16 %v338
      %v467 = vunpack.c.l.bf16 %v339
      %v468 = vunpack.c.l.bf16 %v340
      %v469 = vunpack.c.l.bf16 %v341
      %v470 = vunpack.c.l.bf16 %v342
      %v471 = vunpack.c.l.bf16 %v343
      %v472 = vunpack.c.l.bf16 %v344
      %v473 = vunpack.c.l.bf16 %v345
      %v474 = vunpack.c.l.bf16 %v346
      %v475 = vunpack.c.l.bf16 %v347
      %v476 = vunpack.c.l.bf16 %v348
      %v477 = vunpack.c.l.bf16 %v349
      %v478 = vunpack.c.l.bf16 %v350
      %v479 = vunpack.c.l.bf16 %v351
      %v480 = vunpack.c.l.bf16 %v352
      %v481 = vunpack.c.l.bf16 %v353
      %v482 = vunpack.c.l.bf16 %v354
      %v483 = vunpack.c.l.bf16 %v355
      %v484 = vunpack.c.l.bf16 %v356
      %v485 = vunpack.c.l.bf16 %v357
      %v486 = vunpack.c.l.bf16 %v358
      %v487 = vunpack.c.l.bf16 %v359
      %v488 = vunpack.c.l.bf16 %v360
      %v489 = vunpack.c.l.bf16 %v361
      %v490 = vunpack.c.l.bf16 %v362
      %v491 = vunpack.c.l.bf16 %v363
      %v492 = vunpack.c.l.bf16 %v364
      %v493 = vunpack.c.l.bf16 %v365
      %v494 = vunpack.c.l.bf16 %v366
      %v495 = vunpack.c.l.bf16 %v367
      %v496 = vunpack.c.l.bf16 %v368
      %v497 = vunpack.c.l.bf16 %v369
      %v498 = vunpack.c.l.bf16 %v370
      %v499 = vunpack.c.l.bf16 %v371
      %v500 = vunpack.c.l.bf16 %v372
      %v501 = vunpack.c.l.bf16 %v373
      %v502 = vunpack.c.l.bf16 %v374
      %v503 = vunpack.c.l.bf16 %v375
      %v504 = vunpack.c.l.bf16 %v376
      %v505 = vunpack.c.l.bf16 %v377
      %v506 = vunpack.c.l.bf16 %v378
      %v507 = vunpack.c.l.bf16 %v379
      %v508 = vunpack.c.l.bf16 %v380
      %v509 = vunpack.c.l.bf16 %v381
      %v510 = vunpack.c.l.bf16 %v382
      %v511 = vunpack.c.l.bf16 %v383
      %v512 = vunpack.c.l.bf16 %v384
      %v513 = vunpack.c.l.bf16 %v385
      %v514 = vunpack.c.l.bf16 %v386
      %v515 = vunpack.c.l.bf16 %v387
      %v516 = vunpack.c.l.bf16 %v388
      %v517 = vunpack.c.l.bf16 %v389
      %v518 = vunpack.c.l.bf16 %v390
      %v519 = vunpack.c.l.bf16 %v391
      %v520 = vunpack.c.l.bf16 %v392
      %v521 = vunpack.c.l.bf16 %v393
      %v522 = vunpack.c.l.bf16 %v394
      %v523 = vunpack.c.l.bf16 %v395
      %v524 = vunpack.c.l.bf16 %v396
      %v525 = vunpack.c.l.bf16 %v397
      %v526 = vunpack.c.l.bf16 %v398
      %v527 = vunpack.c.l.bf16 %v399
      %v528 = vunpack.c.l.bf16 %v400
      %v529 = vunpack.c.l.bf16 %v401
      %v530 = vunpack.c.l.bf16 %v402
      %v531 = vunpack.c.l.bf16 %v403
      %v532 = vunpack.c.l.bf16 %v404
      %v533 = vunpack.c.l.bf16 %v405
      %v534 = vunpack.c.l.bf16 %v406
      %v535 = vunpack.c.l.bf16 %v407
      %v536 = vunpack.c.l.bf16 %v408
      %v537 = vunpack.c.l.bf16 %v409
      %v538 = vunpack.c.l.bf16 %v410
      %v539 = vunpack.c.l.bf16 %v411
      %v540 = vunpack.c.l.bf16 %v412
      %v541 = vunpack.c.l.bf16 %v413
      %v542 = vunpack.c.l.bf16 %v414
      %v543 = vunpack.c.l.bf16 %v415
      %v544 = vunpack.c.l.bf16 %v416
      %v545 = vunpack.c.l.bf16 %v417
      %v546 = vunpack.c.l.bf16 %v418
      %v547 = vunpack.c.l.bf16 %v419
      %v548 = vunpack.c.l.bf16 %v420
      %v549 = vunpack.c.l.bf16 %v421
      %v550 = vunpack.c.l.bf16 %v422
      %v551 = vunpack.c.l.bf16 %v423
      %v552 = vunpack.c.l.bf16 %v424
      %v553 = vunpack.c.l.bf16 %v425
      %v554 = vunpack.c.l.bf16 %v426
      %v555 = vunpack.c.l.bf16 %v427
      %v556 = vunpack.c.l.bf16 %v428
      %v557 = vunpack.c.l.bf16 %v429
      %v558 = vunpack.c.l.bf16 %v430
      %v559 = vunpack.c.l.bf16 %v431
      %v560 = vunpack.c.l.bf16 %v432
      %v561 = vunpack.c.l.bf16 %v433
      %v562 = vunpack.c.l.bf16 %v434
      %v563 = vunpack.c.l.bf16 %v435
      %v564 = vunpack.c.l.bf16 %v436
      %v565 = vunpack.c.l.bf16 %v437
      %v566 = vunpack.c.l.bf16 %v438
      %v567 = vunpack.c.l.bf16 %v439
      %v568 = vunpack.c.l.bf16 %v440
      %v569 = vunpack.c.l.bf16 %v441
      %v570 = vunpack.c.l.bf16 %v442
      %v571 = vunpack.c.l.bf16 %v443
      %v572 = vunpack.c.l.bf16 %v444
      %v573 = vunpack.c.l.bf16 %v445
      %v574 = vunpack.c.l.bf16 %v446
      %v575 = vunpack.c.l.bf16 %v447
      %v576 = vunpack.c.l.bf16 %v448
      %v577 = vunpack.c.l.bf16 %v449
      %v578 = vunpack.c.l.bf16 %v450
      %v579 = vunpack.c.l.bf16 %v451
      %v580 = vunpack.c.l.bf16 %v452
      %v581 = vunpack.c.l.bf16 %v453
      %v582 = vunpack.c.l.bf16 %v454
      %v583 = vld [vmem:[%s1] sm:$0xf]
      %v584 = vld [vmem:[%s1 + $0x4] sm:$0xf]
      %v585 = vld [vmem:[%s1 + $0x8] sm:$0xf]
      %v586 = vld [vmem:[%s1 + $0xc] sm:$0xf]
      %v587 = vld [vmem:[%s1 + $0x10] sm:$0xf]
      %v588 = vld [vmem:[%s1 + $0x14] sm:$0xf]
      %v589 = vld [vmem:[%s1 + $0x18] sm:$0xf]
      %v590 = vld [vmem:[%s1 + $0x1c] sm:$0xf]
      %v591 = vld [vmem:[%s1 + $0x20] sm:$0xf]
      %v592 = vld [vmem:[%s1 + $0x24] sm:$0xf]
      %v593 = vld [vmem:[%s1 + $0x28] sm:$0xf]
      %v594 = vld [vmem:[%s1 + $0x2c] sm:$0xf]
      %v595 = vld [vmem:[%s1 + $0x30] sm:$0xf]
      %v596 = vld [vmem:[%s1 + $0x34] sm:$0xf]
      %v597 = vld [vmem:[%s1 + $0x38] sm:$0xf]
      %v598 = vld [vmem:[%s1 + $0x3c] sm:$0xf]
      %v599 = vld [vmem:[%s1 + $0x40] sm:$0xf]
      %v600 = vld [vmem:[%s1 + $0x44] sm:$0xf]
      %v601 = vld [vmem:[%s1 + $0x48] sm:$0xf]
      %v602 = vld [vmem:[%s1 + $0x4c] sm:$0xf]
      %v603 = vld [vmem:[%s1 + $0x50] sm:$0xf]
      %v604 = vld [vmem:[%s1 + $0x54] sm:$0xf]
      %v605 = vld [vmem:[%s1 + $0x58] sm:$0xf]
      %v606 = vld [vmem:[%s1 + $0x5c] sm:$0xf]
      %v607 = vld [vmem:[%s1 + $0x60] sm:$0xf]
      %v608 = vld [vmem:[%s1 + $0x64] sm:$0xf]
      %v609 = vld [vmem:[%s1 + $0x68] sm:$0xf]
      %v610 = vld [vmem:[%s1 + $0x6c] sm:$0xf]
      %v611 = vld [vmem:[%s1 + $0x70] sm:$0xf]
      %v612 = vld [vmem:[%s1 + $0x74] sm:$0xf]
      %v613 = vld [vmem:[%s1 + $0x78] sm:$0xf]
      %v614 = vld [vmem:[%s1 + $0x7c] sm:$0xf]
      %v615 = vld [vmem:[%s1 + $0x80] sm:$0xf]
      %v616 = vld [vmem:[%s1 + $0x84] sm:$0xf]
      %v617 = vld [vmem:[%s1 + $0x88] sm:$0xf]
      %v618 = vld [vmem:[%s1 + $0x8c] sm:$0xf]
      %v619 = vld [vmem:[%s1 + $0x90] sm:$0xf]
      %v620 = vld [vmem:[%s1 + $0x94] sm:$0xf]
      %v621 = vld [vmem:[%s1 + $0x98] sm:$0xf]
      %v622 = vld [vmem:[%s1 + $0x9c] sm:$0xf]
      %v623 = vld [vmem:[%s1 + $0xa0] sm:$0xf]
      %v624 = vld [vmem:[%s1 + $0xa4] sm:$0xf]
      %v625 = vld [vmem:[%s1 + $0xa8] sm:$0xf]
      %v626 = vld [vmem:[%s1 + $0xac] sm:$0xf]
      %v627 = vld [vmem:[%s1 + $0xb0] sm:$0xf]
      %v628 = vld [vmem:[%s1 + $0xb4] sm:$0xf]
      %v629 = vld [vmem:[%s1 + $0xb8] sm:$0xf]
      %v630 = vld [vmem:[%s1 + $0xbc] sm:$0xf]
      %v631 = vld [vmem:[%s1 + $0xc0] sm:$0xf]
      %v632 = vld [vmem:[%s1 + $0xc4] sm:$0xf]
      %v633 = vld [vmem:[%s1 + $0xc8] sm:$0xf]
      %v634 = vld [vmem:[%s1 + $0xcc] sm:$0xf]
      %v635 = vld [vmem:[%s1 + $0xd0] sm:$0xf]
      %v636 = vld [vmem:[%s1 + $0xd4] sm:$0xf]
      %v637 = vld [vmem:[%s1 + $0xd8] sm:$0xf]
      %v638 = vld [vmem:[%s1 + $0xdc] sm:$0xf]
      %v639 = vld [vmem:[%s1 + $0xe0] sm:$0xf]
      %v640 = vld [vmem:[%s1 + $0xe4] sm:$0xf]
      %v641 = vld [vmem:[%s1 + $0xe8] sm:$0xf]
      %v642 = vld [vmem:[%s1 + $0xec] sm:$0xf]
      %v643 = vld [vmem:[%s1 + $0xf0] sm:$0xf]
      %v644 = vld [vmem:[%s1 + $0xf4] sm:$0xf]
      %v645 = vld [vmem:[%s1 + $0xf8] sm:$0xf]
      %v646 = vld [vmem:[%s1 + $0xfc] sm:$0xf]
      %v647 = vld [vmem:[%s1 + $0x100] sm:$0xf]
      %v648 = vld [vmem:[%s1 + $0x104] sm:$0xf]
      %v649 = vld [vmem:[%s1 + $0x108] sm:$0xf]
      %v650 = vld [vmem:[%s1 + $0x10c] sm:$0xf]
      %v651 = vld [vmem:[%s1 + $0x110] sm:$0xf]
      %v652 = vld [vmem:[%s1 + $0x114] sm:$0xf]
      %v653 = vld [vmem:[%s1 + $0x118] sm:$0xf]
      %v654 = vld [vmem:[%s1 + $0x11c] sm:$0xf]
      %v655 = vld [vmem:[%s1 + $0x120] sm:$0xf]
      %v656 = vld [vmem:[%s1 + $0x124] sm:$0xf]
      %v657 = vld [vmem:[%s1 + $0x128] sm:$0xf]
      %v658 = vld [vmem:[%s1 + $0x12c] sm:$0xf]
      %v659 = vld [vmem:[%s1 + $0x130] sm:$0xf]
      %v660 = vld [vmem:[%s1 + $0x134] sm:$0xf]
      %v661 = vld [vmem:[%s1 + $0x138] sm:$0xf]
      %v662 = vld [vmem:[%s1 + $0x13c] sm:$0xf]
      %v663 = vld [vmem:[%s1 + $0x140] sm:$0xf]
      %v664 = vld [vmem:[%s1 + $0x144] sm:$0xf]
      %v665 = vld [vmem:[%s1 + $0x148] sm:$0xf]
      %v666 = vld [vmem:[%s1 + $0x14c] sm:$0xf]
      %v667 = vld [vmem:[%s1 + $0x150] sm:$0xf]
      %v668 = vld [vmem:[%s1 + $0x154] sm:$0xf]
      %v669 = vld [vmem:[%s1 + $0x158] sm:$0xf]
      %v670 = vld [vmem:[%s1 + $0x15c] sm:$0xf]
      %v671 = vld [vmem:[%s1 + $0x160] sm:$0xf]
      %v672 = vld [vmem:[%s1 + $0x164] sm:$0xf]
      %v673 = vld [vmem:[%s1 + $0x168] sm:$0xf]
      %v674 = vld [vmem:[%s1 + $0x16c] sm:$0xf]
      %v675 = vld [vmem:[%s1 + $0x170] sm:$0xf]
      %v676 = vld [vmem:[%s1 + $0x174] sm:$0xf]
      %v677 = vld [vmem:[%s1 + $0x178] sm:$0xf]
      %v678 = vld [vmem:[%s1 + $0x17c] sm:$0xf]
      %v679 = vld [vmem:[%s1 + $0x180] sm:$0xf]
      %v680 = vld [vmem:[%s1 + $0x184] sm:$0xf]
      %v681 = vld [vmem:[%s1 + $0x188] sm:$0xf]
      %v682 = vld [vmem:[%s1 + $0x18c] sm:$0xf]
      %v683 = vld [vmem:[%s1 + $0x190] sm:$0xf]
      %v684 = vld [vmem:[%s1 + $0x194] sm:$0xf]
      %v685 = vld [vmem:[%s1 + $0x198] sm:$0xf]
      %v686 = vld [vmem:[%s1 + $0x19c] sm:$0xf]
      %v687 = vld [vmem:[%s1 + $0x1a0] sm:$0xf]
      %v688 = vld [vmem:[%s1 + $0x1a4] sm:$0xf]
      %v689 = vld [vmem:[%s1 + $0x1a8] sm:$0xf]
      %v690 = vld [vmem:[%s1 + $0x1ac] sm:$0xf]
      %v691 = vld [vmem:[%s1 + $0x1b0] sm:$0xf]
      %v692 = vld [vmem:[%s1 + $0x1b4] sm:$0xf]
      %v693 = vld [vmem:[%s1 + $0x1b8] sm:$0xf]
      %v694 = vld [vmem:[%s1 + $0x1bc] sm:$0xf]
      %v695 = vld [vmem:[%s1 + $0x1c0] sm:$0xf]
      %v696 = vld [vmem:[%s1 + $0x1c4] sm:$0xf]
      %v697 = vld [vmem:[%s1 + $0x1c8] sm:$0xf]
      %v698 = vld [vmem:[%s1 + $0x1cc] sm:$0xf]
      %v699 = vld [vmem:[%s1 + $0x1d0] sm:$0xf]
      %v700 = vld [vmem:[%s1 + $0x1d4] sm:$0xf]
      %v701 = vld [vmem:[%s1 + $0x1d8] sm:$0xf]
      %v702 = vld [vmem:[%s1 + $0x1dc] sm:$0xf]
      %v703 = vld [vmem:[%s1 + $0x1e0] sm:$0xf]
      %v704 = vld [vmem:[%s1 + $0x1e4] sm:$0xf]
      %v705 = vld [vmem:[%s1 + $0x1e8] sm:$0xf]
      %v706 = vld [vmem:[%s1 + $0x1ec] sm:$0xf]
      %v707 = vld [vmem:[%s1 + $0x1f0] sm:$0xf]
      %v708 = vld [vmem:[%s1 + $0x1f4] sm:$0xf]
      %v709 = vld [vmem:[%s1 + $0x1f8] sm:$0xf]
      %v710 = vld [vmem:[%s1 + $0x1fc] sm:$0xf]
      %v711 = vunpack.c.l.bf16 %v583
      %v712 = vunpack.c.l.bf16 %v584
      %v713 = vunpack.c.l.bf16 %v585
      %v714 = vunpack.c.l.bf16 %v586
      %v715 = vunpack.c.l.bf16 %v587
      %v716 = vunpack.c.l.bf16 %v588
      %v717 = vunpack.c.l.bf16 %v589
      %v718 = vunpack.c.l.bf16 %v590
      %v719 = vunpack.c.l.bf16 %v591
      %v720 = vunpack.c.l.bf16 %v592
      %v721 = vunpack.c.l.bf16 %v593
      %v722 = vunpack.c.l.bf16 %v594
      %v723 = vunpack.c.l.bf16 %v595
      %v724 = vunpack.c.l.bf16 %v596
      %v725 = vunpack.c.l.bf16 %v597
      %v726 = vunpack.c.l.bf16 %v598
      %v727 = vunpack.c.l.bf16 %v599
      %v728 = vunpack.c.l.bf16 %v600
      %v729 = vunpack.c.l.bf16 %v601
      %v730 = vunpack.c.l.bf16 %v602
      %v731 = vunpack.c.l.bf16 %v603
      %v732 = vunpack.c.l.bf16 %v604
      %v733 = vunpack.c.l.bf16 %v605
      %v734 = vunpack.c.l.bf16 %v606
      %v735 = vunpack.c.l.bf16 %v607
      %v736 = vunpack.c.l.bf16 %v608
      %v737 = vunpack.c.l.bf16 %v609
      %v738 = vunpack.c.l.bf16 %v610
      %v739 = vunpack.c.l.bf16 %v611
      %v740 = vunpack.c.l.bf16 %v612
      %v741 = vunpack.c.l.bf16 %v613
      %v742 = vunpack.c.l.bf16 %v614
      %v743 = vunpack.c.l.bf16 %v615
      %v744 = vunpack.c.l.bf16 %v616
      %v745 = vunpack.c.l.bf16 %v617
      %v746 = vunpack.c.l.bf16 %v618
      %v747 = vunpack.c.l.bf16 %v619
      %v748 = vunpack.c.l.bf16 %v620
      %v749 = vunpack.c.l.bf16 %v621
      %v750 = vunpack.c.l.bf16 %v622
      %v751 = vunpack.c.l.bf16 %v623
      %v752 = vunpack.c.l.bf16 %v624
      %v753 = vunpack.c.l.bf16 %v625
      %v754 = vunpack.c.l.bf16 %v626
      %v755 = vunpack.c.l.bf16 %v627
      %v756 = vunpack.c.l.bf16 %v628
      %v757 = vunpack.c.l.bf16 %v629
      %v758 = vunpack.c.l.bf16 %v630
      %v759 = vunpack.c.l.bf16 %v631
      %v760 = vunpack.c.l.bf16 %v632
      %v761 = vunpack.c.l.bf16 %v633
      %v762 = vunpack.c.l.bf16 %v634
      %v763 = vunpack.c.l.bf16 %v635
      %v764 = vunpack.c.l.bf16 %v636
      %v765 = vunpack.c.l.bf16 %v637
      %v766 = vunpack.c.l.bf16 %v638
      %v767 = vunpack.c.l.bf16 %v639
      %v768 = vunpack.c.l.bf16 %v640
      %v769 = vunpack.c.l.bf16 %v641
      %v770 = vunpack.c.l.bf16 %v642
      %v771 = vunpack.c.l.bf16 %v643
      %v772 = vunpack.c.l.bf16 %v644
      %v773 = vunpack.c.l.bf16 %v645
      %v774 = vunpack.c.l.bf16 %v646
      %v775 = vunpack.c.l.bf16 %v647
      %v776 = vunpack.c.l.bf16 %v648
      %v777 = vunpack.c.l.bf16 %v649
      %v778 = vunpack.c.l.bf16 %v650
      %v779 = vunpack.c.l.bf16 %v651
      %v780 = vunpack.c.l.bf16 %v652
      %v781 = vunpack.c.l.bf16 %v653
      %v782 = vunpack.c.l.bf16 %v654
      %v783 = vunpack.c.l.bf16 %v655
      %v784 = vunpack.c.l.bf16 %v656
      %v785 = vunpack.c.l.bf16 %v657
      %v786 = vunpack.c.l.bf16 %v658
      %v787 = vunpack.c.l.bf16 %v659
      %v788 = vunpack.c.l.bf16 %v660
      %v789 = vunpack.c.l.bf16 %v661
      %v790 = vunpack.c.l.bf16 %v662
      %v791 = vunpack.c.l.bf16 %v663
      %v792 = vunpack.c.l.bf16 %v664
      %v793 = vunpack.c.l.bf16 %v665
      %v794 = vunpack.c.l.bf16 %v666
      %v795 = vunpack.c.l.bf16 %v667
      %v796 = vunpack.c.l.bf16 %v668
      %v797 = vunpack.c.l.bf16 %v669
      %v798 = vunpack.c.l.bf16 %v670
      %v799 = vunpack.c.l.bf16 %v671
      %v800 = vunpack.c.l.bf16 %v672
      %v801 = vunpack.c.l.bf16 %v673
      %v802 = vunpack.c.l.bf16 %v674
      %v803 = vunpack.c.l.bf16 %v675
      %v804 = vunpack.c.l.bf16 %v676
      %v805 = vunpack.c.l.bf16 %v677
      %v806 = vunpack.c.l.bf16 %v678
      %v807 = vunpack.c.l.bf16 %v679
      %v808 = vunpack.c.l.bf16 %v680
      %v809 = vunpack.c.l.bf16 %v681
      %v810 = vunpack.c.l.bf16 %v682
      %v811 = vunpack.c.l.bf16 %v683
      %v812 = vunpack.c.l.bf16 %v684
      %v813 = vunpack.c.l.bf16 %v685
      %v814 = vunpack.c.l.bf16 %v686
      %v815 = vunpack.c.l.bf16 %v687
      %v816 = vunpack.c.l.bf16 %v688
      %v817 = vunpack.c.l.bf16 %v689
      %v818 = vunpack.c.l.bf16 %v690
      %v819 = vunpack.c.l.bf16 %v691
      %v820 = vunpack.c.l.bf16 %v692
      %v821 = vunpack.c.l.bf16 %v693
      %v822 = vunpack.c.l.bf16 %v694
      %v823 = vunpack.c.l.bf16 %v695
      %v824 = vunpack.c.l.bf16 %v696
      %v825 = vunpack.c.l.bf16 %v697
      %v826 = vunpack.c.l.bf16 %v698
      %v827 = vunpack.c.l.bf16 %v699
      %v828 = vunpack.c.l.bf16 %v700
      %v829 = vunpack.c.l.bf16 %v701
      %v830 = vunpack.c.l.bf16 %v702
      %v831 = vunpack.c.l.bf16 %v703
      %v832 = vunpack.c.l.bf16 %v704
      %v833 = vunpack.c.l.bf16 %v705
      %v834 = vunpack.c.l.bf16 %v706
      %v835 = vunpack.c.l.bf16 %v707
      %v836 = vunpack.c.l.bf16 %v708
      %v837 = vunpack.c.l.bf16 %v709
      %v838 = vunpack.c.l.bf16 %v710
      %v839 = vmul.f32 %v455, %v711
      %v840 = vmul.f32 %v456, %v712
      %v841 = vmul.f32 %v457, %v713
      %v842 = vmul.f32 %v458, %v714
      %v843 = vmul.f32 %v459, %v715
      %v844 = vmul.f32 %v460, %v716
      %v845 = vmul.f32 %v461, %v717
      %v846 = vmul.f32 %v462, %v718
      %v847 = vmul.f32 %v463, %v719
      %v848 = vmul.f32 %v464, %v720
      %v849 = vmul.f32 %v465, %v721
      %v850 = vmul.f32 %v466, %v722
      %v851 = vmul.f32 %v467, %v723
      %v852 = vmul.f32 %v468, %v724
      %v853 = vmul.f32 %v469, %v725
      %v854 = vmul.f32 %v470, %v726
      %v855 = vmul.f32 %v471, %v727
      %v856 = vmul.f32 %v472, %v728
      %v857 = vmul.f32 %v473, %v729
      %v858 = vmul.f32 %v474, %v730
      %v859 = vmul.f32 %v475, %v731
      %v860 = vmul.f32 %v476, %v732
      %v861 = vmul.f32 %v477, %v733
      %v862 = vmul.f32 %v478, %v734
      %v863 = vmul.f32 %v479, %v735
      %v864 = vmul.f32 %v480, %v736
      %v865 = vmul.f32 %v481, %v737
      %v866 = vmul.f32 %v482, %v738
      %v867 = vmul.f32 %v483, %v739
      %v868 = vmul.f32 %v484, %v740
      %v869 = vmul.f32 %v485, %v741
      %v870 = vmul.f32 %v486, %v742
      %v871 = vmul.f32 %v487, %v743
      %v872 = vmul.f32 %v488, %v744
      %v873 = vmul.f32 %v489, %v745
      %v874 = vmul.f32 %v490, %v746
      %v875 = vmul.f32 %v491, %v747
      %v876 = vmul.f32 %v492, %v748
      %v877 = vmul.f32 %v493, %v749
      %v878 = vmul.f32 %v494, %v750
      %v879 = vmul.f32 %v495, %v751
      %v880 = vmul.f32 %v496, %v752
      %v881 = vmul.f32 %v497, %v753
      %v882 = vmul.f32 %v498, %v754
      %v883 = vmul.f32 %v499, %v755
      %v884 = vmul.f32 %v500, %v756
      %v885 = vmul.f32 %v501, %v757
      %v886 = vmul.f32 %v502, %v758
      %v887 = vmul.f32 %v503, %v759
      %v888 = vmul.f32 %v504, %v760
      %v889 = vmul.f32 %v505, %v761
      %v890 = vmul.f32 %v506, %v762
      %v891 = vmul.f32 %v507, %v763
      %v892 = vmul.f32 %v508, %v764
      %v893 = vmul.f32 %v509, %v765
      %v894 = vmul.f32 %v510, %v766
      %v895 = vmul.f32 %v511, %v767
      %v896 = vmul.f32 %v512, %v768
      %v897 = vmul.f32 %v513, %v769
      %v898 = vmul.f32 %v514, %v770
      %v899 = vmul.f32 %v515, %v771
      %v900 = vmul.f32 %v516, %v772
      %v901 = vmul.f32 %v517, %v773
      %v902 = vmul.f32 %v518, %v774
      %v903 = vmul.f32 %v519, %v775
      %v904 = vmul.f32 %v520, %v776
      %v905 = vmul.f32 %v521, %v777
      %v906 = vmul.f32 %v522, %v778
      %v907 = vmul.f32 %v523, %v779
      %v908 = vmul.f32 %v524, %v780
      %v909 = vmul.f32 %v525, %v781
      %v910 = vmul.f32 %v526, %v782
      %v911 = vmul.f32 %v527, %v783
      %v912 = vmul.f32 %v528, %v784
      %v913 = vmul.f32 %v529, %v785
      %v914 = vmul.f32 %v530, %v786
      %v915 = vmul.f32 %v531, %v787
      %v916 = vmul.f32 %v532, %v788
      %v917 = vmul.f32 %v533, %v789
      %v918 = vmul.f32 %v534, %v790
      %v919 = vmul.f32 %v535, %v791
      %v920 = vmul.f32 %v536, %v792
      %v921 = vmul.f32 %v537, %v793
      %v922 = vmul.f32 %v538, %v794
      %v923 = vmul.f32 %v539, %v795
      %v924 = vmul.f32 %v540, %v796
      %v925 = vmul.f32 %v541, %v797
      %v926 = vmul.f32 %v542, %v798
      %v927 = vmul.f32 %v543, %v799
      %v928 = vmul.f32 %v544, %v800
      %v929 = vmul.f32 %v545, %v801
      %v930 = vmul.f32 %v546, %v802
      %v931 = vmul.f32 %v547, %v803
      %v932 = vmul.f32 %v548, %v804
      %v933 = vmul.f32 %v549, %v805
      %v934 = vmul.f32 %v550, %v806
      %v935 = vmul.f32 %v551, %v807
      %v936 = vmul.f32 %v552, %v808
      %v937 = vmul.f32 %v553, %v809
      %v938 = vmul.f32 %v554, %v810
      %v939 = vmul.f32 %v555, %v811
      %v940 = vmul.f32 %v556, %v812
      %v941 = vmul.f32 %v557, %v813
      %v942 = vmul.f32 %v558, %v814
      %v943 = vmul.f32 %v559, %v815
      %v944 = vmul.f32 %v560, %v816
      %v945 = vmul.f32 %v561, %v817
      %v946 = vmul.f32 %v562, %v818
      %v947 = vmul.f32 %v563, %v819
      %v948 = vmul.f32 %v564, %v820
      %v949 = vmul.f32 %v565, %v821
      %v950 = vmul.f32 %v566, %v822
      %v951 = vmul.f32 %v567, %v823
      %v952 = vmul.f32 %v568, %v824
      %v953 = vmul.f32 %v569, %v825
      %v954 = vmul.f32 %v570, %v826
      %v955 = vmul.f32 %v571, %v827
      %v956 = vmul.f32 %v572, %v828
      %v957 = vmul.f32 %v573, %v829
      %v958 = vmul.f32 %v574, %v830
      %v959 = vmul.f32 %v575, %v831
      %v960 = vmul.f32 %v576, %v832
      %v961 = vmul.f32 %v577, %v833
      %v962 = vmul.f32 %v578, %v834
      %v963 = vmul.f32 %v579, %v835
      %v964 = vmul.f32 %v580, %v836
      %v965 = vmul.f32 %v581, %v837
      %v966 = vmul.f32 %v582, %v838
      %v967 = vld [vmem:[%s2] sm:$0xf]
      %v968 = vld [vmem:[%s2 + $0x4] sm:$0xf]
      %v969 = vld [vmem:[%s2 + $0x8] sm:$0xf]
      %v970 = vld [vmem:[%s2 + $0xc] sm:$0xf]
      %v971 = vld [vmem:[%s2 + $0x10] sm:$0xf]
      %v972 = vld [vmem:[%s2 + $0x14] sm:$0xf]
      %v973 = vld [vmem:[%s2 + $0x18] sm:$0xf]
      %v974 = vld [vmem:[%s2 + $0x1c] sm:$0xf]
      %v975 = vld [vmem:[%s2 + $0x20] sm:$0xf]
      %v976 = vld [vmem:[%s2 + $0x24] sm:$0xf]
      %v977 = vld [vmem:[%s2 + $0x28] sm:$0xf]
      %v978 = vld [vmem:[%s2 + $0x2c] sm:$0xf]
      %v979 = vld [vmem:[%s2 + $0x30] sm:$0xf]
      %v980 = vld [vmem:[%s2 + $0x34] sm:$0xf]
      %v981 = vld [vmem:[%s2 + $0x38] sm:$0xf]
      %v982 = vld [vmem:[%s2 + $0x3c] sm:$0xf]
      %v983 = vld [vmem:[%s2 + $0x40] sm:$0xf]
      %v984 = vld [vmem:[%s2 + $0x44] sm:$0xf]
      %v985 = vld [vmem:[%s2 + $0x48] sm:$0xf]
      %v986 = vld [vmem:[%s2 + $0x4c] sm:$0xf]
      %v987 = vld [vmem:[%s2 + $0x50] sm:$0xf]
      %v988 = vld [vmem:[%s2 + $0x54] sm:$0xf]
      %v989 = vld [vmem:[%s2 + $0x58] sm:$0xf]
      %v990 = vld [vmem:[%s2 + $0x5c] sm:$0xf]
      %v991 = vld [vmem:[%s2 + $0x60] sm:$0xf]
      %v992 = vld [vmem:[%s2 + $0x64] sm:$0xf]
      %v993 = vld [vmem:[%s2 + $0x68] sm:$0xf]
      %v994 = vld [vmem:[%s2 + $0x6c] sm:$0xf]
      %v995 = vld [vmem:[%s2 + $0x70] sm:$0xf]
      %v996 = vld [vmem:[%s2 + $0x74] sm:$0xf]
      %v997 = vld [vmem:[%s2 + $0x78] sm:$0xf]
      %v998 = vld [vmem:[%s2 + $0x7c] sm:$0xf]
      %v999 = vld [vmem:[%s2 + $0x80] sm:$0xf]
      %v1000 = vld [vmem:[%s2 + $0x84] sm:$0xf]
      %v1001 = vld [vmem:[%s2 + $0x88] sm:$0xf]
      %v1002 = vld [vmem:[%s2 + $0x8c] sm:$0xf]
      %v1003 = vld [vmem:[%s2 + $0x90] sm:$0xf]
      %v1004 = vld [vmem:[%s2 + $0x94] sm:$0xf]
      %v1005 = vld [vmem:[%s2 + $0x98] sm:$0xf]
      %v1006 = vld [vmem:[%s2 + $0x9c] sm:$0xf]
      %v1007 = vld [vmem:[%s2 + $0xa0] sm:$0xf]
      %v1008 = vld [vmem:[%s2 + $0xa4] sm:$0xf]
      %v1009 = vld [vmem:[%s2 + $0xa8] sm:$0xf]
      %v1010 = vld [vmem:[%s2 + $0xac] sm:$0xf]
      %v1011 = vld [vmem:[%s2 + $0xb0] sm:$0xf]
      %v1012 = vld [vmem:[%s2 + $0xb4] sm:$0xf]
      %v1013 = vld [vmem:[%s2 + $0xb8] sm:$0xf]
      %v1014 = vld [vmem:[%s2 + $0xbc] sm:$0xf]
      %v1015 = vld [vmem:[%s2 + $0xc0] sm:$0xf]
      %v1016 = vld [vmem:[%s2 + $0xc4] sm:$0xf]
      %v1017 = vld [vmem:[%s2 + $0xc8] sm:$0xf]
      %v1018 = vld [vmem:[%s2 + $0xcc] sm:$0xf]
      %v1019 = vld [vmem:[%s2 + $0xd0] sm:$0xf]
      %v1020 = vld [vmem:[%s2 + $0xd4] sm:$0xf]
      %v1021 = vld [vmem:[%s2 + $0xd8] sm:$0xf]
      %v1022 = vld [vmem:[%s2 + $0xdc] sm:$0xf]
      %v1023 = vld [vmem:[%s2 + $0xe0] sm:$0xf]
      %v1024 = vld [vmem:[%s2 + $0xe4] sm:$0xf]
      %v1025 = vld [vmem:[%s2 + $0xe8] sm:$0xf]
      %v1026 = vld [vmem:[%s2 + $0xec] sm:$0xf]
      %v1027 = vld [vmem:[%s2 + $0xf0] sm:$0xf]
      %v1028 = vld [vmem:[%s2 + $0xf4] sm:$0xf]
      %v1029 = vld [vmem:[%s2 + $0xf8] sm:$0xf]
      %v1030 = vld [vmem:[%s2 + $0xfc] sm:$0xf]
      %v1031 = vld [vmem:[%s2 + $0x100] sm:$0xf]
      %v1032 = vld [vmem:[%s2 + $0x104] sm:$0xf]
      %v1033 = vld [vmem:[%s2 + $0x108] sm:$0xf]
      %v1034 = vld [vmem:[%s2 + $0x10c] sm:$0xf]
      %v1035 = vld [vmem:[%s2 + $0x110] sm:$0xf]
      %v1036 = vld [vmem:[%s2 + $0x114] sm:$0xf]
      %v1037 = vld [vmem:[%s2 + $0x118] sm:$0xf]
      %v1038 = vld [vmem:[%s2 + $0x11c] sm:$0xf]
      %v1039 = vld [vmem:[%s2 + $0x120] sm:$0xf]
      %v1040 = vld [vmem:[%s2 + $0x124] sm:$0xf]
      %v1041 = vld [vmem:[%s2 + $0x128] sm:$0xf]
      %v1042 = vld [vmem:[%s2 + $0x12c] sm:$0xf]
      %v1043 = vld [vmem:[%s2 + $0x130] sm:$0xf]
      %v1044 = vld [vmem:[%s2 + $0x134] sm:$0xf]
      %v1045 = vld [vmem:[%s2 + $0x138] sm:$0xf]
      %v1046 = vld [vmem:[%s2 + $0x13c] sm:$0xf]
      %v1047 = vld [vmem:[%s2 + $0x140] sm:$0xf]
      %v1048 = vld [vmem:[%s2 + $0x144] sm:$0xf]
      %v1049 = vld [vmem:[%s2 + $0x148] sm:$0xf]
      %v1050 = vld [vmem:[%s2 + $0x14c] sm:$0xf]
      %v1051 = vld [vmem:[%s2 + $0x150] sm:$0xf]
      %v1052 = vld [vmem:[%s2 + $0x154] sm:$0xf]
      %v1053 = vld [vmem:[%s2 + $0x158] sm:$0xf]
      %v1054 = vld [vmem:[%s2 + $0x15c] sm:$0xf]
      %v1055 = vld [vmem:[%s2 + $0x160] sm:$0xf]
      %v1056 = vld [vmem:[%s2 + $0x164] sm:$0xf]
      %v1057 = vld [vmem:[%s2 + $0x168] sm:$0xf]
      %v1058 = vld [vmem:[%s2 + $0x16c] sm:$0xf]
      %v1059 = vld [vmem:[%s2 + $0x170] sm:$0xf]
      %v1060 = vld [vmem:[%s2 + $0x174] sm:$0xf]
      %v1061 = vld [vmem:[%s2 + $0x178] sm:$0xf]
      %v1062 = vld [vmem:[%s2 + $0x17c] sm:$0xf]
      %v1063 = vld [vmem:[%s2 + $0x180] sm:$0xf]
      %v1064 = vld [vmem:[%s2 + $0x184] sm:$0xf]
      %v1065 = vld [vmem:[%s2 + $0x188] sm:$0xf]
      %v1066 = vld [vmem:[%s2 + $0x18c] sm:$0xf]
      %v1067 = vld [vmem:[%s2 + $0x190] sm:$0xf]
      %v1068 = vld [vmem:[%s2 + $0x194] sm:$0xf]
      %v1069 = vld [vmem:[%s2 + $0x198] sm:$0xf]
      %v1070 = vld [vmem:[%s2 + $0x19c] sm:$0xf]
      %v1071 = vld [vmem:[%s2 + $0x1a0] sm:$0xf]
      %v1072 = vld [vmem:[%s2 + $0x1a4] sm:$0xf]
      %v1073 = vld [vmem:[%s2 + $0x1a8] sm:$0xf]
      %v1074 = vld [vmem:[%s2 + $0x1ac] sm:$0xf]
      %v1075 = vld [vmem:[%s2 + $0x1b0] sm:$0xf]
      %v1076 = vld [vmem:[%s2 + $0x1b4] sm:$0xf]
      %v1077 = vld [vmem:[%s2 + $0x1b8] sm:$0xf]
      %v1078 = vld [vmem:[%s2 + $0x1bc] sm:$0xf]
      %v1079 = vld [vmem:[%s2 + $0x1c0] sm:$0xf]
      %v1080 = vld [vmem:[%s2 + $0x1c4] sm:$0xf]
      %v1081 = vld [vmem:[%s2 + $0x1c8] sm:$0xf]
      %v1082 = vld [vmem:[%s2 + $0x1cc] sm:$0xf]
      %v1083 = vld [vmem:[%s2 + $0x1d0] sm:$0xf]
      %v1084 = vld [vmem:[%s2 + $0x1d4] sm:$0xf]
      %v1085 = vld [vmem:[%s2 + $0x1d8] sm:$0xf]
      %v1086 = vld [vmem:[%s2 + $0x1dc] sm:$0xf]
      %v1087 = vld [vmem:[%s2 + $0x1e0] sm:$0xf]
      %v1088 = vld [vmem:[%s2 + $0x1e4] sm:$0xf]
      %v1089 = vld [vmem:[%s2 + $0x1e8] sm:$0xf]
      %v1090 = vld [vmem:[%s2 + $0x1ec] sm:$0xf]
      %v1091 = vld [vmem:[%s2 + $0x1f0] sm:$0xf]
      %v1092 = vld [vmem:[%s2 + $0x1f4] sm:$0xf]
      %v1093 = vld [vmem:[%s2 + $0x1f8] sm:$0xf]
      %v1094 = vld [vmem:[%s2 + $0x1fc] sm:$0xf]
      %v1095 = vunpack.c.l.bf16 %v967
      %v1096 = vunpack.c.l.bf16 %v968
      %v1097 = vunpack.c.l.bf16 %v969
      %v1098 = vunpack.c.l.bf16 %v970
      %v1099 = vunpack.c.l.bf16 %v971
      %v1100 = vunpack.c.l.bf16 %v972
      %v1101 = vunpack.c.l.bf16 %v973
      %v1102 = vunpack.c.l.bf16 %v974
      %v1103 = vunpack.c.l.bf16 %v975
      %v1104 = vunpack.c.l.bf16 %v976
      %v1105 = vunpack.c.l.bf16 %v977
      %v1106 = vunpack.c.l.bf16 %v978
      %v1107 = vunpack.c.l.bf16 %v979
      %v1108 = vunpack.c.l.bf16 %v980
      %v1109 = vunpack.c.l.bf16 %v981
      %v1110 = vunpack.c.l.bf16 %v982
      %v1111 = vunpack.c.l.bf16 %v983
      %v1112 = vunpack.c.l.bf16 %v984
      %v1113 = vunpack.c.l.bf16 %v985
      %v1114 = vunpack.c.l.bf16 %v986
      %v1115 = vunpack.c.l.bf16 %v987
      %v1116 = vunpack.c.l.bf16 %v988
      %v1117 = vunpack.c.l.bf16 %v989
      %v1118 = vunpack.c.l.bf16 %v990
      %v1119 = vunpack.c.l.bf16 %v991
      %v1120 = vunpack.c.l.bf16 %v992
      %v1121 = vunpack.c.l.bf16 %v993
      %v1122 = vunpack.c.l.bf16 %v994
      %v1123 = vunpack.c.l.bf16 %v995
      %v1124 = vunpack.c.l.bf16 %v996
      %v1125 = vunpack.c.l.bf16 %v997
      %v1126 = vunpack.c.l.bf16 %v998
      %v1127 = vunpack.c.l.bf16 %v999
      %v1128 = vunpack.c.l.bf16 %v1000
      %v1129 = vunpack.c.l.bf16 %v1001
      %v1130 = vunpack.c.l.bf16 %v1002
      %v1131 = vunpack.c.l.bf16 %v1003
      %v1132 = vunpack.c.l.bf16 %v1004
      %v1133 = vunpack.c.l.bf16 %v1005
      %v1134 = vunpack.c.l.bf16 %v1006
      %v1135 = vunpack.c.l.bf16 %v1007
      %v1136 = vunpack.c.l.bf16 %v1008
      %v1137 = vunpack.c.l.bf16 %v1009
      %v1138 = vunpack.c.l.bf16 %v1010
      %v1139 = vunpack.c.l.bf16 %v1011
      %v1140 = vunpack.c.l.bf16 %v1012
      %v1141 = vunpack.c.l.bf16 %v1013
      %v1142 = vunpack.c.l.bf16 %v1014
      %v1143 = vunpack.c.l.bf16 %v1015
      %v1144 = vunpack.c.l.bf16 %v1016
      %v1145 = vunpack.c.l.bf16 %v1017
      %v1146 = vunpack.c.l.bf16 %v1018
      %v1147 = vunpack.c.l.bf16 %v1019
      %v1148 = vunpack.c.l.bf16 %v1020
      %v1149 = vunpack.c.l.bf16 %v1021
      %v1150 = vunpack.c.l.bf16 %v1022
      %v1151 = vunpack.c.l.bf16 %v1023
      %v1152 = vunpack.c.l.bf16 %v1024
      %v1153 = vunpack.c.l.bf16 %v1025
      %v1154 = vunpack.c.l.bf16 %v1026
      %v1155 = vunpack.c.l.bf16 %v1027
      %v1156 = vunpack.c.l.bf16 %v1028
      %v1157 = vunpack.c.l.bf16 %v1029
      %v1158 = vunpack.c.l.bf16 %v1030
      %v1159 = vunpack.c.l.bf16 %v1031
      %v1160 = vunpack.c.l.bf16 %v1032
      %v1161 = vunpack.c.l.bf16 %v1033
      %v1162 = vunpack.c.l.bf16 %v1034
      %v1163 = vunpack.c.l.bf16 %v1035
      %v1164 = vunpack.c.l.bf16 %v1036
      %v1165 = vunpack.c.l.bf16 %v1037
      %v1166 = vunpack.c.l.bf16 %v1038
      %v1167 = vunpack.c.l.bf16 %v1039
      %v1168 = vunpack.c.l.bf16 %v1040
      %v1169 = vunpack.c.l.bf16 %v1041
      %v1170 = vunpack.c.l.bf16 %v1042
      %v1171 = vunpack.c.l.bf16 %v1043
      %v1172 = vunpack.c.l.bf16 %v1044
      %v1173 = vunpack.c.l.bf16 %v1045
      %v1174 = vunpack.c.l.bf16 %v1046
      %v1175 = vunpack.c.l.bf16 %v1047
      %v1176 = vunpack.c.l.bf16 %v1048
      %v1177 = vunpack.c.l.bf16 %v1049
      %v1178 = vunpack.c.l.bf16 %v1050
      %v1179 = vunpack.c.l.bf16 %v1051
      %v1180 = vunpack.c.l.bf16 %v1052
      %v1181 = vunpack.c.l.bf16 %v1053
      %v1182 = vunpack.c.l.bf16 %v1054
      %v1183 = vunpack.c.l.bf16 %v1055
      %v1184 = vunpack.c.l.bf16 %v1056
      %v1185 = vunpack.c.l.bf16 %v1057
      %v1186 = vunpack.c.l.bf16 %v1058
      %v1187 = vunpack.c.l.bf16 %v1059
      %v1188 = vunpack.c.l.bf16 %v1060
      %v1189 = vunpack.c.l.bf16 %v1061
      %v1190 = vunpack.c.l.bf16 %v1062
      %v1191 = vunpack.c.l.bf16 %v1063
      %v1192 = vunpack.c.l.bf16 %v1064
      %v1193 = vunpack.c.l.bf16 %v1065
      %v1194 = vunpack.c.l.bf16 %v1066
      %v1195 = vunpack.c.l.bf16 %v1067
      %v1196 = vunpack.c.l.bf16 %v1068
      %v1197 = vunpack.c.l.bf16 %v1069
      %v1198 = vunpack.c.l.bf16 %v1070
      %v1199 = vunpack.c.l.bf16 %v1071
      %v1200 = vunpack.c.l.bf16 %v1072
      %v1201 = vunpack.c.l.bf16 %v1073
      %v1202 = vunpack.c.l.bf16 %v1074
      %v1203 = vunpack.c.l.bf16 %v1075
      %v1204 = vunpack.c.l.bf16 %v1076
      %v1205 = vunpack.c.l.bf16 %v1077
      %v1206 = vunpack.c.l.bf16 %v1078
      %v1207 = vunpack.c.l.bf16 %v1079
      %v1208 = vunpack.c.l.bf16 %v1080
      %v1209 = vunpack.c.l.bf16 %v1081
      %v1210 = vunpack.c.l.bf16 %v1082
      %v1211 = vunpack.c.l.bf16 %v1083
      %v1212 = vunpack.c.l.bf16 %v1084
      %v1213 = vunpack.c.l.bf16 %v1085
      %v1214 = vunpack.c.l.bf16 %v1086
      %v1215 = vunpack.c.l.bf16 %v1087
      %v1216 = vunpack.c.l.bf16 %v1088
      %v1217 = vunpack.c.l.bf16 %v1089
      %v1218 = vunpack.c.l.bf16 %v1090
      %v1219 = vunpack.c.l.bf16 %v1091
      %v1220 = vunpack.c.l.bf16 %v1092
      %v1221 = vunpack.c.l.bf16 %v1093
      %v1222 = vunpack.c.l.bf16 %v1094
      %v1223 = vadd.f32 %v839, %v1095
      %v1224 = vadd.f32 %v840, %v1096
      %v1225 = vadd.f32 %v841, %v1097
      %v1226 = vadd.f32 %v842, %v1098
      %v1227 = vadd.f32 %v843, %v1099
      %v1228 = vadd.f32 %v844, %v1100
      %v1229 = vadd.f32 %v845, %v1101
      %v1230 = vadd.f32 %v846, %v1102
      %v1231 = vadd.f32 %v847, %v1103
      %v1232 = vadd.f32 %v848, %v1104
      %v1233 = vadd.f32 %v849, %v1105
      %v1234 = vadd.f32 %v850, %v1106
      %v1235 = vadd.f32 %v851, %v1107
      %v1236 = vadd.f32 %v852, %v1108
      %v1237 = vadd.f32 %v853, %v1109
      %v1238 = vadd.f32 %v854, %v1110
      %v1239 = vadd.f32 %v855, %v1111
      %v1240 = vadd.f32 %v856, %v1112
      %v1241 = vadd.f32 %v857, %v1113
      %v1242 = vadd.f32 %v858, %v1114
      %v1243 = vadd.f32 %v859, %v1115
      %v1244 = vadd.f32 %v860, %v1116
      %v1245 = vadd.f32 %v861, %v1117
      %v1246 = vadd.f32 %v862, %v1118
      %v1247 = vadd.f32 %v863, %v1119
      %v1248 = vadd.f32 %v864, %v1120
      %v1249 = vadd.f32 %v865, %v1121
      %v1250 = vadd.f32 %v866, %v1122
      %v1251 = vadd.f32 %v867, %v1123
      %v1252 = vadd.f32 %v868, %v1124
      %v1253 = vadd.f32 %v869, %v1125
      %v1254 = vadd.f32 %v870, %v1126
      %v1255 = vadd.f32 %v871, %v1127
      %v1256 = vadd.f32 %v872, %v1128
      %v1257 = vadd.f32 %v873, %v1129
      %v1258 = vadd.f32 %v874, %v1130
      %v1259 = vadd.f32 %v875, %v1131
      %v1260 = vadd.f32 %v876, %v1132
      %v1261 = vadd.f32 %v877, %v1133
      %v1262 = vadd.f32 %v878, %v1134
      %v1263 = vadd.f32 %v879, %v1135
      %v1264 = vadd.f32 %v880, %v1136
      %v1265 = vadd.f32 %v881, %v1137
      %v1266 = vadd.f32 %v882, %v1138
      %v1267 = vadd.f32 %v883, %v1139
      %v1268 = vadd.f32 %v884, %v1140
      %v1269 = vadd.f32 %v885, %v1141
      %v1270 = vadd.f32 %v886, %v1142
      %v1271 = vadd.f32 %v887, %v1143
      %v1272 = vadd.f32 %v888, %v1144
      %v1273 = vadd.f32 %v889, %v1145
      %v1274 = vadd.f32 %v890, %v1146
      %v1275 = vadd.f32 %v891, %v1147
      %v1276 = vadd.f32 %v892, %v1148
      %v1277 = vadd.f32 %v893, %v1149
      %v1278 = vadd.f32 %v894, %v1150
      %v1279 = vadd.f32 %v895, %v1151
      %v1280 = vadd.f32 %v896, %v1152
      %v1281 = vadd.f32 %v897, %v1153
      %v1282 = vadd.f32 %v898, %v1154
      %v1283 = vadd.f32 %v899, %v1155
      %v1284 = vadd.f32 %v900, %v1156
      %v1285 = vadd.f32 %v901, %v1157
      %v1286 = vadd.f32 %v902, %v1158
      %v1287 = vadd.f32 %v903, %v1159
      %v1288 = vadd.f32 %v904, %v1160
      %v1289 = vadd.f32 %v905, %v1161
      %v1290 = vadd.f32 %v906, %v1162
      %v1291 = vadd.f32 %v907, %v1163
      %v1292 = vadd.f32 %v908, %v1164
      %v1293 = vadd.f32 %v909, %v1165
      %v1294 = vadd.f32 %v910, %v1166
      %v1295 = vadd.f32 %v911, %v1167
      %v1296 = vadd.f32 %v912, %v1168
      %v1297 = vadd.f32 %v913, %v1169
      %v1298 = vadd.f32 %v914, %v1170
      %v1299 = vadd.f32 %v915, %v1171
      %v1300 = vadd.f32 %v916, %v1172
      %v1301 = vadd.f32 %v917, %v1173
      %v1302 = vadd.f32 %v918, %v1174
      %v1303 = vadd.f32 %v919, %v1175
      %v1304 = vadd.f32 %v920, %v1176
      %v1305 = vadd.f32 %v921, %v1177
      %v1306 = vadd.f32 %v922, %v1178
      %v1307 = vadd.f32 %v923, %v1179
      %v1308 = vadd.f32 %v924, %v1180
      %v1309 = vadd.f32 %v925, %v1181
      %v1310 = vadd.f32 %v926, %v1182
      %v1311 = vadd.f32 %v927, %v1183
      %v1312 = vadd.f32 %v928, %v1184
      %v1313 = vadd.f32 %v929, %v1185
      %v1314 = vadd.f32 %v930, %v1186
      %v1315 = vadd.f32 %v931, %v1187
      %v1316 = vadd.f32 %v932, %v1188
      %v1317 = vadd.f32 %v933, %v1189
      %v1318 = vadd.f32 %v934, %v1190
      %v1319 = vadd.f32 %v935, %v1191
      %v1320 = vadd.f32 %v936, %v1192
      %v1321 = vadd.f32 %v937, %v1193
      %v1322 = vadd.f32 %v938, %v1194
      %v1323 = vadd.f32 %v939, %v1195
      %v1324 = vadd.f32 %v940, %v1196
      %v1325 = vadd.f32 %v941, %v1197
      %v1326 = vadd.f32 %v942, %v1198
      %v1327 = vadd.f32 %v943, %v1199
      %v1328 = vadd.f32 %v944, %v1200
      %v1329 = vadd.f32 %v945, %v1201
      %v1330 = vadd.f32 %v946, %v1202
      %v1331 = vadd.f32 %v947, %v1203
      %v1332 = vadd.f32 %v948, %v1204
      %v1333 = vadd.f32 %v949, %v1205
      %v1334 = vadd.f32 %v950, %v1206
      %v1335 = vadd.f32 %v951, %v1207
      %v1336 = vadd.f32 %v952, %v1208
      %v1337 = vadd.f32 %v953, %v1209
      %v1338 = vadd.f32 %v954, %v1210
      %v1339 = vadd.f32 %v955, %v1211
      %v1340 = vadd.f32 %v956, %v1212
      %v1341 = vadd.f32 %v957, %v1213
      %v1342 = vadd.f32 %v958, %v1214
      %v1343 = vadd.f32 %v959, %v1215
      %v1344 = vadd.f32 %v960, %v1216
      %v1345 = vadd.f32 %v961, %v1217
      %v1346 = vadd.f32 %v962, %v1218
      %v1347 = vadd.f32 %v963, %v1219
      %v1348 = vadd.f32 %v964, %v1220
      %v1349 = vadd.f32 %v965, %v1221
      %v1350 = vadd.f32 %v966, %v1222
      %s1351 = smul.u32 %s19, 16
      %v1352 = vlaneseq
      %v1353 = vand.u32 %v1352, 127
      %v1354 = vstv %s1351
      %v1355 = vadd.s32 %v1354, %v1353
      %vm1356 = vcmp.lt.s32.totalorder %v1355, 16
      %v1357 = vsel %vm1356, %v1223, -inf
      %v1358 = vsel %vm1356, %v1224, -inf
      %v1359 = vsel %vm1356, %v1225, -inf
      %v1360 = vsel %vm1356, %v1226, -inf
      %v1361 = vsel %vm1356, %v1227, -inf
      %v1362 = vsel %vm1356, %v1228, -inf
      %v1363 = vsel %vm1356, %v1229, -inf
      %v1364 = vsel %vm1356, %v1230, -inf
      %v1365 = vsel %vm1356, %v1231, -inf
      %v1366 = vsel %vm1356, %v1232, -inf
      %v1367 = vsel %vm1356, %v1233, -inf
      %v1368 = vsel %vm1356, %v1234, -inf
      %v1369 = vsel %vm1356, %v1235, -inf
      %v1370 = vsel %vm1356, %v1236, -inf
      %v1371 = vsel %vm1356, %v1237, -inf
      %v1372 = vsel %vm1356, %v1238, -inf
      %v1373 = vsel %vm1356, %v1239, -inf
      %v1374 = vsel %vm1356, %v1240, -inf
      %v1375 = vsel %vm1356, %v1241, -inf
      %v1376 = vsel %vm1356, %v1242, -inf
      %v1377 = vsel %vm1356, %v1243, -inf
      %v1378 = vsel %vm1356, %v1244, -inf
      %v1379 = vsel %vm1356, %v1245, -inf
      %v1380 = vsel %vm1356, %v1246, -inf
      %v1381 = vsel %vm1356, %v1247, -inf
      %v1382 = vsel %vm1356, %v1248, -inf
      %v1383 = vsel %vm1356, %v1249, -inf
      %v1384 = vsel %vm1356, %v1250, -inf
      %v1385 = vsel %vm1356, %v1251, -inf
      %v1386 = vsel %vm1356, %v1252, -inf
      %v1387 = vsel %vm1356, %v1253, -inf
      %v1388 = vsel %vm1356, %v1254, -inf
      %v1389 = vsel %vm1356, %v1255, -inf
      %v1390 = vsel %vm1356, %v1256, -inf
      %v1391 = vsel %vm1356, %v1257, -inf
      %v1392 = vsel %vm1356, %v1258, -inf
      %v1393 = vsel %vm1356, %v1259, -inf
      %v1394 = vsel %vm1356, %v1260, -inf
      %v1395 = vsel %vm1356, %v1261, -inf
      %v1396 = vsel %vm1356, %v1262, -inf
      %v1397 = vsel %vm1356, %v1263, -inf
      %v1398 = vsel %vm1356, %v1264, -inf
      %v1399 = vsel %vm1356, %v1265, -inf
      %v1400 = vsel %vm1356, %v1266, -inf
      %v1401 = vsel %vm1356, %v1267, -inf
      %v1402 = vsel %vm1356, %v1268, -inf
      %v1403 = vsel %vm1356, %v1269, -inf
      %v1404 = vsel %vm1356, %v1270, -inf
      %v1405 = vsel %vm1356, %v1271, -inf
      %v1406 = vsel %vm1356, %v1272, -inf
      %v1407 = vsel %vm1356, %v1273, -inf
      %v1408 = vsel %vm1356, %v1274, -inf
      %v1409 = vsel %vm1356, %v1275, -inf
      %v1410 = vsel %vm1356, %v1276, -inf
      %v1411 = vsel %vm1356, %v1277, -inf
      %v1412 = vsel %vm1356, %v1278, -inf
      %v1413 = vsel %vm1356, %v1279, -inf
      %v1414 = vsel %vm1356, %v1280, -inf
      %v1415 = vsel %vm1356, %v1281, -inf
      %v1416 = vsel %vm1356, %v1282, -inf
      %v1417 = vsel %vm1356, %v1283, -inf
      %v1418 = vsel %vm1356, %v1284, -inf
      %v1419 = vsel %vm1356, %v1285, -inf
      %v1420 = vsel %vm1356, %v1286, -inf
      %v1421 = vsel %vm1356, %v1287, -inf
      %v1422 = vsel %vm1356, %v1288, -inf
      %v1423 = vsel %vm1356, %v1289, -inf
      %v1424 = vsel %vm1356, %v1290, -inf
      %v1425 = vsel %vm1356, %v1291, -inf
      %v1426 = vsel %vm1356, %v1292, -inf
      %v1427 = vsel %vm1356, %v1293, -inf
      %v1428 = vsel %vm1356, %v1294, -inf
      %v1429 = vsel %vm1356, %v1295, -inf
      %v1430 = vsel %vm1356, %v1296, -inf
      %v1431 = vsel %vm1356, %v1297, -inf
      %v1432 = vsel %vm1356, %v1298, -inf
      %v1433 = vsel %vm1356, %v1299, -inf
      %v1434 = vsel %vm1356, %v1300, -inf
      %v1435 = vsel %vm1356, %v1301, -inf
      %v1436 = vsel %vm1356, %v1302, -inf
      %v1437 = vsel %vm1356, %v1303, -inf
      %v1438 = vsel %vm1356, %v1304, -inf
      %v1439 = vsel %vm1356, %v1305, -inf
      %v1440 = vsel %vm1356, %v1306, -inf
      %v1441 = vsel %vm1356, %v1307, -inf
      %v1442 = vsel %vm1356, %v1308, -inf
      %v1443 = vsel %vm1356, %v1309, -inf
      %v1444 = vsel %vm1356, %v1310, -inf
      %v1445 = vsel %vm1356, %v1311, -inf
      %v1446 = vsel %vm1356, %v1312, -inf
      %v1447 = vsel %vm1356, %v1313, -inf
      %v1448 = vsel %vm1356, %v1314, -inf
      %v1449 = vsel %vm1356, %v1315, -inf
      %v1450 = vsel %vm1356, %v1316, -inf
      %v1451 = vsel %vm1356, %v1317, -inf
      %v1452 = vsel %vm1356, %v1318, -inf
      %v1453 = vsel %vm1356, %v1319, -inf
      %v1454 = vsel %vm1356, %v1320, -inf
      %v1455 = vsel %vm1356, %v1321, -inf
      %v1456 = vsel %vm1356, %v1322, -inf
      %v1457 = vsel %vm1356, %v1323, -inf
      %v1458 = vsel %vm1356, %v1324, -inf
      %v1459 = vsel %vm1356, %v1325, -inf
      %v1460 = vsel %vm1356, %v1326, -inf
      %v1461 = vsel %vm1356, %v1327, -inf
      %v1462 = vsel %vm1356, %v1328, -inf
      %v1463 = vsel %vm1356, %v1329, -inf
      %v1464 = vsel %vm1356, %v1330, -inf
      %v1465 = vsel %vm1356, %v1331, -inf
      %v1466 = vsel %vm1356, %v1332, -inf
      %v1467 = vsel %vm1356, %v1333, -inf
      %v1468 = vsel %vm1356, %v1334, -inf
      %v1469 = vsel %vm1356, %v1335, -inf
      %v1470 = vsel %vm1356, %v1336, -inf
      %v1471 = vsel %vm1356, %v1337, -inf
      %v1472 = vsel %vm1356, %v1338, -inf
      %v1473 = vsel %vm1356, %v1339, -inf
      %v1474 = vsel %vm1356, %v1340, -inf
      %v1475 = vsel %vm1356, %v1341, -inf
      %v1476 = vsel %vm1356, %v1342, -inf
      %v1477 = vsel %vm1356, %v1343, -inf
      %v1478 = vsel %vm1356, %v1344, -inf
      %v1479 = vsel %vm1356, %v1345, -inf
      %v1480 = vsel %vm1356, %v1346, -inf
      %v1481 = vsel %vm1356, %v1347, -inf
      %v1482 = vsel %vm1356, %v1348, -inf
      %v1483 = vsel %vm1356, %v1349, -inf
      %v1484 = vsel %vm1356, %v1350, -inf
      %v1485 = vld [vmem:[#allocation2] sm:$0xff]
      %v1486 = vld [vmem:[#allocation2 + $0x8] sm:$0xff]
      %v1487 = vld [vmem:[#allocation2 + $0x10] sm:$0xff]
      %v1488 = vld [vmem:[#allocation2 + $0x18] sm:$0xff]
      %v1489 = vld [vmem:[#allocation2 + $0x20] sm:$0xff]
      %v1490 = vld [vmem:[#allocation2 + $0x28] sm:$0xff]
      %v1491 = vld [vmem:[#allocation2 + $0x30] sm:$0xff]
      %v1492 = vld [vmem:[#allocation2 + $0x38] sm:$0xff]
      %v1493 = vld [vmem:[#allocation2 + $0x40] sm:$0xff]
      %v1494 = vld [vmem:[#allocation2 + $0x48] sm:$0xff]
      %v1495 = vld [vmem:[#allocation2 + $0x50] sm:$0xff]
      %v1496 = vld [vmem:[#allocation2 + $0x58] sm:$0xff]
      %v1497 = vld [vmem:[#allocation2 + $0x60] sm:$0xff]
      %v1498 = vld [vmem:[#allocation2 + $0x68] sm:$0xff]
      %v1499 = vld [vmem:[#allocation2 + $0x70] sm:$0xff]
      %v1500 = vld [vmem:[#allocation2 + $0x78] sm:$0xff]
      %v1501 = vld [vmem:[#allocation2 + $0x80] sm:$0xff]
      %v1502 = vld [vmem:[#allocation2 + $0x88] sm:$0xff]
      %v1503 = vld [vmem:[#allocation2 + $0x90] sm:$0xff]
      %v1504 = vld [vmem:[#allocation2 + $0x98] sm:$0xff]
      %v1505 = vld [vmem:[#allocation2 + $0xa0] sm:$0xff]
      %v1506 = vld [vmem:[#allocation2 + $0xa8] sm:$0xff]
      %v1507 = vld [vmem:[#allocation2 + $0xb0] sm:$0xff]
      %v1508 = vld [vmem:[#allocation2 + $0xb8] sm:$0xff]
      %v1509 = vld [vmem:[#allocation2 + $0xc0] sm:$0xff]
      %v1510 = vld [vmem:[#allocation2 + $0xc8] sm:$0xff]
      %v1511 = vld [vmem:[#allocation2 + $0xd0] sm:$0xff]
      %v1512 = vld [vmem:[#allocation2 + $0xd8] sm:$0xff]
      %v1513 = vld [vmem:[#allocation2 + $0xe0] sm:$0xff]
      %v1514 = vld [vmem:[#allocation2 + $0xe8] sm:$0xff]
      %v1515 = vld [vmem:[#allocation2 + $0xf0] sm:$0xff]
      %v1516 = vld [vmem:[#allocation2 + $0xf8] sm:$0xff]
      %v1517 = vld [vmem:[#allocation2 + $0x100] sm:$0xff]
      %v1518 = vld [vmem:[#allocation2 + $0x108] sm:$0xff]
      %v1519 = vld [vmem:[#allocation2 + $0x110] sm:$0xff]
      %v1520 = vld [vmem:[#allocation2 + $0x118] sm:$0xff]
      %v1521 = vld [vmem:[#allocation2 + $0x120] sm:$0xff]
      %v1522 = vld [vmem:[#allocation2 + $0x128] sm:$0xff]
      %v1523 = vld [vmem:[#allocation2 + $0x130] sm:$0xff]
      %v1524 = vld [vmem:[#allocation2 + $0x138] sm:$0xff]
      %v1525 = vld [vmem:[#allocation2 + $0x140] sm:$0xff]
      %v1526 = vld [vmem:[#allocation2 + $0x148] sm:$0xff]
      %v1527 = vld [vmem:[#allocation2 + $0x150] sm:$0xff]
      %v1528 = vld [vmem:[#allocation2 + $0x158] sm:$0xff]
      %v1529 = vld [vmem:[#allocation2 + $0x160] sm:$0xff]
      %v1530 = vld [vmem:[#allocation2 + $0x168] sm:$0xff]
      %v1531 = vld [vmem:[#allocation2 + $0x170] sm:$0xff]
      %v1532 = vld [vmem:[#allocation2 + $0x178] sm:$0xff]
      %v1533 = vld [vmem:[#allocation2 + $0x180] sm:$0xff]
      %v1534 = vld [vmem:[#allocation2 + $0x188] sm:$0xff]
      %v1535 = vld [vmem:[#allocation2 + $0x190] sm:$0xff]
      %v1536 = vld [vmem:[#allocation2 + $0x198] sm:$0xff]
      %v1537 = vld [vmem:[#allocation2 + $0x1a0] sm:$0xff]
      %v1538 = vld [vmem:[#allocation2 + $0x1a8] sm:$0xff]
      %v1539 = vld [vmem:[#allocation2 + $0x1b0] sm:$0xff]
      %v1540 = vld [vmem:[#allocation2 + $0x1b8] sm:$0xff]
      %v1541 = vld [vmem:[#allocation2 + $0x1c0] sm:$0xff]
      %v1542 = vld [vmem:[#allocation2 + $0x1c8] sm:$0xff]
      %v1543 = vld [vmem:[#allocation2 + $0x1d0] sm:$0xff]
      %v1544 = vld [vmem:[#allocation2 + $0x1d8] sm:$0xff]
      %v1545 = vld [vmem:[#allocation2 + $0x1e0] sm:$0xff]
      %v1546 = vld [vmem:[#allocation2 + $0x1e8] sm:$0xff]
      %v1547 = vld [vmem:[#allocation2 + $0x1f0] sm:$0xff]
      %v1548 = vld [vmem:[#allocation2 + $0x1f8] sm:$0xff]
      %v1549 = vld [vmem:[#allocation2 + $0x200] sm:$0xff]
      %v1550 = vld [vmem:[#allocation2 + $0x208] sm:$0xff]
      %v1551 = vld [vmem:[#allocation2 + $0x210] sm:$0xff]
      %v1552 = vld [vmem:[#allocation2 + $0x218] sm:$0xff]
      %v1553 = vld [vmem:[#allocation2 + $0x220] sm:$0xff]
      %v1554 = vld [vmem:[#allocation2 + $0x228] sm:$0xff]
      %v1555 = vld [vmem:[#allocation2 + $0x230] sm:$0xff]
      %v1556 = vld [vmem:[#allocation2 + $0x238] sm:$0xff]
      %v1557 = vld [vmem:[#allocation2 + $0x240] sm:$0xff]
      %v1558 = vld [vmem:[#allocation2 + $0x248] sm:$0xff]
      %v1559 = vld [vmem:[#allocation2 + $0x250] sm:$0xff]
      %v1560 = vld [vmem:[#allocation2 + $0x258] sm:$0xff]
      %v1561 = vld [vmem:[#allocation2 + $0x260] sm:$0xff]
      %v1562 = vld [vmem:[#allocation2 + $0x268] sm:$0xff]
      %v1563 = vld [vmem:[#allocation2 + $0x270] sm:$0xff]
      %v1564 = vld [vmem:[#allocation2 + $0x278] sm:$0xff]
      %v1565 = vld [vmem:[#allocation2 + $0x280] sm:$0xff]
      %v1566 = vld [vmem:[#allocation2 + $0x288] sm:$0xff]
      %v1567 = vld [vmem:[#allocation2 + $0x290] sm:$0xff]
      %v1568 = vld [vmem:[#allocation2 + $0x298] sm:$0xff]
      %v1569 = vld [vmem:[#allocation2 + $0x2a0] sm:$0xff]
      %v1570 = vld [vmem:[#allocation2 + $0x2a8] sm:$0xff]
      %v1571 = vld [vmem:[#allocation2 + $0x2b0] sm:$0xff]
      %v1572 = vld [vmem:[#allocation2 + $0x2b8] sm:$0xff]
      %v1573 = vld [vmem:[#allocation2 + $0x2c0] sm:$0xff]
      %v1574 = vld [vmem:[#allocation2 + $0x2c8] sm:$0xff]
      %v1575 = vld [vmem:[#allocation2 + $0x2d0] sm:$0xff]
      %v1576 = vld [vmem:[#allocation2 + $0x2d8] sm:$0xff]
      %v1577 = vld [vmem:[#allocation2 + $0x2e0] sm:$0xff]
      %v1578 = vld [vmem:[#allocation2 + $0x2e8] sm:$0xff]
      %v1579 = vld [vmem:[#allocation2 + $0x2f0] sm:$0xff]
      %v1580 = vld [vmem:[#allocation2 + $0x2f8] sm:$0xff]
      %v1581 = vld [vmem:[#allocation2 + $0x300] sm:$0xff]
      %v1582 = vld [vmem:[#allocation2 + $0x308] sm:$0xff]
      %v1583 = vld [vmem:[#allocation2 + $0x310] sm:$0xff]
      %v1584 = vld [vmem:[#allocation2 + $0x318] sm:$0xff]
      %v1585 = vld [vmem:[#allocation2 + $0x320] sm:$0xff]
      %v1586 = vld [vmem:[#allocation2 + $0x328] sm:$0xff]
      %v1587 = vld [vmem:[#allocation2 + $0x330] sm:$0xff]
      %v1588 = vld [vmem:[#allocation2 + $0x338] sm:$0xff]
      %v1589 = vld [vmem:[#allocation2 + $0x340] sm:$0xff]
      %v1590 = vld [vmem:[#allocation2 + $0x348] sm:$0xff]
      %v1591 = vld [vmem:[#allocation2 + $0x350] sm:$0xff]
      %v1592 = vld [vmem:[#allocation2 + $0x358] sm:$0xff]
      %v1593 = vld [vmem:[#allocation2 + $0x360] sm:$0xff]
      %v1594 = vld [vmem:[#allocation2 + $0x368] sm:$0xff]
      %v1595 = vld [vmem:[#allocation2 + $0x370] sm:$0xff]
      %v1596 = vld [vmem:[#allocation2 + $0x378] sm:$0xff]
      %v1597 = vld [vmem:[#allocation2 + $0x380] sm:$0xff]
      %v1598 = vld [vmem:[#allocation2 + $0x388] sm:$0xff]
      %v1599 = vld [vmem:[#allocation2 + $0x390] sm:$0xff]
      %v1600 = vld [vmem:[#allocation2 + $0x398] sm:$0xff]
      %v1601 = vld [vmem:[#allocation2 + $0x3a0] sm:$0xff]
      %v1602 = vld [vmem:[#allocation2 + $0x3a8] sm:$0xff]
      %v1603 = vld [vmem:[#allocation2 + $0x3b0] sm:$0xff]
      %v1604 = vld [vmem:[#allocation2 + $0x3b8] sm:$0xff]
      %v1605 = vld [vmem:[#allocation2 + $0x3c0] sm:$0xff]
      %v1606 = vld [vmem:[#allocation2 + $0x3c8] sm:$0xff]
      %v1607 = vld [vmem:[#allocation2 + $0x3d0] sm:$0xff]
      %v1608 = vld [vmem:[#allocation2 + $0x3d8] sm:$0xff]
      %v1609 = vld [vmem:[#allocation2 + $0x3e0] sm:$0xff]
      %v1610 = vld [vmem:[#allocation2 + $0x3e8] sm:$0xff]
      %v1611 = vld [vmem:[#allocation2 + $0x3f0] sm:$0xff]
      %v1612 = vld [vmem:[#allocation2 + $0x3f8] sm:$0xff]
      %v1613 = vmax.f32 %v1485, %v1357
      %v1614 = vmax.f32 %v1486, %v1358
      %v1615 = vmax.f32 %v1487, %v1359
      %v1616 = vmax.f32 %v1488, %v1360
      %v1617 = vmax.f32 %v1489, %v1361
      %v1618 = vmax.f32 %v1490, %v1362
      %v1619 = vmax.f32 %v1491, %v1363
      %v1620 = vmax.f32 %v1492, %v1364
      %v1621 = vmax.f32 %v1493, %v1365
      %v1622 = vmax.f32 %v1494, %v1366
      %v1623 = vmax.f32 %v1495, %v1367
      %v1624 = vmax.f32 %v1496, %v1368
      %v1625 = vmax.f32 %v1497, %v1369
      %v1626 = vmax.f32 %v1498, %v1370
      %v1627 = vmax.f32 %v1499, %v1371
      %v1628 = vmax.f32 %v1500, %v1372
      %v1629 = vmax.f32 %v1501, %v1373
      %v1630 = vmax.f32 %v1502, %v1374
      %v1631 = vmax.f32 %v1503, %v1375
      %v1632 = vmax.f32 %v1504, %v1376
      %v1633 = vmax.f32 %v1505, %v1377
      %v1634 = vmax.f32 %v1506, %v1378
      %v1635 = vmax.f32 %v1507, %v1379
      %v1636 = vmax.f32 %v1508, %v1380
      %v1637 = vmax.f32 %v1509, %v1381
      %v1638 = vmax.f32 %v1510, %v1382
      %v1639 = vmax.f32 %v1511, %v1383
      %v1640 = vmax.f32 %v1512, %v1384
      %v1641 = vmax.f32 %v1513, %v1385
      %v1642 = vmax.f32 %v1514, %v1386
      %v1643 = vmax.f32 %v1515, %v1387
      %v1644 = vmax.f32 %v1516, %v1388
      %v1645 = vmax.f32 %v1517, %v1389
      %v1646 = vmax.f32 %v1518, %v1390
      %v1647 = vmax.f32 %v1519, %v1391
      %v1648 = vmax.f32 %v1520, %v1392
      %v1649 = vmax.f32 %v1521, %v1393
      %v1650 = vmax.f32 %v1522, %v1394
      %v1651 = vmax.f32 %v1523, %v1395
      %v1652 = vmax.f32 %v1524, %v1396
      %v1653 = vmax.f32 %v1525, %v1397
      %v1654 = vmax.f32 %v1526, %v1398
      %v1655 = vmax.f32 %v1527, %v1399
      %v1656 = vmax.f32 %v1528, %v1400
      %v1657 = vmax.f32 %v1529, %v1401
      %v1658 = vmax.f32 %v1530, %v1402
      %v1659 = vmax.f32 %v1531, %v1403
      %v1660 = vmax.f32 %v1532, %v1404
      %v1661 = vmax.f32 %v1533, %v1405
      %v1662 = vmax.f32 %v1534, %v1406
      %v1663 = vmax.f32 %v1535, %v1407
      %v1664 = vmax.f32 %v1536, %v1408
      %v1665 = vmax.f32 %v1537, %v1409
      %v1666 = vmax.f32 %v1538, %v1410
      %v1667 = vmax.f32 %v1539, %v1411
      %v1668 = vmax.f32 %v1540, %v1412
      %v1669 = vmax.f32 %v1541, %v1413
      %v1670 = vmax.f32 %v1542, %v1414
      %v1671 = vmax.f32 %v1543, %v1415
      %v1672 = vmax.f32 %v1544, %v1416
      %v1673 = vmax.f32 %v1545, %v1417
      %v1674 = vmax.f32 %v1546, %v1418
      %v1675 = vmax.f32 %v1547, %v1419
      %v1676 = vmax.f32 %v1548, %v1420
      %v1677 = vmax.f32 %v1549, %v1421
      %v1678 = vmax.f32 %v1550, %v1422
      %v1679 = vmax.f32 %v1551, %v1423
      %v1680 = vmax.f32 %v1552, %v1424
      %v1681 = vmax.f32 %v1553, %v1425
      %v1682 = vmax.f32 %v1554, %v1426
      %v1683 = vmax.f32 %v1555, %v1427
      %v1684 = vmax.f32 %v1556, %v1428
      %v1685 = vmax.f32 %v1557, %v1429
      %v1686 = vmax.f32 %v1558, %v1430
      %v1687 = vmax.f32 %v1559, %v1431
      %v1688 = vmax.f32 %v1560, %v1432
      %v1689 = vmax.f32 %v1561, %v1433
      %v1690 = vmax.f32 %v1562, %v1434
      %v1691 = vmax.f32 %v1563, %v1435
      %v1692 = vmax.f32 %v1564, %v1436
      %v1693 = vmax.f32 %v1565, %v1437
      %v1694 = vmax.f32 %v1566, %v1438
      %v1695 = vmax.f32 %v1567, %v1439
      %v1696 = vmax.f32 %v1568, %v1440
      %v1697 = vmax.f32 %v1569, %v1441
      %v1698 = vmax.f32 %v1570, %v1442
      %v1699 = vmax.f32 %v1571, %v1443
      %v1700 = vmax.f32 %v1572, %v1444
      %v1701 = vmax.f32 %v1573, %v1445
      %v1702 = vmax.f32 %v1574, %v1446
      %v1703 = vmax.f32 %v1575, %v1447
      %v1704 = vmax.f32 %v1576, %v1448
      %v1705 = vmax.f32 %v1577, %v1449
      %v1706 = vmax.f32 %v1578, %v1450
      %v1707 = vmax.f32 %v1579, %v1451
      %v1708 = vmax.f32 %v1580, %v1452
      %v1709 = vmax.f32 %v1581, %v1453
      %v1710 = vmax.f32 %v1582, %v1454
      %v1711 = vmax.f32 %v1583, %v1455
      %v1712 = vmax.f32 %v1584, %v1456
      %v1713 = vmax.f32 %v1585, %v1457
      %v1714 = vmax.f32 %v1586, %v1458
      %v1715 = vmax.f32 %v1587, %v1459
      %v1716 = vmax.f32 %v1588, %v1460
      %v1717 = vmax.f32 %v1589, %v1461
      %v1718 = vmax.f32 %v1590, %v1462
      %v1719 = vmax.f32 %v1591, %v1463
      %v1720 = vmax.f32 %v1592, %v1464
      %v1721 = vmax.f32 %v1593, %v1465
      %v1722 = vmax.f32 %v1594, %v1466
      %v1723 = vmax.f32 %v1595, %v1467
      %v1724 = vmax.f32 %v1596, %v1468
      %v1725 = vmax.f32 %v1597, %v1469
      %v1726 = vmax.f32 %v1598, %v1470
      %v1727 = vmax.f32 %v1599, %v1471
      %v1728 = vmax.f32 %v1600, %v1472
      %v1729 = vmax.f32 %v1601, %v1473
      %v1730 = vmax.f32 %v1602, %v1474
      %v1731 = vmax.f32 %v1603, %v1475
      %v1732 = vmax.f32 %v1604, %v1476
      %v1733 = vmax.f32 %v1605, %v1477
      %v1734 = vmax.f32 %v1606, %v1478
      %v1735 = vmax.f32 %v1607, %v1479
      %v1736 = vmax.f32 %v1608, %v1480
      %v1737 = vmax.f32 %v1609, %v1481
      %v1738 = vmax.f32 %v1610, %v1482
      %v1739 = vmax.f32 %v1611, %v1483
      %v1740 = vmax.f32 %v1612, %v1484
      %vm1741 = vcmask 130048
      %1742 = vst.msk [vmem:[#allocation2] sm:$0xff] %vm1741, %v1613
      %1743 = vst.msk [vmem:[#allocation2 + $0x8] sm:$0xff] %vm1741, %v1614
      %1744 = vst.msk [vmem:[#allocation2 + $0x10] sm:$0xff] %vm1741, %v1615
      %1745 = vst.msk [vmem:[#allocation2 + $0x18] sm:$0xff] %vm1741, %v1616
      %1746 = vst.msk [vmem:[#allocation2 + $0x20] sm:$0xff] %vm1741, %v1617
      %1747 = vst.msk [vmem:[#allocation2 + $0x28] sm:$0xff] %vm1741, %v1618
      %1748 = vst.msk [vmem:[#allocation2 + $0x30] sm:$0xff] %vm1741, %v1619
      %1749 = vst.msk [vmem:[#allocation2 + $0x38] sm:$0xff] %vm1741, %v1620
      %1750 = vst.msk [vmem:[#allocation2 + $0x40] sm:$0xff] %vm1741, %v1621
      %1751 = vst.msk [vmem:[#allocation2 + $0x48] sm:$0xff] %vm1741, %v1622
      %1752 = vst.msk [vmem:[#allocation2 + $0x50] sm:$0xff] %vm1741, %v1623
      %1753 = vst.msk [vmem:[#allocation2 + $0x58] sm:$0xff] %vm1741, %v1624
      %1754 = vst.msk [vmem:[#allocation2 + $0x60] sm:$0xff] %vm1741, %v1625
      %1755 = vst.msk [vmem:[#allocation2 + $0x68] sm:$0xff] %vm1741, %v1626
      %1756 = vst.msk [vmem:[#allocation2 + $0x70] sm:$0xff] %vm1741, %v1627
      %1757 = vst.msk [vmem:[#allocation2 + $0x78] sm:$0xff] %vm1741, %v1628
      %1758 = vst.msk [vmem:[#allocation2 + $0x80] sm:$0xff] %vm1741, %v1629
      %1759 = vst.msk [vmem:[#allocation2 + $0x88] sm:$0xff] %vm1741, %v1630
      %1760 = vst.msk [vmem:[#allocation2 + $0x90] sm:$0xff] %vm1741, %v1631
      %1761 = vst.msk [vmem:[#allocation2 + $0x98] sm:$0xff] %vm1741, %v1632
      %1762 = vst.msk [vmem:[#allocation2 + $0xa0] sm:$0xff] %vm1741, %v1633
      %1763 = vst.msk [vmem:[#allocation2 + $0xa8] sm:$0xff] %vm1741, %v1634
      %1764 = vst.msk [vmem:[#allocation2 + $0xb0] sm:$0xff] %vm1741, %v1635
      %1765 = vst.msk [vmem:[#allocation2 + $0xb8] sm:$0xff] %vm1741, %v1636
      %1766 = vst.msk [vmem:[#allocation2 + $0xc0] sm:$0xff] %vm1741, %v1637
      %1767 = vst.msk [vmem:[#allocation2 + $0xc8] sm:$0xff] %vm1741, %v1638
      %1768 = vst.msk [vmem:[#allocation2 + $0xd0] sm:$0xff] %vm1741, %v1639
      %1769 = vst.msk [vmem:[#allocation2 + $0xd8] sm:$0xff] %vm1741, %v1640
      %1770 = vst.msk [vmem:[#allocation2 + $0xe0] sm:$0xff] %vm1741, %v1641
      %1771 = vst.msk [vmem:[#allocation2 + $0xe8] sm:$0xff] %vm1741, %v1642
      %1772 = vst.msk [vmem:[#allocation2 + $0xf0] sm:$0xff] %vm1741, %v1643
      %1773 = vst.msk [vmem:[#allocation2 + $0xf8] sm:$0xff] %vm1741, %v1644
      %1774 = vst.msk [vmem:[#allocation2 + $0x100] sm:$0xff] %vm1741, %v1645
      %1775 = vst.msk [vmem:[#allocation2 + $0x108] sm:$0xff] %vm1741, %v1646
      %1776 = vst.msk [vmem:[#allocation2 + $0x110] sm:$0xff] %vm1741, %v1647
      %1777 = vst.msk [vmem:[#allocation2 + $0x118] sm:$0xff] %vm1741, %v1648
      %1778 = vst.msk [vmem:[#allocation2 + $0x120] sm:$0xff] %vm1741, %v1649
      %1779 = vst.msk [vmem:[#allocation2 + $0x128] sm:$0xff] %vm1741, %v1650
      %1780 = vst.msk [vmem:[#allocation2 + $0x130] sm:$0xff] %vm1741, %v1651
      %1781 = vst.msk [vmem:[#allocation2 + $0x138] sm:$0xff] %vm1741, %v1652
      %1782 = vst.msk [vmem:[#allocation2 + $0x140] sm:$0xff] %vm1741, %v1653
      %1783 = vst.msk [vmem:[#allocation2 + $0x148] sm:$0xff] %vm1741, %v1654
      %1784 = vst.msk [vmem:[#allocation2 + $0x150] sm:$0xff] %vm1741, %v1655
      %1785 = vst.msk [vmem:[#allocation2 + $0x158] sm:$0xff] %vm1741, %v1656
      %1786 = vst.msk [vmem:[#allocation2 + $0x160] sm:$0xff] %vm1741, %v1657
      %1787 = vst.msk [vmem:[#allocation2 + $0x168] sm:$0xff] %vm1741, %v1658
      %1788 = vst.msk [vmem:[#allocation2 + $0x170] sm:$0xff] %vm1741, %v1659
      %1789 = vst.msk [vmem:[#allocation2 + $0x178] sm:$0xff] %vm1741, %v1660
      %1790 = vst.msk [vmem:[#allocation2 + $0x180] sm:$0xff] %vm1741, %v1661
      %1791 = vst.msk [vmem:[#allocation2 + $0x188] sm:$0xff] %vm1741, %v1662
      %1792 = vst.msk [vmem:[#allocation2 + $0x190] sm:$0xff] %vm1741, %v1663
      %1793 = vst.msk [vmem:[#allocation2 + $0x198] sm:$0xff] %vm1741, %v1664
      %1794 = vst.msk [vmem:[#allocation2 + $0x1a0] sm:$0xff] %vm1741, %v1665
      %1795 = vst.msk [vmem:[#allocation2 + $0x1a8] sm:$0xff] %vm1741, %v1666
      %1796 = vst.msk [vmem:[#allocation2 + $0x1b0] sm:$0xff] %vm1741, %v1667
      %1797 = vst.msk [vmem:[#allocation2 + $0x1b8] sm:$0xff] %vm1741, %v1668
      %1798 = vst.msk [vmem:[#allocation2 + $0x1c0] sm:$0xff] %vm1741, %v1669
      %1799 = vst.msk [vmem:[#allocation2 + $0x1c8] sm:$0xff] %vm1741, %v1670
      %1800 = vst.msk [vmem:[#allocation2 + $0x1d0] sm:$0xff] %vm1741, %v1671
      %1801 = vst.msk [vmem:[#allocation2 + $0x1d8] sm:$0xff] %vm1741, %v1672
      %1802 = vst.msk [vmem:[#allocation2 + $0x1e0] sm:$0xff] %vm1741, %v1673
      %1803 = vst.msk [vmem:[#allocation2 + $0x1e8] sm:$0xff] %vm1741, %v1674
      %1804 = vst.msk [vmem:[#allocation2 + $0x1f0] sm:$0xff] %vm1741, %v1675
      %1805 = vst.msk [vmem:[#allocation2 + $0x1f8] sm:$0xff] %vm1741, %v1676
      %1806 = vst.msk [vmem:[#allocation2 + $0x200] sm:$0xff] %vm1741, %v1677
      %1807 = vst.msk [vmem:[#allocation2 + $0x208] sm:$0xff] %vm1741, %v1678
      %1808 = vst.msk [vmem:[#allocation2 + $0x210] sm:$0xff] %vm1741, %v1679
      %1809 = vst.msk [vmem:[#allocation2 + $0x218] sm:$0xff] %vm1741, %v1680
      %1810 = vst.msk [vmem:[#allocation2 + $0x220] sm:$0xff] %vm1741, %v1681
      %1811 = vst.msk [vmem:[#allocation2 + $0x228] sm:$0xff] %vm1741, %v1682
      %1812 = vst.msk [vmem:[#allocation2 + $0x230] sm:$0xff] %vm1741, %v1683
      %1813 = vst.msk [vmem:[#allocation2 + $0x238] sm:$0xff] %vm1741, %v1684
      %1814 = vst.msk [vmem:[#allocation2 + $0x240] sm:$0xff] %vm1741, %v1685
      %1815 = vst.msk [vmem:[#allocation2 + $0x248] sm:$0xff] %vm1741, %v1686
      %1816 = vst.msk [vmem:[#allocation2 + $0x250] sm:$0xff] %vm1741, %v1687
      %1817 = vst.msk [vmem:[#allocation2 + $0x258] sm:$0xff] %vm1741, %v1688
      %1818 = vst.msk [vmem:[#allocation2 + $0x260] sm:$0xff] %vm1741, %v1689
      %1819 = vst.msk [vmem:[#allocation2 + $0x268] sm:$0xff] %vm1741, %v1690
      %1820 = vst.msk [vmem:[#allocation2 + $0x270] sm:$0xff] %vm1741, %v1691
      %1821 = vst.msk [vmem:[#allocation2 + $0x278] sm:$0xff] %vm1741, %v1692
      %1822 = vst.msk [vmem:[#allocation2 + $0x280] sm:$0xff] %vm1741, %v1693
      %1823 = vst.msk [vmem:[#allocation2 + $0x288] sm:$0xff] %vm1741, %v1694
      %1824 = vst.msk [vmem:[#allocation2 + $0x290] sm:$0xff] %vm1741, %v1695
      %1825 = vst.msk [vmem:[#allocation2 + $0x298] sm:$0xff] %vm1741, %v1696
      %1826 = vst.msk [vmem:[#allocation2 + $0x2a0] sm:$0xff] %vm1741, %v1697
      %1827 = vst.msk [vmem:[#allocation2 + $0x2a8] sm:$0xff] %vm1741, %v1698
      %1828 = vst.msk [vmem:[#allocation2 + $0x2b0] sm:$0xff] %vm1741, %v1699
      %1829 = vst.msk [vmem:[#allocation2 + $0x2b8] sm:$0xff] %vm1741, %v1700
      %1830 = vst.msk [vmem:[#allocation2 + $0x2c0] sm:$0xff] %vm1741, %v1701
      %1831 = vst.msk [vmem:[#allocation2 + $0x2c8] sm:$0xff] %vm1741, %v1702
      %1832 = vst.msk [vmem:[#allocation2 + $0x2d0] sm:$0xff] %vm1741, %v1703
      %1833 = vst.msk [vmem:[#allocation2 + $0x2d8] sm:$0xff] %vm1741, %v1704
      %1834 = vst.msk [vmem:[#allocation2 + $0x2e0] sm:$0xff] %vm1741, %v1705
      %1835 = vst.msk [vmem:[#allocation2 + $0x2e8] sm:$0xff] %vm1741, %v1706
      %1836 = vst.msk [vmem:[#allocation2 + $0x2f0] sm:$0xff] %vm1741, %v1707
      %1837 = vst.msk [vmem:[#allocation2 + $0x2f8] sm:$0xff] %vm1741, %v1708
      %1838 = vst.msk [vmem:[#allocation2 + $0x300] sm:$0xff] %vm1741, %v1709
      %1839 = vst.msk [vmem:[#allocation2 + $0x308] sm:$0xff] %vm1741, %v1710
      %1840 = vst.msk [vmem:[#allocation2 + $0x310] sm:$0xff] %vm1741, %v1711
      %1841 = vst.msk [vmem:[#allocation2 + $0x318] sm:$0xff] %vm1741, %v1712
      %1842 = vst.msk [vmem:[#allocation2 + $0x320] sm:$0xff] %vm1741, %v1713
      %1843 = vst.msk [vmem:[#allocation2 + $0x328] sm:$0xff] %vm1741, %v1714
      %1844 = vst.msk [vmem:[#allocation2 + $0x330] sm:$0xff] %vm1741, %v1715
      %1845 = vst.msk [vmem:[#allocation2 + $0x338] sm:$0xff] %vm1741, %v1716
      %1846 = vst.msk [vmem:[#allocation2 + $0x340] sm:$0xff] %vm1741, %v1717
      %1847 = vst.msk [vmem:[#allocation2 + $0x348] sm:$0xff] %vm1741, %v1718
      %1848 = vst.msk [vmem:[#allocation2 + $0x350] sm:$0xff] %vm1741, %v1719
      %1849 = vst.msk [vmem:[#allocation2 + $0x358] sm:$0xff] %vm1741, %v1720
      %1850 = vst.msk [vmem:[#allocation2 + $0x360] sm:$0xff] %vm1741, %v1721
      %1851 = vst.msk [vmem:[#allocation2 + $0x368] sm:$0xff] %vm1741, %v1722
      %1852 = vst.msk [vmem:[#allocation2 + $0x370] sm:$0xff] %vm1741, %v1723
      %1853 = vst.msk [vmem:[#allocation2 + $0x378] sm:$0xff] %vm1741, %v1724
      %1854 = vst.msk [vmem:[#allocation2 + $0x380] sm:$0xff] %vm1741, %v1725
      %1855 = vst.msk [vmem:[#allocation2 + $0x388] sm:$0xff] %vm1741, %v1726
      %1856 = vst.msk [vmem:[#allocation2 + $0x390] sm:$0xff] %vm1741, %v1727
      %1857 = vst.msk [vmem:[#allocation2 + $0x398] sm:$0xff] %vm1741, %v1728
      %1858 = vst.msk [vmem:[#allocation2 + $0x3a0] sm:$0xff] %vm1741, %v1729
      %1859 = vst.msk [vmem:[#allocation2 + $0x3a8] sm:$0xff] %vm1741, %v1730
      %1860 = vst.msk [vmem:[#allocation2 + $0x3b0] sm:$0xff] %vm1741, %v1731
      %1861 = vst.msk [vmem:[#allocation2 + $0x3b8] sm:$0xff] %vm1741, %v1732
      %1862 = vst.msk [vmem:[#allocation2 + $0x3c0] sm:$0xff] %vm1741, %v1733
      %1863 = vst.msk [vmem:[#allocation2 + $0x3c8] sm:$0xff] %vm1741, %v1734
      %1864 = vst.msk [vmem:[#allocation2 + $0x3d0] sm:$0xff] %vm1741, %v1735
      %1865 = vst.msk [vmem:[#allocation2 + $0x3d8] sm:$0xff] %vm1741, %v1736
      %1866 = vst.msk [vmem:[#allocation2 + $0x3e0] sm:$0xff] %vm1741, %v1737
      %1867 = vst.msk [vmem:[#allocation2 + $0x3e8] sm:$0xff] %vm1741, %v1738
      %1868 = vst.msk [vmem:[#allocation2 + $0x3f0] sm:$0xff] %vm1741, %v1739
      %1869 = vst.msk [vmem:[#allocation2 + $0x3f8] sm:$0xff] %vm1741, %v1740
      // Predicated region
      $region37: #{input_tnet_forward.8} parent=31 // pred_check
        %p1870 = pneg %p194
      $region38: #{input_tnet_forward.8} parent=31 // pred_check_branch
        %1872 = sbr.rel (%p1870) target = $region40
      $region39: #{input_tnet_forward.8} parent=31 // pred_region
        %v1873 = vld [vmem:[#allocation2] sm:$0xff]
        %v1874 = vld [vmem:[#allocation2 + $0x8] sm:$0xff]
        %v1875 = vld [vmem:[#allocation2 + $0x10] sm:$0xff]
        %v1876 = vld [vmem:[#allocation2 + $0x18] sm:$0xff]
        %v1877 = vld [vmem:[#allocation2 + $0x20] sm:$0xff]
        %v1878 = vld [vmem:[#allocation2 + $0x28] sm:$0xff]
        %v1879 = vld [vmem:[#allocation2 + $0x30] sm:$0xff]
        %v1880 = vld [vmem:[#allocation2 + $0x38] sm:$0xff]
        %v1881 = vld [vmem:[#allocation2 + $0x40] sm:$0xff]
        %v1882 = vld [vmem:[#allocation2 + $0x48] sm:$0xff]
        %v1883 = vld [vmem:[#allocation2 + $0x50] sm:$0xff]
        %v1884 = vld [vmem:[#allocation2 + $0x58] sm:$0xff]
        %v1885 = vld [vmem:[#allocation2 + $0x60] sm:$0xff]
        %v1886 = vld [vmem:[#allocation2 + $0x68] sm:$0xff]
        %v1887 = vld [vmem:[#allocation2 + $0x70] sm:$0xff]
        %v1888 = vld [vmem:[#allocation2 + $0x78] sm:$0xff]
        %v1889 = vld [vmem:[#allocation2 + $0x80] sm:$0xff]
        %v1890 = vld [vmem:[#allocation2 + $0x88] sm:$0xff]
        %v1891 = vld [vmem:[#allocation2 + $0x90] sm:$0xff]
        %v1892 = vld [vmem:[#allocation2 + $0x98] sm:$0xff]
        %v1893 = vld [vmem:[#allocation2 + $0xa0] sm:$0xff]
        %v1894 = vld [vmem:[#allocation2 + $0xa8] sm:$0xff]
        %v1895 = vld [vmem:[#allocation2 + $0xb0] sm:$0xff]
        %v1896 = vld [vmem:[#allocation2 + $0xb8] sm:$0xff]
        %v1897 = vld [vmem:[#allocation2 + $0xc0] sm:$0xff]
        %v1898 = vld [vmem:[#allocation2 + $0xc8] sm:$0xff]
        %v1899 = vld [vmem:[#allocation2 + $0xd0] sm:$0xff]
        %v1900 = vld [vmem:[#allocation2 + $0xd8] sm:$0xff]
        %v1901 = vld [vmem:[#allocation2 + $0xe0] sm:$0xff]
        %v1902 = vld [vmem:[#allocation2 + $0xe8] sm:$0xff]
        %v1903 = vld [vmem:[#allocation2 + $0xf0] sm:$0xff]
        %v1904 = vld [vmem:[#allocation2 + $0xf8] sm:$0xff]
        %v1905 = vld [vmem:[#allocation2 + $0x100] sm:$0xff]
        %v1906 = vld [vmem:[#allocation2 + $0x108] sm:$0xff]
        %v1907 = vld [vmem:[#allocation2 + $0x110] sm:$0xff]
        %v1908 = vld [vmem:[#allocation2 + $0x118] sm:$0xff]
        %v1909 = vld [vmem:[#allocation2 + $0x120] sm:$0xff]
        %v1910 = vld [vmem:[#allocation2 + $0x128] sm:$0xff]
        %v1911 = vld [vmem:[#allocation2 + $0x130] sm:$0xff]
        %v1912 = vld [vmem:[#allocation2 + $0x138] sm:$0xff]
        %v1913 = vld [vmem:[#allocation2 + $0x140] sm:$0xff]
        %v1914 = vld [vmem:[#allocation2 + $0x148] sm:$0xff]
        %v1915 = vld [vmem:[#allocation2 + $0x150] sm:$0xff]
        %v1916 = vld [vmem:[#allocation2 + $0x158] sm:$0xff]
        %v1917 = vld [vmem:[#allocation2 + $0x160] sm:$0xff]
        %v1918 = vld [vmem:[#allocation2 + $0x168] sm:$0xff]
        %v1919 = vld [vmem:[#allocation2 + $0x170] sm:$0xff]
        %v1920 = vld [vmem:[#allocation2 + $0x178] sm:$0xff]
        %v1921 = vld [vmem:[#allocation2 + $0x180] sm:$0xff]
        %v1922 = vld [vmem:[#allocation2 + $0x188] sm:$0xff]
        %v1923 = vld [vmem:[#allocation2 + $0x190] sm:$0xff]
        %v1924 = vld [vmem:[#allocation2 + $0x198] sm:$0xff]
        %v1925 = vld [vmem:[#allocation2 + $0x1a0] sm:$0xff]
        %v1926 = vld [vmem:[#allocation2 + $0x1a8] sm:$0xff]
        %v1927 = vld [vmem:[#allocation2 + $0x1b0] sm:$0xff]
        %v1928 = vld [vmem:[#allocation2 + $0x1b8] sm:$0xff]
        %v1929 = vld [vmem:[#allocation2 + $0x1c0] sm:$0xff]
        %v1930 = vld [vmem:[#allocation2 + $0x1c8] sm:$0xff]
        %v1931 = vld [vmem:[#allocation2 + $0x1d0] sm:$0xff]
        %v1932 = vld [vmem:[#allocation2 + $0x1d8] sm:$0xff]
        %v1933 = vld [vmem:[#allocation2 + $0x1e0] sm:$0xff]
        %v1934 = vld [vmem:[#allocation2 + $0x1e8] sm:$0xff]
        %v1935 = vld [vmem:[#allocation2 + $0x1f0] sm:$0xff]
        %v1936 = vld [vmem:[#allocation2 + $0x1f8] sm:$0xff]
        %v1937 = vld [vmem:[#allocation2 + $0x200] sm:$0xff]
        %v1938 = vld [vmem:[#allocation2 + $0x208] sm:$0xff]
        %v1939 = vld [vmem:[#allocation2 + $0x210] sm:$0xff]
        %v1940 = vld [vmem:[#allocation2 + $0x218] sm:$0xff]
        %v1941 = vld [vmem:[#allocation2 + $0x220] sm:$0xff]
        %v1942 = vld [vmem:[#allocation2 + $0x228] sm:$0xff]
        %v1943 = vld [vmem:[#allocation2 + $0x230] sm:$0xff]
        %v1944 = vld [vmem:[#allocation2 + $0x238] sm:$0xff]
        %v1945 = vld [vmem:[#allocation2 + $0x240] sm:$0xff]
        %v1946 = vld [vmem:[#allocation2 + $0x248] sm:$0xff]
        %v1947 = vld [vmem:[#allocation2 + $0x250] sm:$0xff]
        %v1948 = vld [vmem:[#allocation2 + $0x258] sm:$0xff]
        %v1949 = vld [vmem:[#allocation2 + $0x260] sm:$0xff]
        %v1950 = vld [vmem:[#allocation2 + $0x268] sm:$0xff]
        %v1951 = vld [vmem:[#allocation2 + $0x270] sm:$0xff]
        %v1952 = vld [vmem:[#allocation2 + $0x278] sm:$0xff]
        %v1953 = vld [vmem:[#allocation2 + $0x280] sm:$0xff]
        %v1954 = vld [vmem:[#allocation2 + $0x288] sm:$0xff]
        %v1955 = vld [vmem:[#allocation2 + $0x290] sm:$0xff]
        %v1956 = vld [vmem:[#allocation2 + $0x298] sm:$0xff]
        %v1957 = vld [vmem:[#allocation2 + $0x2a0] sm:$0xff]
        %v1958 = vld [vmem:[#allocation2 + $0x2a8] sm:$0xff]
        %v1959 = vld [vmem:[#allocation2 + $0x2b0] sm:$0xff]
        %v1960 = vld [vmem:[#allocation2 + $0x2b8] sm:$0xff]
        %v1961 = vld [vmem:[#allocation2 + $0x2c0] sm:$0xff]
        %v1962 = vld [vmem:[#allocation2 + $0x2c8] sm:$0xff]
        %v1963 = vld [vmem:[#allocation2 + $0x2d0] sm:$0xff]
        %v1964 = vld [vmem:[#allocation2 + $0x2d8] sm:$0xff]
        %v1965 = vld [vmem:[#allocation2 + $0x2e0] sm:$0xff]
        %v1966 = vld [vmem:[#allocation2 + $0x2e8] sm:$0xff]
        %v1967 = vld [vmem:[#allocation2 + $0x2f0] sm:$0xff]
        %v1968 = vld [vmem:[#allocation2 + $0x2f8] sm:$0xff]
        %v1969 = vld [vmem:[#allocation2 + $0x300] sm:$0xff]
        %v1970 = vld [vmem:[#allocation2 + $0x308] sm:$0xff]
        %v1971 = vld [vmem:[#allocation2 + $0x310] sm:$0xff]
        %v1972 = vld [vmem:[#allocation2 + $0x318] sm:$0xff]
        %v1973 = vld [vmem:[#allocation2 + $0x320] sm:$0xff]
        %v1974 = vld [vmem:[#allocation2 + $0x328] sm:$0xff]
        %v1975 = vld [vmem:[#allocation2 + $0x330] sm:$0xff]
        %v1976 = vld [vmem:[#allocation2 + $0x338] sm:$0xff]
        %v1977 = vld [vmem:[#allocation2 + $0x340] sm:$0xff]
        %v1978 = vld [vmem:[#allocation2 + $0x348] sm:$0xff]
        %v1979 = vld [vmem:[#allocation2 + $0x350] sm:$0xff]
        %v1980 = vld [vmem:[#allocation2 + $0x358] sm:$0xff]
        %v1981 = vld [vmem:[#allocation2 + $0x360] sm:$0xff]
        %v1982 = vld [vmem:[#allocation2 + $0x368] sm:$0xff]
        %v1983 = vld [vmem:[#allocation2 + $0x370] sm:$0xff]
        %v1984 = vld [vmem:[#allocation2 + $0x378] sm:$0xff]
        %v1985 = vld [vmem:[#allocation2 + $0x380] sm:$0xff]
        %v1986 = vld [vmem:[#allocation2 + $0x388] sm:$0xff]
        %v1987 = vld [vmem:[#allocation2 + $0x390] sm:$0xff]
        %v1988 = vld [vmem:[#allocation2 + $0x398] sm:$0xff]
        %v1989 = vld [vmem:[#allocation2 + $0x3a0] sm:$0xff]
        %v1990 = vld [vmem:[#allocation2 + $0x3a8] sm:$0xff]
        %v1991 = vld [vmem:[#allocation2 + $0x3b0] sm:$0xff]
        %v1992 = vld [vmem:[#allocation2 + $0x3b8] sm:$0xff]
        %v1993 = vld [vmem:[#allocation2 + $0x3c0] sm:$0xff]
        %v1994 = vld [vmem:[#allocation2 + $0x3c8] sm:$0xff]
        %v1995 = vld [vmem:[#allocation2 + $0x3d0] sm:$0xff]
        %v1996 = vld [vmem:[#allocation2 + $0x3d8] sm:$0xff]
        %v1997 = vld [vmem:[#allocation2 + $0x3e0] sm:$0xff]
        %v1998 = vld [vmem:[#allocation2 + $0x3e8] sm:$0xff]
        %v1999 = vld [vmem:[#allocation2 + $0x3f0] sm:$0xff]
        %v2000 = vld [vmem:[#allocation2 + $0x3f8] sm:$0xff]
        %v2001 = vsel %vm1741, %v1873, -inf
        %2002 = vmax.xlane.f32.xlu0 %v2001
        %v2003 = vpop.xlane.xlu0 %2002
        %v2004 = vsel %vm1741, %v1874, -inf
        %2005 = vmax.xlane.f32.xlu0 %v2004
        %v2006 = vpop.xlane.xlu0 %2005
        %v2007 = vsel %vm1741, %v1875, -inf
        %2008 = vmax.xlane.f32.xlu0 %v2007
        %v2009 = vpop.xlane.xlu0 %2008
        %v2010 = vsel %vm1741, %v1876, -inf
        %2011 = vmax.xlane.f32.xlu0 %v2010
        %v2012 = vpop.xlane.xlu0 %2011
        %v2013 = vsel %vm1741, %v1877, -inf
        %2014 = vmax.xlane.f32.xlu0 %v2013
        %v2015 = vpop.xlane.xlu0 %2014
        %v2016 = vsel %vm1741, %v1878, -inf
        %2017 = vmax.xlane.f32.xlu0 %v2016
        %v2018 = vpop.xlane.xlu0 %2017
        %v2019 = vsel %vm1741, %v1879, -inf
        %2020 = vmax.xlane.f32.xlu0 %v2019
        %v2021 = vpop.xlane.xlu0 %2020
        %v2022 = vsel %vm1741, %v1880, -inf
        %2023 = vmax.xlane.f32.xlu0 %v2022
        %v2024 = vpop.xlane.xlu0 %2023
        %v2025 = vsel %vm1741, %v1881, -inf
        %2026 = vmax.xlane.f32.xlu0 %v2025
        %v2027 = vpop.xlane.xlu0 %2026
        %v2028 = vsel %vm1741, %v1882, -inf
        %2029 = vmax.xlane.f32.xlu0 %v2028
        %v2030 = vpop.xlane.xlu0 %2029
        %v2031 = vsel %vm1741, %v1883, -inf
        %2032 = vmax.xlane.f32.xlu0 %v2031
        %v2033 = vpop.xlane.xlu0 %2032
        %v2034 = vsel %vm1741, %v1884, -inf
        %2035 = vmax.xlane.f32.xlu0 %v2034
        %v2036 = vpop.xlane.xlu0 %2035
        %v2037 = vsel %vm1741, %v1885, -inf
        %2038 = vmax.xlane.f32.xlu0 %v2037
        %v2039 = vpop.xlane.xlu0 %2038
        %v2040 = vsel %vm1741, %v1886, -inf
        %2041 = vmax.xlane.f32.xlu0 %v2040
        %v2042 = vpop.xlane.xlu0 %2041
        %v2043 = vsel %vm1741, %v1887, -inf
        %2044 = vmax.xlane.f32.xlu0 %v2043
        %v2045 = vpop.xlane.xlu0 %2044
        %v2046 = vsel %vm1741, %v1888, -inf
        %2047 = vmax.xlane.f32.xlu0 %v2046
        %v2048 = vpop.xlane.xlu0 %2047
        %v2049 = vsel %vm1741, %v1889, -inf
        %2050 = vmax.xlane.f32.xlu0 %v2049
        %v2051 = vpop.xlane.xlu0 %2050
        %v2052 = vsel %vm1741, %v1890, -inf
        %2053 = vmax.xlane.f32.xlu0 %v2052
        %v2054 = vpop.xlane.xlu0 %2053
        %v2055 = vsel %vm1741, %v1891, -inf
        %2056 = vmax.xlane.f32.xlu0 %v2055
        %v2057 = vpop.xlane.xlu0 %2056
        %v2058 = vsel %vm1741, %v1892, -inf
        %2059 = vmax.xlane.f32.xlu0 %v2058
        %v2060 = vpop.xlane.xlu0 %2059
        %v2061 = vsel %vm1741, %v1893, -inf
        %2062 = vmax.xlane.f32.xlu0 %v2061
        %v2063 = vpop.xlane.xlu0 %2062
        %v2064 = vsel %vm1741, %v1894, -inf
        %2065 = vmax.xlane.f32.xlu0 %v2064
        %v2066 = vpop.xlane.xlu0 %2065
        %v2067 = vsel %vm1741, %v1895, -inf
        %2068 = vmax.xlane.f32.xlu0 %v2067
        %v2069 = vpop.xlane.xlu0 %2068
        %v2070 = vsel %vm1741, %v1896, -inf
        %2071 = vmax.xlane.f32.xlu0 %v2070
        %v2072 = vpop.xlane.xlu0 %2071
        %v2073 = vsel %vm1741, %v1897, -inf
        %2074 = vmax.xlane.f32.xlu0 %v2073
        %v2075 = vpop.xlane.xlu0 %2074
        %v2076 = vsel %vm1741, %v1898, -inf
        %2077 = vmax.xlane.f32.xlu0 %v2076
        %v2078 = vpop.xlane.xlu0 %2077
        %v2079 = vsel %vm1741, %v1899, -inf
        %2080 = vmax.xlane.f32.xlu0 %v2079
        %v2081 = vpop.xlane.xlu0 %2080
        %v2082 = vsel %vm1741, %v1900, -inf
        %2083 = vmax.xlane.f32.xlu0 %v2082
        %v2084 = vpop.xlane.xlu0 %2083
        %v2085 = vsel %vm1741, %v1901, -inf
        %2086 = vmax.xlane.f32.xlu0 %v2085
        %v2087 = vpop.xlane.xlu0 %2086
        %v2088 = vsel %vm1741, %v1902, -inf
        %2089 = vmax.xlane.f32.xlu0 %v2088
        %v2090 = vpop.xlane.xlu0 %2089
        %v2091 = vsel %vm1741, %v1903, -inf
        %2092 = vmax.xlane.f32.xlu0 %v2091
        %v2093 = vpop.xlane.xlu0 %2092
        %v2094 = vsel %vm1741, %v1904, -inf
        %2095 = vmax.xlane.f32.xlu0 %v2094
        %v2096 = vpop.xlane.xlu0 %2095
        %v2097 = vsel %vm1741, %v1905, -inf
        %2098 = vmax.xlane.f32.xlu0 %v2097
        %v2099 = vpop.xlane.xlu0 %2098
        %v2100 = vsel %vm1741, %v1906, -inf
        %2101 = vmax.xlane.f32.xlu0 %v2100
        %v2102 = vpop.xlane.xlu0 %2101
        %v2103 = vsel %vm1741, %v1907, -inf
        %2104 = vmax.xlane.f32.xlu0 %v2103
        %v2105 = vpop.xlane.xlu0 %2104
        %v2106 = vsel %vm1741, %v1908, -inf
        %2107 = vmax.xlane.f32.xlu0 %v2106
        %v2108 = vpop.xlane.xlu0 %2107
        %v2109 = vsel %vm1741, %v1909, -inf
        %2110 = vmax.xlane.f32.xlu0 %v2109
        %v2111 = vpop.xlane.xlu0 %2110
        %v2112 = vsel %vm1741, %v1910, -inf
        %2113 = vmax.xlane.f32.xlu0 %v2112
        %v2114 = vpop.xlane.xlu0 %2113
        %v2115 = vsel %vm1741, %v1911, -inf
        %2116 = vmax.xlane.f32.xlu0 %v2115
        %v2117 = vpop.xlane.xlu0 %2116
        %v2118 = vsel %vm1741, %v1912, -inf
        %2119 = vmax.xlane.f32.xlu0 %v2118
        %v2120 = vpop.xlane.xlu0 %2119
        %v2121 = vsel %vm1741, %v1913, -inf
        %2122 = vmax.xlane.f32.xlu0 %v2121
        %v2123 = vpop.xlane.xlu0 %2122
        %v2124 = vsel %vm1741, %v1914, -inf
        %2125 = vmax.xlane.f32.xlu0 %v2124
        %v2126 = vpop.xlane.xlu0 %2125
        %v2127 = vsel %vm1741, %v1915, -inf
        %2128 = vmax.xlane.f32.xlu0 %v2127
        %v2129 = vpop.xlane.xlu0 %2128
        %v2130 = vsel %vm1741, %v1916, -inf
        %2131 = vmax.xlane.f32.xlu0 %v2130
        %v2132 = vpop.xlane.xlu0 %2131
        %v2133 = vsel %vm1741, %v1917, -inf
        %2134 = vmax.xlane.f32.xlu0 %v2133
        %v2135 = vpop.xlane.xlu0 %2134
        %v2136 = vsel %vm1741, %v1918, -inf
        %2137 = vmax.xlane.f32.xlu0 %v2136
        %v2138 = vpop.xlane.xlu0 %2137
        %v2139 = vsel %vm1741, %v1919, -inf
        %2140 = vmax.xlane.f32.xlu0 %v2139
        %v2141 = vpop.xlane.xlu0 %2140
        %v2142 = vsel %vm1741, %v1920, -inf
        %2143 = vmax.xlane.f32.xlu0 %v2142
        %v2144 = vpop.xlane.xlu0 %2143
        %v2145 = vsel %vm1741, %v1921, -inf
        %2146 = vmax.xlane.f32.xlu0 %v2145
        %v2147 = vpop.xlane.xlu0 %2146
        %v2148 = vsel %vm1741, %v1922, -inf
        %2149 = vmax.xlane.f32.xlu0 %v2148
        %v2150 = vpop.xlane.xlu0 %2149
        %v2151 = vsel %vm1741, %v1923, -inf
        %2152 = vmax.xlane.f32.xlu0 %v2151
        %v2153 = vpop.xlane.xlu0 %2152
        %v2154 = vsel %vm1741, %v1924, -inf
        %2155 = vmax.xlane.f32.xlu0 %v2154
        %v2156 = vpop.xlane.xlu0 %2155
        %v2157 = vsel %vm1741, %v1925, -inf
        %2158 = vmax.xlane.f32.xlu0 %v2157
        %v2159 = vpop.xlane.xlu0 %2158
        %v2160 = vsel %vm1741, %v1926, -inf
        %2161 = vmax.xlane.f32.xlu0 %v2160
        %v2162 = vpop.xlane.xlu0 %2161
        %v2163 = vsel %vm1741, %v1927, -inf
        %2164 = vmax.xlane.f32.xlu0 %v2163
        %v2165 = vpop.xlane.xlu0 %2164
        %v2166 = vsel %vm1741, %v1928, -inf
        %2167 = vmax.xlane.f32.xlu0 %v2166
        %v2168 = vpop.xlane.xlu0 %2167
        %v2169 = vsel %vm1741, %v1929, -inf
        %2170 = vmax.xlane.f32.xlu0 %v2169
        %v2171 = vpop.xlane.xlu0 %2170
        %v2172 = vsel %vm1741, %v1930, -inf
        %2173 = vmax.xlane.f32.xlu0 %v2172
        %v2174 = vpop.xlane.xlu0 %2173
        %v2175 = vsel %vm1741, %v1931, -inf
        %2176 = vmax.xlane.f32.xlu0 %v2175
        %v2177 = vpop.xlane.xlu0 %2176
        %v2178 = vsel %vm1741, %v1932, -inf
        %2179 = vmax.xlane.f32.xlu0 %v2178
        %v2180 = vpop.xlane.xlu0 %2179
        %v2181 = vsel %vm1741, %v1933, -inf
        %2182 = vmax.xlane.f32.xlu0 %v2181
        %v2183 = vpop.xlane.xlu0 %2182
        %v2184 = vsel %vm1741, %v1934, -inf
        %2185 = vmax.xlane.f32.xlu0 %v2184
        %v2186 = vpop.xlane.xlu0 %2185
        %v2187 = vsel %vm1741, %v1935, -inf
        %2188 = vmax.xlane.f32.xlu0 %v2187
        %v2189 = vpop.xlane.xlu0 %2188
        %v2190 = vsel %vm1741, %v1936, -inf
        %2191 = vmax.xlane.f32.xlu0 %v2190
        %v2192 = vpop.xlane.xlu0 %2191
        %v2193 = vsel %vm1741, %v1937, -inf
        %2194 = vmax.xlane.f32.xlu0 %v2193
        %v2195 = vpop.xlane.xlu0 %2194
        %v2196 = vsel %vm1741, %v1938, -inf
        %2197 = vmax.xlane.f32.xlu0 %v2196
        %v2198 = vpop.xlane.xlu0 %2197
        %v2199 = vsel %vm1741, %v1939, -inf
        %2200 = vmax.xlane.f32.xlu0 %v2199
        %v2201 = vpop.xlane.xlu0 %2200
        %v2202 = vsel %vm1741, %v1940, -inf
        %2203 = vmax.xlane.f32.xlu0 %v2202
        %v2204 = vpop.xlane.xlu0 %2203
        %v2205 = vsel %vm1741, %v1941, -inf
        %2206 = vmax.xlane.f32.xlu0 %v2205
        %v2207 = vpop.xlane.xlu0 %2206
        %v2208 = vsel %vm1741, %v1942, -inf
        %2209 = vmax.xlane.f32.xlu0 %v2208
        %v2210 = vpop.xlane.xlu0 %2209
        %v2211 = vsel %vm1741, %v1943, -inf
        %2212 = vmax.xlane.f32.xlu0 %v2211
        %v2213 = vpop.xlane.xlu0 %2212
        %v2214 = vsel %vm1741, %v1944, -inf
        %2215 = vmax.xlane.f32.xlu0 %v2214
        %v2216 = vpop.xlane.xlu0 %2215
        %v2217 = vsel %vm1741, %v1945, -inf
        %2218 = vmax.xlane.f32.xlu0 %v2217
        %v2219 = vpop.xlane.xlu0 %2218
        %v2220 = vsel %vm1741, %v1946, -inf
        %2221 = vmax.xlane.f32.xlu0 %v2220
        %v2222 = vpop.xlane.xlu0 %2221
        %v2223 = vsel %vm1741, %v1947, -inf
        %2224 = vmax.xlane.f32.xlu0 %v2223
        %v2225 = vpop.xlane.xlu0 %2224
        %v2226 = vsel %vm1741, %v1948, -inf
        %2227 = vmax.xlane.f32.xlu0 %v2226
        %v2228 = vpop.xlane.xlu0 %2227
        %v2229 = vsel %vm1741, %v1949, -inf
        %2230 = vmax.xlane.f32.xlu0 %v2229
        %v2231 = vpop.xlane.xlu0 %2230
        %v2232 = vsel %vm1741, %v1950, -inf
        %2233 = vmax.xlane.f32.xlu0 %v2232
        %v2234 = vpop.xlane.xlu0 %2233
        %v2235 = vsel %vm1741, %v1951, -inf
        %2236 = vmax.xlane.f32.xlu0 %v2235
        %v2237 = vpop.xlane.xlu0 %2236
        %v2238 = vsel %vm1741, %v1952, -inf
        %2239 = vmax.xlane.f32.xlu0 %v2238
        %v2240 = vpop.xlane.xlu0 %2239
        %v2241 = vsel %vm1741, %v1953, -inf
        %2242 = vmax.xlane.f32.xlu0 %v2241
        %v2243 = vpop.xlane.xlu0 %2242
        %v2244 = vsel %vm1741, %v1954, -inf
        %2245 = vmax.xlane.f32.xlu0 %v2244
        %v2246 = vpop.xlane.xlu0 %2245
        %v2247 = vsel %vm1741, %v1955, -inf
        %2248 = vmax.xlane.f32.xlu0 %v2247
        %v2249 = vpop.xlane.xlu0 %2248
        %v2250 = vsel %vm1741, %v1956, -inf
        %2251 = vmax.xlane.f32.xlu0 %v2250
        %v2252 = vpop.xlane.xlu0 %2251
        %v2253 = vsel %vm1741, %v1957, -inf
        %2254 = vmax.xlane.f32.xlu0 %v2253
        %v2255 = vpop.xlane.xlu0 %2254
        %v2256 = vsel %vm1741, %v1958, -inf
        %2257 = vmax.xlane.f32.xlu0 %v2256
        %v2258 = vpop.xlane.xlu0 %2257
        %v2259 = vsel %vm1741, %v1959, -inf
        %2260 = vmax.xlane.f32.xlu0 %v2259
        %v2261 = vpop.xlane.xlu0 %2260
        %v2262 = vsel %vm1741, %v1960, -inf
        %2263 = vmax.xlane.f32.xlu0 %v2262
        %v2264 = vpop.xlane.xlu0 %2263
        %v2265 = vsel %vm1741, %v1961, -inf
        %2266 = vmax.xlane.f32.xlu0 %v2265
        %v2267 = vpop.xlane.xlu0 %2266
        %v2268 = vsel %vm1741, %v1962, -inf
        %2269 = vmax.xlane.f32.xlu0 %v2268
        %v2270 = vpop.xlane.xlu0 %2269
        %v2271 = vsel %vm1741, %v1963, -inf
        %2272 = vmax.xlane.f32.xlu0 %v2271
        %v2273 = vpop.xlane.xlu0 %2272
        %v2274 = vsel %vm1741, %v1964, -inf
        %2275 = vmax.xlane.f32.xlu0 %v2274
        %v2276 = vpop.xlane.xlu0 %2275
        %v2277 = vsel %vm1741, %v1965, -inf
        %2278 = vmax.xlane.f32.xlu0 %v2277
        %v2279 = vpop.xlane.xlu0 %2278
        %v2280 = vsel %vm1741, %v1966, -inf
        %2281 = vmax.xlane.f32.xlu0 %v2280
        %v2282 = vpop.xlane.xlu0 %2281
        %v2283 = vsel %vm1741, %v1967, -inf
        %2284 = vmax.xlane.f32.xlu0 %v2283
        %v2285 = vpop.xlane.xlu0 %2284
        %v2286 = vsel %vm1741, %v1968, -inf
        %2287 = vmax.xlane.f32.xlu0 %v2286
        %v2288 = vpop.xlane.xlu0 %2287
        %v2289 = vsel %vm1741, %v1969, -inf
        %2290 = vmax.xlane.f32.xlu0 %v2289
        %v2291 = vpop.xlane.xlu0 %2290
        %v2292 = vsel %vm1741, %v1970, -inf
        %2293 = vmax.xlane.f32.xlu0 %v2292
        %v2294 = vpop.xlane.xlu0 %2293
        %v2295 = vsel %vm1741, %v1971, -inf
        %2296 = vmax.xlane.f32.xlu0 %v2295
        %v2297 = vpop.xlane.xlu0 %2296
        %v2298 = vsel %vm1741, %v1972, -inf
        %2299 = vmax.xlane.f32.xlu0 %v2298
        %v2300 = vpop.xlane.xlu0 %2299
        %v2301 = vsel %vm1741, %v1973, -inf
        %2302 = vmax.xlane.f32.xlu0 %v2301
        %v2303 = vpop.xlane.xlu0 %2302
        %v2304 = vsel %vm1741, %v1974, -inf
        %2305 = vmax.xlane.f32.xlu0 %v2304
        %v2306 = vpop.xlane.xlu0 %2305
        %v2307 = vsel %vm1741, %v1975, -inf
        %2308 = vmax.xlane.f32.xlu0 %v2307
        %v2309 = vpop.xlane.xlu0 %2308
        %v2310 = vsel %vm1741, %v1976, -inf
        %2311 = vmax.xlane.f32.xlu0 %v2310
        %v2312 = vpop.xlane.xlu0 %2311
        %v2313 = vsel %vm1741, %v1977, -inf
        %2314 = vmax.xlane.f32.xlu0 %v2313
        %v2315 = vpop.xlane.xlu0 %2314
        %v2316 = vsel %vm1741, %v1978, -inf
        %2317 = vmax.xlane.f32.xlu0 %v2316
        %v2318 = vpop.xlane.xlu0 %2317
        %v2319 = vsel %vm1741, %v1979, -inf
        %2320 = vmax.xlane.f32.xlu0 %v2319
        %v2321 = vpop.xlane.xlu0 %2320
        %v2322 = vsel %vm1741, %v1980, -inf
        %2323 = vmax.xlane.f32.xlu0 %v2322
        %v2324 = vpop.xlane.xlu0 %2323
        %v2325 = vsel %vm1741, %v1981, -inf
        %2326 = vmax.xlane.f32.xlu0 %v2325
        %v2327 = vpop.xlane.xlu0 %2326
        %v2328 = vsel %vm1741, %v1982, -inf
        %2329 = vmax.xlane.f32.xlu0 %v2328
        %v2330 = vpop.xlane.xlu0 %2329
        %v2331 = vsel %vm1741, %v1983, -inf
        %2332 = vmax.xlane.f32.xlu0 %v2331
        %v2333 = vpop.xlane.xlu0 %2332
        %v2334 = vsel %vm1741, %v1984, -inf
        %2335 = vmax.xlane.f32.xlu0 %v2334
        %v2336 = vpop.xlane.xlu0 %2335
        %v2337 = vsel %vm1741, %v1985, -inf
        %2338 = vmax.xlane.f32.xlu0 %v2337
        %v2339 = vpop.xlane.xlu0 %2338
        %v2340 = vsel %vm1741, %v1986, -inf
        %2341 = vmax.xlane.f32.xlu0 %v2340
        %v2342 = vpop.xlane.xlu0 %2341
        %v2343 = vsel %vm1741, %v1987, -inf
        %2344 = vmax.xlane.f32.xlu0 %v2343
        %v2345 = vpop.xlane.xlu0 %2344
        %v2346 = vsel %vm1741, %v1988, -inf
        %2347 = vmax.xlane.f32.xlu0 %v2346
        %v2348 = vpop.xlane.xlu0 %2347
        %v2349 = vsel %vm1741, %v1989, -inf
        %2350 = vmax.xlane.f32.xlu0 %v2349
        %v2351 = vpop.xlane.xlu0 %2350
        %v2352 = vsel %vm1741, %v1990, -inf
        %2353 = vmax.xlane.f32.xlu0 %v2352
        %v2354 = vpop.xlane.xlu0 %2353
        %v2355 = vsel %vm1741, %v1991, -inf
        %2356 = vmax.xlane.f32.xlu0 %v2355
        %v2357 = vpop.xlane.xlu0 %2356
        %v2358 = vsel %vm1741, %v1992, -inf
        %2359 = vmax.xlane.f32.xlu0 %v2358
        %v2360 = vpop.xlane.xlu0 %2359
        %v2361 = vsel %vm1741, %v1993, -inf
        %2362 = vmax.xlane.f32.xlu0 %v2361
        %v2363 = vpop.xlane.xlu0 %2362
        %v2364 = vsel %vm1741, %v1994, -inf
        %2365 = vmax.xlane.f32.xlu0 %v2364
        %v2366 = vpop.xlane.xlu0 %2365
        %v2367 = vsel %vm1741, %v1995, -inf
        %2368 = vmax.xlane.f32.xlu0 %v2367
        %v2369 = vpop.xlane.xlu0 %2368
        %v2370 = vsel %vm1741, %v1996, -inf
        %2371 = vmax.xlane.f32.xlu0 %v2370
        %v2372 = vpop.xlane.xlu0 %2371
        %v2373 = vsel %vm1741, %v1997, -inf
        %2374 = vmax.xlane.f32.xlu0 %v2373
        %v2375 = vpop.xlane.xlu0 %2374
        %v2376 = vsel %vm1741, %v1998, -inf
        %2377 = vmax.xlane.f32.xlu0 %v2376
        %v2378 = vpop.xlane.xlu0 %2377
        %v2379 = vsel %vm1741, %v1999, -inf
        %2380 = vmax.xlane.f32.xlu0 %v2379
        %v2381 = vpop.xlane.xlu0 %2380
        %v2382 = vsel %vm1741, %v2000, -inf
        %2383 = vmax.xlane.f32.xlu0 %v2382
        %v2384 = vpop.xlane.xlu0 %2383
        %vm2385 = vcmask 7168
        %2386 = vst.msk [vmem:[%s193] sm:$0xff] %vm2385, %v2003
        %2387 = vst.msk [vmem:[%s193 + $0x8] sm:$0xff] %vm2385, %v2006
        %2388 = vst.msk [vmem:[%s193 + $0x10] sm:$0xff] %vm2385, %v2009
        %2389 = vst.msk [vmem:[%s193 + $0x18] sm:$0xff] %vm2385, %v2012
        %2390 = vst.msk [vmem:[%s193 + $0x20] sm:$0xff] %vm2385, %v2015
        %2391 = vst.msk [vmem:[%s193 + $0x28] sm:$0xff] %vm2385, %v2018
        %2392 = vst.msk [vmem:[%s193 + $0x30] sm:$0xff] %vm2385, %v2021
        %2393 = vst.msk [vmem:[%s193 + $0x38] sm:$0xff] %vm2385, %v2024
        %2394 = vst.msk [vmem:[%s193 + $0x40] sm:$0xff] %vm2385, %v2027
        %2395 = vst.msk [vmem:[%s193 + $0x48] sm:$0xff] %vm2385, %v2030
        %2396 = vst.msk [vmem:[%s193 + $0x50] sm:$0xff] %vm2385, %v2033
        %2397 = vst.msk [vmem:[%s193 + $0x58] sm:$0xff] %vm2385, %v2036
        %2398 = vst.msk [vmem:[%s193 + $0x60] sm:$0xff] %vm2385, %v2039
        %2399 = vst.msk [vmem:[%s193 + $0x68] sm:$0xff] %vm2385, %v2042
        %2400 = vst.msk [vmem:[%s193 + $0x70] sm:$0xff] %vm2385, %v2045
        %2401 = vst.msk [vmem:[%s193 + $0x78] sm:$0xff] %vm2385, %v2048
        %2402 = vst.msk [vmem:[%s193 + $0x80] sm:$0xff] %vm2385, %v2051
        %2403 = vst.msk [vmem:[%s193 + $0x88] sm:$0xff] %vm2385, %v2054
        %2404 = vst.msk [vmem:[%s193 + $0x90] sm:$0xff] %vm2385, %v2057
        %2405 = vst.msk [vmem:[%s193 + $0x98] sm:$0xff] %vm2385, %v2060
        %2406 = vst.msk [vmem:[%s193 + $0xa0] sm:$0xff] %vm2385, %v2063
        %2407 = vst.msk [vmem:[%s193 + $0xa8] sm:$0xff] %vm2385, %v2066
        %2408 = vst.msk [vmem:[%s193 + $0xb0] sm:$0xff] %vm2385, %v2069
        %2409 = vst.msk [vmem:[%s193 + $0xb8] sm:$0xff] %vm2385, %v2072
        %2410 = vst.msk [vmem:[%s193 + $0xc0] sm:$0xff] %vm2385, %v2075
        %2411 = vst.msk [vmem:[%s193 + $0xc8] sm:$0xff] %vm2385, %v2078
        %2412 = vst.msk [vmem:[%s193 + $0xd0] sm:$0xff] %vm2385, %v2081
        %2413 = vst.msk [vmem:[%s193 + $0xd8] sm:$0xff] %vm2385, %v2084
        %2414 = vst.msk [vmem:[%s193 + $0xe0] sm:$0xff] %vm2385, %v2087
        %2415 = vst.msk [vmem:[%s193 + $0xe8] sm:$0xff] %vm2385, %v2090
        %2416 = vst.msk [vmem:[%s193 + $0xf0] sm:$0xff] %vm2385, %v2093
        %2417 = vst.msk [vmem:[%s193 + $0xf8] sm:$0xff] %vm2385, %v2096
        %2418 = vst.msk [vmem:[%s193 + $0x100] sm:$0xff] %vm2385, %v2099
        %2419 = vst.msk [vmem:[%s193 + $0x108] sm:$0xff] %vm2385, %v2102
        %2420 = vst.msk [vmem:[%s193 + $0x110] sm:$0xff] %vm2385, %v2105
        %2421 = vst.msk [vmem:[%s193 + $0x118] sm:$0xff] %vm2385, %v2108
        %2422 = vst.msk [vmem:[%s193 + $0x120] sm:$0xff] %vm2385, %v2111
        %2423 = vst.msk [vmem:[%s193 + $0x128] sm:$0xff] %vm2385, %v2114
        %2424 = vst.msk [vmem:[%s193 + $0x130] sm:$0xff] %vm2385, %v2117
        %2425 = vst.msk [vmem:[%s193 + $0x138] sm:$0xff] %vm2385, %v2120
        %2426 = vst.msk [vmem:[%s193 + $0x140] sm:$0xff] %vm2385, %v2123
        %2427 = vst.msk [vmem:[%s193 + $0x148] sm:$0xff] %vm2385, %v2126
        %2428 = vst.msk [vmem:[%s193 + $0x150] sm:$0xff] %vm2385, %v2129
        %2429 = vst.msk [vmem:[%s193 + $0x158] sm:$0xff] %vm2385, %v2132
        %2430 = vst.msk [vmem:[%s193 + $0x160] sm:$0xff] %vm2385, %v2135
        %2431 = vst.msk [vmem:[%s193 + $0x168] sm:$0xff] %vm2385, %v2138
        %2432 = vst.msk [vmem:[%s193 + $0x170] sm:$0xff] %vm2385, %v2141
        %2433 = vst.msk [vmem:[%s193 + $0x178] sm:$0xff] %vm2385, %v2144
        %2434 = vst.msk [vmem:[%s193 + $0x180] sm:$0xff] %vm2385, %v2147
        %2435 = vst.msk [vmem:[%s193 + $0x188] sm:$0xff] %vm2385, %v2150
        %2436 = vst.msk [vmem:[%s193 + $0x190] sm:$0xff] %vm2385, %v2153
        %2437 = vst.msk [vmem:[%s193 + $0x198] sm:$0xff] %vm2385, %v2156
        %2438 = vst.msk [vmem:[%s193 + $0x1a0] sm:$0xff] %vm2385, %v2159
        %2439 = vst.msk [vmem:[%s193 + $0x1a8] sm:$0xff] %vm2385, %v2162
        %2440 = vst.msk [vmem:[%s193 + $0x1b0] sm:$0xff] %vm2385, %v2165
        %2441 = vst.msk [vmem:[%s193 + $0x1b8] sm:$0xff] %vm2385, %v2168
        %2442 = vst.msk [vmem:[%s193 + $0x1c0] sm:$0xff] %vm2385, %v2171
        %2443 = vst.msk [vmem:[%s193 + $0x1c8] sm:$0xff] %vm2385, %v2174
        %2444 = vst.msk [vmem:[%s193 + $0x1d0] sm:$0xff] %vm2385, %v2177
        %2445 = vst.msk [vmem:[%s193 + $0x1d8] sm:$0xff] %vm2385, %v2180
        %2446 = vst.msk [vmem:[%s193 + $0x1e0] sm:$0xff] %vm2385, %v2183
        %2447 = vst.msk [vmem:[%s193 + $0x1e8] sm:$0xff] %vm2385, %v2186
        %2448 = vst.msk [vmem:[%s193 + $0x1f0] sm:$0xff] %vm2385, %v2189
        %2449 = vst.msk [vmem:[%s193 + $0x1f8] sm:$0xff] %vm2385, %v2192
        %2450 = vst.msk [vmem:[%s193 + $0x200] sm:$0xff] %vm2385, %v2195
        %2451 = vst.msk [vmem:[%s193 + $0x208] sm:$0xff] %vm2385, %v2198
        %2452 = vst.msk [vmem:[%s193 + $0x210] sm:$0xff] %vm2385, %v2201
        %2453 = vst.msk [vmem:[%s193 + $0x218] sm:$0xff] %vm2385, %v2204
        %2454 = vst.msk [vmem:[%s193 + $0x220] sm:$0xff] %vm2385, %v2207
        %2455 = vst.msk [vmem:[%s193 + $0x228] sm:$0xff] %vm2385, %v2210
        %2456 = vst.msk [vmem:[%s193 + $0x230] sm:$0xff] %vm2385, %v2213
        %2457 = vst.msk [vmem:[%s193 + $0x238] sm:$0xff] %vm2385, %v2216
        %2458 = vst.msk [vmem:[%s193 + $0x240] sm:$0xff] %vm2385, %v2219
        %2459 = vst.msk [vmem:[%s193 + $0x248] sm:$0xff] %vm2385, %v2222
        %2460 = vst.msk [vmem:[%s193 + $0x250] sm:$0xff] %vm2385, %v2225
        %2461 = vst.msk [vmem:[%s193 + $0x258] sm:$0xff] %vm2385, %v2228
        %2462 = vst.msk [vmem:[%s193 + $0x260] sm:$0xff] %vm2385, %v2231
        %2463 = vst.msk [vmem:[%s193 + $0x268] sm:$0xff] %vm2385, %v2234
        %2464 = vst.msk [vmem:[%s193 + $0x270] sm:$0xff] %vm2385, %v2237
        %2465 = vst.msk [vmem:[%s193 + $0x278] sm:$0xff] %vm2385, %v2240
        %2466 = vst.msk [vmem:[%s193 + $0x280] sm:$0xff] %vm2385, %v2243
        %2467 = vst.msk [vmem:[%s193 + $0x288] sm:$0xff] %vm2385, %v2246
        %2468 = vst.msk [vmem:[%s193 + $0x290] sm:$0xff] %vm2385, %v2249
        %2469 = vst.msk [vmem:[%s193 + $0x298] sm:$0xff] %vm2385, %v2252
        %2470 = vst.msk [vmem:[%s193 + $0x2a0] sm:$0xff] %vm2385, %v2255
        %2471 = vst.msk [vmem:[%s193 + $0x2a8] sm:$0xff] %vm2385, %v2258
        %2472 = vst.msk [vmem:[%s193 + $0x2b0] sm:$0xff] %vm2385, %v2261
        %2473 = vst.msk [vmem:[%s193 + $0x2b8] sm:$0xff] %vm2385, %v2264
        %2474 = vst.msk [vmem:[%s193 + $0x2c0] sm:$0xff] %vm2385, %v2267
        %2475 = vst.msk [vmem:[%s193 + $0x2c8] sm:$0xff] %vm2385, %v2270
        %2476 = vst.msk [vmem:[%s193 + $0x2d0] sm:$0xff] %vm2385, %v2273
        %2477 = vst.msk [vmem:[%s193 + $0x2d8] sm:$0xff] %vm2385, %v2276
        %2478 = vst.msk [vmem:[%s193 + $0x2e0] sm:$0xff] %vm2385, %v2279
        %2479 = vst.msk [vmem:[%s193 + $0x2e8] sm:$0xff] %vm2385, %v2282
        %2480 = vst.msk [vmem:[%s193 + $0x2f0] sm:$0xff] %vm2385, %v2285
        %2481 = vst.msk [vmem:[%s193 + $0x2f8] sm:$0xff] %vm2385, %v2288
        %2482 = vst.msk [vmem:[%s193 + $0x300] sm:$0xff] %vm2385, %v2291
        %2483 = vst.msk [vmem:[%s193 + $0x308] sm:$0xff] %vm2385, %v2294
        %2484 = vst.msk [vmem:[%s193 + $0x310] sm:$0xff] %vm2385, %v2297
        %2485 = vst.msk [vmem:[%s193 + $0x318] sm:$0xff] %vm2385, %v2300
        %2486 = vst.msk [vmem:[%s193 + $0x320] sm:$0xff] %vm2385, %v2303
        %2487 = vst.msk [vmem:[%s193 + $0x328] sm:$0xff] %vm2385, %v2306
        %2488 = vst.msk [vmem:[%s193 + $0x330] sm:$0xff] %vm2385, %v2309
        %2489 = vst.msk [vmem:[%s193 + $0x338] sm:$0xff] %vm2385, %v2312
        %2490 = vst.msk [vmem:[%s193 + $0x340] sm:$0xff] %vm2385, %v2315
        %2491 = vst.msk [vmem:[%s193 + $0x348] sm:$0xff] %vm2385, %v2318
        %2492 = vst.msk [vmem:[%s193 + $0x350] sm:$0xff] %vm2385, %v2321
        %2493 = vst.msk [vmem:[%s193 + $0x358] sm:$0xff] %vm2385, %v2324
        %2494 = vst.msk [vmem:[%s193 + $0x360] sm:$0xff] %vm2385, %v2327
        %2495 = vst.msk [vmem:[%s193 + $0x368] sm:$0xff] %vm2385, %v2330
        %2496 = vst.msk [vmem:[%s193 + $0x370] sm:$0xff] %vm2385, %v2333
        %2497 = vst.msk [vmem:[%s193 + $0x378] sm:$0xff] %vm2385, %v2336
        %2498 = vst.msk [vmem:[%s193 + $0x380] sm:$0xff] %vm2385, %v2339
        %2499 = vst.msk [vmem:[%s193 + $0x388] sm:$0xff] %vm2385, %v2342
        %2500 = vst.msk [vmem:[%s193 + $0x390] sm:$0xff] %vm2385, %v2345
        %2501 = vst.msk [vmem:[%s193 + $0x398] sm:$0xff] %vm2385, %v2348
        %2502 = vst.msk [vmem:[%s193 + $0x3a0] sm:$0xff] %vm2385, %v2351
        %2503 = vst.msk [vmem:[%s193 + $0x3a8] sm:$0xff] %vm2385, %v2354
        %2504 = vst.msk [vmem:[%s193 + $0x3b0] sm:$0xff] %vm2385, %v2357
        %2505 = vst.msk [vmem:[%s193 + $0x3b8] sm:$0xff] %vm2385, %v2360
        %2506 = vst.msk [vmem:[%s193 + $0x3c0] sm:$0xff] %vm2385, %v2363
        %2507 = vst.msk [vmem:[%s193 + $0x3c8] sm:$0xff] %vm2385, %v2366
        %2508 = vst.msk [vmem:[%s193 + $0x3d0] sm:$0xff] %vm2385, %v2369
        %2509 = vst.msk [vmem:[%s193 + $0x3d8] sm:$0xff] %vm2385, %v2372
        %2510 = vst.msk [vmem:[%s193 + $0x3e0] sm:$0xff] %vm2385, %v2375
        %2511 = vst.msk [vmem:[%s193 + $0x3e8] sm:$0xff] %vm2385, %v2378
        %2512 = vst.msk [vmem:[%s193 + $0x3f0] sm:$0xff] %vm2385, %v2381
        %2513 = vst.msk [vmem:[%s193 + $0x3f8] sm:$0xff] %vm2385, %v2384
      $region40: #{input_tnet_forward.8} parent=31 // pred_fallthru
        _
      %p2514 = scmp.lt.s32.totalorder %s18, 3
      %s2515 = scalar_select %p2514, %s18, 3
      %s2516 = smul.addr %s2515, 128
      %s2517 = smul.addr %s2516, 8
      %s2518 = scalar_lea.vmem %s3, %s2517
      // Predicated region
      $region41: #{input_tnet_forward.8} parent=31 // pred_check
        %p2519 = pneg %p114
      $region42: #{input_tnet_forward.8} parent=31 // pred_check_branch
        %2521 = sbr.rel (%p2519) target = $region44
      $region43: #{input_tnet_forward.8} parent=31 // pred_region
        _
      $region44: #{input_tnet_forward.8} parent=31 // pred_fallthru
        _
    $region32: #{input_tnet_forward.8} parent=5 // pred_fallthru
      _
    %p2522 = scmp.le.s32.totalorder 2, %s9
    // Predicated region
    $region45: #{input_tnet_forward.8} parent=5 // pred_check
      %p2523 = pneg %p2522
    $region46: #{input_tnet_forward.8} parent=5 // pred_check_branch
      %2525 = sbr.rel (%p2523) target = $region48
    $region47: #{input_tnet_forward.8} parent=5 // pred_region
      %s2526 = ssub.s32 %s9, 2
      // Predicated region
      $region49: #{input_tnet_forward.8} parent=47 // pred_check
        %p2527 = pneg %p120
      $region50: #{input_tnet_forward.8} parent=47 // pred_check_branch
        %2529 = sbr.rel (%p2527) target = $region52
      $region51: #{input_tnet_forward.8} parent=47 // pred_region
        %p2530 = scmp.lt.s32.totalorder %s20, 3
        %s2531 = scalar_select %p2530, %s20, 3
        %s2532 = smul.addr %s2531, 128
        %s2533 = smul.addr %s2532, 8
        %s2534 = scalar_lea.vmem %s3, %s2533
      $region52: #{input_tnet_forward.8} parent=47 // pred_fallthru
        _
    $region48: #{input_tnet_forward.8} parent=5 // pred_fallthru
      _
  $region6: #{input_tnet_forward.8} parent=0 // loop_footer
    %s13 = sadd.s32 1, %s9
  $region7: #{input_tnet_forward.8} parent=0 // loop_footer_branch
    %8 = sbr.rel target = $region3
  $region8: #{input_tnet_forward.8} parent=0 // loop_exit
    _

// kernel: input_tnet_forward.9
$region0: #{input_tnet_forward.9}
  #allocation0 [shape = 'u32[]', space=smem, size = 0x4, offset = 0x4, fixed_abs, tag = 'smem constant byte address 0x4 - core index']
  #allocation1 [shape = 'u32[144,128]{1,0:T(1,128)}', space=vmem, size = 0x12000, scoped, tag = 'internal scratch']
  %s0 = inlined_call_operand.vmem [shape: f32[4,1024], index: 0, kind: input, shape index: {}]
  %s1 = inlined_call_operand.vmem [shape: f32[1024,512], index: 1, kind: input, shape index: {}]
  %s2 = inlined_call_operand.vmem [shape: f32[1,512], index: 2, kind: input, shape index: {}]
  %s3 = inlined_call_operand.vmem [shape: f32[1,512], index: 3, kind: input, shape index: {}]
  %s4 = inlined_call_operand.vmem [shape: f32[1,512], index: 4, kind: input, shape index: {}]
  %s5 = inlined_call_operand.vmem [shape: f32[512,256], index: 5, kind: input, shape index: {}]
  %s6 = inlined_call_operand.vmem [shape: f32[1,256], index: 6, kind: input, shape index: {}]
  %s7 = inlined_call_operand.vmem [shape: f32[1,256], index: 7, kind: input, shape index: {}]
  %s8 = inlined_call_operand.vmem [shape: f32[1,256], index: 8, kind: input, shape index: {}]
  %s9 = inlined_call_operand.vmem [shape: f32[256,9], index: 9, kind: input, shape index: {}]
  %s10 = inlined_call_operand.vmem [shape: f32[1,9], index: 10, kind: input, shape index: {}]
  %s11 = inlined_call_operand.vmem [shape: f32[4,9], index: 11, kind: output, shape index: {}]
  %s12 = sld [smem:[#allocation0]]
  $region54: #{input_tnet_forward.9} parent=0
    _
  %s14 = ssub.s32 1, %s12
  %s15 = scalar_select 0, %s14, %s12
  // Predicated region
  $region2: #{input_tnet_forward.9} parent=0 // pred_check
    _
  $region3: #{input_tnet_forward.9} parent=0 // pred_check_branch
    %17 = sbr.rel (0) target = $region5
  $region4: #{input_tnet_forward.9} parent=0 // pred_region
    _
  $region5: #{input_tnet_forward.9} parent=0 // pred_fallthru
    _
  // Predicated region
  $region6: #{input_tnet_forward.9} parent=0 // pred_check
    _
  $region7: #{input_tnet_forward.9} parent=0 // pred_check_branch
    %19 = sbr.rel (0) target = $region9
  $region8: #{input_tnet_forward.9} parent=0 // pred_region
    _
  $region9: #{input_tnet_forward.9} parent=0 // pred_fallthru
    _
  // Predicated region
  $region10: #{input_tnet_forward.9} parent=0 // pred_check
    _
  $region11: #{input_tnet_forward.9} parent=0 // pred_check_branch
    %21 = sbr.rel (0) target = $region13
  $region12: #{input_tnet_forward.9} parent=0 // pred_region
    _
  $region13: #{input_tnet_forward.9} parent=0 // pred_fallthru
    _
  // Predicated region
  $region14: #{input_tnet_forward.9} parent=0 // pred_check
    _
  $region15: #{input_tnet_forward.9} parent=0 // pred_check_branch
    %23 = sbr.rel (0) target = $region17
  $region16: #{input_tnet_forward.9} parent=0 // pred_region
    _
  $region17: #{input_tnet_forward.9} parent=0 // pred_fallthru
    _
  // Predicated region
  $region18: #{input_tnet_forward.9} parent=0 // pred_check
    _
  $region19: #{input_tnet_forward.9} parent=0 // pred_check_branch
    %25 = sbr.rel (0) target = $region21
  $region20: #{input_tnet_forward.9} parent=0 // pred_region
    _
  $region21: #{input_tnet_forward.9} parent=0 // pred_fallthru
    _
  // Predicated region
  $region22: #{input_tnet_forward.9} parent=0 // pred_check
    _
  $region23: #{input_tnet_forward.9} parent=0 // pred_check_branch
    %27 = sbr.rel (0) target = $region25
  $region24: #{input_tnet_forward.9} parent=0 // pred_region
    _
  $region25: #{input_tnet_forward.9} parent=0 // pred_fallthru
    _
  // Predicated region
  $region26: #{input_tnet_forward.9} parent=0 // pred_check
    _
  $region27: #{input_tnet_forward.9} parent=0 // pred_check_branch
    %29 = sbr.rel (0) target = $region29
  $region28: #{input_tnet_forward.9} parent=0 // pred_region
    _
  $region29: #{input_tnet_forward.9} parent=0 // pred_fallthru
    _
  // Predicated region
  $region30: #{input_tnet_forward.9} parent=0 // pred_check
    _
  $region31: #{input_tnet_forward.9} parent=0 // pred_check_branch
    %31 = sbr.rel (0) target = $region33
  $region32: #{input_tnet_forward.9} parent=0 // pred_region
    _
  $region33: #{input_tnet_forward.9} parent=0 // pred_fallthru
    _
  // Predicated region
  $region34: #{input_tnet_forward.9} parent=0 // pred_check
    _
  $region35: #{input_tnet_forward.9} parent=0 // pred_check_branch
    %33 = sbr.rel (0) target = $region37
  $region36: #{input_tnet_forward.9} parent=0 // pred_region
    _
  $region37: #{input_tnet_forward.9} parent=0 // pred_fallthru
    _
  // Predicated region
  $region38: #{input_tnet_forward.9} parent=0 // pred_check
    _
  $region39: #{input_tnet_forward.9} parent=0 // pred_check_branch
    %35 = sbr.rel (0) target = $region41
  $region40: #{input_tnet_forward.9} parent=0 // pred_region
    _
  $region41: #{input_tnet_forward.9} parent=0 // pred_fallthru
    _
  // Predicated region
  $region42: #{input_tnet_forward.9} parent=0 // pred_check
    _
  $region43: #{input_tnet_forward.9} parent=0 // pred_check_branch
    %37 = sbr.rel (0) target = $region45
  $region44: #{input_tnet_forward.9} parent=0 // pred_region
    _
  $region45: #{input_tnet_forward.9} parent=0 // pred_fallthru
    _
  %v38 = vld [vmem:[%s0] sm:$0xff]
  %v39 = vld [vmem:[%s0 + $0x8] sm:$0xff]
  %v40 = vld [vmem:[%s0 + $0x10] sm:$0xff]
  %v41 = vld [vmem:[%s0 + $0x18] sm:$0xff]
  %v42 = vld [vmem:[%s1] sm:$0xff]
  %v43 = vld [vmem:[%s1 + $0x8] sm:$0xff]
  %v44 = vld [vmem:[%s1 + $0x10] sm:$0xff]
  %v45 = vld [vmem:[%s1 + $0x18] sm:$0xff]
  %v46 = vld [vmem:[%s1 + $0x20] sm:$0xff]
  %v47 = vld [vmem:[%s1 + $0x28] sm:$0xff]
  %v48 = vld [vmem:[%s1 + $0x30] sm:$0xff]
  %v49 = vld [vmem:[%s1 + $0x38] sm:$0xff]
  %v50 = vld [vmem:[%s1 + $0x40] sm:$0xff]
  %v51 = vld [vmem:[%s1 + $0x48] sm:$0xff]
  %v52 = vld [vmem:[%s1 + $0x50] sm:$0xff]
  %v53 = vld [vmem:[%s1 + $0x58] sm:$0xff]
  %v54 = vld [vmem:[%s1 + $0x60] sm:$0xff]
  %v55 = vld [vmem:[%s1 + $0x68] sm:$0xff]
  %v56 = vld [vmem:[%s1 + $0x70] sm:$0xff]
  %v57 = vld [vmem:[%s1 + $0x78] sm:$0xff]
  %v58 = vld [vmem:[%s1 + $0x80] sm:$0xff]
  %v59 = vld [vmem:[%s1 + $0x88] sm:$0xff]
  %v60 = vld [vmem:[%s1 + $0x90] sm:$0xff]
  %v61 = vld [vmem:[%s1 + $0x98] sm:$0xff]
  %v62 = vld [vmem:[%s1 + $0xa0] sm:$0xff]
  %v63 = vld [vmem:[%s1 + $0xa8] sm:$0xff]
  %v64 = vld [vmem:[%s1 + $0xb0] sm:$0xff]
  %v65 = vld [vmem:[%s1 + $0xb8] sm:$0xff]
  %v66 = vld [vmem:[%s1 + $0xc0] sm:$0xff]
  %v67 = vld [vmem:[%s1 + $0xc8] sm:$0xff]
  %v68 = vld [vmem:[%s1 + $0xd0] sm:$0xff]
  %v69 = vld [vmem:[%s1 + $0xd8] sm:$0xff]
  %v70 = vld [vmem:[%s1 + $0xe0] sm:$0xff]
  %v71 = vld [vmem:[%s1 + $0xe8] sm:$0xff]
  %v72 = vld [vmem:[%s1 + $0xf0] sm:$0xff]
  %v73 = vld [vmem:[%s1 + $0xf8] sm:$0xff]
  %v74 = vld [vmem:[%s1 + $0x100] sm:$0xff]
  %v75 = vld [vmem:[%s1 + $0x108] sm:$0xff]
  %v76 = vld [vmem:[%s1 + $0x110] sm:$0xff]
  %v77 = vld [vmem:[%s1 + $0x118] sm:$0xff]
  %v78 = vld [vmem:[%s1 + $0x120] sm:$0xff]
  %v79 = vld [vmem:[%s1 + $0x128] sm:$0xff]
  %v80 = vld [vmem:[%s1 + $0x130] sm:$0xff]
  %v81 = vld [vmem:[%s1 + $0x138] sm:$0xff]
  %v82 = vld [vmem:[%s1 + $0x140] sm:$0xff]
  %v83 = vld [vmem:[%s1 + $0x148] sm:$0xff]
  %v84 = vld [vmem:[%s1 + $0x150] sm:$0xff]
  %v85 = vld [vmem:[%s1 + $0x158] sm:$0xff]
  %v86 = vld [vmem:[%s1 + $0x160] sm:$0xff]
  %v87 = vld [vmem:[%s1 + $0x168] sm:$0xff]
  %v88 = vld [vmem:[%s1 + $0x170] sm:$0xff]
  %v89 = vld [vmem:[%s1 + $0x178] sm:$0xff]
  %v90 = vld [vmem:[%s1 + $0x180] sm:$0xff]
  %v91 = vld [vmem:[%s1 + $0x188] sm:$0xff]
  %v92 = vld [vmem:[%s1 + $0x190] sm:$0xff]
  %v93 = vld [vmem:[%s1 + $0x198] sm:$0xff]
  %v94 = vld [vmem:[%s1 + $0x1a0] sm:$0xff]
  %v95 = vld [vmem:[%s1 + $0x1a8] sm:$0xff]
  %v96 = vld [vmem:[%s1 + $0x1b0] sm:$0xff]
  %v97 = vld [vmem:[%s1 + $0x1b8] sm:$0xff]
  %v98 = vld [vmem:[%s1 + $0x1c0] sm:$0xff]
  %v99 = vld [vmem:[%s1 + $0x1c8] sm:$0xff]
  %v100 = vld [vmem:[%s1 + $0x1d0] sm:$0xff]
  %v101 = vld [vmem:[%s1 + $0x1d8] sm:$0xff]
  %v102 = vld [vmem:[%s1 + $0x1e0] sm:$0xff]
  %v103 = vld [vmem:[%s1 + $0x1e8] sm:$0xff]
  %v104 = vld [vmem:[%s1 + $0x1f0] sm:$0xff]
  %v105 = vld [vmem:[%s1 + $0x1f8] sm:$0xff]
  %v106 = vld [vmem:[%s1 + $0x200] sm:$0xff]
  %v107 = vld [vmem:[%s1 + $0x208] sm:$0xff]
  %v108 = vld [vmem:[%s1 + $0x210] sm:$0xff]
  %v109 = vld [vmem:[%s1 + $0x218] sm:$0xff]
  %v110 = vld [vmem:[%s1 + $0x220] sm:$0xff]
  %v111 = vld [vmem:[%s1 + $0x228] sm:$0xff]
  %v112 = vld [vmem:[%s1 + $0x230] sm:$0xff]
  %v113 = vld [vmem:[%s1 + $0x238] sm:$0xff]
  %v114 = vld [vmem:[%s1 + $0x240] sm:$0xff]
  %v115 = vld [vmem:[%s1 + $0x248] sm:$0xff]
  %v116 = vld [vmem:[%s1 + $0x250] sm:$0xff]
  %v117 = vld [vmem:[%s1 + $0x258] sm:$0xff]
  %v118 = vld [vmem:[%s1 + $0x260] sm:$0xff]
  %v119 = vld [vmem:[%s1 + $0x268] sm:$0xff]
  %v120 = vld [vmem:[%s1 + $0x270] sm:$0xff]
  %v121 = vld [vmem:[%s1 + $0x278] sm:$0xff]
  %v122 = vld [vmem:[%s1 + $0x280] sm:$0xff]
  %v123 = vld [vmem:[%s1 + $0x288] sm:$0xff]
  %v124 = vld [vmem:[%s1 + $0x290] sm:$0xff]
  %v125 = vld [vmem:[%s1 + $0x298] sm:$0xff]
  %v126 = vld [vmem:[%s1 + $0x2a0] sm:$0xff]
  %v127 = vld [vmem:[%s1 + $0x2a8] sm:$0xff]
  %v128 = vld [vmem:[%s1 + $0x2b0] sm:$0xff]
  %v129 = vld [vmem:[%s1 + $0x2b8] sm:$0xff]
  %v130 = vld [vmem:[%s1 + $0x2c0] sm:$0xff]
  %v131 = vld [vmem:[%s1 + $0x2c8] sm:$0xff]
  %v132 = vld [vmem:[%s1 + $0x2d0] sm:$0xff]
  %v133 = vld [vmem:[%s1 + $0x2d8] sm:$0xff]
  %v134 = vld [vmem:[%s1 + $0x2e0] sm:$0xff]
  %v135 = vld [vmem:[%s1 + $0x2e8] sm:$0xff]
  %v136 = vld [vmem:[%s1 + $0x2f0] sm:$0xff]
  %v137 = vld [vmem:[%s1 + $0x2f8] sm:$0xff]
  %v138 = vld [vmem:[%s1 + $0x300] sm:$0xff]
  %v139 = vld [vmem:[%s1 + $0x308] sm:$0xff]
  %v140 = vld [vmem:[%s1 + $0x310] sm:$0xff]
  %v141 = vld [vmem:[%s1 + $0x318] sm:$0xff]
  %v142 = vld [vmem:[%s1 + $0x320] sm:$0xff]
  %v143 = vld [vmem:[%s1 + $0x328] sm:$0xff]
  %v144 = vld [vmem:[%s1 + $0x330] sm:$0xff]
  %v145 = vld [vmem:[%s1 + $0x338] sm:$0xff]
  %v146 = vld [vmem:[%s1 + $0x340] sm:$0xff]
  %v147 = vld [vmem:[%s1 + $0x348] sm:$0xff]
  %v148 = vld [vmem:[%s1 + $0x350] sm:$0xff]
  %v149 = vld [vmem:[%s1 + $0x358] sm:$0xff]
  %v150 = vld [vmem:[%s1 + $0x360] sm:$0xff]
  %v151 = vld [vmem:[%s1 + $0x368] sm:$0xff]
  %v152 = vld [vmem:[%s1 + $0x370] sm:$0xff]
  %v153 = vld [vmem:[%s1 + $0x378] sm:$0xff]
  %v154 = vld [vmem:[%s1 + $0x380] sm:$0xff]
  %v155 = vld [vmem:[%s1 + $0x388] sm:$0xff]
  %v156 = vld [vmem:[%s1 + $0x390] sm:$0xff]
  %v157 = vld [vmem:[%s1 + $0x398] sm:$0xff]
  %v158 = vld [vmem:[%s1 + $0x3a0] sm:$0xff]
  %v159 = vld [vmem:[%s1 + $0x3a8] sm:$0xff]
  %v160 = vld [vmem:[%s1 + $0x3b0] sm:$0xff]
  %v161 = vld [vmem:[%s1 + $0x3b8] sm:$0xff]
  %v162 = vld [vmem:[%s1 + $0x3c0] sm:$0xff]
  %v163 = vld [vmem:[%s1 + $0x3c8] sm:$0xff]
  %v164 = vld [vmem:[%s1 + $0x3d0] sm:$0xff]
  %v165 = vld [vmem:[%s1 + $0x3d8] sm:$0xff]
  %v166 = vld [vmem:[%s1 + $0x3e0] sm:$0xff]
  %v167 = vld [vmem:[%s1 + $0x3e8] sm:$0xff]
  %v168 = vld [vmem:[%s1 + $0x3f0] sm:$0xff]
  %v169 = vld [vmem:[%s1 + $0x3f8] sm:$0xff]
  %v170 = vld [vmem:[%s1 + $0x400] sm:$0xff]
  %v171 = vld [vmem:[%s1 + $0x408] sm:$0xff]
  %v172 = vld [vmem:[%s1 + $0x410] sm:$0xff]
  %v173 = vld [vmem:[%s1 + $0x418] sm:$0xff]
  %v174 = vld [vmem:[%s1 + $0x420] sm:$0xff]
  %v175 = vld [vmem:[%s1 + $0x428] sm:$0xff]
  %v176 = vld [vmem:[%s1 + $0x430] sm:$0xff]
  %v177 = vld [vmem:[%s1 + $0x438] sm:$0xff]
  %v178 = vld [vmem:[%s1 + $0x440] sm:$0xff]
  %v179 = vld [vmem:[%s1 + $0x448] sm:$0xff]
  %v180 = vld [vmem:[%s1 + $0x450] sm:$0xff]
  %v181 = vld [vmem:[%s1 + $0x458] sm:$0xff]
  %v182 = vld [vmem:[%s1 + $0x460] sm:$0xff]
  %v183 = vld [vmem:[%s1 + $0x468] sm:$0xff]
  %v184 = vld [vmem:[%s1 + $0x470] sm:$0xff]
  %v185 = vld [vmem:[%s1 + $0x478] sm:$0xff]
  %v186 = vld [vmem:[%s1 + $0x480] sm:$0xff]
  %v187 = vld [vmem:[%s1 + $0x488] sm:$0xff]
  %v188 = vld [vmem:[%s1 + $0x490] sm:$0xff]
  %v189 = vld [vmem:[%s1 + $0x498] sm:$0xff]
  %v190 = vld [vmem:[%s1 + $0x4a0] sm:$0xff]
  %v191 = vld [vmem:[%s1 + $0x4a8] sm:$0xff]
  %v192 = vld [vmem:[%s1 + $0x4b0] sm:$0xff]
  %v193 = vld [vmem:[%s1 + $0x4b8] sm:$0xff]
  %v194 = vld [vmem:[%s1 + $0x4c0] sm:$0xff]
  %v195 = vld [vmem:[%s1 + $0x4c8] sm:$0xff]
  %v196 = vld [vmem:[%s1 + $0x4d0] sm:$0xff]
  %v197 = vld [vmem:[%s1 + $0x4d8] sm:$0xff]
  %v198 = vld [vmem:[%s1 + $0x4e0] sm:$0xff]
  %v199 = vld [vmem:[%s1 + $0x4e8] sm:$0xff]
  %v200 = vld [vmem:[%s1 + $0x4f0] sm:$0xff]
  %v201 = vld [vmem:[%s1 + $0x4f8] sm:$0xff]
  %v202 = vld [vmem:[%s1 + $0x500] sm:$0xff]
  %v203 = vld [vmem:[%s1 + $0x508] sm:$0xff]
  %v204 = vld [vmem:[%s1 + $0x510] sm:$0xff]
  %v205 = vld [vmem:[%s1 + $0x518] sm:$0xff]
  %v206 = vld [vmem:[%s1 + $0x520] sm:$0xff]
  %v207 = vld [vmem:[%s1 + $0x528] sm:$0xff]
  %v208 = vld [vmem:[%s1 + $0x530] sm:$0xff]
  %v209 = vld [vmem:[%s1 + $0x538] sm:$0xff]
  %v210 = vld [vmem:[%s1 + $0x540] sm:$0xff]
  %v211 = vld [vmem:[%s1 + $0x548] sm:$0xff]
  %v212 = vld [vmem:[%s1 + $0x550] sm:$0xff]
  %v213 = vld [vmem:[%s1 + $0x558] sm:$0xff]
  %v214 = vld [vmem:[%s1 + $0x560] sm:$0xff]
  %v215 = vld [vmem:[%s1 + $0x568] sm:$0xff]
  %v216 = vld [vmem:[%s1 + $0x570] sm:$0xff]
  %v217 = vld [vmem:[%s1 + $0x578] sm:$0xff]
  %v218 = vld [vmem:[%s1 + $0x580] sm:$0xff]
  %v219 = vld [vmem:[%s1 + $0x588] sm:$0xff]
  %v220 = vld [vmem:[%s1 + $0x590] sm:$0xff]
  %v221 = vld [vmem:[%s1 + $0x598] sm:$0xff]
  %v222 = vld [vmem:[%s1 + $0x5a0] sm:$0xff]
  %v223 = vld [vmem:[%s1 + $0x5a8] sm:$0xff]
  %v224 = vld [vmem:[%s1 + $0x5b0] sm:$0xff]
  %v225 = vld [vmem:[%s1 + $0x5b8] sm:$0xff]
  %v226 = vld [vmem:[%s1 + $0x5c0] sm:$0xff]
  %v227 = vld [vmem:[%s1 + $0x5c8] sm:$0xff]
  %v228 = vld [vmem:[%s1 + $0x5d0] sm:$0xff]
  %v229 = vld [vmem:[%s1 + $0x5d8] sm:$0xff]
  %v230 = vld [vmem:[%s1 + $0x5e0] sm:$0xff]
  %v231 = vld [vmem:[%s1 + $0x5e8] sm:$0xff]
  %v232 = vld [vmem:[%s1 + $0x5f0] sm:$0xff]
  %v233 = vld [vmem:[%s1 + $0x5f8] sm:$0xff]
  %v234 = vld [vmem:[%s1 + $0x600] sm:$0xff]
  %v235 = vld [vmem:[%s1 + $0x608] sm:$0xff]
  %v236 = vld [vmem:[%s1 + $0x610] sm:$0xff]
  %v237 = vld [vmem:[%s1 + $0x618] sm:$0xff]
  %v238 = vld [vmem:[%s1 + $0x620] sm:$0xff]
  %v239 = vld [vmem:[%s1 + $0x628] sm:$0xff]
  %v240 = vld [vmem:[%s1 + $0x630] sm:$0xff]
  %v241 = vld [vmem:[%s1 + $0x638] sm:$0xff]
  %v242 = vld [vmem:[%s1 + $0x640] sm:$0xff]
  %v243 = vld [vmem:[%s1 + $0x648] sm:$0xff]
  %v244 = vld [vmem:[%s1 + $0x650] sm:$0xff]
  %v245 = vld [vmem:[%s1 + $0x658] sm:$0xff]
  %v246 = vld [vmem:[%s1 + $0x660] sm:$0xff]
  %v247 = vld [vmem:[%s1 + $0x668] sm:$0xff]
  %v248 = vld [vmem:[%s1 + $0x670] sm:$0xff]
  %v249 = vld [vmem:[%s1 + $0x678] sm:$0xff]
  %v250 = vld [vmem:[%s1 + $0x680] sm:$0xff]
  %v251 = vld [vmem:[%s1 + $0x688] sm:$0xff]
  %v252 = vld [vmem:[%s1 + $0x690] sm:$0xff]
  %v253 = vld [vmem:[%s1 + $0x698] sm:$0xff]
  %v254 = vld [vmem:[%s1 + $0x6a0] sm:$0xff]
  %v255 = vld [vmem:[%s1 + $0x6a8] sm:$0xff]
  %v256 = vld [vmem:[%s1 + $0x6b0] sm:$0xff]
  %v257 = vld [vmem:[%s1 + $0x6b8] sm:$0xff]
  %v258 = vld [vmem:[%s1 + $0x6c0] sm:$0xff]
  %v259 = vld [vmem:[%s1 + $0x6c8] sm:$0xff]
  %v260 = vld [vmem:[%s1 + $0x6d0] sm:$0xff]
  %v261 = vld [vmem:[%s1 + $0x6d8] sm:$0xff]
  %v262 = vld [vmem:[%s1 + $0x6e0] sm:$0xff]
  %v263 = vld [vmem:[%s1 + $0x6e8] sm:$0xff]
  %v264 = vld [vmem:[%s1 + $0x6f0] sm:$0xff]
  %v265 = vld [vmem:[%s1 + $0x6f8] sm:$0xff]
  %v266 = vld [vmem:[%s1 + $0x700] sm:$0xff]
  %v267 = vld [vmem:[%s1 + $0x708] sm:$0xff]
  %v268 = vld [vmem:[%s1 + $0x710] sm:$0xff]
  %v269 = vld [vmem:[%s1 + $0x718] sm:$0xff]
  %v270 = vld [vmem:[%s1 + $0x720] sm:$0xff]
  %v271 = vld [vmem:[%s1 + $0x728] sm:$0xff]
  %v272 = vld [vmem:[%s1 + $0x730] sm:$0xff]
  %v273 = vld [vmem:[%s1 + $0x738] sm:$0xff]
  %v274 = vld [vmem:[%s1 + $0x740] sm:$0xff]
  %v275 = vld [vmem:[%s1 + $0x748] sm:$0xff]
  %v276 = vld [vmem:[%s1 + $0x750] sm:$0xff]
  %v277 = vld [vmem:[%s1 + $0x758] sm:$0xff]
  %v278 = vld [vmem:[%s1 + $0x760] sm:$0xff]
  %v279 = vld [vmem:[%s1 + $0x768] sm:$0xff]
  %v280 = vld [vmem:[%s1 + $0x770] sm:$0xff]
  %v281 = vld [vmem:[%s1 + $0x778] sm:$0xff]
  %v282 = vld [vmem:[%s1 + $0x780] sm:$0xff]
  %v283 = vld [vmem:[%s1 + $0x788] sm:$0xff]
  %v284 = vld [vmem:[%s1 + $0x790] sm:$0xff]
  %v285 = vld [vmem:[%s1 + $0x798] sm:$0xff]
  %v286 = vld [vmem:[%s1 + $0x7a0] sm:$0xff]
  %v287 = vld [vmem:[%s1 + $0x7a8] sm:$0xff]
  %v288 = vld [vmem:[%s1 + $0x7b0] sm:$0xff]
  %v289 = vld [vmem:[%s1 + $0x7b8] sm:$0xff]
  %v290 = vld [vmem:[%s1 + $0x7c0] sm:$0xff]
  %v291 = vld [vmem:[%s1 + $0x7c8] sm:$0xff]
  %v292 = vld [vmem:[%s1 + $0x7d0] sm:$0xff]
  %v293 = vld [vmem:[%s1 + $0x7d8] sm:$0xff]
  %v294 = vld [vmem:[%s1 + $0x7e0] sm:$0xff]
  %v295 = vld [vmem:[%s1 + $0x7e8] sm:$0xff]
  %v296 = vld [vmem:[%s1 + $0x7f0] sm:$0xff]
  %v297 = vld [vmem:[%s1 + $0x7f8] sm:$0xff]
  %v298 = vld [vmem:[%s1 + $0x800] sm:$0xff]
  %v299 = vld [vmem:[%s1 + $0x808] sm:$0xff]
  %v300 = vld [vmem:[%s1 + $0x810] sm:$0xff]
  %v301 = vld [vmem:[%s1 + $0x818] sm:$0xff]
  %v302 = vld [vmem:[%s1 + $0x820] sm:$0xff]
  %v303 = vld [vmem:[%s1 + $0x828] sm:$0xff]
  %v304 = vld [vmem:[%s1 + $0x830] sm:$0xff]
  %v305 = vld [vmem:[%s1 + $0x838] sm:$0xff]
  %v306 = vld [vmem:[%s1 + $0x840] sm:$0xff]
  %v307 = vld [vmem:[%s1 + $0x848] sm:$0xff]
  %v308 = vld [vmem:[%s1 + $0x850] sm:$0xff]
  %v309 = vld [vmem:[%s1 + $0x858] sm:$0xff]
  %v310 = vld [vmem:[%s1 + $0x860] sm:$0xff]
  %v311 = vld [vmem:[%s1 + $0x868] sm:$0xff]
  %v312 = vld [vmem:[%s1 + $0x870] sm:$0xff]
  %v313 = vld [vmem:[%s1 + $0x878] sm:$0xff]
  %v314 = vld [vmem:[%s1 + $0x880] sm:$0xff]
  %v315 = vld [vmem:[%s1 + $0x888] sm:$0xff]
  %v316 = vld [vmem:[%s1 + $0x890] sm:$0xff]
  %v317 = vld [vmem:[%s1 + $0x898] sm:$0xff]
  %v318 = vld [vmem:[%s1 + $0x8a0] sm:$0xff]
  %v319 = vld [vmem:[%s1 + $0x8a8] sm:$0xff]
  %v320 = vld [vmem:[%s1 + $0x8b0] sm:$0xff]
  %v321 = vld [vmem:[%s1 + $0x8b8] sm:$0xff]
  %v322 = vld [vmem:[%s1 + $0x8c0] sm:$0xff]
  %v323 = vld [vmem:[%s1 + $0x8c8] sm:$0xff]
  %v324 = vld [vmem:[%s1 + $0x8d0] sm:$0xff]
  %v325 = vld [vmem:[%s1 + $0x8d8] sm:$0xff]
  %v326 = vld [vmem:[%s1 + $0x8e0] sm:$0xff]
  %v327 = vld [vmem:[%s1 + $0x8e8] sm:$0xff]
  %v328 = vld [vmem:[%s1 + $0x8f0] sm:$0xff]
  %v329 = vld [vmem:[%s1 + $0x8f8] sm:$0xff]
  %v330 = vld [vmem:[%s1 + $0x900] sm:$0xff]
  %v331 = vld [vmem:[%s1 + $0x908] sm:$0xff]
  %v332 = vld [vmem:[%s1 + $0x910] sm:$0xff]
  %v333 = vld [vmem:[%s1 + $0x918] sm:$0xff]
  %v334 = vld [vmem:[%s1 + $0x920] sm:$0xff]
  %v335 = vld [vmem:[%s1 + $0x928] sm:$0xff]
  %v336 = vld [vmem:[%s1 + $0x930] sm:$0xff]
  %v337 = vld [vmem:[%s1 + $0x938] sm:$0xff]
  %v338 = vld [vmem:[%s1 + $0x940] sm:$0xff]
  %v339 = vld [vmem:[%s1 + $0x948] sm:$0xff]
  %v340 = vld [vmem:[%s1 + $0x950] sm:$0xff]
  %v341 = vld [vmem:[%s1 + $0x958] sm:$0xff]
  %v342 = vld [vmem:[%s1 + $0x960] sm:$0xff]
  %v343 = vld [vmem:[%s1 + $0x968] sm:$0xff]
  %v344 = vld [vmem:[%s1 + $0x970] sm:$0xff]
  %v345 = vld [vmem:[%s1 + $0x978] sm:$0xff]
  %v346 = vld [vmem:[%s1 + $0x980] sm:$0xff]
  %v347 = vld [vmem:[%s1 + $0x988] sm:$0xff]
  %v348 = vld [vmem:[%s1 + $0x990] sm:$0xff]
  %v349 = vld [vmem:[%s1 + $0x998] sm:$0xff]
  %v350 = vld [vmem:[%s1 + $0x9a0] sm:$0xff]
  %v351 = vld [vmem:[%s1 + $0x9a8] sm:$0xff]
  %v352 = vld [vmem:[%s1 + $0x9b0] sm:$0xff]
  %v353 = vld [vmem:[%s1 + $0x9b8] sm:$0xff]
  %v354 = vld [vmem:[%s1 + $0x9c0] sm:$0xff]
  %v355 = vld [vmem:[%s1 + $0x9c8] sm:$0xff]
  %v356 = vld [vmem:[%s1 + $0x9d0] sm:$0xff]
  %v357 = vld [vmem:[%s1 + $0x9d8] sm:$0xff]
  %v358 = vld [vmem:[%s1 + $0x9e0] sm:$0xff]
  %v359 = vld [vmem:[%s1 + $0x9e8] sm:$0xff]
  %v360 = vld [vmem:[%s1 + $0x9f0] sm:$0xff]
  %v361 = vld [vmem:[%s1 + $0x9f8] sm:$0xff]
  %v362 = vld [vmem:[%s1 + $0xa00] sm:$0xff]
  %v363 = vld [vmem:[%s1 + $0xa08] sm:$0xff]
  %v364 = vld [vmem:[%s1 + $0xa10] sm:$0xff]
  %v365 = vld [vmem:[%s1 + $0xa18] sm:$0xff]
  %v366 = vld [vmem:[%s1 + $0xa20] sm:$0xff]
  %v367 = vld [vmem:[%s1 + $0xa28] sm:$0xff]
  %v368 = vld [vmem:[%s1 + $0xa30] sm:$0xff]
  %v369 = vld [vmem:[%s1 + $0xa38] sm:$0xff]
  %v370 = vld [vmem:[%s1 + $0xa40] sm:$0xff]
  %v371 = vld [vmem:[%s1 + $0xa48] sm:$0xff]
  %v372 = vld [vmem:[%s1 + $0xa50] sm:$0xff]
  %v373 = vld [vmem:[%s1 + $0xa58] sm:$0xff]
  %v374 = vld [vmem:[%s1 + $0xa60] sm:$0xff]
  %v375 = vld [vmem:[%s1 + $0xa68] sm:$0xff]
  %v376 = vld [vmem:[%s1 + $0xa70] sm:$0xff]
  %v377 = vld [vmem:[%s1 + $0xa78] sm:$0xff]
  %v378 = vld [vmem:[%s1 + $0xa80] sm:$0xff]
  %v379 = vld [vmem:[%s1 + $0xa88] sm:$0xff]
  %v380 = vld [vmem:[%s1 + $0xa90] sm:$0xff]
  %v381 = vld [vmem:[%s1 + $0xa98] sm:$0xff]
  %v382 = vld [vmem:[%s1 + $0xaa0] sm:$0xff]
  %v383 = vld [vmem:[%s1 + $0xaa8] sm:$0xff]
  %v384 = vld [vmem:[%s1 + $0xab0] sm:$0xff]
  %v385 = vld [vmem:[%s1 + $0xab8] sm:$0xff]
  %v386 = vld [vmem:[%s1 + $0xac0] sm:$0xff]
  %v387 = vld [vmem:[%s1 + $0xac8] sm:$0xff]
  %v388 = vld [vmem:[%s1 + $0xad0] sm:$0xff]
  %v389 = vld [vmem:[%s1 + $0xad8] sm:$0xff]
  %v390 = vld [vmem:[%s1 + $0xae0] sm:$0xff]
  %v391 = vld [vmem:[%s1 + $0xae8] sm:$0xff]
  %v392 = vld [vmem:[%s1 + $0xaf0] sm:$0xff]
  %v393 = vld [vmem:[%s1 + $0xaf8] sm:$0xff]
  %v394 = vld [vmem:[%s1 + $0xb00] sm:$0xff]
  %v395 = vld [vmem:[%s1 + $0xb08] sm:$0xff]
  %v396 = vld [vmem:[%s1 + $0xb10] sm:$0xff]
  %v397 = vld [vmem:[%s1 + $0xb18] sm:$0xff]
  %v398 = vld [vmem:[%s1 + $0xb20] sm:$0xff]
  %v399 = vld [vmem:[%s1 + $0xb28] sm:$0xff]
  %v400 = vld [vmem:[%s1 + $0xb30] sm:$0xff]
  %v401 = vld [vmem:[%s1 + $0xb38] sm:$0xff]
  %v402 = vld [vmem:[%s1 + $0xb40] sm:$0xff]
  %v403 = vld [vmem:[%s1 + $0xb48] sm:$0xff]
  %v404 = vld [vmem:[%s1 + $0xb50] sm:$0xff]
  %v405 = vld [vmem:[%s1 + $0xb58] sm:$0xff]
  %v406 = vld [vmem:[%s1 + $0xb60] sm:$0xff]
  %v407 = vld [vmem:[%s1 + $0xb68] sm:$0xff]
  %v408 = vld [vmem:[%s1 + $0xb70] sm:$0xff]
  %v409 = vld [vmem:[%s1 + $0xb78] sm:$0xff]
  %v410 = vld [vmem:[%s1 + $0xb80] sm:$0xff]
  %v411 = vld [vmem:[%s1 + $0xb88] sm:$0xff]
  %v412 = vld [vmem:[%s1 + $0xb90] sm:$0xff]
  %v413 = vld [vmem:[%s1 + $0xb98] sm:$0xff]
  %v414 = vld [vmem:[%s1 + $0xba0] sm:$0xff]
  %v415 = vld [vmem:[%s1 + $0xba8] sm:$0xff]
  %v416 = vld [vmem:[%s1 + $0xbb0] sm:$0xff]
  %v417 = vld [vmem:[%s1 + $0xbb8] sm:$0xff]
  %v418 = vld [vmem:[%s1 + $0xbc0] sm:$0xff]
  %v419 = vld [vmem:[%s1 + $0xbc8] sm:$0xff]
  %v420 = vld [vmem:[%s1 + $0xbd0] sm:$0xff]
  %v421 = vld [vmem:[%s1 + $0xbd8] sm:$0xff]
  %v422 = vld [vmem:[%s1 + $0xbe0] sm:$0xff]
  %v423 = vld [vmem:[%s1 + $0xbe8] sm:$0xff]
  %v424 = vld [vmem:[%s1 + $0xbf0] sm:$0xff]
  %v425 = vld [vmem:[%s1 + $0xbf8] sm:$0xff]
  %v426 = vld [vmem:[%s1 + $0xc00] sm:$0xff]
  %v427 = vld [vmem:[%s1 + $0xc08] sm:$0xff]
  %v428 = vld [vmem:[%s1 + $0xc10] sm:$0xff]
  %v429 = vld [vmem:[%s1 + $0xc18] sm:$0xff]
  %v430 = vld [vmem:[%s1 + $0xc20] sm:$0xff]
  %v431 = vld [vmem:[%s1 + $0xc28] sm:$0xff]
  %v432 = vld [vmem:[%s1 + $0xc30] sm:$0xff]
  %v433 = vld [vmem:[%s1 + $0xc38] sm:$0xff]
  %v434 = vld [vmem:[%s1 + $0xc40] sm:$0xff]
  %v435 = vld [vmem:[%s1 + $0xc48] sm:$0xff]
  %v436 = vld [vmem:[%s1 + $0xc50] sm:$0xff]
  %v437 = vld [vmem:[%s1 + $0xc58] sm:$0xff]
  %v438 = vld [vmem:[%s1 + $0xc60] sm:$0xff]
  %v439 = vld [vmem:[%s1 + $0xc68] sm:$0xff]
  %v440 = vld [vmem:[%s1 + $0xc70] sm:$0xff]
  %v441 = vld [vmem:[%s1 + $0xc78] sm:$0xff]
  %v442 = vld [vmem:[%s1 + $0xc80] sm:$0xff]
  %v443 = vld [vmem:[%s1 + $0xc88] sm:$0xff]
  %v444 = vld [vmem:[%s1 + $0xc90] sm:$0xff]
  %v445 = vld [vmem:[%s1 + $0xc98] sm:$0xff]
  %v446 = vld [vmem:[%s1 + $0xca0] sm:$0xff]
  %v447 = vld [vmem:[%s1 + $0xca8] sm:$0xff]
  %v448 = vld [vmem:[%s1 + $0xcb0] sm:$0xff]
  %v449 = vld [vmem:[%s1 + $0xcb8] sm:$0xff]
  %v450 = vld [vmem:[%s1 + $0xcc0] sm:$0xff]
  %v451 = vld [vmem:[%s1 + $0xcc8] sm:$0xff]
  %v452 = vld [vmem:[%s1 + $0xcd0] sm:$0xff]
  %v453 = vld [vmem:[%s1 + $0xcd8] sm:$0xff]
  %v454 = vld [vmem:[%s1 + $0xce0] sm:$0xff]
  %v455 = vld [vmem:[%s1 + $0xce8] sm:$0xff]
  %v456 = vld [vmem:[%s1 + $0xcf0] sm:$0xff]
  %v457 = vld [vmem:[%s1 + $0xcf8] sm:$0xff]
  %v458 = vld [vmem:[%s1 + $0xd00] sm:$0xff]
  %v459 = vld [vmem:[%s1 + $0xd08] sm:$0xff]
  %v460 = vld [vmem:[%s1 + $0xd10] sm:$0xff]
  %v461 = vld [vmem:[%s1 + $0xd18] sm:$0xff]
  %v462 = vld [vmem:[%s1 + $0xd20] sm:$0xff]
  %v463 = vld [vmem:[%s1 + $0xd28] sm:$0xff]
  %v464 = vld [vmem:[%s1 + $0xd30] sm:$0xff]
  %v465 = vld [vmem:[%s1 + $0xd38] sm:$0xff]
  %v466 = vld [vmem:[%s1 + $0xd40] sm:$0xff]
  %v467 = vld [vmem:[%s1 + $0xd48] sm:$0xff]
  %v468 = vld [vmem:[%s1 + $0xd50] sm:$0xff]
  %v469 = vld [vmem:[%s1 + $0xd58] sm:$0xff]
  %v470 = vld [vmem:[%s1 + $0xd60] sm:$0xff]
  %v471 = vld [vmem:[%s1 + $0xd68] sm:$0xff]
  %v472 = vld [vmem:[%s1 + $0xd70] sm:$0xff]
  %v473 = vld [vmem:[%s1 + $0xd78] sm:$0xff]
  %v474 = vld [vmem:[%s1 + $0xd80] sm:$0xff]
  %v475 = vld [vmem:[%s1 + $0xd88] sm:$0xff]
  %v476 = vld [vmem:[%s1 + $0xd90] sm:$0xff]
  %v477 = vld [vmem:[%s1 + $0xd98] sm:$0xff]
  %v478 = vld [vmem:[%s1 + $0xda0] sm:$0xff]
  %v479 = vld [vmem:[%s1 + $0xda8] sm:$0xff]
  %v480 = vld [vmem:[%s1 + $0xdb0] sm:$0xff]
  %v481 = vld [vmem:[%s1 + $0xdb8] sm:$0xff]
  %v482 = vld [vmem:[%s1 + $0xdc0] sm:$0xff]
  %v483 = vld [vmem:[%s1 + $0xdc8] sm:$0xff]
  %v484 = vld [vmem:[%s1 + $0xdd0] sm:$0xff]
  %v485 = vld [vmem:[%s1 + $0xdd8] sm:$0xff]
  %v486 = vld [vmem:[%s1 + $0xde0] sm:$0xff]
  %v487 = vld [vmem:[%s1 + $0xde8] sm:$0xff]
  %v488 = vld [vmem:[%s1 + $0xdf0] sm:$0xff]
  %v489 = vld [vmem:[%s1 + $0xdf8] sm:$0xff]
  %v490 = vld [vmem:[%s1 + $0xe00] sm:$0xff]
  %v491 = vld [vmem:[%s1 + $0xe08] sm:$0xff]
  %v492 = vld [vmem:[%s1 + $0xe10] sm:$0xff]
  %v493 = vld [vmem:[%s1 + $0xe18] sm:$0xff]
  %v494 = vld [vmem:[%s1 + $0xe20] sm:$0xff]
  %v495 = vld [vmem:[%s1 + $0xe28] sm:$0xff]
  %v496 = vld [vmem:[%s1 + $0xe30] sm:$0xff]
  %v497 = vld [vmem:[%s1 + $0xe38] sm:$0xff]
  %v498 = vld [vmem:[%s1 + $0xe40] sm:$0xff]
  %v499 = vld [vmem:[%s1 + $0xe48] sm:$0xff]
  %v500 = vld [vmem:[%s1 + $0xe50] sm:$0xff]
  %v501 = vld [vmem:[%s1 + $0xe58] sm:$0xff]
  %v502 = vld [vmem:[%s1 + $0xe60] sm:$0xff]
  %v503 = vld [vmem:[%s1 + $0xe68] sm:$0xff]
  %v504 = vld [vmem:[%s1 + $0xe70] sm:$0xff]
  %v505 = vld [vmem:[%s1 + $0xe78] sm:$0xff]
  %v506 = vld [vmem:[%s1 + $0xe80] sm:$0xff]
  %v507 = vld [vmem:[%s1 + $0xe88] sm:$0xff]
  %v508 = vld [vmem:[%s1 + $0xe90] sm:$0xff]
  %v509 = vld [vmem:[%s1 + $0xe98] sm:$0xff]
  %v510 = vld [vmem:[%s1 + $0xea0] sm:$0xff]
  %v511 = vld [vmem:[%s1 + $0xea8] sm:$0xff]
  %v512 = vld [vmem:[%s1 + $0xeb0] sm:$0xff]
  %v513 = vld [vmem:[%s1 + $0xeb8] sm:$0xff]
  %v514 = vld [vmem:[%s1 + $0xec0] sm:$0xff]
  %v515 = vld [vmem:[%s1 + $0xec8] sm:$0xff]
  %v516 = vld [vmem:[%s1 + $0xed0] sm:$0xff]
  %v517 = vld [vmem:[%s1 + $0xed8] sm:$0xff]
  %v518 = vld [vmem:[%s1 + $0xee0] sm:$0xff]
  %v519 = vld [vmem:[%s1 + $0xee8] sm:$0xff]
  %v520 = vld [vmem:[%s1 + $0xef0] sm:$0xff]
  %v521 = vld [vmem:[%s1 + $0xef8] sm:$0xff]
  %v522 = vld [vmem:[%s1 + $0xf00] sm:$0xff]
  %v523 = vld [vmem:[%s1 + $0xf08] sm:$0xff]
  %v524 = vld [vmem:[%s1 + $0xf10] sm:$0xff]
  %v525 = vld [vmem:[%s1 + $0xf18] sm:$0xff]
  %v526 = vld [vmem:[%s1 + $0xf20] sm:$0xff]
  %v527 = vld [vmem:[%s1 + $0xf28] sm:$0xff]
  %v528 = vld [vmem:[%s1 + $0xf30] sm:$0xff]
  %v529 = vld [vmem:[%s1 + $0xf38] sm:$0xff]
  %v530 = vld [vmem:[%s1 + $0xf40] sm:$0xff]
  %v531 = vld [vmem:[%s1 + $0xf48] sm:$0xff]
  %v532 = vld [vmem:[%s1 + $0xf50] sm:$0xff]
  %v533 = vld [vmem:[%s1 + $0xf58] sm:$0xff]
  %v534 = vld [vmem:[%s1 + $0xf60] sm:$0xff]
  %v535 = vld [vmem:[%s1 + $0xf68] sm:$0xff]
  %v536 = vld [vmem:[%s1 + $0xf70] sm:$0xff]
  %v537 = vld [vmem:[%s1 + $0xf78] sm:$0xff]
  %v538 = vld [vmem:[%s1 + $0xf80] sm:$0xff]
  %v539 = vld [vmem:[%s1 + $0xf88] sm:$0xff]
  %v540 = vld [vmem:[%s1 + $0xf90] sm:$0xff]
  %v541 = vld [vmem:[%s1 + $0xf98] sm:$0xff]
  %v542 = vld [vmem:[%s1 + $0xfa0] sm:$0xff]
  %v543 = vld [vmem:[%s1 + $0xfa8] sm:$0xff]
  %v544 = vld [vmem:[%s1 + $0xfb0] sm:$0xff]
  %v545 = vld [vmem:[%s1 + $0xfb8] sm:$0xff]
  %v546 = vld [vmem:[%s1 + $0xfc0] sm:$0xff]
  %v547 = vld [vmem:[%s1 + $0xfc8] sm:$0xff]
  %v548 = vld [vmem:[%s1 + $0xfd0] sm:$0xff]
  %v549 = vld [vmem:[%s1 + $0xfd8] sm:$0xff]
  %v550 = vld [vmem:[%s1 + $0xfe0] sm:$0xff]
  %v551 = vld [vmem:[%s1 + $0xfe8] sm:$0xff]
  %v552 = vld [vmem:[%s1 + $0xff0] sm:$0xff]
  %v553 = vld [vmem:[%s1 + $0xff8] sm:$0xff]
  %v554 = vld [vmem:[%s2] sm:$0xf]
  %v556 = vlaneseq
  %v557 = vshrl.u32 %v556, 7
  %v558 = vsub.s32 0, %v557
  %v559 = vrot.slane %v554, %v558
  %v560 = vlaneseq
  %v561 = vshrl.u32 %v560, 7
  %v562 = vsub.s32 1, %v561
  %v563 = vrot.slane %v554, %v562
  %v564 = vlaneseq
  %v565 = vshrl.u32 %v564, 7
  %v566 = vsub.s32 2, %v565
  %v567 = vrot.slane %v554, %v566
  %v568 = vlaneseq
  %v569 = vshrl.u32 %v568, 7
  %v570 = vsub.s32 3, %v569
  %v571 = vrot.slane %v554, %v570
  %v580 = vcombine.high %v38, %v38
  %v581 = vcombine.high %v39, %v39
  %v582 = vcombine.high %v40, %v40
  %v583 = vcombine.high %v41, %v41
  %588 = vmatprep.subr.mxu0 %v103
  %589 = vmatpush1.msra.mxu0 %v102
  %590 = vmatprep.subr.mxu0 %v99
  %591 = vmatpush1.msra.mxu0 %v98
  %592 = vmatprep.subr.mxu0 %v95
  %593 = vmatpush1.msra.mxu0 %v94
  %594 = vmatprep.subr.mxu0 %v91
  %595 = vmatpush1.msra.mxu0 %v90
  %596 = vmatprep.subr.mxu0 %v87
  %597 = vmatpush1.msra.mxu0 %v86
  %598 = vmatprep.subr.mxu0 %v83
  %599 = vmatpush1.msra.mxu0 %v82
  %600 = vmatprep.subr.mxu0 %v79
  %601 = vmatpush1.msra.mxu0 %v78
  %602 = vmatprep.subr.mxu0 %v75
  %603 = vmatpush1.msra.mxu0 %v74
  %604 = vmatprep.subr.mxu0 %v71
  %605 = vmatpush1.msra.mxu0 %v70
  %606 = vmatprep.subr.mxu0 %v67
  %607 = vmatpush1.msra.mxu0 %v66
  %608 = vmatprep.subr.mxu0 %v63
  %609 = vmatpush1.msra.mxu0 %v62
  %610 = vmatprep.subr.mxu0 %v59
  %611 = vmatpush1.msra.mxu0 %v58
  %612 = vmatprep.subr.mxu0 %v55
  %613 = vmatpush1.msra.mxu0 %v54
  %614 = vmatprep.subr.mxu0 %v51
  %615 = vmatpush1.msra.mxu0 %v50
  %616 = vmatprep.subr.mxu0 %v47
  %617 = vmatpush1.msra.mxu0 %v46
  %618 = vmatprep.subr.mxu0 %v43
  %619 = vmatpush1.msra.mxu0 %v42
  %620 = vmatprep.subr.mxu0 %v167
  %621 = vmatpush2.msra.mxu0 %v166
  %622 = vmatprep.subr.mxu0 %v163
  %623 = vmatpush2.msra.mxu0 %v162
  %624 = vmatprep.subr.mxu0 %v159
  %625 = vmatpush2.msra.mxu0 %v158
  %626 = vmatprep.subr.mxu0 %v155
  %627 = vmatpush2.msra.mxu0 %v154
  %628 = vmatprep.subr.mxu0 %v151
  %629 = vmatpush2.msra.mxu0 %v150
  %630 = vmatprep.subr.mxu0 %v147
  %631 = vmatpush2.msra.mxu0 %v146
  %632 = vmatprep.subr.mxu0 %v143
  %633 = vmatpush2.msra.mxu0 %v142
  %634 = vmatprep.subr.mxu0 %v139
  %635 = vmatpush2.msra.mxu0 %v138
  %636 = vmatprep.subr.mxu0 %v135
  %637 = vmatpush2.msra.mxu0 %v134
  %638 = vmatprep.subr.mxu0 %v131
  %639 = vmatpush2.msra.mxu0 %v130
  %640 = vmatprep.subr.mxu0 %v127
  %641 = vmatpush2.msra.mxu0 %v126
  %642 = vmatprep.subr.mxu0 %v123
  %643 = vmatpush2.msra.mxu0 %v122
  %644 = vmatprep.subr.mxu0 %v119
  %645 = vmatpush2.msra.mxu0 %v118
  %646 = vmatprep.subr.mxu0 %v115
  %647 = vmatpush2.msra.mxu0 %v114
  %648 = vmatprep.subr.mxu0 %v111
  %649 = vmatpush2.msra.mxu0 %v110
  %650 = vmatprep.subr.mxu0 %v107
  %651 = vmatpush2.msra.mxu0 %v106
  %652 = vmatprep.mubr.f32.mxu0 %v580
  %653 = vmatmul.mubr.f32.gmra.mxu0 %v38
  %v654 = vpop.f32.mrf.mxu0
  %v655 = vadd.f32 %v559, %v654
  %v656 = vpop.f32.mrf.mxu0
  %v657 = vadd.f32 %v563, %v656
  %658 = vdwg.mxu0
  %659 = vmatprep.subr.mxu0 %v231
  %660 = vmatpush1.msra.mxu0 %v230
  %661 = vmatprep.subr.mxu0 %v227
  %662 = vmatpush1.msra.mxu0 %v226
  %663 = vmatprep.subr.mxu0 %v223
  %664 = vmatpush1.msra.mxu0 %v222
  %665 = vmatprep.subr.mxu0 %v219
  %666 = vmatpush1.msra.mxu0 %v218
  %667 = vmatprep.subr.mxu0 %v215
  %668 = vmatpush1.msra.mxu0 %v214
  %669 = vmatprep.subr.mxu0 %v211
  %670 = vmatpush1.msra.mxu0 %v210
  %671 = vmatprep.subr.mxu0 %v207
  %672 = vmatpush1.msra.mxu0 %v206
  %673 = vmatprep.subr.mxu0 %v203
  %674 = vmatpush1.msra.mxu0 %v202
  %675 = vmatprep.subr.mxu0 %v199
  %676 = vmatpush1.msra.mxu0 %v198
  %677 = vmatprep.subr.mxu0 %v195
  %678 = vmatpush1.msra.mxu0 %v194
  %679 = vmatprep.subr.mxu0 %v191
  %680 = vmatpush1.msra.mxu0 %v190
  %681 = vmatprep.subr.mxu0 %v187
  %682 = vmatpush1.msra.mxu0 %v186
  %683 = vmatprep.subr.mxu0 %v183
  %684 = vmatpush1.msra.mxu0 %v182
  %685 = vmatprep.subr.mxu0 %v179
  %686 = vmatpush1.msra.mxu0 %v178
  %687 = vmatprep.subr.mxu0 %v175
  %688 = vmatpush1.msra.mxu0 %v174
  %689 = vmatprep.subr.mxu0 %v171
  %690 = vmatpush1.msra.mxu0 %v170
  %691 = vmatprep.subr.mxu0 %v295
  %692 = vmatpush2.msra.mxu0 %v294
  %693 = vmatprep.subr.mxu0 %v291
  %694 = vmatpush2.msra.mxu0 %v290
  %695 = vmatprep.subr.mxu0 %v287
  %696 = vmatpush2.msra.mxu0 %v286
  %697 = vmatprep.subr.mxu0 %v283
  %698 = vmatpush2.msra.mxu0 %v282
  %699 = vmatprep.subr.mxu0 %v279
  %700 = vmatpush2.msra.mxu0 %v278
  %701 = vmatprep.subr.mxu0 %v275
  %702 = vmatpush2.msra.mxu0 %v274
  %703 = vmatprep.subr.mxu0 %v271
  %704 = vmatpush2.msra.mxu0 %v270
  %705 = vmatprep.subr.mxu0 %v267
  %706 = vmatpush2.msra.mxu0 %v266
  %707 = vmatprep.subr.mxu0 %v263
  %708 = vmatpush2.msra.mxu0 %v262
  %709 = vmatprep.subr.mxu0 %v259
  %710 = vmatpush2.msra.mxu0 %v258
  %711 = vmatprep.subr.mxu0 %v255
  %712 = vmatpush2.msra.mxu0 %v254
  %713 = vmatprep.subr.mxu0 %v251
  %714 = vmatpush2.msra.mxu0 %v250
  %715 = vmatprep.subr.mxu0 %v247
  %716 = vmatpush2.msra.mxu0 %v246
  %717 = vmatprep.subr.mxu0 %v243
  %718 = vmatpush2.msra.mxu0 %v242
  %719 = vmatprep.subr.mxu0 %v239
  %720 = vmatpush2.msra.mxu0 %v238
  %721 = vmatprep.subr.mxu0 %v235
  %722 = vmatpush2.msra.mxu0 %v234
  %723 = vmatprep.mubr.f32.mxu0 %v581
  %724 = vmatmul.mubr.f32.gmra.mxu0 %v39
  %v725 = vpop.f32.mrf.mxu0
  %v726 = vadd.f32 %v655, %v725
  %v727 = vpop.f32.mrf.mxu0
  %v728 = vadd.f32 %v657, %v727
  %729 = vdwg.mxu0
  %730 = vmatprep.subr.mxu0 %v359
  %731 = vmatpush1.msra.mxu0 %v358
  %732 = vmatprep.subr.mxu0 %v355
  %733 = vmatpush1.msra.mxu0 %v354
  %734 = vmatprep.subr.mxu0 %v351
  %735 = vmatpush1.msra.mxu0 %v350
  %736 = vmatprep.subr.mxu0 %v347
  %737 = vmatpush1.msra.mxu0 %v346
  %738 = vmatprep.subr.mxu0 %v343
  %739 = vmatpush1.msra.mxu0 %v342
  %740 = vmatprep.subr.mxu0 %v339
  %741 = vmatpush1.msra.mxu0 %v338
  %742 = vmatprep.subr.mxu0 %v335
  %743 = vmatpush1.msra.mxu0 %v334
  %744 = vmatprep.subr.mxu0 %v331
  %745 = vmatpush1.msra.mxu0 %v330
  %746 = vmatprep.subr.mxu0 %v327
  %747 = vmatpush1.msra.mxu0 %v326
  %748 = vmatprep.subr.mxu0 %v323
  %749 = vmatpush1.msra.mxu0 %v322
  %750 = vmatprep.subr.mxu0 %v319
  %751 = vmatpush1.msra.mxu0 %v318
  %752 = vmatprep.subr.mxu0 %v315
  %753 = vmatpush1.msra.mxu0 %v314
  %754 = vmatprep.subr.mxu0 %v311
  %755 = vmatpush1.msra.mxu0 %v310
  %756 = vmatprep.subr.mxu0 %v307
  %757 = vmatpush1.msra.mxu0 %v306
  %758 = vmatprep.subr.mxu0 %v303
  %759 = vmatpush1.msra.mxu0 %v302
  %760 = vmatprep.subr.mxu0 %v299
  %761 = vmatpush1.msra.mxu0 %v298
  %762 = vmatprep.subr.mxu0 %v423
  %763 = vmatpush2.msra.mxu0 %v422
  %764 = vmatprep.subr.mxu0 %v419
  %765 = vmatpush2.msra.mxu0 %v418
  %766 = vmatprep.subr.mxu0 %v415
  %767 = vmatpush2.msra.mxu0 %v414
  %768 = vmatprep.subr.mxu0 %v411
  %769 = vmatpush2.msra.mxu0 %v410
  %770 = vmatprep.subr.mxu0 %v407
  %771 = vmatpush2.msra.mxu0 %v406
  %772 = vmatprep.subr.mxu0 %v403
  %773 = vmatpush2.msra.mxu0 %v402
  %774 = vmatprep.subr.mxu0 %v399
  %775 = vmatpush2.msra.mxu0 %v398
  %776 = vmatprep.subr.mxu0 %v395
  %777 = vmatpush2.msra.mxu0 %v394
  %778 = vmatprep.subr.mxu0 %v391
  %779 = vmatpush2.msra.mxu0 %v390
  %780 = vmatprep.subr.mxu0 %v387
  %781 = vmatpush2.msra.mxu0 %v386
  %782 = vmatprep.subr.mxu0 %v383
  %783 = vmatpush2.msra.mxu0 %v382
  %784 = vmatprep.subr.mxu0 %v379
  %785 = vmatpush2.msra.mxu0 %v378
  %786 = vmatprep.subr.mxu0 %v375
  %787 = vmatpush2.msra.mxu0 %v374
  %788 = vmatprep.subr.mxu0 %v371
  %789 = vmatpush2.msra.mxu0 %v370
  %790 = vmatprep.subr.mxu0 %v367
  %791 = vmatpush2.msra.mxu0 %v366
  %792 = vmatprep.subr.mxu0 %v363
  %793 = vmatpush2.msra.mxu0 %v362
  %794 = vmatprep.mubr.f32.mxu0 %v582
  %795 = vmatmul.mubr.f32.gmra.mxu0 %v40
  %v796 = vpop.f32.mrf.mxu0
  %v797 = vadd.f32 %v726, %v796
  %v798 = vpop.f32.mrf.mxu0
  %v799 = vadd.f32 %v728, %v798
  %800 = vdwg.mxu0
  %801 = vmatprep.subr.mxu0 %v487
  %802 = vmatpush1.msra.mxu0 %v486
  %803 = vmatprep.subr.mxu0 %v483
  %804 = vmatpush1.msra.mxu0 %v482
  %805 = vmatprep.subr.mxu0 %v479
  %806 = vmatpush1.msra.mxu0 %v478
  %807 = vmatprep.subr.mxu0 %v475
  %808 = vmatpush1.msra.mxu0 %v474
  %809 = vmatprep.subr.mxu0 %v471
  %810 = vmatpush1.msra.mxu0 %v470
  %811 = vmatprep.subr.mxu0 %v467
  %812 = vmatpush1.msra.mxu0 %v466
  %813 = vmatprep.subr.mxu0 %v463
  %814 = vmatpush1.msra.mxu0 %v462
  %815 = vmatprep.subr.mxu0 %v459
  %816 = vmatpush1.msra.mxu0 %v458
  %817 = vmatprep.subr.mxu0 %v455
  %818 = vmatpush1.msra.mxu0 %v454
  %819 = vmatprep.subr.mxu0 %v451
  %820 = vmatpush1.msra.mxu0 %v450
  %821 = vmatprep.subr.mxu0 %v447
  %822 = vmatpush1.msra.mxu0 %v446
  %823 = vmatprep.subr.mxu0 %v443
  %824 = vmatpush1.msra.mxu0 %v442
  %825 = vmatprep.subr.mxu0 %v439
  %826 = vmatpush1.msra.mxu0 %v438
  %827 = vmatprep.subr.mxu0 %v435
  %828 = vmatpush1.msra.mxu0 %v434
  %829 = vmatprep.subr.mxu0 %v431
  %830 = vmatpush1.msra.mxu0 %v430
  %831 = vmatprep.subr.mxu0 %v427
  %832 = vmatpush1.msra.mxu0 %v426
  %833 = vmatprep.subr.mxu0 %v551
  %834 = vmatpush2.msra.mxu0 %v550
  %835 = vmatprep.subr.mxu0 %v547
  %836 = vmatpush2.msra.mxu0 %v546
  %837 = vmatprep.subr.mxu0 %v543
  %838 = vmatpush2.msra.mxu0 %v542
  %839 = vmatprep.subr.mxu0 %v539
  %840 = vmatpush2.msra.mxu0 %v538
  %841 = vmatprep.subr.mxu0 %v535
  %842 = vmatpush2.msra.mxu0 %v534
  %843 = vmatprep.subr.mxu0 %v531
  %844 = vmatpush2.msra.mxu0 %v530
  %845 = vmatprep.subr.mxu0 %v527
  %846 = vmatpush2.msra.mxu0 %v526
  %847 = vmatprep.subr.mxu0 %v523
  %848 = vmatpush2.msra.mxu0 %v522
  %849 = vmatprep.subr.mxu0 %v519
  %850 = vmatpush2.msra.mxu0 %v518
  %851 = vmatprep.subr.mxu0 %v515
  %852 = vmatpush2.msra.mxu0 %v514
  %853 = vmatprep.subr.mxu0 %v511
  %854 = vmatpush2.msra.mxu0 %v510
  %855 = vmatprep.subr.mxu0 %v507
  %856 = vmatpush2.msra.mxu0 %v506
  %857 = vmatprep.subr.mxu0 %v503
  %858 = vmatpush2.msra.mxu0 %v502
  %859 = vmatprep.subr.mxu0 %v499
  %860 = vmatpush2.msra.mxu0 %v498
  %861 = vmatprep.subr.mxu0 %v495
  %862 = vmatpush2.msra.mxu0 %v494
  %863 = vmatprep.subr.mxu0 %v491
  %864 = vmatpush2.msra.mxu0 %v490
  %865 = vmatprep.mubr.f32.mxu0 %v583
  %866 = vmatmul.mubr.f32.gmra.mxu0 %v41
  %v867 = vpop.f32.mrf.mxu0
  %v868 = vadd.f32 %v797, %v867
  %v869 = vpop.f32.mrf.mxu0
  %v870 = vadd.f32 %v799, %v869
  %871 = vdwg.mxu0
  %872 = vmatprep.subr.mxu0 %v105
  %873 = vmatpush1.msra.mxu0 %v104
  %874 = vmatprep.subr.mxu0 %v101
  %875 = vmatpush1.msra.mxu0 %v100
  %876 = vmatprep.subr.mxu0 %v97
  %877 = vmatpush1.msra.mxu0 %v96
  %878 = vmatprep.subr.mxu0 %v93
  %879 = vmatpush1.msra.mxu0 %v92
  %880 = vmatprep.subr.mxu0 %v89
  %881 = vmatpush1.msra.mxu0 %v88
  %882 = vmatprep.subr.mxu0 %v85
  %883 = vmatpush1.msra.mxu0 %v84
  %884 = vmatprep.subr.mxu0 %v81
  %885 = vmatpush1.msra.mxu0 %v80
  %886 = vmatprep.subr.mxu0 %v77
  %887 = vmatpush1.msra.mxu0 %v76
  %888 = vmatprep.subr.mxu0 %v73
  %889 = vmatpush1.msra.mxu0 %v72
  %890 = vmatprep.subr.mxu0 %v69
  %891 = vmatpush1.msra.mxu0 %v68
  %892 = vmatprep.subr.mxu0 %v65
  %893 = vmatpush1.msra.mxu0 %v64
  %894 = vmatprep.subr.mxu0 %v61
  %895 = vmatpush1.msra.mxu0 %v60
  %896 = vmatprep.subr.mxu0 %v57
  %897 = vmatpush1.msra.mxu0 %v56
  %898 = vmatprep.subr.mxu0 %v53
  %899 = vmatpush1.msra.mxu0 %v52
  %900 = vmatprep.subr.mxu0 %v49
  %901 = vmatpush1.msra.mxu0 %v48
  %902 = vmatprep.subr.mxu0 %v45
  %903 = vmatpush1.msra.mxu0 %v44
  %904 = vmatprep.subr.mxu0 %v169
  %905 = vmatpush2.msra.mxu0 %v168
  %906 = vmatprep.subr.mxu0 %v165
  %907 = vmatpush2.msra.mxu0 %v164
  %908 = vmatprep.subr.mxu0 %v161
  %909 = vmatpush2.msra.mxu0 %v160
  %910 = vmatprep.subr.mxu0 %v157
  %911 = vmatpush2.msra.mxu0 %v156
  %912 = vmatprep.subr.mxu0 %v153
  %913 = vmatpush2.msra.mxu0 %v152
  %914 = vmatprep.subr.mxu0 %v149
  %915 = vmatpush2.msra.mxu0 %v148
  %916 = vmatprep.subr.mxu0 %v145
  %917 = vmatpush2.msra.mxu0 %v144
  %918 = vmatprep.subr.mxu0 %v141
  %919 = vmatpush2.msra.mxu0 %v140
  %920 = vmatprep.subr.mxu0 %v137
  %921 = vmatpush2.msra.mxu0 %v136
  %922 = vmatprep.subr.mxu0 %v133
  %923 = vmatpush2.msra.mxu0 %v132
  %924 = vmatprep.subr.mxu0 %v129
  %925 = vmatpush2.msra.mxu0 %v128
  %926 = vmatprep.subr.mxu0 %v125
  %927 = vmatpush2.msra.mxu0 %v124
  %928 = vmatprep.subr.mxu0 %v121
  %929 = vmatpush2.msra.mxu0 %v120
  %930 = vmatprep.subr.mxu0 %v117
  %931 = vmatpush2.msra.mxu0 %v116
  %932 = vmatprep.subr.mxu0 %v113
  %933 = vmatpush2.msra.mxu0 %v112
  %934 = vmatprep.subr.mxu0 %v109
  %935 = vmatpush2.msra.mxu0 %v108
  %936 = vmatprep.mubr.f32.mxu0 %v580
  %937 = vmatmul.mubr.f32.gmra.mxu0 %v38
  %v938 = vpop.f32.mrf.mxu0
  %v939 = vadd.f32 %v567, %v938
  %v940 = vpop.f32.mrf.mxu0
  %v941 = vadd.f32 %v571, %v940
  %942 = vdwg.mxu0
  %943 = vmatprep.subr.mxu0 %v233
  %944 = vmatpush1.msra.mxu0 %v232
  %945 = vmatprep.subr.mxu0 %v229
  %946 = vmatpush1.msra.mxu0 %v228
  %947 = vmatprep.subr.mxu0 %v225
  %948 = vmatpush1.msra.mxu0 %v224
  %949 = vmatprep.subr.mxu0 %v221
  %950 = vmatpush1.msra.mxu0 %v220
  %951 = vmatprep.subr.mxu0 %v217
  %952 = vmatpush1.msra.mxu0 %v216
  %953 = vmatprep.subr.mxu0 %v213
  %954 = vmatpush1.msra.mxu0 %v212
  %955 = vmatprep.subr.mxu0 %v209
  %956 = vmatpush1.msra.mxu0 %v208
  %957 = vmatprep.subr.mxu0 %v205
  %958 = vmatpush1.msra.mxu0 %v204
  %959 = vmatprep.subr.mxu0 %v201
  %960 = vmatpush1.msra.mxu0 %v200
  %961 = vmatprep.subr.mxu0 %v197
  %962 = vmatpush1.msra.mxu0 %v196
  %963 = vmatprep.subr.mxu0 %v193
  %964 = vmatpush1.msra.mxu0 %v192
  %965 = vmatprep.subr.mxu0 %v189
  %966 = vmatpush1.msra.mxu0 %v188
  %967 = vmatprep.subr.mxu0 %v185
  %968 = vmatpush1.msra.mxu0 %v184
  %969 = vmatprep.subr.mxu0 %v181
  %970 = vmatpush1.msra.mxu0 %v180
  %971 = vmatprep.subr.mxu0 %v177
  %972 = vmatpush1.msra.mxu0 %v176
  %973 = vmatprep.subr.mxu0 %v173
  %974 = vmatpush1.msra.mxu0 %v172
  %975 = vmatprep.subr.mxu0 %v297
  %976 = vmatpush2.msra.mxu0 %v296
  %977 = vmatprep.subr.mxu0 %v293
  %978 = vmatpush2.msra.mxu0 %v292
  %979 = vmatprep.subr.mxu0 %v289
  %980 = vmatpush2.msra.mxu0 %v288
  %981 = vmatprep.subr.mxu0 %v285
  %982 = vmatpush2.msra.mxu0 %v284
  %983 = vmatprep.subr.mxu0 %v281
  %984 = vmatpush2.msra.mxu0 %v280
  %985 = vmatprep.subr.mxu0 %v277
  %986 = vmatpush2.msra.mxu0 %v276
  %987 = vmatprep.subr.mxu0 %v273
  %988 = vmatpush2.msra.mxu0 %v272
  %989 = vmatprep.subr.mxu0 %v269
  %990 = vmatpush2.msra.mxu0 %v268
  %991 = vmatprep.subr.mxu0 %v265
  %992 = vmatpush2.msra.mxu0 %v264
  %993 = vmatprep.subr.mxu0 %v261
  %994 = vmatpush2.msra.mxu0 %v260
  %995 = vmatprep.subr.mxu0 %v257
  %996 = vmatpush2.msra.mxu0 %v256
  %997 = vmatprep.subr.mxu0 %v253
  %998 = vmatpush2.msra.mxu0 %v252
  %999 = vmatprep.subr.mxu0 %v249
  %1000 = vmatpush2.msra.mxu0 %v248
  %1001 = vmatprep.subr.mxu0 %v245
  %1002 = vmatpush2.msra.mxu0 %v244
  %1003 = vmatprep.subr.mxu0 %v241
  %1004 = vmatpush2.msra.mxu0 %v240
  %1005 = vmatprep.subr.mxu0 %v237
  %1006 = vmatpush2.msra.mxu0 %v236
  %1007 = vmatprep.mubr.f32.mxu0 %v581
  %1008 = vmatmul.mubr.f32.gmra.mxu0 %v39
  %v1009 = vpop.f32.mrf.mxu0
  %v1010 = vadd.f32 %v939, %v1009
  %v1011 = vpop.f32.mrf.mxu0
  %v1012 = vadd.f32 %v941, %v1011
  %1013 = vdwg.mxu0
  %1014 = vmatprep.subr.mxu0 %v361
  %1015 = vmatpush1.msra.mxu0 %v360
  %1016 = vmatprep.subr.mxu0 %v357
  %1017 = vmatpush1.msra.mxu0 %v356
  %1018 = vmatprep.subr.mxu0 %v353
  %1019 = vmatpush1.msra.mxu0 %v352
  %1020 = vmatprep.subr.mxu0 %v349
  %1021 = vmatpush1.msra.mxu0 %v348
  %1022 = vmatprep.subr.mxu0 %v345
  %1023 = vmatpush1.msra.mxu0 %v344
  %1024 = vmatprep.subr.mxu0 %v341
  %1025 = vmatpush1.msra.mxu0 %v340
  %1026 = vmatprep.subr.mxu0 %v337
  %1027 = vmatpush1.msra.mxu0 %v336
  %1028 = vmatprep.subr.mxu0 %v333
  %1029 = vmatpush1.msra.mxu0 %v332
  %1030 = vmatprep.subr.mxu0 %v329
  %1031 = vmatpush1.msra.mxu0 %v328
  %1032 = vmatprep.subr.mxu0 %v325
  %1033 = vmatpush1.msra.mxu0 %v324
  %1034 = vmatprep.subr.mxu0 %v321
  %1035 = vmatpush1.msra.mxu0 %v320
  %1036 = vmatprep.subr.mxu0 %v317
  %1037 = vmatpush1.msra.mxu0 %v316
  %1038 = vmatprep.subr.mxu0 %v313
  %1039 = vmatpush1.msra.mxu0 %v312
  %1040 = vmatprep.subr.mxu0 %v309
  %1041 = vmatpush1.msra.mxu0 %v308
  %1042 = vmatprep.subr.mxu0 %v305
  %1043 = vmatpush1.msra.mxu0 %v304
  %1044 = vmatprep.subr.mxu0 %v301
  %1045 = vmatpush1.msra.mxu0 %v300
  %1046 = vmatprep.subr.mxu0 %v425
  %1047 = vmatpush2.msra.mxu0 %v424
  %1048 = vmatprep.subr.mxu0 %v421
  %1049 = vmatpush2.msra.mxu0 %v420
  %1050 = vmatprep.subr.mxu0 %v417
  %1051 = vmatpush2.msra.mxu0 %v416
  %1052 = vmatprep.subr.mxu0 %v413
  %1053 = vmatpush2.msra.mxu0 %v412
  %1054 = vmatprep.subr.mxu0 %v409
  %1055 = vmatpush2.msra.mxu0 %v408
  %1056 = vmatprep.subr.mxu0 %v405
  %1057 = vmatpush2.msra.mxu0 %v404
  %1058 = vmatprep.subr.mxu0 %v401
  %1059 = vmatpush2.msra.mxu0 %v400
  %1060 = vmatprep.subr.mxu0 %v397
  %1061 = vmatpush2.msra.mxu0 %v396
  %1062 = vmatprep.subr.mxu0 %v393
  %1063 = vmatpush2.msra.mxu0 %v392
  %1064 = vmatprep.subr.mxu0 %v389
  %1065 = vmatpush2.msra.mxu0 %v388
  %1066 = vmatprep.subr.mxu0 %v385
  %1067 = vmatpush2.msra.mxu0 %v384
  %1068 = vmatprep.subr.mxu0 %v381
  %1069 = vmatpush2.msra.mxu0 %v380
  %1070 = vmatprep.subr.mxu0 %v377
  %1071 = vmatpush2.msra.mxu0 %v376
  %1072 = vmatprep.subr.mxu0 %v373
  %1073 = vmatpush2.msra.mxu0 %v372
  %1074 = vmatprep.subr.mxu0 %v369
  %1075 = vmatpush2.msra.mxu0 %v368
  %1076 = vmatprep.subr.mxu0 %v365
  %1077 = vmatpush2.msra.mxu0 %v364
  %1078 = vmatprep.mubr.f32.mxu0 %v582
  %1079 = vmatmul.mubr.f32.gmra.mxu0 %v40
  %v1080 = vpop.f32.mrf.mxu0
  %v1081 = vadd.f32 %v1010, %v1080
  %v1082 = vpop.f32.mrf.mxu0
  %v1083 = vadd.f32 %v1012, %v1082
  %1084 = vdwg.mxu0
  %1085 = vmatprep.subr.mxu0 %v489
  %1086 = vmatpush1.msra.mxu0 %v488
  %1087 = vmatprep.subr.mxu0 %v485
  %1088 = vmatpush1.msra.mxu0 %v484
  %1089 = vmatprep.subr.mxu0 %v481
  %1090 = vmatpush1.msra.mxu0 %v480
  %1091 = vmatprep.subr.mxu0 %v477
  %1092 = vmatpush1.msra.mxu0 %v476
  %1093 = vmatprep.subr.mxu0 %v473
  %1094 = vmatpush1.msra.mxu0 %v472
  %1095 = vmatprep.subr.mxu0 %v469
  %1096 = vmatpush1.msra.mxu0 %v468
  %1097 = vmatprep.subr.mxu0 %v465
  %1098 = vmatpush1.msra.mxu0 %v464
  %1099 = vmatprep.subr.mxu0 %v461
  %1100 = vmatpush1.msra.mxu0 %v460
  %1101 = vmatprep.subr.mxu0 %v457
  %1102 = vmatpush1.msra.mxu0 %v456
  %1103 = vmatprep.subr.mxu0 %v453
  %1104 = vmatpush1.msra.mxu0 %v452
  %1105 = vmatprep.subr.mxu0 %v449
  %1106 = vmatpush1.msra.mxu0 %v448
  %1107 = vmatprep.subr.mxu0 %v445
  %1108 = vmatpush1.msra.mxu0 %v444
  %1109 = vmatprep.subr.mxu0 %v441
  %1110 = vmatpush1.msra.mxu0 %v440
  %1111 = vmatprep.subr.mxu0 %v437
  %1112 = vmatpush1.msra.mxu0 %v436
  %1113 = vmatprep.subr.mxu0 %v433
  %1114 = vmatpush1.msra.mxu0 %v432
  %1115 = vmatprep.subr.mxu0 %v429
  %1116 = vmatpush1.msra.mxu0 %v428
  %1117 = vmatprep.subr.mxu0 %v553
  %1118 = vmatpush2.msra.mxu0 %v552
  %1119 = vmatprep.subr.mxu0 %v549
  %1120 = vmatpush2.msra.mxu0 %v548
  %1121 = vmatprep.subr.mxu0 %v545
  %1122 = vmatpush2.msra.mxu0 %v544
  %1123 = vmatprep.subr.mxu0 %v541
  %1124 = vmatpush2.msra.mxu0 %v540
  %1125 = vmatprep.subr.mxu0 %v537
  %1126 = vmatpush2.msra.mxu0 %v536
  %1127 = vmatprep.subr.mxu0 %v533
  %1128 = vmatpush2.msra.mxu0 %v532
  %1129 = vmatprep.subr.mxu0 %v529
  %1130 = vmatpush2.msra.mxu0 %v528
  %1131 = vmatprep.subr.mxu0 %v525
  %1132 = vmatpush2.msra.mxu0 %v524
  %1133 = vmatprep.subr.mxu0 %v521
  %1134 = vmatpush2.msra.mxu0 %v520
  %1135 = vmatprep.subr.mxu0 %v517
  %1136 = vmatpush2.msra.mxu0 %v516
  %1137 = vmatprep.subr.mxu0 %v513
  %1138 = vmatpush2.msra.mxu0 %v512
  %1139 = vmatprep.subr.mxu0 %v509
  %1140 = vmatpush2.msra.mxu0 %v508
  %1141 = vmatprep.subr.mxu0 %v505
  %1142 = vmatpush2.msra.mxu0 %v504
  %1143 = vmatprep.subr.mxu0 %v501
  %1144 = vmatpush2.msra.mxu0 %v500
  %1145 = vmatprep.subr.mxu0 %v497
  %1146 = vmatpush2.msra.mxu0 %v496
  %1147 = vmatprep.subr.mxu0 %v493
  %1148 = vmatpush2.msra.mxu0 %v492
  %1149 = vmatprep.mubr.f32.mxu0 %v583
  %1150 = vmatmul.mubr.f32.gmra.mxu0 %v41
  %v1151 = vpop.f32.mrf.mxu0
  %v1152 = vadd.f32 %v1081, %v1151
  %v1153 = vpop.f32.mrf.mxu0
  %v1154 = vadd.f32 %v1083, %v1153
  %1155 = vdwg.mxu0
  %v1156 = vmax.f32 %v868, 0.0
  %v1157 = vmax.f32 %v870, 0.0
  %v1158 = vmax.f32 %v1152, 0.0
  %v1159 = vmax.f32 %v1154, 0.0
  %vm1160 = vcmask 1043456
  %v1161 = vsel %vm1160, %v1156, 0.0
  %v1162 = vrot.slane %v1161, 4
  %v1163 = vadd.f32 %v1161, %v1162
  %v1164 = vrot.slane %v1163, 2
  %v1165 = vadd.f32 %v1163, %v1164
  %v1166 = vrot.slane %v1165, 1
  %v1167 = vadd.f32 %v1165, %v1166
  %v1168 = vsel %vm1160, %v1157, 0.0
  %v1169 = vrot.slane %v1168, 4
  %v1170 = vadd.f32 %v1168, %v1169
  %v1171 = vrot.slane %v1170, 2
  %v1172 = vadd.f32 %v1170, %v1171
  %v1173 = vrot.slane %v1172, 1
  %v1174 = vadd.f32 %v1172, %v1173
  %v1175 = vsel %vm1160, %v1158, 0.0
  %v1176 = vrot.slane %v1175, 4
  %v1177 = vadd.f32 %v1175, %v1176
  %v1178 = vrot.slane %v1177, 2
  %v1179 = vadd.f32 %v1177, %v1178
  %v1180 = vrot.slane %v1179, 1
  %v1181 = vadd.f32 %v1179, %v1180
  %v1182 = vsel %vm1160, %v1159, 0.0
  %v1183 = vrot.slane %v1182, 4
  %v1184 = vadd.f32 %v1182, %v1183
  %v1185 = vrot.slane %v1184, 2
  %v1186 = vadd.f32 %v1184, %v1185
  %v1187 = vrot.slane %v1186, 1
  %v1188 = vadd.f32 %v1186, %v1187
  %v1189 = vrcp.pop 4.0
  %v1190 = vmul.f32 %v1167, %v1189
  %v1191 = vmul.f32 %v1174, %v1189
  %v1192 = vmul.f32 %v1181, %v1189
  %v1193 = vmul.f32 %v1188, %v1189
  %v1194 = vmul.f32 %v1156, %v1156
  %v1195 = vmul.f32 %v1157, %v1157
  %v1196 = vmul.f32 %v1158, %v1158
  %v1197 = vmul.f32 %v1159, %v1159
  %v1198 = vsel %vm1160, %v1194, 0.0
  %v1199 = vrot.slane %v1198, 4
  %v1200 = vadd.f32 %v1198, %v1199
  %v1201 = vrot.slane %v1200, 2
  %v1202 = vadd.f32 %v1200, %v1201
  %v1203 = vrot.slane %v1202, 1
  %v1204 = vadd.f32 %v1202, %v1203
  %v1205 = vsel %vm1160, %v1195, 0.0
  %v1206 = vrot.slane %v1205, 4
  %v1207 = vadd.f32 %v1205, %v1206
  %v1208 = vrot.slane %v1207, 2
  %v1209 = vadd.f32 %v1207, %v1208
  %v1210 = vrot.slane %v1209, 1
  %v1211 = vadd.f32 %v1209, %v1210
  %v1212 = vsel %vm1160, %v1196, 0.0
  %v1213 = vrot.slane %v1212, 4
  %v1214 = vadd.f32 %v1212, %v1213
  %v1215 = vrot.slane %v1214, 2
  %v1216 = vadd.f32 %v1214, %v1215
  %v1217 = vrot.slane %v1216, 1
  %v1218 = vadd.f32 %v1216, %v1217
  %v1219 = vsel %vm1160, %v1197, 0.0
  %v1220 = vrot.slane %v1219, 4
  %v1221 = vadd.f32 %v1219, %v1220
  %v1222 = vrot.slane %v1221, 2
  %v1223 = vadd.f32 %v1221, %v1222
  %v1224 = vrot.slane %v1223, 1
  %v1225 = vadd.f32 %v1223, %v1224
  %v1226 = vmul.f32 %v1204, %v1189
  %v1227 = vmul.f32 %v1211, %v1189
  %v1228 = vmul.f32 %v1218, %v1189
  %v1229 = vmul.f32 %v1225, %v1189
  %v1230 = vmul.f32 %v1190, %v1190
  %v1231 = vmul.f32 %v1191, %v1191
  %v1232 = vmul.f32 %v1192, %v1192
  %v1233 = vmul.f32 %v1193, %v1193
  %v1234 = vsub.f32 %v1226, %v1230
  %v1235 = vsub.f32 %v1227, %v1231
  %v1236 = vsub.f32 %v1228, %v1232
  %v1237 = vsub.f32 %v1229, %v1233
  %v1238 = vmax.f32 %v1234, 0.0
  %v1239 = vmax.f32 %v1235, 0.0
  %v1240 = vmax.f32 %v1236, 0.0
  %v1241 = vmax.f32 %v1237, 0.0
  %v1242 = vsub.f32 %v1156, %v1190
  %v1243 = vsub.f32 %v1157, %v1191
  %v1244 = vsub.f32 %v1158, %v1192
  %v1245 = vsub.f32 %v1159, %v1193
  %v1246 = vadd.f32 %v1238, 1e-05
  %v1247 = vadd.f32 %v1239, 1e-05
  %v1248 = vadd.f32 %v1240, 1e-05
  %v1249 = vadd.f32 %v1241, 1e-05
  %v1250 = vrsqrt.pop %v1246
  %v1251 = vrsqrt.pop %v1247
  %v1252 = vrsqrt.pop %v1248
  %v1253 = vrsqrt.pop %v1249
  %v1254 = vmul.f32 %v1242, %v1250
  %v1255 = vmul.f32 %v1243, %v1251
  %v1256 = vmul.f32 %v1244, %v1252
  %v1257 = vmul.f32 %v1245, %v1253
  %v1258 = vld [vmem:[%s3] sm:$0xf]
  %v1260 = vlaneseq
  %v1261 = vshrl.u32 %v1260, 7
  %v1262 = vsub.s32 0, %v1261
  %v1263 = vrot.slane %v1258, %v1262
  %v1264 = vlaneseq
  %v1265 = vshrl.u32 %v1264, 7
  %v1266 = vsub.s32 1, %v1265
  %v1267 = vrot.slane %v1258, %v1266
  %v1268 = vlaneseq
  %v1269 = vshrl.u32 %v1268, 7
  %v1270 = vsub.s32 2, %v1269
  %v1271 = vrot.slane %v1258, %v1270
  %v1272 = vlaneseq
  %v1273 = vshrl.u32 %v1272, 7
  %v1274 = vsub.s32 3, %v1273
  %v1275 = vrot.slane %v1258, %v1274
  %v1280 = vmul.f32 %v1254, %v1263
  %v1281 = vmul.f32 %v1255, %v1267
  %v1282 = vmul.f32 %v1256, %v1271
  %v1283 = vmul.f32 %v1257, %v1275
  %v1284 = vld [vmem:[%s4] sm:$0xf]
  %v1286 = vlaneseq
  %v1287 = vshrl.u32 %v1286, 7
  %v1288 = vsub.s32 0, %v1287
  %v1289 = vrot.slane %v1284, %v1288
  %v1290 = vlaneseq
  %v1291 = vshrl.u32 %v1290, 7
  %v1292 = vsub.s32 1, %v1291
  %v1293 = vrot.slane %v1284, %v1292
  %v1294 = vlaneseq
  %v1295 = vshrl.u32 %v1294, 7
  %v1296 = vsub.s32 2, %v1295
  %v1297 = vrot.slane %v1284, %v1296
  %v1298 = vlaneseq
  %v1299 = vshrl.u32 %v1298, 7
  %v1300 = vsub.s32 3, %v1299
  %v1301 = vrot.slane %v1284, %v1300
  %v1306 = vadd.f32 %v1280, %v1289
  %v1307 = vadd.f32 %v1281, %v1293
  %v1308 = vadd.f32 %v1282, %v1297
  %v1309 = vadd.f32 %v1283, %v1301
  %v1310 = vld [vmem:[%s5] sm:$0xff]
  %v1311 = vld [vmem:[%s5 + $0x8] sm:$0xff]
  %v1312 = vld [vmem:[%s5 + $0x10] sm:$0xff]
  %v1313 = vld [vmem:[%s5 + $0x18] sm:$0xff]
  %v1314 = vld [vmem:[%s5 + $0x20] sm:$0xff]
  %v1315 = vld [vmem:[%s5 + $0x28] sm:$0xff]
  %v1316 = vld [vmem:[%s5 + $0x30] sm:$0xff]
  %v1317 = vld [vmem:[%s5 + $0x38] sm:$0xff]
  %v1318 = vld [vmem:[%s5 + $0x40] sm:$0xff]
  %v1319 = vld [vmem:[%s5 + $0x48] sm:$0xff]
  %v1320 = vld [vmem:[%s5 + $0x50] sm:$0xff]
  %v1321 = vld [vmem:[%s5 + $0x58] sm:$0xff]
  %v1322 = vld [vmem:[%s5 + $0x60] sm:$0xff]
  %v1323 = vld [vmem:[%s5 + $0x68] sm:$0xff]
  %v1324 = vld [vmem:[%s5 + $0x70] sm:$0xff]
  %v1325 = vld [vmem:[%s5 + $0x78] sm:$0xff]
  %v1326 = vld [vmem:[%s5 + $0x80] sm:$0xff]
  %v1327 = vld [vmem:[%s5 + $0x88] sm:$0xff]
  %v1328 = vld [vmem:[%s5 + $0x90] sm:$0xff]
  %v1329 = vld [vmem:[%s5 + $0x98] sm:$0xff]
  %v1330 = vld [vmem:[%s5 + $0xa0] sm:$0xff]
  %v1331 = vld [vmem:[%s5 + $0xa8] sm:$0xff]
  %v1332 = vld [vmem:[%s5 + $0xb0] sm:$0xff]
  %v1333 = vld [vmem:[%s5 + $0xb8] sm:$0xff]
  %v1334 = vld [vmem:[%s5 + $0xc0] sm:$0xff]
  %v1335 = vld [vmem:[%s5 + $0xc8] sm:$0xff]
  %v1336 = vld [vmem:[%s5 + $0xd0] sm:$0xff]
  %v1337 = vld [vmem:[%s5 + $0xd8] sm:$0xff]
  %v1338 = vld [vmem:[%s5 + $0xe0] sm:$0xff]
  %v1339 = vld [vmem:[%s5 + $0xe8] sm:$0xff]
  %v1340 = vld [vmem:[%s5 + $0xf0] sm:$0xff]
  %v1341 = vld [vmem:[%s5 + $0xf8] sm:$0xff]
  %v1342 = vld [vmem:[%s5 + $0x100] sm:$0xff]
  %v1343 = vld [vmem:[%s5 + $0x108] sm:$0xff]
  %v1344 = vld [vmem:[%s5 + $0x110] sm:$0xff]
  %v1345 = vld [vmem:[%s5 + $0x118] sm:$0xff]
  %v1346 = vld [vmem:[%s5 + $0x120] sm:$0xff]
  %v1347 = vld [vmem:[%s5 + $0x128] sm:$0xff]
  %v1348 = vld [vmem:[%s5 + $0x130] sm:$0xff]
  %v1349 = vld [vmem:[%s5 + $0x138] sm:$0xff]
  %v1350 = vld [vmem:[%s5 + $0x140] sm:$0xff]
  %v1351 = vld [vmem:[%s5 + $0x148] sm:$0xff]
  %v1352 = vld [vmem:[%s5 + $0x150] sm:$0xff]
  %v1353 = vld [vmem:[%s5 + $0x158] sm:$0xff]
  %v1354 = vld [vmem:[%s5 + $0x160] sm:$0xff]
  %v1355 = vld [vmem:[%s5 + $0x168] sm:$0xff]
  %v1356 = vld [vmem:[%s5 + $0x170] sm:$0xff]
  %v1357 = vld [vmem:[%s5 + $0x178] sm:$0xff]
  %v1358 = vld [vmem:[%s5 + $0x180] sm:$0xff]
  %v1359 = vld [vmem:[%s5 + $0x188] sm:$0xff]
  %v1360 = vld [vmem:[%s5 + $0x190] sm:$0xff]
  %v1361 = vld [vmem:[%s5 + $0x198] sm:$0xff]
  %v1362 = vld [vmem:[%s5 + $0x1a0] sm:$0xff]
  %v1363 = vld [vmem:[%s5 + $0x1a8] sm:$0xff]
  %v1364 = vld [vmem:[%s5 + $0x1b0] sm:$0xff]
  %v1365 = vld [vmem:[%s5 + $0x1b8] sm:$0xff]
  %v1366 = vld [vmem:[%s5 + $0x1c0] sm:$0xff]
  %v1367 = vld [vmem:[%s5 + $0x1c8] sm:$0xff]
  %v1368 = vld [vmem:[%s5 + $0x1d0] sm:$0xff]
  %v1369 = vld [vmem:[%s5 + $0x1d8] sm:$0xff]
  %v1370 = vld [vmem:[%s5 + $0x1e0] sm:$0xff]
  %v1371 = vld [vmem:[%s5 + $0x1e8] sm:$0xff]
  %v1372 = vld [vmem:[%s5 + $0x1f0] sm:$0xff]
  %v1373 = vld [vmem:[%s5 + $0x1f8] sm:$0xff]
  %v1374 = vld [vmem:[%s5 + $0x200] sm:$0xff]
  %v1375 = vld [vmem:[%s5 + $0x208] sm:$0xff]
  %v1376 = vld [vmem:[%s5 + $0x210] sm:$0xff]
  %v1377 = vld [vmem:[%s5 + $0x218] sm:$0xff]
  %v1378 = vld [vmem:[%s5 + $0x220] sm:$0xff]
  %v1379 = vld [vmem:[%s5 + $0x228] sm:$0xff]
  %v1380 = vld [vmem:[%s5 + $0x230] sm:$0xff]
  %v1381 = vld [vmem:[%s5 + $0x238] sm:$0xff]
  %v1382 = vld [vmem:[%s5 + $0x240] sm:$0xff]
  %v1383 = vld [vmem:[%s5 + $0x248] sm:$0xff]
  %v1384 = vld [vmem:[%s5 + $0x250] sm:$0xff]
  %v1385 = vld [vmem:[%s5 + $0x258] sm:$0xff]
  %v1386 = vld [vmem:[%s5 + $0x260] sm:$0xff]
  %v1387 = vld [vmem:[%s5 + $0x268] sm:$0xff]
  %v1388 = vld [vmem:[%s5 + $0x270] sm:$0xff]
  %v1389 = vld [vmem:[%s5 + $0x278] sm:$0xff]
  %v1390 = vld [vmem:[%s5 + $0x280] sm:$0xff]
  %v1391 = vld [vmem:[%s5 + $0x288] sm:$0xff]
  %v1392 = vld [vmem:[%s5 + $0x290] sm:$0xff]
  %v1393 = vld [vmem:[%s5 + $0x298] sm:$0xff]
  %v1394 = vld [vmem:[%s5 + $0x2a0] sm:$0xff]
  %v1395 = vld [vmem:[%s5 + $0x2a8] sm:$0xff]
  %v1396 = vld [vmem:[%s5 + $0x2b0] sm:$0xff]
  %v1397 = vld [vmem:[%s5 + $0x2b8] sm:$0xff]
  %v1398 = vld [vmem:[%s5 + $0x2c0] sm:$0xff]
  %v1399 = vld [vmem:[%s5 + $0x2c8] sm:$0xff]
  %v1400 = vld [vmem:[%s5 + $0x2d0] sm:$0xff]
  %v1401 = vld [vmem:[%s5 + $0x2d8] sm:$0xff]
  %v1402 = vld [vmem:[%s5 + $0x2e0] sm:$0xff]
  %v1403 = vld [vmem:[%s5 + $0x2e8] sm:$0xff]
  %v1404 = vld [vmem:[%s5 + $0x2f0] sm:$0xff]
  %v1405 = vld [vmem:[%s5 + $0x2f8] sm:$0xff]
  %v1406 = vld [vmem:[%s5 + $0x300] sm:$0xff]
  %v1407 = vld [vmem:[%s5 + $0x308] sm:$0xff]
  %v1408 = vld [vmem:[%s5 + $0x310] sm:$0xff]
  %v1409 = vld [vmem:[%s5 + $0x318] sm:$0xff]
  %v1410 = vld [vmem:[%s5 + $0x320] sm:$0xff]
  %v1411 = vld [vmem:[%s5 + $0x328] sm:$0xff]
  %v1412 = vld [vmem:[%s5 + $0x330] sm:$0xff]
  %v1413 = vld [vmem:[%s5 + $0x338] sm:$0xff]
  %v1414 = vld [vmem:[%s5 + $0x340] sm:$0xff]
  %v1415 = vld [vmem:[%s5 + $0x348] sm:$0xff]
  %v1416 = vld [vmem:[%s5 + $0x350] sm:$0xff]
  %v1417 = vld [vmem:[%s5 + $0x358] sm:$0xff]
  %v1418 = vld [vmem:[%s5 + $0x360] sm:$0xff]
  %v1419 = vld [vmem:[%s5 + $0x368] sm:$0xff]
  %v1420 = vld [vmem:[%s5 + $0x370] sm:$0xff]
  %v1421 = vld [vmem:[%s5 + $0x378] sm:$0xff]
  %v1422 = vld [vmem:[%s5 + $0x380] sm:$0xff]
  %v1423 = vld [vmem:[%s5 + $0x388] sm:$0xff]
  %v1424 = vld [vmem:[%s5 + $0x390] sm:$0xff]
  %v1425 = vld [vmem:[%s5 + $0x398] sm:$0xff]
  %v1426 = vld [vmem:[%s5 + $0x3a0] sm:$0xff]
  %v1427 = vld [vmem:[%s5 + $0x3a8] sm:$0xff]
  %v1428 = vld [vmem:[%s5 + $0x3b0] sm:$0xff]
  %v1429 = vld [vmem:[%s5 + $0x3b8] sm:$0xff]
  %v1430 = vld [vmem:[%s5 + $0x3c0] sm:$0xff]
  %v1431 = vld [vmem:[%s5 + $0x3c8] sm:$0xff]
  %v1432 = vld [vmem:[%s5 + $0x3d0] sm:$0xff]
  %v1433 = vld [vmem:[%s5 + $0x3d8] sm:$0xff]
  %v1434 = vld [vmem:[%s5 + $0x3e0] sm:$0xff]
  %v1435 = vld [vmem:[%s5 + $0x3e8] sm:$0xff]
  %v1436 = vld [vmem:[%s5 + $0x3f0] sm:$0xff]
  %v1437 = vld [vmem:[%s5 + $0x3f8] sm:$0xff]
  %v1438 = vld [vmem:[%s6] sm:$0x3]
  %v1440 = vlaneseq
  %v1441 = vshrl.u32 %v1440, 7
  %v1442 = vsub.s32 0, %v1441
  %v1443 = vrot.slane %v1438, %v1442
  %v1444 = vlaneseq
  %v1445 = vshrl.u32 %v1444, 7
  %v1446 = vsub.s32 1, %v1445
  %v1447 = vrot.slane %v1438, %v1446
  %1450 = vmatprep.subr.mxu0 %v1341
  %1451 = vmatpush1.msra.mxu0 %v1340
  %1452 = vmatprep.subr.mxu0 %v1339
  %1453 = vmatpush1.msra.mxu0 %v1338
  %1454 = vmatprep.subr.mxu0 %v1337
  %1455 = vmatpush1.msra.mxu0 %v1336
  %1456 = vmatprep.subr.mxu0 %v1335
  %1457 = vmatpush1.msra.mxu0 %v1334
  %1458 = vmatprep.subr.mxu0 %v1333
  %1459 = vmatpush1.msra.mxu0 %v1332
  %1460 = vmatprep.subr.mxu0 %v1331
  %1461 = vmatpush1.msra.mxu0 %v1330
  %1462 = vmatprep.subr.mxu0 %v1329
  %1463 = vmatpush1.msra.mxu0 %v1328
  %1464 = vmatprep.subr.mxu0 %v1327
  %1465 = vmatpush1.msra.mxu0 %v1326
  %1466 = vmatprep.subr.mxu0 %v1325
  %1467 = vmatpush1.msra.mxu0 %v1324
  %1468 = vmatprep.subr.mxu0 %v1323
  %1469 = vmatpush1.msra.mxu0 %v1322
  %1470 = vmatprep.subr.mxu0 %v1321
  %1471 = vmatpush1.msra.mxu0 %v1320
  %1472 = vmatprep.subr.mxu0 %v1319
  %1473 = vmatpush1.msra.mxu0 %v1318
  %1474 = vmatprep.subr.mxu0 %v1317
  %1475 = vmatpush1.msra.mxu0 %v1316
  %1476 = vmatprep.subr.mxu0 %v1315
  %1477 = vmatpush1.msra.mxu0 %v1314
  %1478 = vmatprep.subr.mxu0 %v1313
  %1479 = vmatpush1.msra.mxu0 %v1312
  %1480 = vmatprep.subr.mxu0 %v1311
  %1481 = vmatpush1.msra.mxu0 %v1310
  %1482 = vmatprep.subr.mxu0 %v1373
  %1483 = vmatpush2.msra.mxu0 %v1372
  %1484 = vmatprep.subr.mxu0 %v1371
  %1485 = vmatpush2.msra.mxu0 %v1370
  %1486 = vmatprep.subr.mxu0 %v1369
  %1487 = vmatpush2.msra.mxu0 %v1368
  %1488 = vmatprep.subr.mxu0 %v1367
  %1489 = vmatpush2.msra.mxu0 %v1366
  %1490 = vmatprep.subr.mxu0 %v1365
  %1491 = vmatpush2.msra.mxu0 %v1364
  %1492 = vmatprep.subr.mxu0 %v1363
  %1493 = vmatpush2.msra.mxu0 %v1362
  %1494 = vmatprep.subr.mxu0 %v1361
  %1495 = vmatpush2.msra.mxu0 %v1360
  %1496 = vmatprep.subr.mxu0 %v1359
  %1497 = vmatpush2.msra.mxu0 %v1358
  %1498 = vmatprep.subr.mxu0 %v1357
  %1499 = vmatpush2.msra.mxu0 %v1356
  %1500 = vmatprep.subr.mxu0 %v1355
  %1501 = vmatpush2.msra.mxu0 %v1354
  %1502 = vmatprep.subr.mxu0 %v1353
  %1503 = vmatpush2.msra.mxu0 %v1352
  %1504 = vmatprep.subr.mxu0 %v1351
  %1505 = vmatpush2.msra.mxu0 %v1350
  %1506 = vmatprep.subr.mxu0 %v1349
  %1507 = vmatpush2.msra.mxu0 %v1348
  %1508 = vmatprep.subr.mxu0 %v1347
  %1509 = vmatpush2.msra.mxu0 %v1346
  %1510 = vmatprep.subr.mxu0 %v1345
  %1511 = vmatpush2.msra.mxu0 %v1344
  %1512 = vmatprep.subr.mxu0 %v1343
  %1513 = vmatpush2.msra.mxu0 %v1342
  %1514 = vmatprep.mubr.f32.mxu0 %v1307
  %1515 = vmatmul.mubr.f32.gmra.mxu0 %v1306
  %v1516 = vpop.f32.mrf.mxu0
  %v1517 = vadd.f32 %v1443, %v1516
  %v1518 = vpop.f32.mrf.mxu0
  %v1519 = vadd.f32 %v1447, %v1518
  %1520 = vdwg.mxu0
  %1521 = vmatprep.subr.mxu0 %v1405
  %1522 = vmatpush1.msra.mxu0 %v1404
  %1523 = vmatprep.subr.mxu0 %v1403
  %1524 = vmatpush1.msra.mxu0 %v1402
  %1525 = vmatprep.subr.mxu0 %v1401
  %1526 = vmatpush1.msra.mxu0 %v1400
  %1527 = vmatprep.subr.mxu0 %v1399
  %1528 = vmatpush1.msra.mxu0 %v1398
  %1529 = vmatprep.subr.mxu0 %v1397
  %1530 = vmatpush1.msra.mxu0 %v1396
  %1531 = vmatprep.subr.mxu0 %v1395
  %1532 = vmatpush1.msra.mxu0 %v1394
  %1533 = vmatprep.subr.mxu0 %v1393
  %1534 = vmatpush1.msra.mxu0 %v1392
  %1535 = vmatprep.subr.mxu0 %v1391
  %1536 = vmatpush1.msra.mxu0 %v1390
  %1537 = vmatprep.subr.mxu0 %v1389
  %1538 = vmatpush1.msra.mxu0 %v1388
  %1539 = vmatprep.subr.mxu0 %v1387
  %1540 = vmatpush1.msra.mxu0 %v1386
  %1541 = vmatprep.subr.mxu0 %v1385
  %1542 = vmatpush1.msra.mxu0 %v1384
  %1543 = vmatprep.subr.mxu0 %v1383
  %1544 = vmatpush1.msra.mxu0 %v1382
  %1545 = vmatprep.subr.mxu0 %v1381
  %1546 = vmatpush1.msra.mxu0 %v1380
  %1547 = vmatprep.subr.mxu0 %v1379
  %1548 = vmatpush1.msra.mxu0 %v1378
  %1549 = vmatprep.subr.mxu0 %v1377
  %1550 = vmatpush1.msra.mxu0 %v1376
  %1551 = vmatprep.subr.mxu0 %v1375
  %1552 = vmatpush1.msra.mxu0 %v1374
  %1553 = vmatprep.subr.mxu0 %v1437
  %1554 = vmatpush2.msra.mxu0 %v1436
  %1555 = vmatprep.subr.mxu0 %v1435
  %1556 = vmatpush2.msra.mxu0 %v1434
  %1557 = vmatprep.subr.mxu0 %v1433
  %1558 = vmatpush2.msra.mxu0 %v1432
  %1559 = vmatprep.subr.mxu0 %v1431
  %1560 = vmatpush2.msra.mxu0 %v1430
  %1561 = vmatprep.subr.mxu0 %v1429
  %1562 = vmatpush2.msra.mxu0 %v1428
  %1563 = vmatprep.subr.mxu0 %v1427
  %1564 = vmatpush2.msra.mxu0 %v1426
  %1565 = vmatprep.subr.mxu0 %v1425
  %1566 = vmatpush2.msra.mxu0 %v1424
  %1567 = vmatprep.subr.mxu0 %v1423
  %1568 = vmatpush2.msra.mxu0 %v1422
  %1569 = vmatprep.subr.mxu0 %v1421
  %1570 = vmatpush2.msra.mxu0 %v1420
  %1571 = vmatprep.subr.mxu0 %v1419
  %1572 = vmatpush2.msra.mxu0 %v1418
  %1573 = vmatprep.subr.mxu0 %v1417
  %1574 = vmatpush2.msra.mxu0 %v1416
  %1575 = vmatprep.subr.mxu0 %v1415
  %1576 = vmatpush2.msra.mxu0 %v1414
  %1577 = vmatprep.subr.mxu0 %v1413
  %1578 = vmatpush2.msra.mxu0 %v1412
  %1579 = vmatprep.subr.mxu0 %v1411
  %1580 = vmatpush2.msra.mxu0 %v1410
  %1581 = vmatprep.subr.mxu0 %v1409
  %1582 = vmatpush2.msra.mxu0 %v1408
  %1583 = vmatprep.subr.mxu0 %v1407
  %1584 = vmatpush2.msra.mxu0 %v1406
  %1585 = vmatprep.mubr.f32.mxu0 %v1309
  %1586 = vmatmul.mubr.f32.gmra.mxu0 %v1308
  %v1587 = vpop.f32.mrf.mxu0
  %v1588 = vadd.f32 %v1517, %v1587
  %v1589 = vpop.f32.mrf.mxu0
  %v1590 = vadd.f32 %v1519, %v1589
  %1591 = vdwg.mxu0
  %v1592 = vmax.f32 %v1588, 0.0
  %v1593 = vmax.f32 %v1590, 0.0
  %v1594 = vsel %vm1160, %v1592, 0.0
  %v1595 = vrot.slane %v1594, 4
  %v1596 = vadd.f32 %v1594, %v1595
  %v1597 = vrot.slane %v1596, 2
  %v1598 = vadd.f32 %v1596, %v1597
  %v1599 = vrot.slane %v1598, 1
  %v1600 = vadd.f32 %v1598, %v1599
  %v1601 = vsel %vm1160, %v1593, 0.0
  %v1602 = vrot.slane %v1601, 4
  %v1603 = vadd.f32 %v1601, %v1602
  %v1604 = vrot.slane %v1603, 2
  %v1605 = vadd.f32 %v1603, %v1604
  %v1606 = vrot.slane %v1605, 1
  %v1607 = vadd.f32 %v1605, %v1606
  %v1608 = vmul.f32 %v1600, %v1189
  %v1609 = vmul.f32 %v1607, %v1189
  %v1610 = vmul.f32 %v1592, %v1592
  %v1611 = vmul.f32 %v1593, %v1593
  %v1612 = vsel %vm1160, %v1610, 0.0
  %v1613 = vrot.slane %v1612, 4
  %v1614 = vadd.f32 %v1612, %v1613
  %v1615 = vrot.slane %v1614, 2
  %v1616 = vadd.f32 %v1614, %v1615
  %v1617 = vrot.slane %v1616, 1
  %v1618 = vadd.f32 %v1616, %v1617
  %v1619 = vsel %vm1160, %v1611, 0.0
  %v1620 = vrot.slane %v1619, 4
  %v1621 = vadd.f32 %v1619, %v1620
  %v1622 = vrot.slane %v1621, 2
  %v1623 = vadd.f32 %v1621, %v1622
  %v1624 = vrot.slane %v1623, 1
  %v1625 = vadd.f32 %v1623, %v1624
  %v1626 = vmul.f32 %v1618, %v1189
  %v1627 = vmul.f32 %v1625, %v1189
  %v1628 = vmul.f32 %v1608, %v1608
  %v1629 = vmul.f32 %v1609, %v1609
  %v1630 = vsub.f32 %v1626, %v1628
  %v1631 = vsub.f32 %v1627, %v1629
  %v1632 = vmax.f32 %v1630, 0.0
  %v1633 = vmax.f32 %v1631, 0.0
  %v1634 = vsub.f32 %v1592, %v1608
  %v1635 = vsub.f32 %v1593, %v1609
  %v1636 = vadd.f32 %v1632, 1e-05
  %v1637 = vadd.f32 %v1633, 1e-05
  %v1638 = vrsqrt.pop %v1636
  %v1639 = vrsqrt.pop %v1637
  %v1640 = vmul.f32 %v1634, %v1638
  %v1641 = vmul.f32 %v1635, %v1639
  %v1642 = vld [vmem:[%s7] sm:$0x3]
  %v1644 = vlaneseq
  %v1645 = vshrl.u32 %v1644, 7
  %v1646 = vsub.s32 0, %v1645
  %v1647 = vrot.slane %v1642, %v1646
  %v1648 = vlaneseq
  %v1649 = vshrl.u32 %v1648, 7
  %v1650 = vsub.s32 1, %v1649
  %v1651 = vrot.slane %v1642, %v1650
  %v1654 = vmul.f32 %v1640, %v1647
  %v1655 = vmul.f32 %v1641, %v1651
  %v1656 = vld [vmem:[%s8] sm:$0x3]
  %v1658 = vlaneseq
  %v1659 = vshrl.u32 %v1658, 7
  %v1660 = vsub.s32 0, %v1659
  %v1661 = vrot.slane %v1656, %v1660
  %v1662 = vlaneseq
  %v1663 = vshrl.u32 %v1662, 7
  %v1664 = vsub.s32 1, %v1663
  %v1665 = vrot.slane %v1656, %v1664
  %v1668 = vadd.f32 %v1654, %v1661
  %v1669 = vadd.f32 %v1655, %v1665
  %v1670 = vld [vmem:[%s9] sm:$0xff]
  %v1671 = vld [vmem:[%s9 + $0x8] sm:$0xff]
  %v1672 = vld [vmem:[%s9 + $0x10] sm:$0xff]
  %v1673 = vld [vmem:[%s9 + $0x18] sm:$0xff]
  %v1674 = vld [vmem:[%s9 + $0x20] sm:$0xff]
  %v1675 = vld [vmem:[%s9 + $0x28] sm:$0xff]
  %v1676 = vld [vmem:[%s9 + $0x30] sm:$0xff]
  %v1677 = vld [vmem:[%s9 + $0x38] sm:$0xff]
  %v1678 = vld [vmem:[%s9 + $0x40] sm:$0xff]
  %v1679 = vld [vmem:[%s9 + $0x48] sm:$0xff]
  %v1680 = vld [vmem:[%s9 + $0x50] sm:$0xff]
  %v1681 = vld [vmem:[%s9 + $0x58] sm:$0xff]
  %v1682 = vld [vmem:[%s9 + $0x60] sm:$0xff]
  %v1683 = vld [vmem:[%s9 + $0x68] sm:$0xff]
  %v1684 = vld [vmem:[%s9 + $0x70] sm:$0xff]
  %v1685 = vld [vmem:[%s9 + $0x78] sm:$0xff]
  %v1686 = vld [vmem:[%s9 + $0x80] sm:$0xff]
  %v1687 = vld [vmem:[%s9 + $0x88] sm:$0xff]
  %v1688 = vld [vmem:[%s9 + $0x90] sm:$0xff]
  %v1689 = vld [vmem:[%s9 + $0x98] sm:$0xff]
  %v1690 = vld [vmem:[%s9 + $0xa0] sm:$0xff]
  %v1691 = vld [vmem:[%s9 + $0xa8] sm:$0xff]
  %v1692 = vld [vmem:[%s9 + $0xb0] sm:$0xff]
  %v1693 = vld [vmem:[%s9 + $0xb8] sm:$0xff]
  %v1694 = vld [vmem:[%s9 + $0xc0] sm:$0xff]
  %v1695 = vld [vmem:[%s9 + $0xc8] sm:$0xff]
  %v1696 = vld [vmem:[%s9 + $0xd0] sm:$0xff]
  %v1697 = vld [vmem:[%s9 + $0xd8] sm:$0xff]
  %v1698 = vld [vmem:[%s9 + $0xe0] sm:$0xff]
  %v1699 = vld [vmem:[%s9 + $0xe8] sm:$0xff]
  %v1700 = vld [vmem:[%s9 + $0xf0] sm:$0xff]
  %v1701 = vld [vmem:[%s9 + $0xf8] sm:$0xff]
  %v1702 = vld [vmem:[%s10] sm:$0x1]
  %v1704 = vlaneseq
  %v1705 = vshrl.u32 %v1704, 7
  %v1706 = vsub.s32 0, %v1705
  %v1707 = vrot.slane %v1702, %v1706
  %1709 = vmatprep.subr.mxu0 0.0
  %1710 = vmatpush1.msra.mxu0 %v1685
  %1711 = vmatprep.subr.mxu0 0.0
  %1712 = vmatpush1.msra.mxu0 %v1684
  %1713 = vmatprep.subr.mxu0 0.0
  %1714 = vmatpush1.msra.mxu0 %v1683
  %1715 = vmatprep.subr.mxu0 0.0
  %1716 = vmatpush1.msra.mxu0 %v1682
  %1717 = vmatprep.subr.mxu0 0.0
  %1718 = vmatpush1.msra.mxu0 %v1681
  %1719 = vmatprep.subr.mxu0 0.0
  %1720 = vmatpush1.msra.mxu0 %v1680
  %1721 = vmatprep.subr.mxu0 0.0
  %1722 = vmatpush1.msra.mxu0 %v1679
  %1723 = vmatprep.subr.mxu0 0.0
  %1724 = vmatpush1.msra.mxu0 %v1678
  %1725 = vmatprep.subr.mxu0 0.0
  %1726 = vmatpush1.msra.mxu0 %v1677
  %1727 = vmatprep.subr.mxu0 0.0
  %1728 = vmatpush1.msra.mxu0 %v1676
  %1729 = vmatprep.subr.mxu0 0.0
  %1730 = vmatpush1.msra.mxu0 %v1675
  %1731 = vmatprep.subr.mxu0 0.0
  %1732 = vmatpush1.msra.mxu0 %v1674
  %1733 = vmatprep.subr.mxu0 0.0
  %1734 = vmatpush1.msra.mxu0 %v1673
  %1735 = vmatprep.subr.mxu0 0.0
  %1736 = vmatpush1.msra.mxu0 %v1672
  %1737 = vmatprep.subr.mxu0 0.0
  %1738 = vmatpush1.msra.mxu0 %v1671
  %1739 = vmatprep.subr.mxu0 0.0
  %1740 = vmatpush1.msra.mxu0 %v1670
  %1741 = vmatprep.subr.mxu0 0.0
  %1742 = vmatpush2.msra.mxu0 %v1701
  %1743 = vmatprep.subr.mxu0 0.0
  %1744 = vmatpush2.msra.mxu0 %v1700
  %1745 = vmatprep.subr.mxu0 0.0
  %1746 = vmatpush2.msra.mxu0 %v1699
  %1747 = vmatprep.subr.mxu0 0.0
  %1748 = vmatpush2.msra.mxu0 %v1698
  %1749 = vmatprep.subr.mxu0 0.0
  %1750 = vmatpush2.msra.mxu0 %v1697
  %1751 = vmatprep.subr.mxu0 0.0
  %1752 = vmatpush2.msra.mxu0 %v1696
  %1753 = vmatprep.subr.mxu0 0.0
  %1754 = vmatpush2.msra.mxu0 %v1695
  %1755 = vmatprep.subr.mxu0 0.0
  %1756 = vmatpush2.msra.mxu0 %v1694
  %1757 = vmatprep.subr.mxu0 0.0
  %1758 = vmatpush2.msra.mxu0 %v1693
  %1759 = vmatprep.subr.mxu0 0.0
  %1760 = vmatpush2.msra.mxu0 %v1692
  %1761 = vmatprep.subr.mxu0 0.0
  %1762 = vmatpush2.msra.mxu0 %v1691
  %1763 = vmatprep.subr.mxu0 0.0
  %1764 = vmatpush2.msra.mxu0 %v1690
  %1765 = vmatprep.subr.mxu0 0.0
  %1766 = vmatpush2.msra.mxu0 %v1689
  %1767 = vmatprep.subr.mxu0 0.0
  %1768 = vmatpush2.msra.mxu0 %v1688
  %1769 = vmatprep.subr.mxu0 0.0
  %1770 = vmatpush2.msra.mxu0 %v1687
  %1771 = vmatprep.subr.mxu0 0.0
  %1772 = vmatpush2.msra.mxu0 %v1686
  %1773 = vmatprep.mubr.f32.mxu0 %v1669
  %1774 = vmatmul.mubr.f32.gmra.mxu0 %v1668
  %v1775 = vpop.f32.mrf.mxu0
  %v1776 = vadd.f32 %v1707, %v1775
  %v1777 = vpop.f32.mrf.mxu0
  %1778 = vdwg.mxu0
  %vm1779 = vcmask 68608
  %1780 = vst.msk [vmem:[%s11] sm:$0xf] %vm1779, %v1776
  // Predicated region
  $region46: #{input_tnet_forward.9} parent=0 // pred_check
    _
  $region47: #{input_tnet_forward.9} parent=0 // pred_check_branch
    %1782 = sbr.rel (0) target = $region49
  $region48: #{input_tnet_forward.9} parent=0 // pred_region
    _
  $region49: #{input_tnet_forward.9} parent=0 // pred_fallthru
    _
  // Predicated region
  $region50: #{input_tnet_forward.9} parent=0 // pred_check
    _
  $region51: #{input_tnet_forward.9} parent=0 // pred_check_branch
    %1784 = sbr.rel (0) target = $region53
  $region52: #{input_tnet_forward.9} parent=0 // pred_region
    _
  $region53: #{input_tnet_forward.9} parent=0 // pred_fallthru
    _

</llo_original>
